<compile_context>
chip_gen: v6e
topology: v6e:2x2x1
jax: 0.10.0
libtpu: 0.0.40
codegen_flags: <defaults>
</compile_context>

<pallas_src>
import jax
import jax.numpy as jnp
import numpy as np
from jax.experimental import pallas as pl
from jax.experimental.pallas import tpu as pltpu


# ------------------------------ small helpers -------------------------------
def _round_up(x, m):
    return ((x + m - 1) // m) * m


def _pad_last(a, n):
    pad = [(0, 0)] * (a.ndim - 1) + [(0, n - a.shape[-1])]
    return jnp.pad(a, pad)


def _pick_time_chunk(S, target=64):
    # Largest divisor of S that is <= target (keeps per-grid-step work large,
    # VMEM footprint bounded, and avoids ragged time chunks).
    if S <= target:
        return S
    for t in range(target, 0, -1):
        if S % t == 0:
            return t
    return 1


# ----------------------------- dense (Linear) kernel ------------------------
def _dense_kernel(x_ref, w_ref, b_ref, o_ref):
    o_ref[...] = (jnp.dot(x_ref[...], w_ref[...],
                          preferred_element_type=jnp.float32)
                  + b_ref[...]).astype(o_ref.dtype)


def dense(x, w, b, tile_m=256):
    # x: [M, K], w: [K, N], b: [N] -> [M, N], tiled over M (K kept resident;
    # for the classifier K = 2*Hp which always fits VMEM comfortably).
    M, K = x.shape
    N = w.shape[1]
    tm = min(tile_m, M)
    return pl.pallas_call(
        _dense_kernel,
        out_shape=jax.ShapeDtypeStruct((M, N), jnp.float32),
        grid_spec=pltpu.PrefetchScalarGridSpec(
            num_scalar_prefetch=0,
            grid=(pl.cdiv(M, tm),),
            in_specs=[pl.BlockSpec((tm, K), lambda i: (i, 0)),
                      pl.BlockSpec((K, N), lambda i: (0, 0)),
                      pl.BlockSpec((1, N), lambda i: (0, 0))],
            out_specs=pl.BlockSpec((tm, N), lambda i: (i, 0))),
        compiler_params=pltpu.CompilerParams(
            dimension_semantics=("parallel",)),
    )(x, w, b.reshape(1, N))


# ------------------------ fused bidirectional GRU layer ----------------------
def _bigru_layer_kernel(x_ref, wih_ref, whh_ref, bih_ref, bhh_ref,
                        y_ref, hlast_ref, h_scr):
    # x_ref:     [Tc, Bp, In]   f32   time chunk (already the right chunk for
    #                                 this direction via the index_map)
    # wih_ref:   [1, In, 3Hp]   bf16  this direction's input weights
    # whh_ref:   [1, Hp, 3Hp]   bf16
    # bih/bhh:   [1, 1, 3Hp]    f32
    # y_ref:     [Tc, Bp, Hp]   f32   this direction's half of the output
    # hlast_ref: [1, Bp, Hp]    f32   final hidden state of this direction
    # h_scr:     [2, Bp, Hp]    f32   per-direction hidden carry across chunks
    d = pl.program_id(0)          # direction: 0 = forward, 1 = backward
    c = pl.program_id(1)          # time chunk
    n_chunks = pl.num_programs(1)

    Tc = x_ref.shape[0]
    Hp = h_scr.shape[-1]

    @pl.when(c == 0)
    def _():
        h_scr[d] = jnp.zeros(h_scr.shape[1:], h_scr.dtype)

    wih = wih_ref[0]              # [In, 3Hp] bf16 (resident in VMEM)
    whh = whh_ref[0]              # [Hp, 3Hp] bf16
    bih = bih_ref[0]              # [1, 3Hp]  f32
    bhh = bhh_ref[0]              # [1, 3Hp]  f32

    def step(s, h):
        # Forward walks the chunk front-to-back; backward walks it back-to-front
        # (the chunk index_map already reverses the chunk order).
        t = jnp.where(d == 0, s, Tc - 1 - s)
        x_t = x_ref[t].astype(jnp.bfloat16)                       # [Bp, In]
        gx = jnp.dot(x_t, wih, preferred_element_type=jnp.float32) + bih
        gh = jnp.dot(h.astype(jnp.bfloat16), whh,
                     preferred_element_type=jnp.float32) + bhh
        # lane-aligned gate slices (Hp is a multiple of 128); all f32 math
        r = jax.nn.sigmoid(gx[:, :Hp] + gh[:, :Hp])
        z = jax.nn.sigmoid(gx[:, Hp:2 * Hp] + gh[:, Hp:2 * Hp])
        n = jnp.tanh(gx[:, 2 * Hp:] + r * gh[:, 2 * Hp:])
        h_new = (1.0 - z) * n + z * h
        y_ref[t] = h_new.astype(y_ref.dtype)
        return h_new

    h_final = jax.lax.fori_loop(0, Tc, step, h_scr[d], unroll=(Tc <= 8))
    h_scr[d] = h_final

    @pl.when(c == n_chunks - 1)
    def _():
        hlast_ref[0] = h_final.astype(hlast_ref.dtype)


def bigru_layer(x_tm, lp, time_chunk):
    # x_tm: [S, Bp, In] time-major layer input (f32)
    # returns y: [S, Bp, 2*Hp] (fwd half | bwd half), h_last: [2, Bp, Hp]
    S, Bp, In = x_tm.shape
    Hp = lp['w_hh'].shape[1]
    G = 3 * Hp
    Tc = time_chunk
    C = S // Tc

    def x_chunk(d, c):
        # forward direction reads chunks front-to-back, backward back-to-front
        return ((1 - d) * c + d * (C - 1 - c), 0, 0)

    def y_chunk(d, c):
        return ((1 - d) * c + d * (C - 1 - c), 0, d)

    y, h_last = pl.pallas_call(
        _bigru_layer_kernel,
        out_shape=(jax.ShapeDtypeStruct((S, Bp, 2 * Hp), jnp.float32),
                   jax.ShapeDtypeStruct((2, Bp, Hp), jnp.float32)),
        grid_spec=pltpu.PrefetchScalarGridSpec(
            num_scalar_prefetch=0,
            grid=(2, C),
            in_specs=[
                pl.BlockSpec((Tc, Bp, In), x_chunk),
                pl.BlockSpec((1, In, G), lambda d, c: (d, 0, 0)),
                pl.BlockSpec((1, Hp, G), lambda d, c: (d, 0, 0)),
                pl.BlockSpec((1, 1, G), lambda d, c: (d, 0, 0)),
                pl.BlockSpec((1, 1, G), lambda d, c: (d, 0, 0)),
            ],
            out_specs=[
                pl.BlockSpec((Tc, Bp, Hp), y_chunk),
                pl.BlockSpec((1, Bp, Hp), lambda d, c: (d, 0, 0)),
            ],
            scratch_shapes=[pltpu.VMEM((2, Bp, Hp), jnp.float32)]),
        compiler_params=pltpu.CompilerParams(
            # direction axis parallel (v7x: split across the 2 TensorCores);
            # the time-chunk carry axis must stay "arbitrary".
            dimension_semantics=("parallel", "arbitrary")),
    )(x_tm, lp['w_ih'], lp['w_hh'], lp['b_ih'], lp['b_hh'])
    return y, h_last


# ------------------------------ model forward --------------------------------
def bert_gru_sentiment_forward(kparams, text):
    B, S = text.shape
    Bp = _round_up(max(B, 8), 8)
    Hp = kparams['gru'][0]['w_hh'].shape[1]

    # TODO(synk): the frozen BERT encoder (self.bert(text)[0]) is modeled as a
    # deterministic embedding lookup producing [S, Bp, Ep]; the transformer
    # stack itself is not reproduced here.
    text_p = jnp.pad(text, ((0, Bp - B), (0, 0)))          # padded rows ignored
    x = kparams['emb'][text_p.T]                           # [S, Bp, Ep] f32

    Tc = _pick_time_chunk(S)
    h_last = None
    for lp in kparams['gru']:
        x, h_last = bigru_layer(x, lp, Tc)                 # x -> [S, Bp, 2Hp]
        # inter-layer GRU dropout: eval-mode identity

    # hidden[-2] = last-layer forward final state, hidden[-1] = backward
    hidden = jnp.concatenate([h_last[0], h_last[1]], axis=-1)   # [Bp, 2Hp]
    # self.dropout: eval-mode identity
    logits = dense(hidden, kparams['out_w'], kparams['out_b'])  # [Bp, out]
    return logits[:B]


# ----------------------- kernel-layout parameter packing ---------------------
def prepare_kernel_params(raw, emb_dim, hidden_dim):
    """Pad / transpose / stack raw (PyTorch-layout) params for the kernels.

    Hidden and embedding dims are padded to multiples of 128 (lane-dense);
    padded rows/cols are zero so padded hidden state stays exactly 0 through
    the recurrence (sigmoid(0)=0.5, tanh(0)=0 -> h_pad stays 0 from h0=0).
    """
    H, E = hidden_dim, emb_dim
    Hp = _round_up(max(H, 128), 128)
    Ep = _round_up(max(E, 128), 128)

    def pad_gates(m):            # m: [rows, 3H] -> [rows, 3Hp] (per-gate pad)
        return jnp.concatenate(
            [_pad_last(m[:, g * H:(g + 1) * H], Hp) for g in range(3)], axis=-1)

    def expand_in_rows(m, layer):  # m: [in_real, 3Hp] -> [in_pad, 3Hp]
        if layer == 0:
            return jnp.pad(m, ((0, Ep - E), (0, 0)))
        # layer >= 1: input features live at [0:H] and [Hp:Hp+H] of 2Hp cols
        out = jnp.zeros((2 * Hp, m.shape[1]), m.dtype)
        out = out.at[:H].set(m[:H])
        out = out.at[Hp:Hp + H].set(m[H:2 * H])
        return out

    kp = {'emb': _pad_last(raw['emb'].astype(jnp.float32), Ep), 'gru': []}
    for li, lyr in enumerate(raw['gru']):
        wih, whh, bih, bhh = [], [], [], []
        for d in ('fwd', 'bwd'):
            p = lyr[d]
            w_ih = expand_in_rows(pad_gates(p['w_ih'].T.astype(jnp.float32)), li)
            w_hh = jnp.pad(pad_gates(p['w_hh'].T.astype(jnp.float32)),
                           ((0, Hp - H), (0, 0)))
            wih.append(w_ih.astype(jnp.bfloat16))            # bf16 MXU operands
            whh.append(w_hh.astype(jnp.bfloat16))
            bih.append(pad_gates(p['b_ih'].astype(jnp.float32).reshape(1, -1)))
            bhh.append(pad_gates(p['b_hh'].astype(jnp.float32).reshape(1, -1)))
        kp['gru'].append(dict(
            w_ih=jnp.stack(wih),                             # [2, in_p, 3Hp] bf16
            w_hh=jnp.stack(whh),                             # [2, Hp,  3Hp] bf16
            b_ih=jnp.stack(bih),                             # [2, 1,   3Hp] f32
            b_hh=jnp.stack(bhh),                             # [2, 1,   3Hp] f32
        ))

    ow = raw['out_w'].T.astype(jnp.float32)                  # [2H, out]
    out_dim = ow.shape[1]
    ow_p = jnp.zeros((2 * Hp, out_dim), jnp.float32)
    ow_p = ow_p.at[:H].set(ow[:H]).at[Hp:Hp + H].set(ow[H:])
    kp['out_w'] = ow_p                                       # [2Hp, out]
    kp['out_b'] = raw['out_b'].astype(jnp.float32)
    return kp


# ------------------------------ pure-JAX reference ---------------------------
def _ref_gru_dir(x, p, H, reverse):
    xs = jnp.flip(x, axis=1) if reverse else x
    B, S, _ = xs.shape

    def cell(h, x_t):
        gx = x_t @ p['w_ih'].T + p['b_ih']
        gh = h @ p['w_hh'].T + p['b_hh']
        r = jax.nn.sigmoid(gx[:, :H] + gh[:, :H])
        z = jax.nn.sigmoid(gx[:, H:2 * H] + gh[:, H:2 * H])
        n = jnp.tanh(gx[:, 2 * H:] + r * gh[:, 2 * H:])
        h_new = (1.0 - z) * n + z * h
        return h_new, h_new

    h_last, ys = jax.lax.scan(cell, jnp.zeros((B, H), jnp.float32),
                              jnp.transpose(xs, (1, 0, 2)))
    y = jnp.transpose(ys, (1, 0, 2))
    if reverse:
        y = jnp.flip(y, axis=1)
    return y, h_last


def reference_forward(params, text, hidden_dim):
    x = params['emb'][text]
    h_f = h_b = None
    for layer_p in params['gru']:
        y_f, h_f = _ref_gru_dir(x, layer_p['fwd'], hidden_dim, False)
        y_b, h_b = _ref_gru_dir(x, layer_p['bwd'], hidden_dim, True)
        x = jnp.concatenate([y_f, y_b], axis=-1)
    hidden = jnp.concatenate([h_f, h_b], axis=-1)
    return hidden @ params['out_w'].T + params['out_b']


# ------------------------------ params --------------------------------------
def init_params(key, vocab, emb_dim, hidden_dim, output_dim, n_layers):
    k = 1.0 / np.sqrt(hidden_dim)
    keys = iter(jax.random.split(key, 64))
    params = {
        'emb': jax.random.normal(next(keys), (vocab, emb_dim), jnp.float32) * 0.02,
        'gru': [],
    }
    for layer in range(n_layers):
        in_dim = emb_dim if layer == 0 else 2 * hidden_dim
        layer_p = {}
        for d in ('fwd', 'bwd'):
            layer_p[d] = dict(
                w_ih=jax.random.uniform(next(keys), (3 * hidden_dim, in_dim),
                                        jnp.float32, -k, k),
                w_hh=jax.random.uniform(next(keys), (3 * hidden_dim, hidden_dim),
                                        jnp.float32, -k, k),
                b_ih=jax.random.uniform(next(keys), (3 * hidden_dim,),
                                        jnp.float32, -k, k),
                b_hh=jax.random.uniform(next(keys), (3 * hidden_dim,),
                                        jnp.float32, -k, k),
            )
        params['gru'].append(layer_p)
    ko = 1.0 / np.sqrt(2 * hidden_dim)
    params['out_w'] = jax.random.uniform(next(keys), (output_dim, 2 * hidden_dim),
                                         jnp.float32, -ko, ko)
    params['out_b'] = jax.random.uniform(next(keys), (output_dim,),
                                         jnp.float32, -ko, ko)
    return params


# ------------------------------ main -----------------------------------------
if __name__ == "__main__":
    B, S = 2, 8                 # batch, sequence length
    VOCAB = 30
    EMB_DIM = 16                # bert.config.hidden_size (synthetic)
    HIDDEN_DIM = 32
    OUTPUT_DIM = 2
    N_LAYERS = 2                # bidirectional GRU, 2 layers

    key = jax.random.PRNGKey(0)
    pkey, tkey = jax.random.split(key)
    raw_params = init_params(pkey, VOCAB, EMB_DIM, HIDDEN_DIM, OUTPUT_DIM, N_LAYERS)
    text = jax.random.randint(tkey, (B, S), 0, VOCAB, dtype=jnp.int32)

    kparams = prepare_kernel_params(raw_params, EMB_DIM, HIDDEN_DIM)

    fwd = jax.jit(bert_gru_sentiment_forward)
    logits = fwd(kparams, text)
    jax.block_until_ready(logits)

    ref = reference_forward(raw_params, text, HIDDEN_DIM)
    np.testing.assert_allclose(np.asarray(logits), np.asarray(ref),
                               rtol=2e-2, atol=2e-2)

    assert logits.shape == (B, OUTPUT_DIM)
    print("KERNEL_OK")
</pallas_src>

<mosaic_0001>
module attributes {stable_mosaic.version = 11 : i64} {
  func.func @_dense_kernel(%arg0: i32, %arg1: memref<8x256xf32, #tpu.memory_space<vmem>>, %arg2: memref<256x2xf32, #tpu.memory_space<vmem>>, %arg3: memref<1x2xf32, #tpu.memory_space<vmem>>, %arg4: memref<8x2xf32, #tpu.memory_space<vmem>>) attributes {dimension_semantics = [#tpu.dimension_semantics<parallel>], iteration_bounds = array<i64: 1>, scalar_prefetch = 0 : i64, scratch_operands = 0 : i64, tpu.core_type = #tpu.core_type<tc>, window_params = [{transform_indices = @transform_0, window_bounds = array<i64: 8, 256>}, {pipeline_mode = #tpu.pipeline_mode<synchronous>, transform_indices = @transform_1, window_bounds = array<i64: 256, 2>}, {pipeline_mode = #tpu.pipeline_mode<synchronous>, transform_indices = @transform_2, window_bounds = array<i64: 1, 2>}, {transform_indices = @transform_3, window_bounds = array<i64: 8, 2>}]} {
    %c0 = arith.constant 0 : index
    %c0_0 = arith.constant 0 : index
    %0 = vector.load %arg1[%c0, %c0_0] : memref<8x256xf32, #tpu.memory_space<vmem>>, vector<8x256xf32>
    %c0_1 = arith.constant 0 : index
    %c0_2 = arith.constant 0 : index
    %1 = vector.load %arg2[%c0_1, %c0_2] : memref<256x2xf32, #tpu.memory_space<vmem>>, vector<256x2xf32>
    %cst = arith.constant dense<0.000000e+00> : vector<8x2xf32>
    %2 = tpu.matmul %0, %1, %cst {dimension_numbers = #tpu.dot_dimension_numbers<[1], [0], [0], [1], [0, 0, 1, 1], [], []>} : vector<8x256xf32>, vector<256x2xf32>, vector<8x2xf32> -> vector<8x2xf32>
    %c0_3 = arith.constant 0 : index
    %c0_4 = arith.constant 0 : index
    %3 = vector.load %arg3[%c0_3, %c0_4] : memref<1x2xf32, #tpu.memory_space<vmem>>, vector<1x2xf32>
    %4 = vector.broadcast %3 : vector<1x2xf32> to vector<8x2xf32>
    %5 = arith.addf %2, %4 : vector<8x2xf32>
    %c0_5 = arith.constant 0 : index
    %c0_6 = arith.constant 0 : index
    %6 = vector.load %arg4[%c0_5, %c0_6] : memref<8x2xf32, #tpu.memory_space<vmem>>, vector<8x2xf32>
    tpu.vector_store %arg4[%c0_5, %c0_6], %5 {strides = array<i32>} : memref<8x2xf32, #tpu.memory_space<vmem>>, vector<8x2xf32>,
    return
  }
  func.func @transform_0(%arg0: i32) -> (i32, i32) {
    %c0_i32 = arith.constant 0 : i32
    %c0_i32_0 = arith.constant 0 : i32
    return %arg0, %c0_i32 : i32, i32
  }
  func.func @transform_1(%arg0: i32) -> (i32, i32) {
    %c0_i32 = arith.constant 0 : i32
    %c0_i32_0 = arith.constant 0 : i32
    %c0_i32_1 = arith.constant 0 : i32
    return %c0_i32, %c0_i32_0 : i32, i32
  }
  func.func @transform_2(%arg0: i32) -> (i32, i32) {
    %c0_i32 = arith.constant 0 : i32
    %c0_i32_0 = arith.constant 0 : i32
    %c0_i32_1 = arith.constant 0 : i32
    return %c0_i32, %c0_i32_0 : i32, i32
  }
  func.func @transform_3(%arg0: i32) -> (i32, i32) {
    %c0_i32 = arith.constant 0 : i32
    %c0_i32_0 = arith.constant 0 : i32
    return %arg0, %c0_i32 : i32, i32
  }
}

module attributes {stable_mosaic.version = 11 : i64} {
  func.func @_bigru_layer_kernel(%arg0: i32, %arg1: i32, %arg2: memref<8x8x256xf32, #tpu.memory_space<vmem>>, %arg3: memref<1x256x384xbf16, #tpu.memory_space<vmem>>, %arg4: memref<1x128x384xbf16, #tpu.memory_space<vmem>>, %arg5: memref<1x1x384xf32, #tpu.memory_space<vmem>>, %arg6: memref<1x1x384xf32, #tpu.memory_space<vmem>>, %arg7: memref<8x8x128xf32, #tpu.memory_space<vmem>>, %arg8: memref<1x8x128xf32, #tpu.memory_space<vmem>>, %arg9: memref<2x8x128xf32, #tpu.memory_space<vmem>>) attributes {dimension_semantics = [#tpu.dimension_semantics<parallel>, #tpu.dimension_semantics<arbitrary>], iteration_bounds = array<i64: 2, 1>, scalar_prefetch = 0 : i64, scratch_operands = 1 : i64, tpu.core_type = #tpu.core_type<tc>, window_params = [{transform_indices = @transform_0, window_bounds = array<i64: 8, 8, 256>}, {transform_indices = @transform_1, window_bounds = array<i64: 1, 256, 384>}, {transform_indices = @transform_2, window_bounds = array<i64: 1, 128, 384>}, {transform_indices = @transform_3, window_bounds = array<i64: 1, 1, 384>}, {transform_indices = @transform_4, window_bounds = array<i64: 1, 1, 384>}, {transform_indices = @transform_5, window_bounds = array<i64: 8, 8, 128>}, {transform_indices = @transform_6, window_bounds = array<i64: 1, 8, 128>}]} {
    %c0_i32 = arith.constant 0 : i32
    %0 = arith.cmpi eq, %arg1, %c0_i32 : i32
    %1 = arith.extui %0 : i1 to i32
    %c0_i32_0 = arith.constant 0 : i32
    %2 = arith.cmpi ne, %1, %c0_i32_0 : i32
    scf.if %2 {
      %cst_106 = arith.constant 0.000000e+00 : f32
      %373 = vector.broadcast %cst_106 : f32 to vector<8x128xf32>
      %374 = arith.index_cast %arg0 : i32 to index
      %c0_107 = arith.constant 0 : index
      %c0_108 = arith.constant 0 : index
      %375 = vector.load %arg9[%374, %c0_107, %c0_108] : memref<2x8x128xf32, #tpu.memory_space<vmem>>, vector<1x8x128xf32>
      %376 = vector.shape_cast %375 : vector<1x8x128xf32> to vector<8x128xf32>
      %377 = vector.shape_cast %373 : vector<8x128xf32> to vector<1x8x128xf32>
      tpu.vector_store %arg9[%374, %c0_107, %c0_108], %377 {strides = array<i32>} : memref<2x8x128xf32, #tpu.memory_space<vmem>>, vector<1x8x128xf32>,
    } else {
    }
    %c0 = arith.constant 0 : index
    %c0_1 = arith.constant 0 : index
    %c0_2 = arith.constant 0 : index
    %3 = vector.load %arg3[%c0, %c0_1, %c0_2] : memref<1x256x384xbf16, #tpu.memory_space<vmem>>, vector<1x256x384xbf16>
    %4 = vector.shape_cast %3 : vector<1x256x384xbf16> to vector<256x384xbf16>
    %c0_3 = arith.constant 0 : index
    %c0_4 = arith.constant 0 : index
    %c0_5 = arith.constant 0 : index
    %5 = vector.load %arg4[%c0_3, %c0_4, %c0_5] : memref<1x128x384xbf16, #tpu.memory_space<vmem>>, vector<1x128x384xbf16>
    %6 = vector.shape_cast %5 : vector<1x128x384xbf16> to vector<128x384xbf16>
    %c0_6 = arith.constant 0 : index
    %c0_7 = arith.constant 0 : index
    %c0_8 = arith.constant 0 : index
    %7 = vector.load %arg5[%c0_6, %c0_7, %c0_8] : memref<1x1x384xf32, #tpu.memory_space<vmem>>, vector<1x1x384xf32>
    %8 = vector.shape_cast %7 : vector<1x1x384xf32> to vector<1x384xf32>
    %c0_9 = arith.constant 0 : index
    %c0_10 = arith.constant 0 : index
    %c0_11 = arith.constant 0 : index
    %9 = vector.load %arg6[%c0_9, %c0_10, %c0_11] : memref<1x1x384xf32, #tpu.memory_space<vmem>>, vector<1x1x384xf32>
    %10 = vector.shape_cast %9 : vector<1x1x384xf32> to vector<1x384xf32>
    %11 = arith.index_cast %arg0 : i32 to index
    %c0_12 = arith.constant 0 : index
    %c0_13 = arith.constant 0 : index
    %12 = vector.load %arg9[%11, %c0_12, %c0_13] : memref<2x8x128xf32, #tpu.memory_space<vmem>>, vector<1x8x128xf32>
    %13 = vector.shape_cast %12 : vector<1x8x128xf32> to vector<8x128xf32>
    %c0_i32_14 = arith.constant 0 : i32
    %c0_i32_15 = arith.constant 0 : i32
    %14 = arith.cmpi eq, %arg0, %c0_i32_15 : i32
    %c7_i32 = arith.constant 7 : i32
    %15 = arith.subi %c7_i32, %c0_i32_14 : i32
    %16 = arith.select %14, %c0_i32_14, %15 : i32
    %17 = arith.index_cast %16 : i32 to index
    %c0_16 = arith.constant 0 : index
    %c0_17 = arith.constant 0 : index
    %18 = vector.load %arg2[%17, %c0_16, %c0_17] : memref<8x8x256xf32, #tpu.memory_space<vmem>>, vector<1x8x256xf32>
    %19 = vector.shape_cast %18 : vector<1x8x256xf32> to vector<8x256xf32>
    %20 = arith.truncf %19 : vector<8x256xf32> to vector<8x256xbf16>
    %cst = arith.constant dense<0.000000e+00> : vector<8x384xf32>
    %21 = tpu.matmul %20, %4, %cst {dimension_numbers = #tpu.dot_dimension_numbers<[1], [0], [0], [1], [0, 0, 1, 1], [], []>} : vector<8x256xbf16>, vector<256x384xbf16>, vector<8x384xf32> -> vector<8x384xf32>
    %22 = vector.broadcast %8 : vector<1x384xf32> to vector<8x384xf32>
    %23 = arith.addf %21, %22 : vector<8x384xf32>
    %24 = arith.truncf %13 : vector<8x128xf32> to vector<8x128xbf16>
    %cst_18 = arith.constant dense<0.000000e+00> : vector<8x384xf32>
    %25 = tpu.matmul %24, %6, %cst_18 {dimension_numbers = #tpu.dot_dimension_numbers<[1], [0], [0], [1], [0, 0, 1, 1], [], []>} : vector<8x128xbf16>, vector<128x384xbf16>, vector<8x384xf32> -> vector<8x384xf32>
    %26 = vector.broadcast %10 : vector<1x384xf32> to vector<8x384xf32>
    %27 = arith.addf %25, %26 : vector<8x384xf32>
    %28 = vector.extract_strided_slice %23 {offsets = [0, 0], sizes = [8, 128], strides = [1, 1]} : vector<8x384xf32> to vector<8x128xf32>
    %29 = vector.extract_strided_slice %27 {offsets = [0, 0], sizes = [8, 128], strides = [1, 1]} : vector<8x384xf32> to vector<8x128xf32>
    %30 = arith.addf %28, %29 : vector<8x128xf32>
    %31 = arith.negf %30 : vector<8x128xf32>
    %32 = math.exp %31 : vector<8x128xf32>
    %cst_19 = arith.constant 1.000000e+00 : f32
    %33 = vector.broadcast %cst_19 : f32 to vector<8x128xf32>
    %34 = arith.addf %33, %32 : vector<8x128xf32>
    %35 = arith.divf %33, %34 : vector<8x128xf32>
    %36 = vector.extract_strided_slice %23 {offsets = [0, 128], sizes = [8, 128], strides = [1, 1]} : vector<8x384xf32> to vector<8x128xf32>
    %37 = vector.extract_strided_slice %27 {offsets = [0, 128], sizes = [8, 128], strides = [1, 1]} : vector<8x384xf32> to vector<8x128xf32>
    %38 = arith.addf %36, %37 : vector<8x128xf32>
    %39 = arith.negf %38 : vector<8x128xf32>
    %40 = math.exp %39 : vector<8x128xf32>
    %cst_20 = arith.constant 1.000000e+00 : f32
    %41 = vector.broadcast %cst_20 : f32 to vector<8x128xf32>
    %42 = arith.addf %41, %40 : vector<8x128xf32>
    %43 = arith.divf %41, %42 : vector<8x128xf32>
    %44 = vector.extract_strided_slice %23 {offsets = [0, 256], sizes = [8, 128], strides = [1, 1]} : vector<8x384xf32> to vector<8x128xf32>
    %45 = vector.extract_strided_slice %27 {offsets = [0, 256], sizes = [8, 128], strides = [1, 1]} : vector<8x384xf32> to vector<8x128xf32>
    %46 = arith.mulf %35, %45 : vector<8x128xf32>
    %47 = arith.addf %44, %46 : vector<8x128xf32>
    %48 = math.tanh %47 : vector<8x128xf32>
    %cst_21 = arith.constant 1.000000e+00 : f32
    %49 = vector.broadcast %cst_21 : f32 to vector<8x128xf32>
    %50 = arith.subf %49, %43 : vector<8x128xf32>
    %51 = arith.mulf %50, %48 : vector<8x128xf32>
    %52 = arith.mulf %43, %13 : vector<8x128xf32>
    %53 = arith.addf %51, %52 : vector<8x128xf32>
    %54 = arith.index_cast %16 : i32 to index
    %c0_22 = arith.constant 0 : index
    %c0_23 = arith.constant 0 : index
    %55 = vector.load %arg7[%54, %c0_22, %c0_23] : memref<8x8x128xf32, #tpu.memory_space<vmem>>, vector<1x8x128xf32>
    %56 = vector.shape_cast %55 : vector<1x8x128xf32> to vector<8x128xf32>
    %57 = vector.shape_cast %53 : vector<8x128xf32> to vector<1x8x128xf32>
    tpu.vector_store %arg7[%54, %c0_22, %c0_23], %57 {strides = array<i32>} : memref<8x8x128xf32, #tpu.memory_space<vmem>>, vector<1x8x128xf32>,
    %c1_i32 = arith.constant 1 : i32
    %c0_i32_24 = arith.constant 0 : i32
    %58 = arith.cmpi eq, %arg0, %c0_i32_24 : i32
    %c7_i32_25 = arith.constant 7 : i32
    %59 = arith.subi %c7_i32_25, %c1_i32 : i32
    %60 = arith.select %58, %c1_i32, %59 : i32
    %61 = arith.index_cast %60 : i32 to index
    %c0_26 = arith.constant 0 : index
    %c0_27 = arith.constant 0 : index
    %62 = vector.load %arg2[%61, %c0_26, %c0_27] : memref<8x8x256xf32, #tpu.memory_space<vmem>>, vector<1x8x256xf32>
    %63 = vector.shape_cast %62 : vector<1x8x256xf32> to vector<8x256xf32>
    %64 = arith.truncf %63 : vector<8x256xf32> to vector<8x256xbf16>
    %cst_28 = arith.constant dense<0.000000e+00> : vector<8x384xf32>
    %65 = tpu.matmul %64, %4, %cst_28 {dimension_numbers = #tpu.dot_dimension_numbers<[1], [0], [0], [1], [0, 0, 1, 1], [], []>} : vector<8x256xbf16>, vector<256x384xbf16>, vector<8x384xf32> -> vector<8x384xf32>
    %66 = vector.broadcast %8 : vector<1x384xf32> to vector<8x384xf32>
    %67 = arith.addf %65, %66 : vector<8x384xf32>
    %68 = arith.truncf %53 : vector<8x128xf32> to vector<8x128xbf16>
    %cst_29 = arith.constant dense<0.000000e+00> : vector<8x384xf32>
    %69 = tpu.matmul %68, %6, %cst_29 {dimension_numbers = #tpu.dot_dimension_numbers<[1], [0], [0], [1], [0, 0, 1, 1], [], []>} : vector<8x128xbf16>, vector<128x384xbf16>, vector<8x384xf32> -> vector<8x384xf32>
    %70 = vector.broadcast %10 : vector<1x384xf32> to vector<8x384xf32>
    %71 = arith.addf %69, %70 : vector<8x384xf32>
    %72 = vector.extract_strided_slice %67 {offsets = [0, 0], sizes = [8, 128], strides = [1, 1]} : vector<8x384xf32> to vector<8x128xf32>
    %73 = vector.extract_strided_slice %71 {offsets = [0, 0], sizes = [8, 128], strides = [1, 1]} : vector<8x384xf32> to vector<8x128xf32>
    %74 = arith.addf %72, %73 : vector<8x128xf32>
    %75 = arith.negf %74 : vector<8x128xf32>
    %76 = math.exp %75 : vector<8x128xf32>
    %cst_30 = arith.constant 1.000000e+00 : f32
    %77 = vector.broadcast %cst_30 : f32 to vector<8x128xf32>
    %78 = arith.addf %77, %76 : vector<8x128xf32>
    %79 = arith.divf %77, %78 : vector<8x128xf32>
    %80 = vector.extract_strided_slice %67 {offsets = [0, 128], sizes = [8, 128], strides = [1, 1]} : vector<8x384xf32> to vector<8x128xf32>
    %81 = vector.extract_strided_slice %71 {offsets = [0, 128], sizes = [8, 128], strides = [1, 1]} : vector<8x384xf32> to vector<8x128xf32>
    %82 = arith.addf %80, %81 : vector<8x128xf32>
    %83 = arith.negf %82 : vector<8x128xf32>
    %84 = math.exp %83 : vector<8x128xf32>
    %cst_31 = arith.constant 1.000000e+00 : f32
    %85 = vector.broadcast %cst_31 : f32 to vector<8x128xf32>
    %86 = arith.addf %85, %84 : vector<8x128xf32>
    %87 = arith.divf %85, %86 : vector<8x128xf32>
    %88 = vector.extract_strided_slice %67 {offsets = [0, 256], sizes = [8, 128], strides = [1, 1]} : vector<8x384xf32> to vector<8x128xf32>
    %89 = vector.extract_strided_slice %71 {offsets = [0, 256], sizes = [8, 128], strides = [1, 1]} : vector<8x384xf32> to vector<8x128xf32>
    %90 = arith.mulf %79, %89 : vector<8x128xf32>
    %91 = arith.addf %88, %90 : vector<8x128xf32>
    %92 = math.tanh %91 : vector<8x128xf32>
    %cst_32 = arith.constant 1.000000e+00 : f32
    %93 = vector.broadcast %cst_32 : f32 to vector<8x128xf32>
    %94 = arith.subf %93, %87 : vector<8x128xf32>
    %95 = arith.mulf %94, %92 : vector<8x128xf32>
    %96 = arith.mulf %87, %53 : vector<8x128xf32>
    %97 = arith.addf %95, %96 : vector<8x128xf32>
    %98 = arith.index_cast %60 : i32 to index
    %c0_33 = arith.constant 0 : index
    %c0_34 = arith.constant 0 : index
    %99 = vector.load %arg7[%98, %c0_33, %c0_34] : memref<8x8x128xf32, #tpu.memory_space<vmem>>, vector<1x8x128xf32>
    %100 = vector.shape_cast %99 : vector<1x8x128xf32> to vector<8x128xf32>
    %101 = vector.shape_cast %97 : vector<8x128xf32> to vector<1x8x128xf32>
    tpu.vector_store %arg7[%98, %c0_33, %c0_34], %101 {strides = array<i32>} : memref<8x8x128xf32, #tpu.memory_space<vmem>>, vector<1x8x128xf32>,
    %c2_i32 = arith.constant 2 : i32
    %c0_i32_35 = arith.constant 0 : i32
    %102 = arith.cmpi eq, %arg0, %c0_i32_35 : i32
    %c7_i32_36 = arith.constant 7 : i32
    %103 = arith.subi %c7_i32_36, %c2_i32 : i32
    %104 = arith.select %102, %c2_i32, %103 : i32
    %105 = arith.index_cast %104 : i32 to index
    %c0_37 = arith.constant 0 : index
    %c0_38 = arith.constant 0 : index
    %106 = vector.load %arg2[%105, %c0_37, %c0_38] : memref<8x8x256xf32, #tpu.memory_space<vmem>>, vector<1x8x256xf32>
    %107 = vector.shape_cast %106 : vector<1x8x256xf32> to vector<8x256xf32>
    %108 = arith.truncf %107 : vector<8x256xf32> to vector<8x256xbf16>
    %cst_39 = arith.constant dense<0.000000e+00> : vector<8x384xf32>
    %109 = tpu.matmul %108, %4, %cst_39 {dimension_numbers = #tpu.dot_dimension_numbers<[1], [0], [0], [1], [0, 0, 1, 1], [], []>} : vector<8x256xbf16>, vector<256x384xbf16>, vector<8x384xf32> -> vector<8x384xf32>
    %110 = vector.broadcast %8 : vector<1x384xf32> to vector<8x384xf32>
    %111 = arith.addf %109, %110 : vector<8x384xf32>
    %112 = arith.truncf %97 : vector<8x128xf32> to vector<8x128xbf16>
    %cst_40 = arith.constant dense<0.000000e+00> : vector<8x384xf32>
    %113 = tpu.matmul %112, %6, %cst_40 {dimension_numbers = #tpu.dot_dimension_numbers<[1], [0], [0], [1], [0, 0, 1, 1], [], []>} : vector<8x128xbf16>, vector<128x384xbf16>, vector<8x384xf32> -> vector<8x384xf32>
    %114 = vector.broadcast %10 : vector<1x384xf32> to vector<8x384xf32>
    %115 = arith.addf %113, %114 : vector<8x384xf32>
    %116 = vector.extract_strided_slice %111 {offsets = [0, 0], sizes = [8, 128], strides = [1, 1]} : vector<8x384xf32> to vector<8x128xf32>
    %117 = vector.extract_strided_slice %115 {offsets = [0, 0], sizes = [8, 128], strides = [1, 1]} : vector<8x384xf32> to vector<8x128xf32>
    %118 = arith.addf %116, %117 : vector<8x128xf32>
    %119 = arith.negf %118 : vector<8x128xf32>
    %120 = math.exp %119 : vector<8x128xf32>
    %cst_41 = arith.constant 1.000000e+00 : f32
    %121 = vector.broadcast %cst_41 : f32 to vector<8x128xf32>
    %122 = arith.addf %121, %120 : vector<8x128xf32>
    %123 = arith.divf %121, %122 : vector<8x128xf32>
    %124 = vector.extract_strided_slice %111 {offsets = [0, 128], sizes = [8, 128], strides = [1, 1]} : vector<8x384xf32> to vector<8x128xf32>
    %125 = vector.extract_strided_slice %115 {offsets = [0, 128], sizes = [8, 128], strides = [1, 1]} : vector<8x384xf32> to vector<8x128xf32>
    %126 = arith.addf %124, %125 : vector<8x128xf32>
    %127 = arith.negf %126 : vector<8x128xf32>
    %128 = math.exp %127 : vector<8x128xf32>
    %cst_42 = arith.constant 1.000000e+00 : f32
    %129 = vector.broadcast %cst_42 : f32 to vector<8x128xf32>
    %130 = arith.addf %129, %128 : vector<8x128xf32>
    %131 = arith.divf %129, %130 : vector<8x128xf32>
    %132 = vector.extract_strided_slice %111 {offsets = [0, 256], sizes = [8, 128], strides = [1, 1]} : vector<8x384xf32> to vector<8x128xf32>
    %133 = vector.extract_strided_slice %115 {offsets = [0, 256], sizes = [8, 128], strides = [1, 1]} : vector<8x384xf32> to vector<8x128xf32>
    %134 = arith.mulf %123, %133 : vector<8x128xf32>
    %135 = arith.addf %132, %134 : vector<8x128xf32>
    %136 = math.tanh %135 : vector<8x128xf32>
    %cst_43 = arith.constant 1.000000e+00 : f32
    %137 = vector.broadcast %cst_43 : f32 to vector<8x128xf32>
    %138 = arith.subf %137, %131 : vector<8x128xf32>
    %139 = arith.mulf %138, %136 : vector<8x128xf32>
    %140 = arith.mulf %131, %97 : vector<8x128xf32>
    %141 = arith.addf %139, %140 : vector<8x128xf32>
    %142 = arith.index_cast %104 : i32 to index
    %c0_44 = arith.constant 0 : index
    %c0_45 = arith.constant 0 : index
    %143 = vector.load %arg7[%142, %c0_44, %c0_45] : memref<8x8x128xf32, #tpu.memory_space<vmem>>, vector<1x8x128xf32>
    %144 = vector.shape_cast %143 : vector<1x8x128xf32> to vector<8x128xf32>
    %145 = vector.shape_cast %141 : vector<8x128xf32> to vector<1x8x128xf32>
    tpu.vector_store %arg7[%142, %c0_44, %c0_45], %145 {strides = array<i32>} : memref<8x8x128xf32, #tpu.memory_space<vmem>>, vector<1x8x128xf32>,
    %c3_i32 = arith.constant 3 : i32
    %c0_i32_46 = arith.constant 0 : i32
    %146 = arith.cmpi eq, %arg0, %c0_i32_46 : i32
    %c7_i32_47 = arith.constant 7 : i32
    %147 = arith.subi %c7_i32_47, %c3_i32 : i32
    %148 = arith.select %146, %c3_i32, %147 : i32
    %149 = arith.index_cast %148 : i32 to index
    %c0_48 = arith.constant 0 : index
    %c0_49 = arith.constant 0 : index
    %150 = vector.load %arg2[%149, %c0_48, %c0_49] : memref<8x8x256xf32, #tpu.memory_space<vmem>>, vector<1x8x256xf32>
    %151 = vector.shape_cast %150 : vector<1x8x256xf32> to vector<8x256xf32>
    %152 = arith.truncf %151 : vector<8x256xf32> to vector<8x256xbf16>
    %cst_50 = arith.constant dense<0.000000e+00> : vector<8x384xf32>
    %153 = tpu.matmul %152, %4, %cst_50 {dimension_numbers = #tpu.dot_dimension_numbers<[1], [0], [0], [1], [0, 0, 1, 1], [], []>} : vector<8x256xbf16>, vector<256x384xbf16>, vector<8x384xf32> -> vector<8x384xf32>
    %154 = vector.broadcast %8 : vector<1x384xf32> to vector<8x384xf32>
    %155 = arith.addf %153, %154 : vector<8x384xf32>
    %156 = arith.truncf %141 : vector<8x128xf32> to vector<8x128xbf16>
    %cst_51 = arith.constant dense<0.000000e+00> : vector<8x384xf32>
    %157 = tpu.matmul %156, %6, %cst_51 {dimension_numbers = #tpu.dot_dimension_numbers<[1], [0], [0], [1], [0, 0, 1, 1], [], []>} : vector<8x128xbf16>, vector<128x384xbf16>, vector<8x384xf32> -> vector<8x384xf32>
    %158 = vector.broadcast %10 : vector<1x384xf32> to vector<8x384xf32>
    %159 = arith.addf %157, %158 : vector<8x384xf32>
    %160 = vector.extract_strided_slice %155 {offsets = [0, 0], sizes = [8, 128], strides = [1, 1]} : vector<8x384xf32> to vector<8x128xf32>
    %161 = vector.extract_strided_slice %159 {offsets = [0, 0], sizes = [8, 128], strides = [1, 1]} : vector<8x384xf32> to vector<8x128xf32>
    %162 = arith.addf %160, %161 : vector<8x128xf32>
    %163 = arith.negf %162 : vector<8x128xf32>
    %164 = math.exp %163 : vector<8x128xf32>
    %cst_52 = arith.constant 1.000000e+00 : f32
    %165 = vector.broadcast %cst_52 : f32 to vector<8x128xf32>
    %166 = arith.addf %165, %164 : vector<8x128xf32>
    %167 = arith.divf %165, %166 : vector<8x128xf32>
    %168 = vector.extract_strided_slice %155 {offsets = [0, 128], sizes = [8, 128], strides = [1, 1]} : vector<8x384xf32> to vector<8x128xf32>
    %169 = vector.extract_strided_slice %159 {offsets = [0, 128], sizes = [8, 128], strides = [1, 1]} : vector<8x384xf32> to vector<8x128xf32>
    %170 = arith.addf %168, %169 : vector<8x128xf32>
    %171 = arith.negf %170 : vector<8x128xf32>
    %172 = math.exp %171 : vector<8x128xf32>
    %cst_53 = arith.constant 1.000000e+00 : f32
    %173 = vector.broadcast %cst_53 : f32 to vector<8x128xf32>
    %174 = arith.addf %173, %172 : vector<8x128xf32>
    %175 = arith.divf %173, %174 : vector<8x128xf32>
    %176 = vector.extract_strided_slice %155 {offsets = [0, 256], sizes = [8, 128], strides = [1, 1]} : vector<8x384xf32> to vector<8x128xf32>
    %177 = vector.extract_strided_slice %159 {offsets = [0, 256], sizes = [8, 128], strides = [1, 1]} : vector<8x384xf32> to vector<8x128xf32>
    %178 = arith.mulf %167, %177 : vector<8x128xf32>
    %179 = arith.addf %176, %178 : vector<8x128xf32>
    %180 = math.tanh %179 : vector<8x128xf32>
    %cst_54 = arith.constant 1.000000e+00 : f32
    %181 = vector.broadcast %cst_54 : f32 to vector<8x128xf32>
    %182 = arith.subf %181, %175 : vector<8x128xf32>
    %183 = arith.mulf %182, %180 : vector<8x128xf32>
    %184 = arith.mulf %175, %141 : vector<8x128xf32>
    %185 = arith.addf %183, %184 : vector<8x128xf32>
    %186 = arith.index_cast %148 : i32 to index
    %c0_55 = arith.constant 0 : index
    %c0_56 = arith.constant 0 : index
    %187 = vector.load %arg7[%186, %c0_55, %c0_56] : memref<8x8x128xf32, #tpu.memory_space<vmem>>, vector<1x8x128xf32>
    %188 = vector.shape_cast %187 : vector<1x8x128xf32> to vector<8x128xf32>
    %189 = vector.shape_cast %185 : vector<8x128xf32> to vector<1x8x128xf32>
    tpu.vector_store %arg7[%186, %c0_55, %c0_56], %189 {strides = array<i32>} : memref<8x8x128xf32, #tpu.memory_space<vmem>>, vector<1x8x128xf32>,
    %c4_i32 = arith.constant 4 : i32
    %c0_i32_57 = arith.constant 0 : i32
    %190 = arith.cmpi eq, %arg0, %c0_i32_57 : i32
    %c7_i32_58 = arith.constant 7 : i32
    %191 = arith.subi %c7_i32_58, %c4_i32 : i32
    %192 = arith.select %190, %c4_i32, %191 : i32
    %193 = arith.index_cast %192 : i32 to index
    %c0_59 = arith.constant 0 : index
    %c0_60 = arith.constant 0 : index
    %194 = vector.load %arg2[%193, %c0_59, %c0_60] : memref<8x8x256xf32, #tpu.memory_space<vmem>>, vector<1x8x256xf32>
    %195 = vector.shape_cast %194 : vector<1x8x256xf32> to vector<8x256xf32>
    %196 = arith.truncf %195 : vector<8x256xf32> to vector<8x256xbf16>
    %cst_61 = arith.constant dense<0.000000e+00> : vector<8x384xf32>
    %197 = tpu.matmul %196, %4, %cst_61 {dimension_numbers = #tpu.dot_dimension_numbers<[1], [0], [0], [1], [0, 0, 1, 1], [], []>} : vector<8x256xbf16>, vector<256x384xbf16>, vector<8x384xf32> -> vector<8x384xf32>
    %198 = vector.broadcast %8 : vector<1x384xf32> to vector<8x384xf32>
    %199 = arith.addf %197, %198 : vector<8x384xf32>
    %200 = arith.truncf %185 : vector<8x128xf32> to vector<8x128xbf16>
    %cst_62 = arith.constant dense<0.000000e+00> : vector<8x384xf32>
    %201 = tpu.matmul %200, %6, %cst_62 {dimension_numbers = #tpu.dot_dimension_numbers<[1], [0], [0], [1], [0, 0, 1, 1], [], []>} : vector<8x128xbf16>, vector<128x384xbf16>, vector<8x384xf32> -> vector<8x384xf32>
    %202 = vector.broadcast %10 : vector<1x384xf32> to vector<8x384xf32>
    %203 = arith.addf %201, %202 : vector<8x384xf32>
    %204 = vector.extract_strided_slice %199 {offsets = [0, 0], sizes = [8, 128], strides = [1, 1]} : vector<8x384xf32> to vector<8x128xf32>
    %205 = vector.extract_strided_slice %203 {offsets = [0, 0], sizes = [8, 128], strides = [1, 1]} : vector<8x384xf32> to vector<8x128xf32>
    %206 = arith.addf %204, %205 : vector<8x128xf32>
    %207 = arith.negf %206 : vector<8x128xf32>
    %208 = math.exp %207 : vector<8x128xf32>
    %cst_63 = arith.constant 1.000000e+00 : f32
    %209 = vector.broadcast %cst_63 : f32 to vector<8x128xf32>
    %210 = arith.addf %209, %208 : vector<8x128xf32>
    %211 = arith.divf %209, %210 : vector<8x128xf32>
    %212 = vector.extract_strided_slice %199 {offsets = [0, 128], sizes = [8, 128], strides = [1, 1]} : vector<8x384xf32> to vector<8x128xf32>
    %213 = vector.extract_strided_slice %203 {offsets = [0, 128], sizes = [8, 128], strides = [1, 1]} : vector<8x384xf32> to vector<8x128xf32>
    %214 = arith.addf %212, %213 : vector<8x128xf32>
    %215 = arith.negf %214 : vector<8x128xf32>
    %216 = math.exp %215 : vector<8x128xf32>
    %cst_64 = arith.constant 1.000000e+00 : f32
    %217 = vector.broadcast %cst_64 : f32 to vector<8x128xf32>
    %218 = arith.addf %217, %216 : vector<8x128xf32>
    %219 = arith.divf %217, %218 : vector<8x128xf32>
    %220 = vector.extract_strided_slice %199 {offsets = [0, 256], sizes = [8, 128], strides = [1, 1]} : vector<8x384xf32> to vector<8x128xf32>
    %221 = vector.extract_strided_slice %203 {offsets = [0, 256], sizes = [8, 128], strides = [1, 1]} : vector<8x384xf32> to vector<8x128xf32>
    %222 = arith.mulf %211, %221 : vector<8x128xf32>
    %223 = arith.addf %220, %222 : vector<8x128xf32>
    %224 = math.tanh %223 : vector<8x128xf32>
    %cst_65 = arith.constant 1.000000e+00 : f32
    %225 = vector.broadcast %cst_65 : f32 to vector<8x128xf32>
    %226 = arith.subf %225, %219 : vector<8x128xf32>
    %227 = arith.mulf %226, %224 : vector<8x128xf32>
    %228 = arith.mulf %219, %185 : vector<8x128xf32>
    %229 = arith.addf %227, %228 : vector<8x128xf32>
    %230 = arith.index_cast %192 : i32 to index
    %c0_66 = arith.constant 0 : index
    %c0_67 = arith.constant 0 : index
    %231 = vector.load %arg7[%230, %c0_66, %c0_67] : memref<8x8x128xf32, #tpu.memory_space<vmem>>, vector<1x8x128xf32>
    %232 = vector.shape_cast %231 : vector<1x8x128xf32> to vector<8x128xf32>
    %233 = vector.shape_cast %229 : vector<8x128xf32> to vector<1x8x128xf32>
    tpu.vector_store %arg7[%230, %c0_66, %c0_67], %233 {strides = array<i32>} : memref<8x8x128xf32, #tpu.memory_space<vmem>>, vector<1x8x128xf32>,
    %c5_i32 = arith.constant 5 : i32
    %c0_i32_68 = arith.constant 0 : i32
    %234 = arith.cmpi eq, %arg0, %c0_i32_68 : i32
    %c7_i32_69 = arith.constant 7 : i32
    %235 = arith.subi %c7_i32_69, %c5_i32 : i32
    %236 = arith.select %234, %c5_i32, %235 : i32
    %237 = arith.index_cast %236 : i32 to index
    %c0_70 = arith.constant 0 : index
    %c0_71 = arith.constant 0 : index
    %238 = vector.load %arg2[%237, %c0_70, %c0_71] : memref<8x8x256xf32, #tpu.memory_space<vmem>>, vector<1x8x256xf32>
    %239 = vector.shape_cast %238 : vector<1x8x256xf32> to vector<8x256xf32>
    %240 = arith.truncf %239 : vector<8x256xf32> to vector<8x256xbf16>
    %cst_72 = arith.constant dense<0.000000e+00> : vector<8x384xf32>
    %241 = tpu.matmul %240, %4, %cst_72 {dimension_numbers = #tpu.dot_dimension_numbers<[1], [0], [0], [1], [0, 0, 1, 1], [], []>} : vector<8x256xbf16>, vector<256x384xbf16>, vector<8x384xf32> -> vector<8x384xf32>
    %242 = vector.broadcast %8 : vector<1x384xf32> to vector<8x384xf32>
    %243 = arith.addf %241, %242 : vector<8x384xf32>
    %244 = arith.truncf %229 : vector<8x128xf32> to vector<8x128xbf16>
    %cst_73 = arith.constant dense<0.000000e+00> : vector<8x384xf32>
    %245 = tpu.matmul %244, %6, %cst_73 {dimension_numbers = #tpu.dot_dimension_numbers<[1], [0], [0], [1], [0, 0, 1, 1], [], []>} : vector<8x128xbf16>, vector<128x384xbf16>, vector<8x384xf32> -> vector<8x384xf32>
    %246 = vector.broadcast %10 : vector<1x384xf32> to vector<8x384xf32>
    %247 = arith.addf %245, %246 : vector<8x384xf32>
    %248 = vector.extract_strided_slice %243 {offsets = [0, 0], sizes = [8, 128], strides = [1, 1]} : vector<8x384xf32> to vector<8x128xf32>
    %249 = vector.extract_strided_slice %247 {offsets = [0, 0], sizes = [8, 128], strides = [1, 1]} : vector<8x384xf32> to vector<8x128xf32>
    %250 = arith.addf %248, %249 : vector<8x128xf32>
    %251 = arith.negf %250 : vector<8x128xf32>
    %252 = math.exp %251 : vector<8x128xf32>
    %cst_74 = arith.constant 1.000000e+00 : f32
    %253 = vector.broadcast %cst_74 : f32 to vector<8x128xf32>
    %254 = arith.addf %253, %252 : vector<8x128xf32>
    %255 = arith.divf %253, %254 : vector<8x128xf32>
    %256 = vector.extract_strided_slice %243 {offsets = [0, 128], sizes = [8, 128], strides = [1, 1]} : vector<8x384xf32> to vector<8x128xf32>
    %257 = vector.extract_strided_slice %247 {offsets = [0, 128], sizes = [8, 128], strides = [1, 1]} : vector<8x384xf32> to vector<8x128xf32>
    %258 = arith.addf %256, %257 : vector<8x128xf32>
    %259 = arith.negf %258 : vector<8x128xf32>
    %260 = math.exp %259 : vector<8x128xf32>
    %cst_75 = arith.constant 1.000000e+00 : f32
    %261 = vector.broadcast %cst_75 : f32 to vector<8x128xf32>
    %262 = arith.addf %261, %260 : vector<8x128xf32>
    %263 = arith.divf %261, %262 : vector<8x128xf32>
    %264 = vector.extract_strided_slice %243 {offsets = [0, 256], sizes = [8, 128], strides = [1, 1]} : vector<8x384xf32> to vector<8x128xf32>
    %265 = vector.extract_strided_slice %247 {offsets = [0, 256], sizes = [8, 128], strides = [1, 1]} : vector<8x384xf32> to vector<8x128xf32>
    %266 = arith.mulf %255, %265 : vector<8x128xf32>
    %267 = arith.addf %264, %266 : vector<8x128xf32>
    %268 = math.tanh %267 : vector<8x128xf32>
    %cst_76 = arith.constant 1.000000e+00 : f32
    %269 = vector.broadcast %cst_76 : f32 to vector<8x128xf32>
    %270 = arith.subf %269, %263 : vector<8x128xf32>
    %271 = arith.mulf %270, %268 : vector<8x128xf32>
    %272 = arith.mulf %263, %229 : vector<8x128xf32>
    %273 = arith.addf %271, %272 : vector<8x128xf32>
    %274 = arith.index_cast %236 : i32 to index
    %c0_77 = arith.constant 0 : index
    %c0_78 = arith.constant 0 : index
    %275 = vector.load %arg7[%274, %c0_77, %c0_78] : memref<8x8x128xf32, #tpu.memory_space<vmem>>, vector<1x8x128xf32>
    %276 = vector.shape_cast %275 : vector<1x8x128xf32> to vector<8x128xf32>
    %277 = vector.shape_cast %273 : vector<8x128xf32> to vector<1x8x128xf32>
    tpu.vector_store %arg7[%274, %c0_77, %c0_78], %277 {strides = array<i32>} : memref<8x8x128xf32, #tpu.memory_space<vmem>>, vector<1x8x128xf32>,
    %c6_i32 = arith.constant 6 : i32
    %c0_i32_79 = arith.constant 0 : i32
    %278 = arith.cmpi eq, %arg0, %c0_i32_79 : i32
    %c7_i32_80 = arith.constant 7 : i32
    %279 = arith.subi %c7_i32_80, %c6_i32 : i32
    %280 = arith.select %278, %c6_i32, %279 : i32
    %281 = arith.index_cast %280 : i32 to index
    %c0_81 = arith.constant 0 : index
    %c0_82 = arith.constant 0 : index
    %282 = vector.load %arg2[%281, %c0_81, %c0_82] : memref<8x8x256xf32, #tpu.memory_space<vmem>>, vector<1x8x256xf32>
    %283 = vector.shape_cast %282 : vector<1x8x256xf32> to vector<8x256xf32>
    %284 = arith.truncf %283 : vector<8x256xf32> to vector<8x256xbf16>
    %cst_83 = arith.constant dense<0.000000e+00> : vector<8x384xf32>
    %285 = tpu.matmul %284, %4, %cst_83 {dimension_numbers = #tpu.dot_dimension_numbers<[1], [0], [0], [1], [0, 0, 1, 1], [], []>} : vector<8x256xbf16>, vector<256x384xbf16>, vector<8x384xf32> -> vector<8x384xf32>
    %286 = vector.broadcast %8 : vector<1x384xf32> to vector<8x384xf32>
    %287 = arith.addf %285, %286 : vector<8x384xf32>
    %288 = arith.truncf %273 : vector<8x128xf32> to vector<8x128xbf16>
    %cst_84 = arith.constant dense<0.000000e+00> : vector<8x384xf32>
    %289 = tpu.matmul %288, %6, %cst_84 {dimension_numbers = #tpu.dot_dimension_numbers<[1], [0], [0], [1], [0, 0, 1, 1], [], []>} : vector<8x128xbf16>, vector<128x384xbf16>, vector<8x384xf32> -> vector<8x384xf32>
    %290 = vector.broadcast %10 : vector<1x384xf32> to vector<8x384xf32>
    %291 = arith.addf %289, %290 : vector<8x384xf32>
    %292 = vector.extract_strided_slice %287 {offsets = [0, 0], sizes = [8, 128], strides = [1, 1]} : vector<8x384xf32> to vector<8x128xf32>
    %293 = vector.extract_strided_slice %291 {offsets = [0, 0], sizes = [8, 128], strides = [1, 1]} : vector<8x384xf32> to vector<8x128xf32>
    %294 = arith.addf %292, %293 : vector<8x128xf32>
    %295 = arith.negf %294 : vector<8x128xf32>
    %296 = math.exp %295 : vector<8x128xf32>
    %cst_85 = arith.constant 1.000000e+00 : f32
    %297 = vector.broadcast %cst_85 : f32 to vector<8x128xf32>
    %298 = arith.addf %297, %296 : vector<8x128xf32>
    %299 = arith.divf %297, %298 : vector<8x128xf32>
    %300 = vector.extract_strided_slice %287 {offsets = [0, 128], sizes = [8, 128], strides = [1, 1]} : vector<8x384xf32> to vector<8x128xf32>
    %301 = vector.extract_strided_slice %291 {offsets = [0, 128], sizes = [8, 128], strides = [1, 1]} : vector<8x384xf32> to vector<8x128xf32>
    %302 = arith.addf %300, %301 : vector<8x128xf32>
    %303 = arith.negf %302 : vector<8x128xf32>
    %304 = math.exp %303 : vector<8x128xf32>
    %cst_86 = arith.constant 1.000000e+00 : f32
    %305 = vector.broadcast %cst_86 : f32 to vector<8x128xf32>
    %306 = arith.addf %305, %304 : vector<8x128xf32>
    %307 = arith.divf %305, %306 : vector<8x128xf32>
    %308 = vector.extract_strided_slice %287 {offsets = [0, 256], sizes = [8, 128], strides = [1, 1]} : vector<8x384xf32> to vector<8x128xf32>
    %309 = vector.extract_strided_slice %291 {offsets = [0, 256], sizes = [8, 128], strides = [1, 1]} : vector<8x384xf32> to vector<8x128xf32>
    %310 = arith.mulf %299, %309 : vector<8x128xf32>
    %311 = arith.addf %308, %310 : vector<8x128xf32>
    %312 = math.tanh %311 : vector<8x128xf32>
    %cst_87 = arith.constant 1.000000e+00 : f32
    %313 = vector.broadcast %cst_87 : f32 to vector<8x128xf32>
    %314 = arith.subf %313, %307 : vector<8x128xf32>
    %315 = arith.mulf %314, %312 : vector<8x128xf32>
    %316 = arith.mulf %307, %273 : vector<8x128xf32>
    %317 = arith.addf %315, %316 : vector<8x128xf32>
    %318 = arith.index_cast %280 : i32 to index
    %c0_88 = arith.constant 0 : index
    %c0_89 = arith.constant 0 : index
    %319 = vector.load %arg7[%318, %c0_88, %c0_89] : memref<8x8x128xf32, #tpu.memory_space<vmem>>, vector<1x8x128xf32>
    %320 = vector.shape_cast %319 : vector<1x8x128xf32> to vector<8x128xf32>
    %321 = vector.shape_cast %317 : vector<8x128xf32> to vector<1x8x128xf32>
    tpu.vector_store %arg7[%318, %c0_88, %c0_89], %321 {strides = array<i32>} : memref<8x8x128xf32, #tpu.memory_space<vmem>>, vector<1x8x128xf32>,
    %c7_i32_90 = arith.constant 7 : i32
    %c0_i32_91 = arith.constant 0 : i32
    %322 = arith.cmpi eq, %arg0, %c0_i32_91 : i32
    %c7_i32_92 = arith.constant 7 : i32
    %323 = arith.subi %c7_i32_92, %c7_i32_90 : i32
    %324 = arith.select %322, %c7_i32_90, %323 : i32
    %325 = arith.index_cast %324 : i32 to index
    %c0_93 = arith.constant 0 : index
    %c0_94 = arith.constant 0 : index
    %326 = vector.load %arg2[%325, %c0_93, %c0_94] : memref<8x8x256xf32, #tpu.memory_space<vmem>>, vector<1x8x256xf32>
    %327 = vector.shape_cast %326 : vector<1x8x256xf32> to vector<8x256xf32>
    %328 = arith.truncf %327 : vector<8x256xf32> to vector<8x256xbf16>
    %cst_95 = arith.constant dense<0.000000e+00> : vector<8x384xf32>
    %329 = tpu.matmul %328, %4, %cst_95 {dimension_numbers = #tpu.dot_dimension_numbers<[1], [0], [0], [1], [0, 0, 1, 1], [], []>} : vector<8x256xbf16>, vector<256x384xbf16>, vector<8x384xf32> -> vector<8x384xf32>
    %330 = vector.broadcast %8 : vector<1x384xf32> to vector<8x384xf32>
    %331 = arith.addf %329, %330 : vector<8x384xf32>
    %332 = arith.truncf %317 : vector<8x128xf32> to vector<8x128xbf16>
    %cst_96 = arith.constant dense<0.000000e+00> : vector<8x384xf32>
    %333 = tpu.matmul %332, %6, %cst_96 {dimension_numbers = #tpu.dot_dimension_numbers<[1], [0], [0], [1], [0, 0, 1, 1], [], []>} : vector<8x128xbf16>, vector<128x384xbf16>, vector<8x384xf32> -> vector<8x384xf32>
    %334 = vector.broadcast %10 : vector<1x384xf32> to vector<8x384xf32>
    %335 = arith.addf %333, %334 : vector<8x384xf32>
    %336 = vector.extract_strided_slice %331 {offsets = [0, 0], sizes = [8, 128], strides = [1, 1]} : vector<8x384xf32> to vector<8x128xf32>
    %337 = vector.extract_strided_slice %335 {offsets = [0, 0], sizes = [8, 128], strides = [1, 1]} : vector<8x384xf32> to vector<8x128xf32>
    %338 = arith.addf %336, %337 : vector<8x128xf32>
    %339 = arith.negf %338 : vector<8x128xf32>
    %340 = math.exp %339 : vector<8x128xf32>
    %cst_97 = arith.constant 1.000000e+00 : f32
    %341 = vector.broadcast %cst_97 : f32 to vector<8x128xf32>
    %342 = arith.addf %341, %340 : vector<8x128xf32>
    %343 = arith.divf %341, %342 : vector<8x128xf32>
    %344 = vector.extract_strided_slice %331 {offsets = [0, 128], sizes = [8, 128], strides = [1, 1]} : vector<8x384xf32> to vector<8x128xf32>
    %345 = vector.extract_strided_slice %335 {offsets = [0, 128], sizes = [8, 128], strides = [1, 1]} : vector<8x384xf32> to vector<8x128xf32>
    %346 = arith.addf %344, %345 : vector<8x128xf32>
    %347 = arith.negf %346 : vector<8x128xf32>
    %348 = math.exp %347 : vector<8x128xf32>
    %cst_98 = arith.constant 1.000000e+00 : f32
    %349 = vector.broadcast %cst_98 : f32 to vector<8x128xf32>
    %350 = arith.addf %349, %348 : vector<8x128xf32>
    %351 = arith.divf %349, %350 : vector<8x128xf32>
    %352 = vector.extract_strided_slice %331 {offsets = [0, 256], sizes = [8, 128], strides = [1, 1]} : vector<8x384xf32> to vector<8x128xf32>
    %353 = vector.extract_strided_slice %335 {offsets = [0, 256], sizes = [8, 128], strides = [1, 1]} : vector<8x384xf32> to vector<8x128xf32>
    %354 = arith.mulf %343, %353 : vector<8x128xf32>
    %355 = arith.addf %352, %354 : vector<8x128xf32>
    %356 = math.tanh %355 : vector<8x128xf32>
    %cst_99 = arith.constant 1.000000e+00 : f32
    %357 = vector.broadcast %cst_99 : f32 to vector<8x128xf32>
    %358 = arith.subf %357, %351 : vector<8x128xf32>
    %359 = arith.mulf %358, %356 : vector<8x128xf32>
    %360 = arith.mulf %351, %317 : vector<8x128xf32>
    %361 = arith.addf %359, %360 : vector<8x128xf32>
    %362 = arith.index_cast %324 : i32 to index
    %c0_100 = arith.constant 0 : index
    %c0_101 = arith.constant 0 : index
    %363 = vector.load %arg7[%362, %c0_100, %c0_101] : memref<8x8x128xf32, #tpu.memory_space<vmem>>, vector<1x8x128xf32>
    %364 = vector.shape_cast %363 : vector<1x8x128xf32> to vector<8x128xf32>
    %365 = vector.shape_cast %361 : vector<8x128xf32> to vector<1x8x128xf32>
    tpu.vector_store %arg7[%362, %c0_100, %c0_101], %365 {strides = array<i32>} : memref<8x8x128xf32, #tpu.memory_space<vmem>>, vector<1x8x128xf32>,
    %c8_i32 = arith.constant 8 : i32
    %366 = arith.index_cast %arg0 : i32 to index
    %c0_102 = arith.constant 0 : index
    %c0_103 = arith.constant 0 : index
    %367 = vector.load %arg9[%366, %c0_102, %c0_103] : memref<2x8x128xf32, #tpu.memory_space<vmem>>, vector<1x8x128xf32>
    %368 = vector.shape_cast %367 : vector<1x8x128xf32> to vector<8x128xf32>
    %369 = vector.shape_cast %361 : vector<8x128xf32> to vector<1x8x128xf32>
    tpu.vector_store %arg9[%366, %c0_102, %c0_103], %369 {strides = array<i32>} : memref<2x8x128xf32, #tpu.memory_space<vmem>>, vector<1x8x128xf32>,
    %c0_i32_104 = arith.constant 0 : i32
    %370 = arith.cmpi eq, %arg1, %c0_i32_104 : i32
    %371 = arith.extui %370 : i1 to i32
    %c0_i32_105 = arith.constant 0 : i32
    %372 = arith.cmpi ne, %371, %c0_i32_105 : i32
    scf.if %372 {
      %c0_106 = arith.constant 0 : index
      %c0_107 = arith.constant 0 : index
      %c0_108 = arith.constant 0 : index
      %373 = vector.load %arg8[%c0_106, %c0_107, %c0_108] : memref<1x8x128xf32, #tpu.memory_space<vmem>>, vector<1x8x128xf32>
      %374 = vector.shape_cast %373 : vector<1x8x128xf32> to vector<8x128xf32>
      %375 = vector.shape_cast %361 : vector<8x128xf32> to vector<1x8x128xf32>
      tpu.vector_store %arg8[%c0_106, %c0_107, %c0_108], %375 {strides = array<i32>} : memref<1x8x128xf32, #tpu.memory_space<vmem>>, vector<1x8x128xf32>,
    } else {
    }
    return
  }
  func.func @transform_0(%arg0: i32, %arg1: i32) -> (i32, i32, i32) {
    %c1_i32 = arith.constant 1 : i32
    %0 = arith.subi %c1_i32, %arg0 : i32
    %1 = arith.muli %0, %arg1 : i32
    %c0_i32 = arith.constant 0 : i32
    %2 = arith.subi %c0_i32, %arg1 : i32
    %3 = arith.muli %arg0, %2 : i32
    %4 = arith.addi %1, %3 : i32
    %c0_i32_0 = arith.constant 0 : i32
    %c0_i32_1 = arith.constant 0 : i32
    %c0_i32_2 = arith.constant 0 : i32
    return %4, %c0_i32_0, %c0_i32_1 : i32, i32, i32
  }
  func.func @transform_1(%arg0: i32, %arg1: i32) -> (i32, i32, i32) {
    %c0_i32 = arith.constant 0 : i32
    %c0_i32_0 = arith.constant 0 : i32
    %c0_i32_1 = arith.constant 0 : i32
    return %arg0, %c0_i32, %c0_i32_0 : i32, i32, i32
  }
  func.func @transform_2(%arg0: i32, %arg1: i32) -> (i32, i32, i32) {
    %c0_i32 = arith.constant 0 : i32
    %c0_i32_0 = arith.constant 0 : i32
    %c0_i32_1 = arith.constant 0 : i32
    return %arg0, %c0_i32, %c0_i32_0 : i32, i32, i32
  }
  func.func @transform_3(%arg0: i32, %arg1: i32) -> (i32, i32, i32) {
    %c0_i32 = arith.constant 0 : i32
    %c0_i32_0 = arith.constant 0 : i32
    %c0_i32_1 = arith.constant 0 : i32
    return %arg0, %c0_i32, %c0_i32_0 : i32, i32, i32
  }
  func.func @transform_4(%arg0: i32, %arg1: i32) -> (i32, i32, i32) {
    %c0_i32 = arith.constant 0 : i32
    %c0_i32_0 = arith.constant 0 : i32
    %c0_i32_1 = arith.constant 0 : i32
    return %arg0, %c0_i32, %c0_i32_0 : i32, i32, i32
  }
  func.func @transform_5(%arg0: i32, %arg1: i32) -> (i32, i32, i32) {
    %c1_i32 = arith.constant 1 : i32
    %0 = arith.subi %c1_i32, %arg0 : i32
    %1 = arith.muli %0, %arg1 : i32
    %c0_i32 = arith.constant 0 : i32
    %2 = arith.subi %c0_i32, %arg1 : i32
    %3 = arith.muli %arg0, %2 : i32
    %4 = arith.addi %1, %3 : i32
    %c0_i32_0 = arith.constant 0 : i32
    %c0_i32_1 = arith.constant 0 : i32
    return %4, %c0_i32_0, %arg0 : i32, i32, i32
  }
  func.func @transform_6(%arg0: i32, %arg1: i32) -> (i32, i32, i32) {
    %c0_i32 = arith.constant 0 : i32
    %c0_i32_0 = arith.constant 0 : i32
    %c0_i32_1 = arith.constant 0 : i32
    return %arg0, %c0_i32, %c0_i32_0 : i32, i32, i32
  }
}

module attributes {stable_mosaic.version = 11 : i64} {
  func.func @_bigru_layer_kernel(%arg0: i32, %arg1: i32, %arg2: memref<8x8x128xf32, #tpu.memory_space<vmem>>, %arg3: memref<1x128x384xbf16, #tpu.memory_space<vmem>>, %arg4: memref<1x128x384xbf16, #tpu.memory_space<vmem>>, %arg5: memref<1x1x384xf32, #tpu.memory_space<vmem>>, %arg6: memref<1x1x384xf32, #tpu.memory_space<vmem>>, %arg7: memref<8x8x128xf32, #tpu.memory_space<vmem>>, %arg8: memref<1x8x128xf32, #tpu.memory_space<vmem>>, %arg9: memref<2x8x128xf32, #tpu.memory_space<vmem>>) attributes {dimension_semantics = [#tpu.dimension_semantics<parallel>, #tpu.dimension_semantics<arbitrary>], iteration_bounds = array<i64: 2, 1>, scalar_prefetch = 0 : i64, scratch_operands = 1 : i64, tpu.core_type = #tpu.core_type<tc>, window_params = [{transform_indices = @transform_0, window_bounds = array<i64: 8, 8, 128>}, {transform_indices = @transform_1, window_bounds = array<i64: 1, 128, 384>}, {transform_indices = @transform_2, window_bounds = array<i64: 1, 128, 384>}, {transform_indices = @transform_3, window_bounds = array<i64: 1, 1, 384>}, {transform_indices = @transform_4, window_bounds = array<i64: 1, 1, 384>}, {transform_indices = @transform_5, window_bounds = array<i64: 8, 8, 128>}, {transform_indices = @transform_6, window_bounds = array<i64: 1, 8, 128>}]} {
    %c0_i32 = arith.constant 0 : i32
    %0 = arith.cmpi eq, %arg1, %c0_i32 : i32
    %1 = arith.extui %0 : i1 to i32
    %c0_i32_0 = arith.constant 0 : i32
    %2 = arith.cmpi ne, %1, %c0_i32_0 : i32
    scf.if %2 {
      %cst_106 = arith.constant 0.000000e+00 : f32
      %373 = vector.broadcast %cst_106 : f32 to vector<8x128xf32>
      %374 = arith.index_cast %arg0 : i32 to index
      %c0_107 = arith.constant 0 : index
      %c0_108 = arith.constant 0 : index
      %375 = vector.load %arg9[%374, %c0_107, %c0_108] : memref<2x8x128xf32, #tpu.memory_space<vmem>>, vector<1x8x128xf32>
      %376 = vector.shape_cast %375 : vector<1x8x128xf32> to vector<8x128xf32>
      %377 = vector.shape_cast %373 : vector<8x128xf32> to vector<1x8x128xf32>
      tpu.vector_store %arg9[%374, %c0_107, %c0_108], %377 {strides = array<i32>} : memref<2x8x128xf32, #tpu.memory_space<vmem>>, vector<1x8x128xf32>,
    } else {
    }
    %c0 = arith.constant 0 : index
    %c0_1 = arith.constant 0 : index
    %c0_2 = arith.constant 0 : index
    %3 = vector.load %arg3[%c0, %c0_1, %c0_2] : memref<1x128x384xbf16, #tpu.memory_space<vmem>>, vector<1x128x384xbf16>
    %4 = vector.shape_cast %3 : vector<1x128x384xbf16> to vector<128x384xbf16>
    %c0_3 = arith.constant 0 : index
    %c0_4 = arith.constant 0 : index
    %c0_5 = arith.constant 0 : index
    %5 = vector.load %arg4[%c0_3, %c0_4, %c0_5] : memref<1x128x384xbf16, #tpu.memory_space<vmem>>, vector<1x128x384xbf16>
    %6 = vector.shape_cast %5 : vector<1x128x384xbf16> to vector<128x384xbf16>
    %c0_6 = arith.constant 0 : index
    %c0_7 = arith.constant 0 : index
    %c0_8 = arith.constant 0 : index
    %7 = vector.load %arg5[%c0_6, %c0_7, %c0_8] : memref<1x1x384xf32, #tpu.memory_space<vmem>>, vector<1x1x384xf32>
    %8 = vector.shape_cast %7 : vector<1x1x384xf32> to vector<1x384xf32>
    %c0_9 = arith.constant 0 : index
    %c0_10 = arith.constant 0 : index
    %c0_11 = arith.constant 0 : index
    %9 = vector.load %arg6[%c0_9, %c0_10, %c0_11] : memref<1x1x384xf32, #tpu.memory_space<vmem>>, vector<1x1x384xf32>
    %10 = vector.shape_cast %9 : vector<1x1x384xf32> to vector<1x384xf32>
    %11 = arith.index_cast %arg0 : i32 to index
    %c0_12 = arith.constant 0 : index
    %c0_13 = arith.constant 0 : index
    %12 = vector.load %arg9[%11, %c0_12, %c0_13] : memref<2x8x128xf32, #tpu.memory_space<vmem>>, vector<1x8x128xf32>
    %13 = vector.shape_cast %12 : vector<1x8x128xf32> to vector<8x128xf32>
    %c0_i32_14 = arith.constant 0 : i32
    %c0_i32_15 = arith.constant 0 : i32
    %14 = arith.cmpi eq, %arg0, %c0_i32_15 : i32
    %c7_i32 = arith.constant 7 : i32
    %15 = arith.subi %c7_i32, %c0_i32_14 : i32
    %16 = arith.select %14, %c0_i32_14, %15 : i32
    %17 = arith.index_cast %16 : i32 to index
    %c0_16 = arith.constant 0 : index
    %c0_17 = arith.constant 0 : index
    %18 = vector.load %arg2[%17, %c0_16, %c0_17] : memref<8x8x128xf32, #tpu.memory_space<vmem>>, vector<1x8x128xf32>
    %19 = vector.shape_cast %18 : vector<1x8x128xf32> to vector<8x128xf32>
    %20 = arith.truncf %19 : vector<8x128xf32> to vector<8x128xbf16>
    %cst = arith.constant dense<0.000000e+00> : vector<8x384xf32>
    %21 = tpu.matmul %20, %4, %cst {dimension_numbers = #tpu.dot_dimension_numbers<[1], [0], [0], [1], [0, 0, 1, 1], [], []>} : vector<8x128xbf16>, vector<128x384xbf16>, vector<8x384xf32> -> vector<8x384xf32>
    %22 = vector.broadcast %8 : vector<1x384xf32> to vector<8x384xf32>
    %23 = arith.addf %21, %22 : vector<8x384xf32>
    %24 = arith.truncf %13 : vector<8x128xf32> to vector<8x128xbf16>
    %cst_18 = arith.constant dense<0.000000e+00> : vector<8x384xf32>
    %25 = tpu.matmul %24, %6, %cst_18 {dimension_numbers = #tpu.dot_dimension_numbers<[1], [0], [0], [1], [0, 0, 1, 1], [], []>} : vector<8x128xbf16>, vector<128x384xbf16>, vector<8x384xf32> -> vector<8x384xf32>
    %26 = vector.broadcast %10 : vector<1x384xf32> to vector<8x384xf32>
    %27 = arith.addf %25, %26 : vector<8x384xf32>
    %28 = vector.extract_strided_slice %23 {offsets = [0, 0], sizes = [8, 128], strides = [1, 1]} : vector<8x384xf32> to vector<8x128xf32>
    %29 = vector.extract_strided_slice %27 {offsets = [0, 0], sizes = [8, 128], strides = [1, 1]} : vector<8x384xf32> to vector<8x128xf32>
    %30 = arith.addf %28, %29 : vector<8x128xf32>
    %31 = arith.negf %30 : vector<8x128xf32>
    %32 = math.exp %31 : vector<8x128xf32>
    %cst_19 = arith.constant 1.000000e+00 : f32
    %33 = vector.broadcast %cst_19 : f32 to vector<8x128xf32>
    %34 = arith.addf %33, %32 : vector<8x128xf32>
    %35 = arith.divf %33, %34 : vector<8x128xf32>
    %36 = vector.extract_strided_slice %23 {offsets = [0, 128], sizes = [8, 128], strides = [1, 1]} : vector<8x384xf32> to vector<8x128xf32>
    %37 = vector.extract_strided_slice %27 {offsets = [0, 128], sizes = [8, 128], strides = [1, 1]} : vector<8x384xf32> to vector<8x128xf32>
    %38 = arith.addf %36, %37 : vector<8x128xf32>
    %39 = arith.negf %38 : vector<8x128xf32>
    %40 = math.exp %39 : vector<8x128xf32>
    %cst_20 = arith.constant 1.000000e+00 : f32
    %41 = vector.broadcast %cst_20 : f32 to vector<8x128xf32>
    %42 = arith.addf %41, %40 : vector<8x128xf32>
    %43 = arith.divf %41, %42 : vector<8x128xf32>
    %44 = vector.extract_strided_slice %23 {offsets = [0, 256], sizes = [8, 128], strides = [1, 1]} : vector<8x384xf32> to vector<8x128xf32>
    %45 = vector.extract_strided_slice %27 {offsets = [0, 256], sizes = [8, 128], strides = [1, 1]} : vector<8x384xf32> to vector<8x128xf32>
    %46 = arith.mulf %35, %45 : vector<8x128xf32>
    %47 = arith.addf %44, %46 : vector<8x128xf32>
    %48 = math.tanh %47 : vector<8x128xf32>
    %cst_21 = arith.constant 1.000000e+00 : f32
    %49 = vector.broadcast %cst_21 : f32 to vector<8x128xf32>
    %50 = arith.subf %49, %43 : vector<8x128xf32>
    %51 = arith.mulf %50, %48 : vector<8x128xf32>
    %52 = arith.mulf %43, %13 : vector<8x128xf32>
    %53 = arith.addf %51, %52 : vector<8x128xf32>
    %54 = arith.index_cast %16 : i32 to index
    %c0_22 = arith.constant 0 : index
    %c0_23 = arith.constant 0 : index
    %55 = vector.load %arg7[%54, %c0_22, %c0_23] : memref<8x8x128xf32, #tpu.memory_space<vmem>>, vector<1x8x128xf32>
    %56 = vector.shape_cast %55 : vector<1x8x128xf32> to vector<8x128xf32>
    %57 = vector.shape_cast %53 : vector<8x128xf32> to vector<1x8x128xf32>
    tpu.vector_store %arg7[%54, %c0_22, %c0_23], %57 {strides = array<i32>} : memref<8x8x128xf32, #tpu.memory_space<vmem>>, vector<1x8x128xf32>,
    %c1_i32 = arith.constant 1 : i32
    %c0_i32_24 = arith.constant 0 : i32
    %58 = arith.cmpi eq, %arg0, %c0_i32_24 : i32
    %c7_i32_25 = arith.constant 7 : i32
    %59 = arith.subi %c7_i32_25, %c1_i32 : i32
    %60 = arith.select %58, %c1_i32, %59 : i32
    %61 = arith.index_cast %60 : i32 to index
    %c0_26 = arith.constant 0 : index
    %c0_27 = arith.constant 0 : index
    %62 = vector.load %arg2[%61, %c0_26, %c0_27] : memref<8x8x128xf32, #tpu.memory_space<vmem>>, vector<1x8x128xf32>
    %63 = vector.shape_cast %62 : vector<1x8x128xf32> to vector<8x128xf32>
    %64 = arith.truncf %63 : vector<8x128xf32> to vector<8x128xbf16>
    %cst_28 = arith.constant dense<0.000000e+00> : vector<8x384xf32>
    %65 = tpu.matmul %64, %4, %cst_28 {dimension_numbers = #tpu.dot_dimension_numbers<[1], [0], [0], [1], [0, 0, 1, 1], [], []>} : vector<8x128xbf16>, vector<128x384xbf16>, vector<8x384xf32> -> vector<8x384xf32>
    %66 = vector.broadcast %8 : vector<1x384xf32> to vector<8x384xf32>
    %67 = arith.addf %65, %66 : vector<8x384xf32>
    %68 = arith.truncf %53 : vector<8x128xf32> to vector<8x128xbf16>
    %cst_29 = arith.constant dense<0.000000e+00> : vector<8x384xf32>
    %69 = tpu.matmul %68, %6, %cst_29 {dimension_numbers = #tpu.dot_dimension_numbers<[1], [0], [0], [1], [0, 0, 1, 1], [], []>} : vector<8x128xbf16>, vector<128x384xbf16>, vector<8x384xf32> -> vector<8x384xf32>
    %70 = vector.broadcast %10 : vector<1x384xf32> to vector<8x384xf32>
    %71 = arith.addf %69, %70 : vector<8x384xf32>
    %72 = vector.extract_strided_slice %67 {offsets = [0, 0], sizes = [8, 128], strides = [1, 1]} : vector<8x384xf32> to vector<8x128xf32>
    %73 = vector.extract_strided_slice %71 {offsets = [0, 0], sizes = [8, 128], strides = [1, 1]} : vector<8x384xf32> to vector<8x128xf32>
    %74 = arith.addf %72, %73 : vector<8x128xf32>
    %75 = arith.negf %74 : vector<8x128xf32>
    %76 = math.exp %75 : vector<8x128xf32>
    %cst_30 = arith.constant 1.000000e+00 : f32
    %77 = vector.broadcast %cst_30 : f32 to vector<8x128xf32>
    %78 = arith.addf %77, %76 : vector<8x128xf32>
    %79 = arith.divf %77, %78 : vector<8x128xf32>
    %80 = vector.extract_strided_slice %67 {offsets = [0, 128], sizes = [8, 128], strides = [1, 1]} : vector<8x384xf32> to vector<8x128xf32>
    %81 = vector.extract_strided_slice %71 {offsets = [0, 128], sizes = [8, 128], strides = [1, 1]} : vector<8x384xf32> to vector<8x128xf32>
    %82 = arith.addf %80, %81 : vector<8x128xf32>
    %83 = arith.negf %82 : vector<8x128xf32>
    %84 = math.exp %83 : vector<8x128xf32>
    %cst_31 = arith.constant 1.000000e+00 : f32
    %85 = vector.broadcast %cst_31 : f32 to vector<8x128xf32>
    %86 = arith.addf %85, %84 : vector<8x128xf32>
    %87 = arith.divf %85, %86 : vector<8x128xf32>
    %88 = vector.extract_strided_slice %67 {offsets = [0, 256], sizes = [8, 128], strides = [1, 1]} : vector<8x384xf32> to vector<8x128xf32>
    %89 = vector.extract_strided_slice %71 {offsets = [0, 256], sizes = [8, 128], strides = [1, 1]} : vector<8x384xf32> to vector<8x128xf32>
    %90 = arith.mulf %79, %89 : vector<8x128xf32>
    %91 = arith.addf %88, %90 : vector<8x128xf32>
    %92 = math.tanh %91 : vector<8x128xf32>
    %cst_32 = arith.constant 1.000000e+00 : f32
    %93 = vector.broadcast %cst_32 : f32 to vector<8x128xf32>
    %94 = arith.subf %93, %87 : vector<8x128xf32>
    %95 = arith.mulf %94, %92 : vector<8x128xf32>
    %96 = arith.mulf %87, %53 : vector<8x128xf32>
    %97 = arith.addf %95, %96 : vector<8x128xf32>
    %98 = arith.index_cast %60 : i32 to index
    %c0_33 = arith.constant 0 : index
    %c0_34 = arith.constant 0 : index
    %99 = vector.load %arg7[%98, %c0_33, %c0_34] : memref<8x8x128xf32, #tpu.memory_space<vmem>>, vector<1x8x128xf32>
    %100 = vector.shape_cast %99 : vector<1x8x128xf32> to vector<8x128xf32>
    %101 = vector.shape_cast %97 : vector<8x128xf32> to vector<1x8x128xf32>
    tpu.vector_store %arg7[%98, %c0_33, %c0_34], %101 {strides = array<i32>} : memref<8x8x128xf32, #tpu.memory_space<vmem>>, vector<1x8x128xf32>,
    %c2_i32 = arith.constant 2 : i32
    %c0_i32_35 = arith.constant 0 : i32
    %102 = arith.cmpi eq, %arg0, %c0_i32_35 : i32
    %c7_i32_36 = arith.constant 7 : i32
    %103 = arith.subi %c7_i32_36, %c2_i32 : i32
    %104 = arith.select %102, %c2_i32, %103 : i32
    %105 = arith.index_cast %104 : i32 to index
    %c0_37 = arith.constant 0 : index
    %c0_38 = arith.constant 0 : index
    %106 = vector.load %arg2[%105, %c0_37, %c0_38] : memref<8x8x128xf32, #tpu.memory_space<vmem>>, vector<1x8x128xf32>
    %107 = vector.shape_cast %106 : vector<1x8x128xf32> to vector<8x128xf32>
    %108 = arith.truncf %107 : vector<8x128xf32> to vector<8x128xbf16>
    %cst_39 = arith.constant dense<0.000000e+00> : vector<8x384xf32>
    %109 = tpu.matmul %108, %4, %cst_39 {dimension_numbers = #tpu.dot_dimension_numbers<[1], [0], [0], [1], [0, 0, 1, 1], [], []>} : vector<8x128xbf16>, vector<128x384xbf16>, vector<8x384xf32> -> vector<8x384xf32>
    %110 = vector.broadcast %8 : vector<1x384xf32> to vector<8x384xf32>
    %111 = arith.addf %109, %110 : vector<8x384xf32>
    %112 = arith.truncf %97 : vector<8x128xf32> to vector<8x128xbf16>
    %cst_40 = arith.constant dense<0.000000e+00> : vector<8x384xf32>
    %113 = tpu.matmul %112, %6, %cst_40 {dimension_numbers = #tpu.dot_dimension_numbers<[1], [0], [0], [1], [0, 0, 1, 1], [], []>} : vector<8x128xbf16>, vector<128x384xbf16>, vector<8x384xf32> -> vector<8x384xf32>
    %114 = vector.broadcast %10 : vector<1x384xf32> to vector<8x384xf32>
    %115 = arith.addf %113, %114 : vector<8x384xf32>
    %116 = vector.extract_strided_slice %111 {offsets = [0, 0], sizes = [8, 128], strides = [1, 1]} : vector<8x384xf32> to vector<8x128xf32>
    %117 = vector.extract_strided_slice %115 {offsets = [0, 0], sizes = [8, 128], strides = [1, 1]} : vector<8x384xf32> to vector<8x128xf32>
    %118 = arith.addf %116, %117 : vector<8x128xf32>
    %119 = arith.negf %118 : vector<8x128xf32>
    %120 = math.exp %119 : vector<8x128xf32>
    %cst_41 = arith.constant 1.000000e+00 : f32
    %121 = vector.broadcast %cst_41 : f32 to vector<8x128xf32>
    %122 = arith.addf %121, %120 : vector<8x128xf32>
    %123 = arith.divf %121, %122 : vector<8x128xf32>
    %124 = vector.extract_strided_slice %111 {offsets = [0, 128], sizes = [8, 128], strides = [1, 1]} : vector<8x384xf32> to vector<8x128xf32>
    %125 = vector.extract_strided_slice %115 {offsets = [0, 128], sizes = [8, 128], strides = [1, 1]} : vector<8x384xf32> to vector<8x128xf32>
    %126 = arith.addf %124, %125 : vector<8x128xf32>
    %127 = arith.negf %126 : vector<8x128xf32>
    %128 = math.exp %127 : vector<8x128xf32>
    %cst_42 = arith.constant 1.000000e+00 : f32
    %129 = vector.broadcast %cst_42 : f32 to vector<8x128xf32>
    %130 = arith.addf %129, %128 : vector<8x128xf32>
    %131 = arith.divf %129, %130 : vector<8x128xf32>
    %132 = vector.extract_strided_slice %111 {offsets = [0, 256], sizes = [8, 128], strides = [1, 1]} : vector<8x384xf32> to vector<8x128xf32>
    %133 = vector.extract_strided_slice %115 {offsets = [0, 256], sizes = [8, 128], strides = [1, 1]} : vector<8x384xf32> to vector<8x128xf32>
    %134 = arith.mulf %123, %133 : vector<8x128xf32>
    %135 = arith.addf %132, %134 : vector<8x128xf32>
    %136 = math.tanh %135 : vector<8x128xf32>
    %cst_43 = arith.constant 1.000000e+00 : f32
    %137 = vector.broadcast %cst_43 : f32 to vector<8x128xf32>
    %138 = arith.subf %137, %131 : vector<8x128xf32>
    %139 = arith.mulf %138, %136 : vector<8x128xf32>
    %140 = arith.mulf %131, %97 : vector<8x128xf32>
    %141 = arith.addf %139, %140 : vector<8x128xf32>
    %142 = arith.index_cast %104 : i32 to index
    %c0_44 = arith.constant 0 : index
    %c0_45 = arith.constant 0 : index
    %143 = vector.load %arg7[%142, %c0_44, %c0_45] : memref<8x8x128xf32, #tpu.memory_space<vmem>>, vector<1x8x128xf32>
    %144 = vector.shape_cast %143 : vector<1x8x128xf32> to vector<8x128xf32>
    %145 = vector.shape_cast %141 : vector<8x128xf32> to vector<1x8x128xf32>
    tpu.vector_store %arg7[%142, %c0_44, %c0_45], %145 {strides = array<i32>} : memref<8x8x128xf32, #tpu.memory_space<vmem>>, vector<1x8x128xf32>,
    %c3_i32 = arith.constant 3 : i32
    %c0_i32_46 = arith.constant 0 : i32
    %146 = arith.cmpi eq, %arg0, %c0_i32_46 : i32
    %c7_i32_47 = arith.constant 7 : i32
    %147 = arith.subi %c7_i32_47, %c3_i32 : i32
    %148 = arith.select %146, %c3_i32, %147 : i32
    %149 = arith.index_cast %148 : i32 to index
    %c0_48 = arith.constant 0 : index
    %c0_49 = arith.constant 0 : index
    %150 = vector.load %arg2[%149, %c0_48, %c0_49] : memref<8x8x128xf32, #tpu.memory_space<vmem>>, vector<1x8x128xf32>
    %151 = vector.shape_cast %150 : vector<1x8x128xf32> to vector<8x128xf32>
    %152 = arith.truncf %151 : vector<8x128xf32> to vector<8x128xbf16>
    %cst_50 = arith.constant dense<0.000000e+00> : vector<8x384xf32>
    %153 = tpu.matmul %152, %4, %cst_50 {dimension_numbers = #tpu.dot_dimension_numbers<[1], [0], [0], [1], [0, 0, 1, 1], [], []>} : vector<8x128xbf16>, vector<128x384xbf16>, vector<8x384xf32> -> vector<8x384xf32>
    %154 = vector.broadcast %8 : vector<1x384xf32> to vector<8x384xf32>
    %155 = arith.addf %153, %154 : vector<8x384xf32>
    %156 = arith.truncf %141 : vector<8x128xf32> to vector<8x128xbf16>
    %cst_51 = arith.constant dense<0.000000e+00> : vector<8x384xf32>
    %157 = tpu.matmul %156, %6, %cst_51 {dimension_numbers = #tpu.dot_dimension_numbers<[1], [0], [0], [1], [0, 0, 1, 1], [], []>} : vector<8x128xbf16>, vector<128x384xbf16>, vector<8x384xf32> -> vector<8x384xf32>
    %158 = vector.broadcast %10 : vector<1x384xf32> to vector<8x384xf32>
    %159 = arith.addf %157, %158 : vector<8x384xf32>
    %160 = vector.extract_strided_slice %155 {offsets = [0, 0], sizes = [8, 128], strides = [1, 1]} : vector<8x384xf32> to vector<8x128xf32>
    %161 = vector.extract_strided_slice %159 {offsets = [0, 0], sizes = [8, 128], strides = [1, 1]} : vector<8x384xf32> to vector<8x128xf32>
    %162 = arith.addf %160, %161 : vector<8x128xf32>
    %163 = arith.negf %162 : vector<8x128xf32>
    %164 = math.exp %163 : vector<8x128xf32>
    %cst_52 = arith.constant 1.000000e+00 : f32
    %165 = vector.broadcast %cst_52 : f32 to vector<8x128xf32>
    %166 = arith.addf %165, %164 : vector<8x128xf32>
    %167 = arith.divf %165, %166 : vector<8x128xf32>
    %168 = vector.extract_strided_slice %155 {offsets = [0, 128], sizes = [8, 128], strides = [1, 1]} : vector<8x384xf32> to vector<8x128xf32>
    %169 = vector.extract_strided_slice %159 {offsets = [0, 128], sizes = [8, 128], strides = [1, 1]} : vector<8x384xf32> to vector<8x128xf32>
    %170 = arith.addf %168, %169 : vector<8x128xf32>
    %171 = arith.negf %170 : vector<8x128xf32>
    %172 = math.exp %171 : vector<8x128xf32>
    %cst_53 = arith.constant 1.000000e+00 : f32
    %173 = vector.broadcast %cst_53 : f32 to vector<8x128xf32>
    %174 = arith.addf %173, %172 : vector<8x128xf32>
    %175 = arith.divf %173, %174 : vector<8x128xf32>
    %176 = vector.extract_strided_slice %155 {offsets = [0, 256], sizes = [8, 128], strides = [1, 1]} : vector<8x384xf32> to vector<8x128xf32>
    %177 = vector.extract_strided_slice %159 {offsets = [0, 256], sizes = [8, 128], strides = [1, 1]} : vector<8x384xf32> to vector<8x128xf32>
    %178 = arith.mulf %167, %177 : vector<8x128xf32>
    %179 = arith.addf %176, %178 : vector<8x128xf32>
    %180 = math.tanh %179 : vector<8x128xf32>
    %cst_54 = arith.constant 1.000000e+00 : f32
    %181 = vector.broadcast %cst_54 : f32 to vector<8x128xf32>
    %182 = arith.subf %181, %175 : vector<8x128xf32>
    %183 = arith.mulf %182, %180 : vector<8x128xf32>
    %184 = arith.mulf %175, %141 : vector<8x128xf32>
    %185 = arith.addf %183, %184 : vector<8x128xf32>
    %186 = arith.index_cast %148 : i32 to index
    %c0_55 = arith.constant 0 : index
    %c0_56 = arith.constant 0 : index
    %187 = vector.load %arg7[%186, %c0_55, %c0_56] : memref<8x8x128xf32, #tpu.memory_space<vmem>>, vector<1x8x128xf32>
    %188 = vector.shape_cast %187 : vector<1x8x128xf32> to vector<8x128xf32>
    %189 = vector.shape_cast %185 : vector<8x128xf32> to vector<1x8x128xf32>
    tpu.vector_store %arg7[%186, %c0_55, %c0_56], %189 {strides = array<i32>} : memref<8x8x128xf32, #tpu.memory_space<vmem>>, vector<1x8x128xf32>,
    %c4_i32 = arith.constant 4 : i32
    %c0_i32_57 = arith.constant 0 : i32
    %190 = arith.cmpi eq, %arg0, %c0_i32_57 : i32
    %c7_i32_58 = arith.constant 7 : i32
    %191 = arith.subi %c7_i32_58, %c4_i32 : i32
    %192 = arith.select %190, %c4_i32, %191 : i32
    %193 = arith.index_cast %192 : i32 to index
    %c0_59 = arith.constant 0 : index
    %c0_60 = arith.constant 0 : index
    %194 = vector.load %arg2[%193, %c0_59, %c0_60] : memref<8x8x128xf32, #tpu.memory_space<vmem>>, vector<1x8x128xf32>
    %195 = vector.shape_cast %194 : vector<1x8x128xf32> to vector<8x128xf32>
    %196 = arith.truncf %195 : vector<8x128xf32> to vector<8x128xbf16>
    %cst_61 = arith.constant dense<0.000000e+00> : vector<8x384xf32>
    %197 = tpu.matmul %196, %4, %cst_61 {dimension_numbers = #tpu.dot_dimension_numbers<[1], [0], [0], [1], [0, 0, 1, 1], [], []>} : vector<8x128xbf16>, vector<128x384xbf16>, vector<8x384xf32> -> vector<8x384xf32>
    %198 = vector.broadcast %8 : vector<1x384xf32> to vector<8x384xf32>
    %199 = arith.addf %197, %198 : vector<8x384xf32>
    %200 = arith.truncf %185 : vector<8x128xf32> to vector<8x128xbf16>
    %cst_62 = arith.constant dense<0.000000e+00> : vector<8x384xf32>
    %201 = tpu.matmul %200, %6, %cst_62 {dimension_numbers = #tpu.dot_dimension_numbers<[1], [0], [0], [1], [0, 0, 1, 1], [], []>} : vector<8x128xbf16>, vector<128x384xbf16>, vector<8x384xf32> -> vector<8x384xf32>
    %202 = vector.broadcast %10 : vector<1x384xf32> to vector<8x384xf32>
    %203 = arith.addf %201, %202 : vector<8x384xf32>
    %204 = vector.extract_strided_slice %199 {offsets = [0, 0], sizes = [8, 128], strides = [1, 1]} : vector<8x384xf32> to vector<8x128xf32>
    %205 = vector.extract_strided_slice %203 {offsets = [0, 0], sizes = [8, 128], strides = [1, 1]} : vector<8x384xf32> to vector<8x128xf32>
    %206 = arith.addf %204, %205 : vector<8x128xf32>
    %207 = arith.negf %206 : vector<8x128xf32>
    %208 = math.exp %207 : vector<8x128xf32>
    %cst_63 = arith.constant 1.000000e+00 : f32
    %209 = vector.broadcast %cst_63 : f32 to vector<8x128xf32>
    %210 = arith.addf %209, %208 : vector<8x128xf32>
    %211 = arith.divf %209, %210 : vector<8x128xf32>
    %212 = vector.extract_strided_slice %199 {offsets = [0, 128], sizes = [8, 128], strides = [1, 1]} : vector<8x384xf32> to vector<8x128xf32>
    %213 = vector.extract_strided_slice %203 {offsets = [0, 128], sizes = [8, 128], strides = [1, 1]} : vector<8x384xf32> to vector<8x128xf32>
    %214 = arith.addf %212, %213 : vector<8x128xf32>
    %215 = arith.negf %214 : vector<8x128xf32>
    %216 = math.exp %215 : vector<8x128xf32>
    %cst_64 = arith.constant 1.000000e+00 : f32
    %217 = vector.broadcast %cst_64 : f32 to vector<8x128xf32>
    %218 = arith.addf %217, %216 : vector<8x128xf32>
    %219 = arith.divf %217, %218 : vector<8x128xf32>
    %220 = vector.extract_strided_slice %199 {offsets = [0, 256], sizes = [8, 128], strides = [1, 1]} : vector<8x384xf32> to vector<8x128xf32>
    %221 = vector.extract_strided_slice %203 {offsets = [0, 256], sizes = [8, 128], strides = [1, 1]} : vector<8x384xf32> to vector<8x128xf32>
    %222 = arith.mulf %211, %221 : vector<8x128xf32>
    %223 = arith.addf %220, %222 : vector<8x128xf32>
    %224 = math.tanh %223 : vector<8x128xf32>
    %cst_65 = arith.constant 1.000000e+00 : f32
    %225 = vector.broadcast %cst_65 : f32 to vector<8x128xf32>
    %226 = arith.subf %225, %219 : vector<8x128xf32>
    %227 = arith.mulf %226, %224 : vector<8x128xf32>
    %228 = arith.mulf %219, %185 : vector<8x128xf32>
    %229 = arith.addf %227, %228 : vector<8x128xf32>
    %230 = arith.index_cast %192 : i32 to index
    %c0_66 = arith.constant 0 : index
    %c0_67 = arith.constant 0 : index
    %231 = vector.load %arg7[%230, %c0_66, %c0_67] : memref<8x8x128xf32, #tpu.memory_space<vmem>>, vector<1x8x128xf32>
    %232 = vector.shape_cast %231 : vector<1x8x128xf32> to vector<8x128xf32>
    %233 = vector.shape_cast %229 : vector<8x128xf32> to vector<1x8x128xf32>
    tpu.vector_store %arg7[%230, %c0_66, %c0_67], %233 {strides = array<i32>} : memref<8x8x128xf32, #tpu.memory_space<vmem>>, vector<1x8x128xf32>,
    %c5_i32 = arith.constant 5 : i32
    %c0_i32_68 = arith.constant 0 : i32
    %234 = arith.cmpi eq, %arg0, %c0_i32_68 : i32
    %c7_i32_69 = arith.constant 7 : i32
    %235 = arith.subi %c7_i32_69, %c5_i32 : i32
    %236 = arith.select %234, %c5_i32, %235 : i32
    %237 = arith.index_cast %236 : i32 to index
    %c0_70 = arith.constant 0 : index
    %c0_71 = arith.constant 0 : index
    %238 = vector.load %arg2[%237, %c0_70, %c0_71] : memref<8x8x128xf32, #tpu.memory_space<vmem>>, vector<1x8x128xf32>
    %239 = vector.shape_cast %238 : vector<1x8x128xf32> to vector<8x128xf32>
    %240 = arith.truncf %239 : vector<8x128xf32> to vector<8x128xbf16>
    %cst_72 = arith.constant dense<0.000000e+00> : vector<8x384xf32>
    %241 = tpu.matmul %240, %4, %cst_72 {dimension_numbers = #tpu.dot_dimension_numbers<[1], [0], [0], [1], [0, 0, 1, 1], [], []>} : vector<8x128xbf16>, vector<128x384xbf16>, vector<8x384xf32> -> vector<8x384xf32>
    %242 = vector.broadcast %8 : vector<1x384xf32> to vector<8x384xf32>
    %243 = arith.addf %241, %242 : vector<8x384xf32>
    %244 = arith.truncf %229 : vector<8x128xf32> to vector<8x128xbf16>
    %cst_73 = arith.constant dense<0.000000e+00> : vector<8x384xf32>
    %245 = tpu.matmul %244, %6, %cst_73 {dimension_numbers = #tpu.dot_dimension_numbers<[1], [0], [0], [1], [0, 0, 1, 1], [], []>} : vector<8x128xbf16>, vector<128x384xbf16>, vector<8x384xf32> -> vector<8x384xf32>
    %246 = vector.broadcast %10 : vector<1x384xf32> to vector<8x384xf32>
    %247 = arith.addf %245, %246 : vector<8x384xf32>
    %248 = vector.extract_strided_slice %243 {offsets = [0, 0], sizes = [8, 128], strides = [1, 1]} : vector<8x384xf32> to vector<8x128xf32>
    %249 = vector.extract_strided_slice %247 {offsets = [0, 0], sizes = [8, 128], strides = [1, 1]} : vector<8x384xf32> to vector<8x128xf32>
    %250 = arith.addf %248, %249 : vector<8x128xf32>
    %251 = arith.negf %250 : vector<8x128xf32>
    %252 = math.exp %251 : vector<8x128xf32>
    %cst_74 = arith.constant 1.000000e+00 : f32
    %253 = vector.broadcast %cst_74 : f32 to vector<8x128xf32>
    %254 = arith.addf %253, %252 : vector<8x128xf32>
    %255 = arith.divf %253, %254 : vector<8x128xf32>
    %256 = vector.extract_strided_slice %243 {offsets = [0, 128], sizes = [8, 128], strides = [1, 1]} : vector<8x384xf32> to vector<8x128xf32>
    %257 = vector.extract_strided_slice %247 {offsets = [0, 128], sizes = [8, 128], strides = [1, 1]} : vector<8x384xf32> to vector<8x128xf32>
    %258 = arith.addf %256, %257 : vector<8x128xf32>
    %259 = arith.negf %258 : vector<8x128xf32>
    %260 = math.exp %259 : vector<8x128xf32>
    %cst_75 = arith.constant 1.000000e+00 : f32
    %261 = vector.broadcast %cst_75 : f32 to vector<8x128xf32>
    %262 = arith.addf %261, %260 : vector<8x128xf32>
    %263 = arith.divf %261, %262 : vector<8x128xf32>
    %264 = vector.extract_strided_slice %243 {offsets = [0, 256], sizes = [8, 128], strides = [1, 1]} : vector<8x384xf32> to vector<8x128xf32>
    %265 = vector.extract_strided_slice %247 {offsets = [0, 256], sizes = [8, 128], strides = [1, 1]} : vector<8x384xf32> to vector<8x128xf32>
    %266 = arith.mulf %255, %265 : vector<8x128xf32>
    %267 = arith.addf %264, %266 : vector<8x128xf32>
    %268 = math.tanh %267 : vector<8x128xf32>
    %cst_76 = arith.constant 1.000000e+00 : f32
    %269 = vector.broadcast %cst_76 : f32 to vector<8x128xf32>
    %270 = arith.subf %269, %263 : vector<8x128xf32>
    %271 = arith.mulf %270, %268 : vector<8x128xf32>
    %272 = arith.mulf %263, %229 : vector<8x128xf32>
    %273 = arith.addf %271, %272 : vector<8x128xf32>
    %274 = arith.index_cast %236 : i32 to index
    %c0_77 = arith.constant 0 : index
    %c0_78 = arith.constant 0 : index
    %275 = vector.load %arg7[%274, %c0_77, %c0_78] : memref<8x8x128xf32, #tpu.memory_space<vmem>>, vector<1x8x128xf32>
    %276 = vector.shape_cast %275 : vector<1x8x128xf32> to vector<8x128xf32>
    %277 = vector.shape_cast %273 : vector<8x128xf32> to vector<1x8x128xf32>
    tpu.vector_store %arg7[%274, %c0_77, %c0_78], %277 {strides = array<i32>} : memref<8x8x128xf32, #tpu.memory_space<vmem>>, vector<1x8x128xf32>,
    %c6_i32 = arith.constant 6 : i32
    %c0_i32_79 = arith.constant 0 : i32
    %278 = arith.cmpi eq, %arg0, %c0_i32_79 : i32
    %c7_i32_80 = arith.constant 7 : i32
    %279 = arith.subi %c7_i32_80, %c6_i32 : i32
    %280 = arith.select %278, %c6_i32, %279 : i32
    %281 = arith.index_cast %280 : i32 to index
    %c0_81 = arith.constant 0 : index
    %c0_82 = arith.constant 0 : index
    %282 = vector.load %arg2[%281, %c0_81, %c0_82] : memref<8x8x128xf32, #tpu.memory_space<vmem>>, vector<1x8x128xf32>
    %283 = vector.shape_cast %282 : vector<1x8x128xf32> to vector<8x128xf32>
    %284 = arith.truncf %283 : vector<8x128xf32> to vector<8x128xbf16>
    %cst_83 = arith.constant dense<0.000000e+00> : vector<8x384xf32>
    %285 = tpu.matmul %284, %4, %cst_83 {dimension_numbers = #tpu.dot_dimension_numbers<[1], [0], [0], [1], [0, 0, 1, 1], [], []>} : vector<8x128xbf16>, vector<128x384xbf16>, vector<8x384xf32> -> vector<8x384xf32>
    %286 = vector.broadcast %8 : vector<1x384xf32> to vector<8x384xf32>
    %287 = arith.addf %285, %286 : vector<8x384xf32>
    %288 = arith.truncf %273 : vector<8x128xf32> to vector<8x128xbf16>
    %cst_84 = arith.constant dense<0.000000e+00> : vector<8x384xf32>
    %289 = tpu.matmul %288, %6, %cst_84 {dimension_numbers = #tpu.dot_dimension_numbers<[1], [0], [0], [1], [0, 0, 1, 1], [], []>} : vector<8x128xbf16>, vector<128x384xbf16>, vector<8x384xf32> -> vector<8x384xf32>
    %290 = vector.broadcast %10 : vector<1x384xf32> to vector<8x384xf32>
    %291 = arith.addf %289, %290 : vector<8x384xf32>
    %292 = vector.extract_strided_slice %287 {offsets = [0, 0], sizes = [8, 128], strides = [1, 1]} : vector<8x384xf32> to vector<8x128xf32>
    %293 = vector.extract_strided_slice %291 {offsets = [0, 0], sizes = [8, 128], strides = [1, 1]} : vector<8x384xf32> to vector<8x128xf32>
    %294 = arith.addf %292, %293 : vector<8x128xf32>
    %295 = arith.negf %294 : vector<8x128xf32>
    %296 = math.exp %295 : vector<8x128xf32>
    %cst_85 = arith.constant 1.000000e+00 : f32
    %297 = vector.broadcast %cst_85 : f32 to vector<8x128xf32>
    %298 = arith.addf %297, %296 : vector<8x128xf32>
    %299 = arith.divf %297, %298 : vector<8x128xf32>
    %300 = vector.extract_strided_slice %287 {offsets = [0, 128], sizes = [8, 128], strides = [1, 1]} : vector<8x384xf32> to vector<8x128xf32>
    %301 = vector.extract_strided_slice %291 {offsets = [0, 128], sizes = [8, 128], strides = [1, 1]} : vector<8x384xf32> to vector<8x128xf32>
    %302 = arith.addf %300, %301 : vector<8x128xf32>
    %303 = arith.negf %302 : vector<8x128xf32>
    %304 = math.exp %303 : vector<8x128xf32>
    %cst_86 = arith.constant 1.000000e+00 : f32
    %305 = vector.broadcast %cst_86 : f32 to vector<8x128xf32>
    %306 = arith.addf %305, %304 : vector<8x128xf32>
    %307 = arith.divf %305, %306 : vector<8x128xf32>
    %308 = vector.extract_strided_slice %287 {offsets = [0, 256], sizes = [8, 128], strides = [1, 1]} : vector<8x384xf32> to vector<8x128xf32>
    %309 = vector.extract_strided_slice %291 {offsets = [0, 256], sizes = [8, 128], strides = [1, 1]} : vector<8x384xf32> to vector<8x128xf32>
    %310 = arith.mulf %299, %309 : vector<8x128xf32>
    %311 = arith.addf %308, %310 : vector<8x128xf32>
    %312 = math.tanh %311 : vector<8x128xf32>
    %cst_87 = arith.constant 1.000000e+00 : f32
    %313 = vector.broadcast %cst_87 : f32 to vector<8x128xf32>
    %314 = arith.subf %313, %307 : vector<8x128xf32>
    %315 = arith.mulf %314, %312 : vector<8x128xf32>
    %316 = arith.mulf %307, %273 : vector<8x128xf32>
    %317 = arith.addf %315, %316 : vector<8x128xf32>
    %318 = arith.index_cast %280 : i32 to index
    %c0_88 = arith.constant 0 : index
    %c0_89 = arith.constant 0 : index
    %319 = vector.load %arg7[%318, %c0_88, %c0_89] : memref<8x8x128xf32, #tpu.memory_space<vmem>>, vector<1x8x128xf32>
    %320 = vector.shape_cast %319 : vector<1x8x128xf32> to vector<8x128xf32>
    %321 = vector.shape_cast %317 : vector<8x128xf32> to vector<1x8x128xf32>
    tpu.vector_store %arg7[%318, %c0_88, %c0_89], %321 {strides = array<i32>} : memref<8x8x128xf32, #tpu.memory_space<vmem>>, vector<1x8x128xf32>,
    %c7_i32_90 = arith.constant 7 : i32
    %c0_i32_91 = arith.constant 0 : i32
    %322 = arith.cmpi eq, %arg0, %c0_i32_91 : i32
    %c7_i32_92 = arith.constant 7 : i32
    %323 = arith.subi %c7_i32_92, %c7_i32_90 : i32
    %324 = arith.select %322, %c7_i32_90, %323 : i32
    %325 = arith.index_cast %324 : i32 to index
    %c0_93 = arith.constant 0 : index
    %c0_94 = arith.constant 0 : index
    %326 = vector.load %arg2[%325, %c0_93, %c0_94] : memref<8x8x128xf32, #tpu.memory_space<vmem>>, vector<1x8x128xf32>
    %327 = vector.shape_cast %326 : vector<1x8x128xf32> to vector<8x128xf32>
    %328 = arith.truncf %327 : vector<8x128xf32> to vector<8x128xbf16>
    %cst_95 = arith.constant dense<0.000000e+00> : vector<8x384xf32>
    %329 = tpu.matmul %328, %4, %cst_95 {dimension_numbers = #tpu.dot_dimension_numbers<[1], [0], [0], [1], [0, 0, 1, 1], [], []>} : vector<8x128xbf16>, vector<128x384xbf16>, vector<8x384xf32> -> vector<8x384xf32>
    %330 = vector.broadcast %8 : vector<1x384xf32> to vector<8x384xf32>
    %331 = arith.addf %329, %330 : vector<8x384xf32>
    %332 = arith.truncf %317 : vector<8x128xf32> to vector<8x128xbf16>
    %cst_96 = arith.constant dense<0.000000e+00> : vector<8x384xf32>
    %333 = tpu.matmul %332, %6, %cst_96 {dimension_numbers = #tpu.dot_dimension_numbers<[1], [0], [0], [1], [0, 0, 1, 1], [], []>} : vector<8x128xbf16>, vector<128x384xbf16>, vector<8x384xf32> -> vector<8x384xf32>
    %334 = vector.broadcast %10 : vector<1x384xf32> to vector<8x384xf32>
    %335 = arith.addf %333, %334 : vector<8x384xf32>
    %336 = vector.extract_strided_slice %331 {offsets = [0, 0], sizes = [8, 128], strides = [1, 1]} : vector<8x384xf32> to vector<8x128xf32>
    %337 = vector.extract_strided_slice %335 {offsets = [0, 0], sizes = [8, 128], strides = [1, 1]} : vector<8x384xf32> to vector<8x128xf32>
    %338 = arith.addf %336, %337 : vector<8x128xf32>
    %339 = arith.negf %338 : vector<8x128xf32>
    %340 = math.exp %339 : vector<8x128xf32>
    %cst_97 = arith.constant 1.000000e+00 : f32
    %341 = vector.broadcast %cst_97 : f32 to vector<8x128xf32>
    %342 = arith.addf %341, %340 : vector<8x128xf32>
    %343 = arith.divf %341, %342 : vector<8x128xf32>
    %344 = vector.extract_strided_slice %331 {offsets = [0, 128], sizes = [8, 128], strides = [1, 1]} : vector<8x384xf32> to vector<8x128xf32>
    %345 = vector.extract_strided_slice %335 {offsets = [0, 128], sizes = [8, 128], strides = [1, 1]} : vector<8x384xf32> to vector<8x128xf32>
    %346 = arith.addf %344, %345 : vector<8x128xf32>
    %347 = arith.negf %346 : vector<8x128xf32>
    %348 = math.exp %347 : vector<8x128xf32>
    %cst_98 = arith.constant 1.000000e+00 : f32
    %349 = vector.broadcast %cst_98 : f32 to vector<8x128xf32>
    %350 = arith.addf %349, %348 : vector<8x128xf32>
    %351 = arith.divf %349, %350 : vector<8x128xf32>
    %352 = vector.extract_strided_slice %331 {offsets = [0, 256], sizes = [8, 128], strides = [1, 1]} : vector<8x384xf32> to vector<8x128xf32>
    %353 = vector.extract_strided_slice %335 {offsets = [0, 256], sizes = [8, 128], strides = [1, 1]} : vector<8x384xf32> to vector<8x128xf32>
    %354 = arith.mulf %343, %353 : vector<8x128xf32>
    %355 = arith.addf %352, %354 : vector<8x128xf32>
    %356 = math.tanh %355 : vector<8x128xf32>
    %cst_99 = arith.constant 1.000000e+00 : f32
    %357 = vector.broadcast %cst_99 : f32 to vector<8x128xf32>
    %358 = arith.subf %357, %351 : vector<8x128xf32>
    %359 = arith.mulf %358, %356 : vector<8x128xf32>
    %360 = arith.mulf %351, %317 : vector<8x128xf32>
    %361 = arith.addf %359, %360 : vector<8x128xf32>
    %362 = arith.index_cast %324 : i32 to index
    %c0_100 = arith.constant 0 : index
    %c0_101 = arith.constant 0 : index
    %363 = vector.load %arg7[%362, %c0_100, %c0_101] : memref<8x8x128xf32, #tpu.memory_space<vmem>>, vector<1x8x128xf32>
    %364 = vector.shape_cast %363 : vector<1x8x128xf32> to vector<8x128xf32>
    %365 = vector.shape_cast %361 : vector<8x128xf32> to vector<1x8x128xf32>
    tpu.vector_store %arg7[%362, %c0_100, %c0_101], %365 {strides = array<i32>} : memref<8x8x128xf32, #tpu.memory_space<vmem>>, vector<1x8x128xf32>,
    %c8_i32 = arith.constant 8 : i32
    %366 = arith.index_cast %arg0 : i32 to index
    %c0_102 = arith.constant 0 : index
    %c0_103 = arith.constant 0 : index
    %367 = vector.load %arg9[%366, %c0_102, %c0_103] : memref<2x8x128xf32, #tpu.memory_space<vmem>>, vector<1x8x128xf32>
    %368 = vector.shape_cast %367 : vector<1x8x128xf32> to vector<8x128xf32>
    %369 = vector.shape_cast %361 : vector<8x128xf32> to vector<1x8x128xf32>
    tpu.vector_store %arg9[%366, %c0_102, %c0_103], %369 {strides = array<i32>} : memref<2x8x128xf32, #tpu.memory_space<vmem>>, vector<1x8x128xf32>,
    %c0_i32_104 = arith.constant 0 : i32
    %370 = arith.cmpi eq, %arg1, %c0_i32_104 : i32
    %371 = arith.extui %370 : i1 to i32
    %c0_i32_105 = arith.constant 0 : i32
    %372 = arith.cmpi ne, %371, %c0_i32_105 : i32
    scf.if %372 {
      %c0_106 = arith.constant 0 : index
      %c0_107 = arith.constant 0 : index
      %c0_108 = arith.constant 0 : index
      %373 = vector.load %arg8[%c0_106, %c0_107, %c0_108] : memref<1x8x128xf32, #tpu.memory_space<vmem>>, vector<1x8x128xf32>
      %374 = vector.shape_cast %373 : vector<1x8x128xf32> to vector<8x128xf32>
      %375 = vector.shape_cast %361 : vector<8x128xf32> to vector<1x8x128xf32>
      tpu.vector_store %arg8[%c0_106, %c0_107, %c0_108], %375 {strides = array<i32>} : memref<1x8x128xf32, #tpu.memory_space<vmem>>, vector<1x8x128xf32>,
    } else {
    }
    return
  }
  func.func @transform_0(%arg0: i32, %arg1: i32) -> (i32, i32, i32) {
    %c1_i32 = arith.constant 1 : i32
    %0 = arith.subi %c1_i32, %arg0 : i32
    %1 = arith.muli %0, %arg1 : i32
    %c0_i32 = arith.constant 0 : i32
    %2 = arith.subi %c0_i32, %arg1 : i32
    %3 = arith.muli %arg0, %2 : i32
    %4 = arith.addi %1, %3 : i32
    %c0_i32_0 = arith.constant 0 : i32
    %c0_i32_1 = arith.constant 0 : i32
    %c0_i32_2 = arith.constant 0 : i32
    return %4, %c0_i32_0, %c0_i32_1 : i32, i32, i32
  }
  func.func @transform_1(%arg0: i32, %arg1: i32) -> (i32, i32, i32) {
    %c0_i32 = arith.constant 0 : i32
    %c0_i32_0 = arith.constant 0 : i32
    %c0_i32_1 = arith.constant 0 : i32
    return %arg0, %c0_i32, %c0_i32_0 : i32, i32, i32
  }
  func.func @transform_2(%arg0: i32, %arg1: i32) -> (i32, i32, i32) {
    %c0_i32 = arith.constant 0 : i32
    %c0_i32_0 = arith.constant 0 : i32
    %c0_i32_1 = arith.constant 0 : i32
    return %arg0, %c0_i32, %c0_i32_0 : i32, i32, i32
  }
  func.func @transform_3(%arg0: i32, %arg1: i32) -> (i32, i32, i32) {
    %c0_i32 = arith.constant 0 : i32
    %c0_i32_0 = arith.constant 0 : i32
    %c0_i32_1 = arith.constant 0 : i32
    return %arg0, %c0_i32, %c0_i32_0 : i32, i32, i32
  }
  func.func @transform_4(%arg0: i32, %arg1: i32) -> (i32, i32, i32) {
    %c0_i32 = arith.constant 0 : i32
    %c0_i32_0 = arith.constant 0 : i32
    %c0_i32_1 = arith.constant 0 : i32
    return %arg0, %c0_i32, %c0_i32_0 : i32, i32, i32
  }
  func.func @transform_5(%arg0: i32, %arg1: i32) -> (i32, i32, i32) {
    %c1_i32 = arith.constant 1 : i32
    %0 = arith.subi %c1_i32, %arg0 : i32
    %1 = arith.muli %0, %arg1 : i32
    %c0_i32 = arith.constant 0 : i32
    %2 = arith.subi %c0_i32, %arg1 : i32
    %3 = arith.muli %arg0, %2 : i32
    %4 = arith.addi %1, %3 : i32
    %c0_i32_0 = arith.constant 0 : i32
    %c0_i32_1 = arith.constant 0 : i32
    return %4, %c0_i32_0, %arg0 : i32, i32, i32
  }
  func.func @transform_6(%arg0: i32, %arg1: i32) -> (i32, i32, i32) {
    %c0_i32 = arith.constant 0 : i32
    %c0_i32_0 = arith.constant 0 : i32
    %c0_i32_1 = arith.constant 0 : i32
    return %arg0, %c0_i32, %c0_i32_0 : i32, i32, i32
  }
}

</mosaic_0001>

<llo_original>
// kernel: bert_gru_sentiment_forward.5
$region0: #{bert_gru_sentiment_forward.5}
  #allocation0 [shape = 'u32[]', space=smem, size = 0x4, offset = 0x4, fixed_abs, tag = 'smem constant byte address 0x4 - core index']
  #allocation1 [shape = 'u32[144,128]{1,0:T(1,128)}', space=vmem, size = 0x12000, scoped, tag = 'internal scratch']
  %s0 = inlined_call_operand.vmem [shape: f32[8,256], index: 0, kind: input, shape index: {}]
  %s1 = inlined_call_operand.vmem [shape: f32[256,2], index: 1, kind: input, shape index: {}]
  %s2 = inlined_call_operand.vmem [shape: f32[1,2], index: 2, kind: input, shape index: {}]
  %s3 = inlined_call_operand.vmem [shape: f32[8,2], index: 3, kind: output, shape index: {}]
  %s4 = sld [smem:[#allocation0]]
  $region22: #{bert_gru_sentiment_forward.5} parent=0
    _
  %s6 = ssub.s32 1, %s4
  %s7 = scalar_select 0, %s6, %s4
  // Predicated region
  $region2: #{bert_gru_sentiment_forward.5} parent=0 // pred_check
    _
  $region3: #{bert_gru_sentiment_forward.5} parent=0 // pred_check_branch
    %9 = sbr.rel (0) target = $region5
  $region4: #{bert_gru_sentiment_forward.5} parent=0 // pred_region
    _
  $region5: #{bert_gru_sentiment_forward.5} parent=0 // pred_fallthru
    _
  // Predicated region
  $region6: #{bert_gru_sentiment_forward.5} parent=0 // pred_check
    _
  $region7: #{bert_gru_sentiment_forward.5} parent=0 // pred_check_branch
    %11 = sbr.rel (0) target = $region9
  $region8: #{bert_gru_sentiment_forward.5} parent=0 // pred_region
    _
  $region9: #{bert_gru_sentiment_forward.5} parent=0 // pred_fallthru
    _
  // Predicated region
  $region10: #{bert_gru_sentiment_forward.5} parent=0 // pred_check
    _
  $region11: #{bert_gru_sentiment_forward.5} parent=0 // pred_check_branch
    %13 = sbr.rel (0) target = $region13
  $region12: #{bert_gru_sentiment_forward.5} parent=0 // pred_region
    _
  $region13: #{bert_gru_sentiment_forward.5} parent=0 // pred_fallthru
    _
  %v14 = vld [vmem:[%s0] sm:$0xff]
  %v15 = vld [vmem:[%s0 + $0x8] sm:$0xff]
  %v16 = vld [vmem:[%s1] sm:$0xff]
  %v17 = vld [vmem:[%s1 + $0x8] sm:$0xff]
  %v18 = vld [vmem:[%s1 + $0x10] sm:$0xff]
  %v19 = vld [vmem:[%s1 + $0x18] sm:$0xff]
  %v20 = vld [vmem:[%s1 + $0x20] sm:$0xff]
  %v21 = vld [vmem:[%s1 + $0x28] sm:$0xff]
  %v22 = vld [vmem:[%s1 + $0x30] sm:$0xff]
  %v23 = vld [vmem:[%s1 + $0x38] sm:$0xff]
  %v24 = vld [vmem:[%s1 + $0x40] sm:$0xff]
  %v25 = vld [vmem:[%s1 + $0x48] sm:$0xff]
  %v26 = vld [vmem:[%s1 + $0x50] sm:$0xff]
  %v27 = vld [vmem:[%s1 + $0x58] sm:$0xff]
  %v28 = vld [vmem:[%s1 + $0x60] sm:$0xff]
  %v29 = vld [vmem:[%s1 + $0x68] sm:$0xff]
  %v30 = vld [vmem:[%s1 + $0x70] sm:$0xff]
  %v31 = vld [vmem:[%s1 + $0x78] sm:$0xff]
  %v32 = vld [vmem:[%s1 + $0x80] sm:$0xff]
  %v33 = vld [vmem:[%s1 + $0x88] sm:$0xff]
  %v34 = vld [vmem:[%s1 + $0x90] sm:$0xff]
  %v35 = vld [vmem:[%s1 + $0x98] sm:$0xff]
  %v36 = vld [vmem:[%s1 + $0xa0] sm:$0xff]
  %v37 = vld [vmem:[%s1 + $0xa8] sm:$0xff]
  %v38 = vld [vmem:[%s1 + $0xb0] sm:$0xff]
  %v39 = vld [vmem:[%s1 + $0xb8] sm:$0xff]
  %v40 = vld [vmem:[%s1 + $0xc0] sm:$0xff]
  %v41 = vld [vmem:[%s1 + $0xc8] sm:$0xff]
  %v42 = vld [vmem:[%s1 + $0xd0] sm:$0xff]
  %v43 = vld [vmem:[%s1 + $0xd8] sm:$0xff]
  %v44 = vld [vmem:[%s1 + $0xe0] sm:$0xff]
  %v45 = vld [vmem:[%s1 + $0xe8] sm:$0xff]
  %v46 = vld [vmem:[%s1 + $0xf0] sm:$0xff]
  %v47 = vld [vmem:[%s1 + $0xf8] sm:$0xff]
  %v48 = vld [vmem:[%s2] sm:$0x1]
  %v50 = vlaneseq
  %v51 = vshrl.u32 %v50, 7
  %v52 = vsub.s32 0, %v51
  %v53 = vrot.slane %v48, %v52
  %55 = vmatprep.subr.mxu0 0.0
  %56 = vmatpush1.msra.mxu0 %v31
  %57 = vmatprep.subr.mxu0 0.0
  %58 = vmatpush1.msra.mxu0 %v30
  %59 = vmatprep.subr.mxu0 0.0
  %60 = vmatpush1.msra.mxu0 %v29
  %61 = vmatprep.subr.mxu0 0.0
  %62 = vmatpush1.msra.mxu0 %v28
  %63 = vmatprep.subr.mxu0 0.0
  %64 = vmatpush1.msra.mxu0 %v27
  %65 = vmatprep.subr.mxu0 0.0
  %66 = vmatpush1.msra.mxu0 %v26
  %67 = vmatprep.subr.mxu0 0.0
  %68 = vmatpush1.msra.mxu0 %v25
  %69 = vmatprep.subr.mxu0 0.0
  %70 = vmatpush1.msra.mxu0 %v24
  %71 = vmatprep.subr.mxu0 0.0
  %72 = vmatpush1.msra.mxu0 %v23
  %73 = vmatprep.subr.mxu0 0.0
  %74 = vmatpush1.msra.mxu0 %v22
  %75 = vmatprep.subr.mxu0 0.0
  %76 = vmatpush1.msra.mxu0 %v21
  %77 = vmatprep.subr.mxu0 0.0
  %78 = vmatpush1.msra.mxu0 %v20
  %79 = vmatprep.subr.mxu0 0.0
  %80 = vmatpush1.msra.mxu0 %v19
  %81 = vmatprep.subr.mxu0 0.0
  %82 = vmatpush1.msra.mxu0 %v18
  %83 = vmatprep.subr.mxu0 0.0
  %84 = vmatpush1.msra.mxu0 %v17
  %85 = vmatprep.subr.mxu0 0.0
  %86 = vmatpush1.msra.mxu0 %v16
  %87 = vmatprep.subr.mxu0 0.0
  %88 = vmatpush2.msra.mxu0 %v47
  %89 = vmatprep.subr.mxu0 0.0
  %90 = vmatpush2.msra.mxu0 %v46
  %91 = vmatprep.subr.mxu0 0.0
  %92 = vmatpush2.msra.mxu0 %v45
  %93 = vmatprep.subr.mxu0 0.0
  %94 = vmatpush2.msra.mxu0 %v44
  %95 = vmatprep.subr.mxu0 0.0
  %96 = vmatpush2.msra.mxu0 %v43
  %97 = vmatprep.subr.mxu0 0.0
  %98 = vmatpush2.msra.mxu0 %v42
  %99 = vmatprep.subr.mxu0 0.0
  %100 = vmatpush2.msra.mxu0 %v41
  %101 = vmatprep.subr.mxu0 0.0
  %102 = vmatpush2.msra.mxu0 %v40
  %103 = vmatprep.subr.mxu0 0.0
  %104 = vmatpush2.msra.mxu0 %v39
  %105 = vmatprep.subr.mxu0 0.0
  %106 = vmatpush2.msra.mxu0 %v38
  %107 = vmatprep.subr.mxu0 0.0
  %108 = vmatpush2.msra.mxu0 %v37
  %109 = vmatprep.subr.mxu0 0.0
  %110 = vmatpush2.msra.mxu0 %v36
  %111 = vmatprep.subr.mxu0 0.0
  %112 = vmatpush2.msra.mxu0 %v35
  %113 = vmatprep.subr.mxu0 0.0
  %114 = vmatpush2.msra.mxu0 %v34
  %115 = vmatprep.subr.mxu0 0.0
  %116 = vmatpush2.msra.mxu0 %v33
  %117 = vmatprep.subr.mxu0 0.0
  %118 = vmatpush2.msra.mxu0 %v32
  %119 = vmatprep.mubr.f32.mxu0 %v15
  %120 = vmatmul.mubr.f32.gmra.mxu0 %v14
  %v121 = vpop.f32.mrf.mxu0
  %v122 = vadd.f32 %v53, %v121
  %v123 = vpop.f32.mrf.mxu0
  %124 = vdwg.mxu0
  %vm125 = vcmask 15360
  %126 = vst.msk [vmem:[%s3] sm:$0xff] %vm125, %v122
  // Predicated region
  $region14: #{bert_gru_sentiment_forward.5} parent=0 // pred_check
    _
  $region15: #{bert_gru_sentiment_forward.5} parent=0 // pred_check_branch
    %128 = sbr.rel (0) target = $region17
  $region16: #{bert_gru_sentiment_forward.5} parent=0 // pred_region
    _
  $region17: #{bert_gru_sentiment_forward.5} parent=0 // pred_fallthru
    _
  // Predicated region
  $region18: #{bert_gru_sentiment_forward.5} parent=0 // pred_check
    _
  $region19: #{bert_gru_sentiment_forward.5} parent=0 // pred_check_branch
    %130 = sbr.rel (0) target = $region21
  $region20: #{bert_gru_sentiment_forward.5} parent=0 // pred_region
    _
  $region21: #{bert_gru_sentiment_forward.5} parent=0 // pred_fallthru
    _

// kernel: bert_gru_sentiment_forward.3
$region0: #{bert_gru_sentiment_forward.3}
  #allocation0 [shape = 'u32[]', space=smem, size = 0x4, offset = 0x4, fixed_abs, tag = 'smem constant byte address 0x4 - core index']
  #allocation1 [shape = 'u32[144,128]{1,0:T(1,128)}', space=vmem, size = 0x12000, scoped, tag = 'internal scratch']
  #allocation2 [shape = 'f32[2,8,128]{2,1,0:T(8,128)}', space=vmem, size = 0x2000, scoped, tag = 'scratch operand']
  %s0 = inlined_call_operand.vmem [shape: f32[8,8,128], index: 0, kind: input, shape index: {}]
  %s1 = inlined_call_operand.hbm [shape: bf16[2,128,384], index: 1, kind: input, shape index: {}]
  %s2 = inlined_call_operand.hbm [shape: bf16[2,128,384], index: 2, kind: input, shape index: {}]
  %s3 = inlined_call_operand.hbm [shape: f32[2,1,384], index: 3, kind: input, shape index: {}]
  %s4 = inlined_call_operand.hbm [shape: f32[2,1,384], index: 4, kind: input, shape index: {}]
  %s5 = inlined_call_operand.vmem [shape: f32[8,8,256], index: 5, kind: output, shape index: {0}]
  %s6 = inlined_call_operand.hbm [shape: f32[2,8,128], index: 6, kind: output, shape index: {1}]
  %7 = xla_tuple %s5, %s6
  %s8 = sld [smem:[#allocation0]]
  $region119: #{bert_gru_sentiment_forward.3} parent=0
    _
  %s10 = ssub.s32 1, %s8
  %s11 = scalar_select 0, %s10, %s8
  $region1: #{bert_gru_sentiment_forward.3} parent=0
    #allocation3 [shape = 'u8[196608]{0}', space=vmem, size = 0x30000, scoped, tag = 'input window, operand 1']
    #allocation4 [shape = 's32[2]{0}', space=sflag, size = 0x8, scoped, tag = 'scoped memory for bert_gru_sentiment_forward.3']
    #allocation5 [shape = 's32[2]{0}', space=sflag, size = 0x8, scoped, tag = 'scoped memory for bert_gru_sentiment_forward.3']
    #allocation6 [shape = 'u8[196608]{0}', space=vmem, size = 0x30000, scoped, tag = 'input window, operand 2']
    #allocation7 [shape = 's32[2]{0}', space=sflag, size = 0x8, scoped, tag = 'scoped memory for bert_gru_sentiment_forward.3']
    #allocation8 [shape = 'u8[3072]{0}', space=vmem, size = 0xc00, scoped, tag = 'input window, operand 3']
    #allocation9 [shape = 'u8[3072]{0}', space=vmem, size = 0xc00, scoped, tag = 'input window, operand 4']
    #allocation10 [shape = 's32[2]{0}', space=sflag, size = 0x8, scoped, tag = 'scoped memory for bert_gru_sentiment_forward.3']
    #allocation11 [shape = 'u8[65536]{0}', space=vmem, size = 0x10000, scoped, tag = 'output window, operand 0']
    #allocation12 [shape = 'u8[8192]{0}', space=vmem, size = 0x2000, scoped, tag = 'output window, operand 1']
    %12 = vsyncpa [#allocation4], 0
    %s13 = scalar_lea.sflag [#allocation4], 1
    %14 = vsyncpa %s13, 0
    %15 = vsyncpa [#allocation7], 0
    %s16 = scalar_lea.sflag [#allocation7], 1
    %17 = vsyncpa %s16, 0
    %18 = vsyncpa [#allocation10], 0
    %s19 = scalar_lea.sflag [#allocation10], 1
    %20 = vsyncpa %s19, 0
    %21 = vsyncpa [#allocation5], 0
    %s22 = scalar_lea.sflag [#allocation5], 1
    %23 = vsyncpa %s22, 0
    loop: start=0, step=1, limit=4
    $region2: #{bert_gru_sentiment_forward.3} parent=1 // loop_pre_header
      _
    $region3: #{bert_gru_sentiment_forward.3} parent=1 // loop_header
      %s25 = sphi 0, %s29
      %p26 = scmp.ge.s32.totalorder %s25, 4
      %s32 = sphi 0, %s44
      %s33 = sphi 0, %s40
      %s34 = sphi 0, %s32
      %s35 = sphi 0, %s33
      %s36 = sphi 0, %s34
      %s37 = sphi 0, %s35
      %s57 = sphi 0, %s59
      %s60 = sphi 0, %s57
      %s61 = sphi 0, %s60
      %s77 = sphi 0, %s61
      %s83 = sphi 0, %s85
      %s86 = sphi 0, %s83
      %s87 = sphi 0, %s86
      %s103 = sphi 0, %s87
      %s109 = sphi 0, %s111
      %s112 = sphi 0, %s109
      %s113 = sphi 0, %s112
      %s129 = sphi 0, %s113
      %s135 = sphi 0, %s137
      %s138 = sphi 0, %s135
      %s139 = sphi 0, %s138
      %s155 = sphi 0, %s139
      %s161 = sphi 0, %s163
      %s164 = sphi 0, %s161
      %s165 = sphi 0, %s164
      %s181 = sphi 0, %s165
      %s199 = sphi 0, %s201
      %s202 = sphi 0, %s199
      %s203 = sphi 0, %s202
      %s219 = sphi 0, %s203
      %s225 = sphi 0, %s227
      %s228 = sphi 0, %s225
      %s229 = sphi 0, %s228
      %s245 = sphi 0, %s229
    $region4: #{bert_gru_sentiment_forward.3} parent=1 // loop_header_branch
      %28 = sbr.rel (%p26) target = $region8
    $region5: #{bert_gru_sentiment_forward.3} parent=1 // loop_body
      %s30 = ssub.s32 %s25, 1
      %s31 = ssub.s32 %s25, 2
      %s38 = sadd.s32 1, %s33
      %p39 = scmp.ge.s32.totalorder %s38, 1
      %s40 = scalar_select %p39, 0, %s38
      %s41 = sadd.s32 1, %s32
      %s42 = scalar_select %p39, %s41, %s32
      %p43 = scmp.ge.s32.totalorder %s42, 2
      %s44 = scalar_select %p43, 0, %s42
      %s45 = ssub.s32 1, %s32
      %s46 = smul.u32 %s45, %s33
      %s47 = ssub.s32 0, %s33
      %s48 = smul.u32 %s32, %s47
      %s49 = sadd.s32 %s46, %s48
      %s50 = ssub.s32 1, %s44
      %s51 = smul.u32 %s50, %s40
      %s52 = ssub.s32 0, %s40
      %s53 = smul.u32 %s44, %s52
      %s54 = sadd.s32 %s51, %s53
      %s55 = ssub.s32 %s49, %s54
      %p56 = scmp.eq.s32.totalorder %s55, 0
      %s58 = sadd.s32 %s57, 1
      %s59 = scalar_select %p56, %s57, %s58
      %p62 = pneg %p56
      %p63 = scmp.eq.s32.totalorder %s25, 1
      %p64 = por %p62, %p63
      %p65 = scmp.ne.s32.totalorder %s57, %s60
      %p66 = scmp.eq.s32.totalorder %s25, 0
      %p67 = por %p65, %p66
      %p68 = scmp.ne.s32.totalorder %s57, %s60
      %p69 = scmp.eq.s32.totalorder %s30, 1
      %p70 = por %p68, %p69
      %p71 = scmp.ne.s32.totalorder %s60, %s61
      %p72 = scmp.eq.s32.totalorder %s30, 0
      %p73 = por %p71, %p72
      %p74 = scmp.ne.s32.totalorder %s60, %s61
      %p75 = scmp.eq.s32.totalorder %s31, 1
      %p76 = por %p74, %p75
      %p78 = scmp.ne.s32.totalorder %s61, %s77
      %p79 = scmp.eq.s32.totalorder %s31, 0
      %p80 = por %p78, %p79
      %s81 = ssub.s32 %s32, %s44
      %p82 = scmp.eq.s32.totalorder %s81, 0
      %s84 = sadd.s32 %s83, 1
      %s85 = scalar_select %p82, %s83, %s84
      %p88 = pneg %p82
      %p89 = scmp.eq.s32.totalorder %s25, 1
      %p90 = por %p88, %p89
      %p91 = scmp.ne.s32.totalorder %s83, %s86
      %p92 = scmp.eq.s32.totalorder %s25, 0
      %p93 = por %p91, %p92
      %p94 = scmp.ne.s32.totalorder %s83, %s86
      %p95 = scmp.eq.s32.totalorder %s30, 1
      %p96 = por %p94, %p95
      %p97 = scmp.ne.s32.totalorder %s86, %s87
      %p98 = scmp.eq.s32.totalorder %s30, 0
      %p99 = por %p97, %p98
      %p100 = scmp.ne.s32.totalorder %s86, %s87
      %p101 = scmp.eq.s32.totalorder %s31, 1
      %p102 = por %p100, %p101
      %p104 = scmp.ne.s32.totalorder %s87, %s103
      %p105 = scmp.eq.s32.totalorder %s31, 0
      %p106 = por %p104, %p105
      %s107 = ssub.s32 %s32, %s44
      %p108 = scmp.eq.s32.totalorder %s107, 0
      %s110 = sadd.s32 %s109, 1
      %s111 = scalar_select %p108, %s109, %s110
      %p114 = pneg %p108
      %p115 = scmp.eq.s32.totalorder %s25, 1
      %p116 = por %p114, %p115
      %p117 = scmp.ne.s32.totalorder %s109, %s112
      %p118 = scmp.eq.s32.totalorder %s25, 0
      %p119 = por %p117, %p118
      %p120 = scmp.ne.s32.totalorder %s109, %s112
      %p121 = scmp.eq.s32.totalorder %s30, 1
      %p122 = por %p120, %p121
      %p123 = scmp.ne.s32.totalorder %s112, %s113
      %p124 = scmp.eq.s32.totalorder %s30, 0
      %p125 = por %p123, %p124
      %p126 = scmp.ne.s32.totalorder %s112, %s113
      %p127 = scmp.eq.s32.totalorder %s31, 1
      %p128 = por %p126, %p127
      %p130 = scmp.ne.s32.totalorder %s113, %s129
      %p131 = scmp.eq.s32.totalorder %s31, 0
      %p132 = por %p130, %p131
      %s133 = ssub.s32 %s32, %s44
      %p134 = scmp.eq.s32.totalorder %s133, 0
      %s136 = sadd.s32 %s135, 1
      %s137 = scalar_select %p134, %s135, %s136
      %p140 = pneg %p134
      %p141 = scmp.eq.s32.totalorder %s25, 1
      %p142 = por %p140, %p141
      %p143 = scmp.ne.s32.totalorder %s135, %s138
      %p144 = scmp.eq.s32.totalorder %s25, 0
      %p145 = por %p143, %p144
      %p146 = scmp.ne.s32.totalorder %s135, %s138
      %p147 = scmp.eq.s32.totalorder %s30, 1
      %p148 = por %p146, %p147
      %p149 = scmp.ne.s32.totalorder %s138, %s139
      %p150 = scmp.eq.s32.totalorder %s30, 0
      %p151 = por %p149, %p150
      %p152 = scmp.ne.s32.totalorder %s138, %s139
      %p153 = scmp.eq.s32.totalorder %s31, 1
      %p154 = por %p152, %p153
      %p156 = scmp.ne.s32.totalorder %s139, %s155
      %p157 = scmp.eq.s32.totalorder %s31, 0
      %p158 = por %p156, %p157
      %s159 = ssub.s32 %s32, %s44
      %p160 = scmp.eq.s32.totalorder %s159, 0
      %s162 = sadd.s32 %s161, 1
      %s163 = scalar_select %p160, %s161, %s162
      %p166 = pneg %p160
      %p167 = scmp.eq.s32.totalorder %s25, 1
      %p168 = por %p166, %p167
      %p169 = scmp.ne.s32.totalorder %s161, %s164
      %p170 = scmp.eq.s32.totalorder %s25, 0
      %p171 = por %p169, %p170
      %p172 = scmp.ne.s32.totalorder %s161, %s164
      %p173 = scmp.eq.s32.totalorder %s30, 1
      %p174 = por %p172, %p173
      %p175 = scmp.ne.s32.totalorder %s164, %s165
      %p176 = scmp.eq.s32.totalorder %s30, 0
      %p177 = por %p175, %p176
      %p178 = scmp.ne.s32.totalorder %s164, %s165
      %p179 = scmp.eq.s32.totalorder %s31, 1
      %p180 = por %p178, %p179
      %p182 = scmp.ne.s32.totalorder %s165, %s181
      %p183 = scmp.eq.s32.totalorder %s31, 0
      %p184 = por %p182, %p183
      %s185 = ssub.s32 1, %s32
      %s186 = smul.u32 %s185, %s33
      %s187 = ssub.s32 0, %s33
      %s188 = smul.u32 %s32, %s187
      %s189 = sadd.s32 %s186, %s188
      %s190 = ssub.s32 1, %s44
      %s191 = smul.u32 %s190, %s40
      %s192 = ssub.s32 0, %s40
      %s193 = smul.u32 %s44, %s192
      %s194 = sadd.s32 %s191, %s193
      %s195 = ssub.s32 %s189, %s194
      %s196 = ssub.s32 %s32, %s44
      %s197 = sor.u32 %s195, %s196
      %p198 = scmp.eq.s32.totalorder %s197, 0
      %s200 = sadd.s32 %s199, 1
      %s201 = scalar_select %p198, %s199, %s200
      %p204 = pneg %p198
      %p205 = scmp.eq.s32.totalorder %s25, 1
      %p206 = por %p204, %p205
      %p207 = scmp.ne.s32.totalorder %s199, %s202
      %p208 = scmp.eq.s32.totalorder %s25, 0
      %p209 = por %p207, %p208
      %p210 = scmp.ne.s32.totalorder %s199, %s202
      %p211 = scmp.eq.s32.totalorder %s30, 1
      %p212 = por %p210, %p211
      %p213 = scmp.ne.s32.totalorder %s202, %s203
      %p214 = scmp.eq.s32.totalorder %s30, 0
      %p215 = por %p213, %p214
      %p216 = scmp.ne.s32.totalorder %s202, %s203
      %p217 = scmp.eq.s32.totalorder %s31, 1
      %p218 = por %p216, %p217
      %p220 = scmp.ne.s32.totalorder %s203, %s219
      %p221 = scmp.eq.s32.totalorder %s31, 0
      %p222 = por %p220, %p221
      %s223 = ssub.s32 %s32, %s44
      %p224 = scmp.eq.s32.totalorder %s223, 0
      %s226 = sadd.s32 %s225, 1
      %s227 = scalar_select %p224, %s225, %s226
      %p230 = pneg %p224
      %p231 = scmp.eq.s32.totalorder %s25, 1
      %p232 = por %p230, %p231
      %p233 = scmp.ne.s32.totalorder %s225, %s228
      %p234 = scmp.eq.s32.totalorder %s25, 0
      %p235 = por %p233, %p234
      %p236 = scmp.ne.s32.totalorder %s225, %s228
      %p237 = scmp.eq.s32.totalorder %s30, 1
      %p238 = por %p236, %p237
      %p239 = scmp.ne.s32.totalorder %s228, %s229
      %p240 = scmp.eq.s32.totalorder %s30, 0
      %p241 = por %p239, %p240
      %p242 = scmp.ne.s32.totalorder %s228, %s229
      %p243 = scmp.eq.s32.totalorder %s31, 1
      %p244 = por %p242, %p243
      %p246 = scmp.ne.s32.totalorder %s229, %s245
      %p247 = scmp.eq.s32.totalorder %s31, 0
      %p248 = por %p246, %p247
      %p249 = scmp.le.s32.totalorder 1, %s25
      %p250 = scmp.lt.s32.totalorder %s25, 3
      %p251 = pnand %p249, %p250
      %p252 = pneg %p251
      // Predicated region
      $region9: #{bert_gru_sentiment_forward.3} parent=5 // pred_check
        _
      $region10: #{bert_gru_sentiment_forward.3} parent=5 // pred_check_branch
        %254 = sbr.rel (%p251) target = $region12
      $region11: #{bert_gru_sentiment_forward.3} parent=5 // pred_region
        %s255 = ssub.s32 %s25, 1
      $region12: #{bert_gru_sentiment_forward.3} parent=5 // pred_fallthru
        _
      %p256 = scmp.lt.s32.totalorder %s25, 2
      // Predicated region
      $region13: #{bert_gru_sentiment_forward.3} parent=5 // pred_check
        %p257 = pneg %p256
      $region14: #{bert_gru_sentiment_forward.3} parent=5 // pred_check_branch
        %259 = sbr.rel (%p257) target = $region16
      $region15: #{bert_gru_sentiment_forward.3} parent=5 // pred_region
        // Predicated region
        $region17: #{bert_gru_sentiment_forward.3} parent=15 // pred_check
          %p260 = pneg %p67
        $region18: #{bert_gru_sentiment_forward.3} parent=15 // pred_check_branch
          %262 = sbr.rel (%p260) target = $region20
        $region19: #{bert_gru_sentiment_forward.3} parent=15 // pred_region
          %s263 = ssub.s32 1, %s32
          %s264 = smul.u32 %s263, %s33
          %s265 = ssub.s32 0, %s33
          %s266 = smul.u32 %s32, %s265
          %s267 = sadd.s32 %s264, %s266
          %s268 = smul.u32 8, %s267
          %p269 = scmp.lt.s32.totalorder %s268, 7
          %s270 = scalar_select %p269, %s268, 7
          %s271 = smul.addr %s270, 8
          %s272 = scalar_lea.vmem %s0, %s271
          %s273 = ssub.s32 1, %s32
          %s274 = smul.u32 %s273, %s33
          %s275 = ssub.s32 0, %s33
          %s276 = smul.u32 %s32, %s275
          %s277 = sadd.s32 %s274, %s276
          %s278 = smul.u32 8, %s277
        $region20: #{bert_gru_sentiment_forward.3} parent=15 // pred_fallthru
          _
        // Predicated region
        $region21: #{bert_gru_sentiment_forward.3} parent=15 // pred_check
          %p279 = pneg %p93
        $region22: #{bert_gru_sentiment_forward.3} parent=15 // pred_check_branch
          %281 = sbr.rel (%p279) target = $region24
        $region23: #{bert_gru_sentiment_forward.3} parent=15 // pred_region
          %s282 = sand.u32 %s83, 1
          %s283 = scalar_lea.sflag [#allocation4], %s282
          %s284 = sand.u32 %s83, 1
          %s285 = smul.addr %s284, 192
          %s286 = scalar_lea.vmem [#allocation3], %s285
          %s288 = ssub.s32 3072, 3072
          %289 = vsyncadd %s283, %s288
          %s290 = smul.addr %s32, 48
          %s291 = smul.addr %s290, 64
          %s292 = scalar_lea.hbm %s1, %s291
          %s293 = sshll.u32 %s286, 4
          %s294 = int_to_ptr.vmem [resolvable:$true] %s293
          %299 = dma.hbm_to_vmem [thread:$0]  %s292, 3072, %s294, %s283, 192, 192, 12
        $region24: #{bert_gru_sentiment_forward.3} parent=15 // pred_fallthru
          _
        // Predicated region
        $region25: #{bert_gru_sentiment_forward.3} parent=15 // pred_check
          %p300 = pneg %p119
        $region26: #{bert_gru_sentiment_forward.3} parent=15 // pred_check_branch
          %302 = sbr.rel (%p300) target = $region28
        $region27: #{bert_gru_sentiment_forward.3} parent=15 // pred_region
          %s303 = sand.u32 %s25, 1
          %s304 = scalar_lea.sflag [#allocation7], %s303
          %s305 = sand.u32 %s109, 1
          %s306 = smul.addr %s305, 192
          %s307 = scalar_lea.vmem [#allocation6], %s306
          %s309 = ssub.s32 3072, 3072
          %310 = vsyncadd %s304, %s309
          %s311 = smul.addr %s32, 48
          %s312 = smul.addr %s311, 64
          %s313 = scalar_lea.hbm %s2, %s312
          %s314 = sshll.u32 %s307, 4
          %s315 = int_to_ptr.vmem [resolvable:$true] %s314
          %320 = dma.hbm_to_vmem [thread:$0]  %s313, 3072, %s315, %s304, 192, 192, 12
        $region28: #{bert_gru_sentiment_forward.3} parent=15 // pred_fallthru
          _
        // Predicated region
        $region29: #{bert_gru_sentiment_forward.3} parent=15 // pred_check
          %p321 = pneg %p145
        $region30: #{bert_gru_sentiment_forward.3} parent=15 // pred_check_branch
          %323 = sbr.rel (%p321) target = $region32
        $region31: #{bert_gru_sentiment_forward.3} parent=15 // pred_region
          %s324 = sand.u32 %s25, 1
          %s325 = scalar_lea.sflag [#allocation7], %s324
          %s326 = sand.u32 %s135, 1
          %s327 = smul.addr %s326, 3
          %s328 = scalar_lea.vmem [#allocation8], %s327
          %s330 = ssub.s32 48, 48
          %331 = vsyncadd %s325, %s330
          %s332 = smul.addr %s32, 3
          %s333 = smul.addr %s332, 16
          %s334 = scalar_lea.hbm %s3, %s333
          %s336 = sshll.u32 %s328, 4
          %s337 = int_to_ptr.vmem [resolvable:$true] %s336
          %339 = dma.hbm_to_vmem [thread:$0]  %s334, 48, %s337, %s325
        $region32: #{bert_gru_sentiment_forward.3} parent=15 // pred_fallthru
          _
        // Predicated region
        $region33: #{bert_gru_sentiment_forward.3} parent=15 // pred_check
          %p340 = pneg %p171
        $region34: #{bert_gru_sentiment_forward.3} parent=15 // pred_check_branch
          %342 = sbr.rel (%p340) target = $region36
        $region35: #{bert_gru_sentiment_forward.3} parent=15 // pred_region
          %s343 = sand.u32 %s161, 1
          %s344 = scalar_lea.sflag [#allocation10], %s343
          %s345 = sand.u32 %s161, 1
          %s346 = smul.addr %s345, 3
          %s347 = scalar_lea.vmem [#allocation9], %s346
          %s349 = ssub.s32 48, 48
          %350 = vsyncadd %s344, %s349
          %s351 = smul.addr %s32, 3
          %s352 = smul.addr %s351, 16
          %s353 = scalar_lea.hbm %s4, %s352
          %s355 = sshll.u32 %s347, 4
          %s356 = int_to_ptr.vmem [resolvable:$true] %s355
          %358 = dma.hbm_to_vmem [thread:$0]  %s353, 48, %s356, %s344
        $region36: #{bert_gru_sentiment_forward.3} parent=15 // pred_fallthru
          _
      $region16: #{bert_gru_sentiment_forward.3} parent=5 // pred_fallthru
        _
      %p359 = scmp.le.s32.totalorder 1, %s25
      %p360 = scmp.lt.s32.totalorder %s25, 3
      %p361 = pnand %p359, %p360
      %p362 = pneg %p361
      // Predicated region
      $region37: #{bert_gru_sentiment_forward.3} parent=5 // pred_check
        _
      $region38: #{bert_gru_sentiment_forward.3} parent=5 // pred_check_branch
        %364 = sbr.rel (%p361) target = $region40
      $region39: #{bert_gru_sentiment_forward.3} parent=5 // pred_region
        %s365 = ssub.s32 %s25, 1
        %s366 = sand.u32 %s86, 1
        %s367 = scalar_lea.sflag [#allocation4], %s366
        %s368 = sand.u32 %s86, 1
        %s369 = smul.addr %s368, 192
        %s370 = scalar_lea.vmem [#allocation3], %s369
        // Predicated region
        $region41: #{bert_gru_sentiment_forward.3} parent=39 // pred_check
          %p371 = pneg %p99
        $region42: #{bert_gru_sentiment_forward.3} parent=39 // pred_check_branch
          %373 = sbr.rel (%p371) target = $region44
        $region43: #{bert_gru_sentiment_forward.3} parent=39 // pred_region
          %374 = dma.done %s367, 3072
        $region44: #{bert_gru_sentiment_forward.3} parent=39 // pred_fallthru
          _
        %s375 = sand.u32 %s30, 1
        %s376 = scalar_lea.sflag [#allocation7], %s375
        %s377 = sand.u32 %s112, 1
        %s378 = smul.addr %s377, 192
        %s379 = scalar_lea.vmem [#allocation6], %s378
        // Predicated region
        $region45: #{bert_gru_sentiment_forward.3} parent=39 // pred_check
          %p380 = pneg %p125
        $region46: #{bert_gru_sentiment_forward.3} parent=39 // pred_check_branch
          %382 = sbr.rel (%p380) target = $region48
        $region47: #{bert_gru_sentiment_forward.3} parent=39 // pred_region
          %383 = dma.done %s376, 3072
        $region48: #{bert_gru_sentiment_forward.3} parent=39 // pred_fallthru
          _
        %s384 = sand.u32 %s30, 1
        %s385 = scalar_lea.sflag [#allocation7], %s384
        %s386 = sand.u32 %s138, 1
        %s387 = smul.addr %s386, 3
        %s388 = scalar_lea.vmem [#allocation8], %s387
        // Predicated region
        $region49: #{bert_gru_sentiment_forward.3} parent=39 // pred_check
          %p389 = pneg %p151
        $region50: #{bert_gru_sentiment_forward.3} parent=39 // pred_check_branch
          %391 = sbr.rel (%p389) target = $region52
        $region51: #{bert_gru_sentiment_forward.3} parent=39 // pred_region
          %392 = dma.done %s385, 48
        $region52: #{bert_gru_sentiment_forward.3} parent=39 // pred_fallthru
          _
        %s393 = sand.u32 %s164, 1
        %s394 = scalar_lea.sflag [#allocation10], %s393
        %s395 = sand.u32 %s164, 1
        %s396 = smul.addr %s395, 3
        %s397 = scalar_lea.vmem [#allocation9], %s396
        // Predicated region
        $region53: #{bert_gru_sentiment_forward.3} parent=39 // pred_check
          %p398 = pneg %p177
        $region54: #{bert_gru_sentiment_forward.3} parent=39 // pred_check_branch
          %400 = sbr.rel (%p398) target = $region56
        $region55: #{bert_gru_sentiment_forward.3} parent=39 // pred_region
          %401 = dma.done %s394, 48
        $region56: #{bert_gru_sentiment_forward.3} parent=39 // pred_fallthru
          _
        %s402 = ssub.s32 1, %s34
        %s403 = smul.u32 %s402, %s35
        %s404 = ssub.s32 0, %s35
        %s405 = smul.u32 %s34, %s404
        %s406 = sadd.s32 %s403, %s405
        %s407 = smul.u32 8, %s406
        %p408 = scmp.lt.s32.totalorder %s407, 7
        %s409 = scalar_select %p408, %s407, 7
        %s410 = smul.addr %s409, 8
        %s411 = scalar_lea.vmem %s0, %s410
        %p412 = pneg %p73
        %p413 = pneg %p70
        %s414 = sand.u32 %s86, 1
        %s415 = scalar_lea.sflag [#allocation4], %s414
        %s416 = sand.u32 %s86, 1
        %s417 = smul.addr %s416, 192
        %s418 = scalar_lea.vmem [#allocation3], %s417
        %p419 = pneg %p99
        %p420 = pneg %p96
        %s421 = sand.u32 %s30, 1
        %s422 = scalar_lea.sflag [#allocation7], %s421
        %s423 = sand.u32 %s112, 1
        %s424 = smul.addr %s423, 192
        %s425 = scalar_lea.vmem [#allocation6], %s424
        %p426 = pneg %p125
        %p427 = pneg %p122
        %s428 = sand.u32 %s30, 1
        %s429 = scalar_lea.sflag [#allocation7], %s428
        %s430 = sand.u32 %s138, 1
        %s431 = smul.addr %s430, 3
        %s432 = scalar_lea.vmem [#allocation8], %s431
        %p433 = pneg %p151
        %p434 = pneg %p148
        %s435 = sand.u32 %s164, 1
        %s436 = scalar_lea.sflag [#allocation10], %s435
        %s437 = sand.u32 %s164, 1
        %s438 = smul.addr %s437, 3
        %s439 = scalar_lea.vmem [#allocation9], %s438
        %p440 = pneg %p177
        %p441 = pneg %p174
        %p442 = pneg %p215
        %p443 = pneg %p212
        %s444 = sand.u32 %s202, 1
        %s445 = sand.u32 %s202, 1
        %s446 = smul.addr %s445, 64
        %s447 = scalar_lea.vmem [#allocation11], %s446
        %p448 = pneg %p241
        %p449 = pneg %p238
        %s450 = sand.u32 %s228, 1
        %s451 = scalar_lea.sflag [#allocation5], %s450
        %s452 = sand.u32 %s228, 1
        %s453 = smul.addr %s452, 8
        %s454 = scalar_lea.vmem [#allocation12], %s453
        %s455 = ssub.s32 1, %s34
        %s456 = smul.u32 %s455, %s35
        %s457 = ssub.s32 0, %s35
        %s458 = smul.u32 %s34, %s457
        %s459 = sadd.s32 %s456, %s458
        %s460 = smul.u32 8, %s459
        %p461 = scmp.lt.s32.totalorder %s460, 7
        %s462 = scalar_select %p461, %s460, 7
        %s463 = smul.addr %s462, 8
        %s464 = scalar_lea.vmem %s0, %s463
        %s465 = ssub.s32 1, %s34
        %s466 = smul.u32 %s465, %s35
        %s467 = ssub.s32 0, %s35
        %s468 = smul.u32 %s34, %s467
        %s469 = sadd.s32 %s466, %s468
        %s470 = smul.u32 8, %s469
        %s471 = ssub.s32 1, %s34
        %s472 = smul.u32 %s471, %s35
        %s473 = ssub.s32 0, %s35
        %s474 = smul.u32 %s34, %s473
        %s475 = sadd.s32 %s472, %s474
        %s476 = smul.u32 8, %s475
        %p478 = scmp.eq.s32.totalorder %s35, 0
        // Predicated region
        $region57: #{bert_gru_sentiment_forward.3} parent=39 // pred_check
          %p479 = pneg %p478
        $region58: #{bert_gru_sentiment_forward.3} parent=39 // pred_check_branch
          %481 = sbr.rel (%p479) target = $region60
        $region59: #{bert_gru_sentiment_forward.3} parent=39 // pred_region
          %s482 = smul.u32 %s34, 8
          %s483 = scalar_lea.vmem [#allocation2], %s482
          %484 = vst [vmem:[%s483] sm:$0xff] 0.0
        $region60: #{bert_gru_sentiment_forward.3} parent=39 // pred_fallthru
          _
        %v485 = vld [vmem:[%s370] sm:$0xff]
        %v486 = vld [vmem:[%s370 + $0x8] sm:$0xf]
        %v487 = vld [vmem:[%s370 + $0xc] sm:$0xff]
        %v488 = vld [vmem:[%s370 + $0x14] sm:$0xf]
        %v489 = vld [vmem:[%s370 + $0x18] sm:$0xff]
        %v490 = vld [vmem:[%s370 + $0x20] sm:$0xf]
        %v491 = vld [vmem:[%s370 + $0x24] sm:$0xff]
        %v492 = vld [vmem:[%s370 + $0x2c] sm:$0xf]
        %v493 = vld [vmem:[%s370 + $0x30] sm:$0xff]
        %v494 = vld [vmem:[%s370 + $0x38] sm:$0xf]
        %v495 = vld [vmem:[%s370 + $0x3c] sm:$0xff]
        %v496 = vld [vmem:[%s370 + $0x44] sm:$0xf]
        %v497 = vld [vmem:[%s370 + $0x48] sm:$0xff]
        %v498 = vld [vmem:[%s370 + $0x50] sm:$0xf]
        %v499 = vld [vmem:[%s370 + $0x54] sm:$0xff]
        %v500 = vld [vmem:[%s370 + $0x5c] sm:$0xf]
        %v501 = vld [vmem:[%s370 + $0x60] sm:$0xff]
        %v502 = vld [vmem:[%s370 + $0x68] sm:$0xf]
        %v503 = vld [vmem:[%s370 + $0x6c] sm:$0xff]
        %v504 = vld [vmem:[%s370 + $0x74] sm:$0xf]
        %v505 = vld [vmem:[%s370 + $0x78] sm:$0xff]
        %v506 = vld [vmem:[%s370 + $0x80] sm:$0xf]
        %v507 = vld [vmem:[%s370 + $0x84] sm:$0xff]
        %v508 = vld [vmem:[%s370 + $0x8c] sm:$0xf]
        %v509 = vld [vmem:[%s370 + $0x90] sm:$0xff]
        %v510 = vld [vmem:[%s370 + $0x98] sm:$0xf]
        %v511 = vld [vmem:[%s370 + $0x9c] sm:$0xff]
        %v512 = vld [vmem:[%s370 + $0xa4] sm:$0xf]
        %v513 = vld [vmem:[%s370 + $0xa8] sm:$0xff]
        %v514 = vld [vmem:[%s370 + $0xb0] sm:$0xf]
        %v515 = vld [vmem:[%s370 + $0xb4] sm:$0xff]
        %v516 = vld [vmem:[%s370 + $0xbc] sm:$0xf]
        %v517 = vld [vmem:[%s379] sm:$0xff]
        %v518 = vld [vmem:[%s379 + $0x8] sm:$0xf]
        %v519 = vld [vmem:[%s379 + $0xc] sm:$0xff]
        %v520 = vld [vmem:[%s379 + $0x14] sm:$0xf]
        %v521 = vld [vmem:[%s379 + $0x18] sm:$0xff]
        %v522 = vld [vmem:[%s379 + $0x20] sm:$0xf]
        %v523 = vld [vmem:[%s379 + $0x24] sm:$0xff]
        %v524 = vld [vmem:[%s379 + $0x2c] sm:$0xf]
        %v525 = vld [vmem:[%s379 + $0x30] sm:$0xff]
        %v526 = vld [vmem:[%s379 + $0x38] sm:$0xf]
        %v527 = vld [vmem:[%s379 + $0x3c] sm:$0xff]
        %v528 = vld [vmem:[%s379 + $0x44] sm:$0xf]
        %v529 = vld [vmem:[%s379 + $0x48] sm:$0xff]
        %v530 = vld [vmem:[%s379 + $0x50] sm:$0xf]
        %v531 = vld [vmem:[%s379 + $0x54] sm:$0xff]
        %v532 = vld [vmem:[%s379 + $0x5c] sm:$0xf]
        %v533 = vld [vmem:[%s379 + $0x60] sm:$0xff]
        %v534 = vld [vmem:[%s379 + $0x68] sm:$0xf]
        %v535 = vld [vmem:[%s379 + $0x6c] sm:$0xff]
        %v536 = vld [vmem:[%s379 + $0x74] sm:$0xf]
        %v537 = vld [vmem:[%s379 + $0x78] sm:$0xff]
        %v538 = vld [vmem:[%s379 + $0x80] sm:$0xf]
        %v539 = vld [vmem:[%s379 + $0x84] sm:$0xff]
        %v540 = vld [vmem:[%s379 + $0x8c] sm:$0xf]
        %v541 = vld [vmem:[%s379 + $0x90] sm:$0xff]
        %v542 = vld [vmem:[%s379 + $0x98] sm:$0xf]
        %v543 = vld [vmem:[%s379 + $0x9c] sm:$0xff]
        %v544 = vld [vmem:[%s379 + $0xa4] sm:$0xf]
        %v545 = vld [vmem:[%s379 + $0xa8] sm:$0xff]
        %v546 = vld [vmem:[%s379 + $0xb0] sm:$0xf]
        %v547 = vld [vmem:[%s379 + $0xb4] sm:$0xff]
        %v548 = vld [vmem:[%s379 + $0xbc] sm:$0xf]
        %v549 = vld [vmem:[%s388] sm:$0x7]
        %v550 = vld [vmem:[%s397] sm:$0x7]
        %s551 = smul.u32 %s34, 8
        %s552 = scalar_lea.vmem [#allocation2], %s551
        %v553 = vld [vmem:[%s552] sm:$0xff]
        %p554 = scmp.eq.s32.totalorder %s34, 0
        %s555 = scalar_select %p554, 0, 7
        %s556 = smul.u32 %s555, 8
        %s557 = scalar_lea.vmem %s464, %s556
        %v558 = vld [vmem:[%s557] sm:$0xff]
        %v559 = vpack.c.bf16 %v558, %v558
        %v561 = vlaneseq
        %v562 = vshrl.u32 %v561, 7
        %v563 = vsub.s32 0, %v562
        %v564 = vrot.slane %v549, %v563
        %v565 = vlaneseq
        %v566 = vshrl.u32 %v565, 7
        %v567 = vsub.s32 1, %v566
        %v568 = vrot.slane %v549, %v567
        %v569 = vlaneseq
        %v570 = vshrl.u32 %v569, 7
        %v571 = vsub.s32 2, %v570
        %v572 = vrot.slane %v549, %v571
        %v608 = vunpack.c.l.b16 %v485
        %v609 = vunpack.c.h.b16 %v485
        %v610 = vunpack.c.l.b16 %v486
        %v611 = vunpack.c.l.b16 %v487
        %v612 = vunpack.c.h.b16 %v487
        %v613 = vunpack.c.l.b16 %v488
        %v614 = vunpack.c.l.b16 %v489
        %v615 = vunpack.c.h.b16 %v489
        %v616 = vunpack.c.l.b16 %v490
        %v617 = vunpack.c.l.b16 %v491
        %v618 = vunpack.c.h.b16 %v491
        %v619 = vunpack.c.l.b16 %v492
        %v620 = vunpack.c.l.b16 %v493
        %v621 = vunpack.c.h.b16 %v493
        %v622 = vunpack.c.l.b16 %v494
        %v623 = vunpack.c.l.b16 %v495
        %v624 = vunpack.c.h.b16 %v495
        %v625 = vunpack.c.l.b16 %v496
        %v626 = vunpack.c.l.b16 %v497
        %v627 = vunpack.c.h.b16 %v497
        %v628 = vunpack.c.l.b16 %v498
        %v629 = vunpack.c.l.b16 %v499
        %v630 = vunpack.c.h.b16 %v499
        %v631 = vunpack.c.l.b16 %v500
        %v632 = vunpack.c.l.b16 %v501
        %v633 = vunpack.c.h.b16 %v501
        %v634 = vunpack.c.l.b16 %v502
        %v635 = vunpack.c.l.b16 %v503
        %v636 = vunpack.c.h.b16 %v503
        %v637 = vunpack.c.l.b16 %v504
        %v638 = vunpack.c.l.b16 %v505
        %v639 = vunpack.c.h.b16 %v505
        %v640 = vunpack.c.l.b16 %v506
        %v641 = vunpack.c.l.b16 %v507
        %v642 = vunpack.c.h.b16 %v507
        %v643 = vunpack.c.l.b16 %v508
        %v644 = vunpack.c.l.b16 %v509
        %v645 = vunpack.c.h.b16 %v509
        %v646 = vunpack.c.l.b16 %v510
        %v647 = vunpack.c.l.b16 %v511
        %v648 = vunpack.c.h.b16 %v511
        %v649 = vunpack.c.l.b16 %v512
        %v650 = vunpack.c.l.b16 %v513
        %v651 = vunpack.c.h.b16 %v513
        %v652 = vunpack.c.l.b16 %v514
        %v653 = vunpack.c.l.b16 %v515
        %v654 = vunpack.c.h.b16 %v515
        %v655 = vunpack.c.l.b16 %v516
        %v656 = vpack.c.b16 %v611, %v608
        %v657 = vpack.c.b16 %v612, %v609
        %v658 = vpack.c.b16 %v613, %v610
        %v659 = vpack.c.b16 %v617, %v614
        %v660 = vpack.c.b16 %v618, %v615
        %v661 = vpack.c.b16 %v619, %v616
        %v662 = vpack.c.b16 %v623, %v620
        %v663 = vpack.c.b16 %v624, %v621
        %v664 = vpack.c.b16 %v625, %v622
        %v665 = vpack.c.b16 %v629, %v626
        %v666 = vpack.c.b16 %v630, %v627
        %v667 = vpack.c.b16 %v631, %v628
        %v668 = vpack.c.b16 %v635, %v632
        %v669 = vpack.c.b16 %v636, %v633
        %v670 = vpack.c.b16 %v637, %v634
        %v671 = vpack.c.b16 %v641, %v638
        %v672 = vpack.c.b16 %v642, %v639
        %v673 = vpack.c.b16 %v643, %v640
        %v674 = vpack.c.b16 %v647, %v644
        %v675 = vpack.c.b16 %v648, %v645
        %v676 = vpack.c.b16 %v649, %v646
        %v677 = vpack.c.b16 %v653, %v650
        %v678 = vpack.c.b16 %v654, %v651
        %v679 = vpack.c.b16 %v655, %v652
        %704 = vmatprep.subr.bf16.mxu0 %v678
        %705 = vmatpush1.bf16.msra.mxu0 %v677
        %706 = vmatprep.subr.bf16.mxu0 %v675
        %707 = vmatpush1.bf16.msra.mxu0 %v674
        %708 = vmatprep.subr.bf16.mxu0 %v672
        %709 = vmatpush1.bf16.msra.mxu0 %v671
        %710 = vmatprep.subr.bf16.mxu0 %v669
        %711 = vmatpush1.bf16.msra.mxu0 %v668
        %712 = vmatprep.subr.bf16.mxu0 %v666
        %713 = vmatpush1.bf16.msra.mxu0 %v665
        %714 = vmatprep.subr.bf16.mxu0 %v663
        %715 = vmatpush1.bf16.msra.mxu0 %v662
        %716 = vmatprep.subr.bf16.mxu0 %v660
        %717 = vmatpush1.bf16.msra.mxu0 %v659
        %718 = vmatprep.subr.bf16.mxu0 %v657
        %719 = vmatpush1.bf16.msra.mxu0 %v656
        %720 = vmatprep.subr.bf16.mxu0 0
        %721 = vmatpush2.bf16.msra.mxu0 0
        %722 = vmatprep.subr.bf16.mxu0 0
        %723 = vmatpush2.bf16.msra.mxu0 0
        %724 = vmatprep.subr.bf16.mxu0 0
        %725 = vmatpush2.bf16.msra.mxu0 0
        %726 = vmatprep.subr.bf16.mxu0 0
        %727 = vmatpush2.bf16.msra.mxu0 0
        %728 = vmatprep.subr.bf16.mxu0 0
        %729 = vmatpush2.bf16.msra.mxu0 0
        %730 = vmatprep.subr.bf16.mxu0 0
        %731 = vmatpush2.bf16.msra.mxu0 0
        %732 = vmatprep.subr.bf16.mxu0 0
        %733 = vmatpush2.bf16.msra.mxu0 0
        %734 = vmatprep.subr.bf16.mxu0 0
        %735 = vmatpush2.bf16.msra.mxu0 0
        %736 = vmatprep.mubr.bf16.mxu0 0
        %737 = vmatmul.mubr.bf16.gmra.mxu0 %v559
        %v738 = vpop.f32.mrf.mxu0
        %v739 = vadd.f32 %v564, %v738
        %v740 = vpop.f32.mrf.mxu0
        %v741 = vadd.f32 %v568, %v740
        %v742 = vpop.f32.mrf.mxu0
        %v743 = vpop.f32.mrf.mxu0
        %744 = vdwg.mxu0
        %745 = vmatprep.subr.bf16.mxu0 0
        %746 = vmatpush1.bf16.msra.mxu0 %v679
        %747 = vmatprep.subr.bf16.mxu0 0
        %748 = vmatpush1.bf16.msra.mxu0 %v676
        %749 = vmatprep.subr.bf16.mxu0 0
        %750 = vmatpush1.bf16.msra.mxu0 %v673
        %751 = vmatprep.subr.bf16.mxu0 0
        %752 = vmatpush1.bf16.msra.mxu0 %v670
        %753 = vmatprep.subr.bf16.mxu0 0
        %754 = vmatpush1.bf16.msra.mxu0 %v667
        %755 = vmatprep.subr.bf16.mxu0 0
        %756 = vmatpush1.bf16.msra.mxu0 %v664
        %757 = vmatprep.subr.bf16.mxu0 0
        %758 = vmatpush1.bf16.msra.mxu0 %v661
        %759 = vmatprep.subr.bf16.mxu0 0
        %760 = vmatpush1.bf16.msra.mxu0 %v658
        %761 = vmatprep.subr.bf16.mxu0 0
        %762 = vmatpush2.bf16.msra.mxu0 0
        %763 = vmatprep.subr.bf16.mxu0 0
        %764 = vmatpush2.bf16.msra.mxu0 0
        %765 = vmatprep.subr.bf16.mxu0 0
        %766 = vmatpush2.bf16.msra.mxu0 0
        %767 = vmatprep.subr.bf16.mxu0 0
        %768 = vmatpush2.bf16.msra.mxu0 0
        %769 = vmatprep.subr.bf16.mxu0 0
        %770 = vmatpush2.bf16.msra.mxu0 0
        %771 = vmatprep.subr.bf16.mxu0 0
        %772 = vmatpush2.bf16.msra.mxu0 0
        %773 = vmatprep.subr.bf16.mxu0 0
        %774 = vmatpush2.bf16.msra.mxu0 0
        %775 = vmatprep.subr.bf16.mxu0 0
        %776 = vmatpush2.bf16.msra.mxu0 0
        %777 = vmatprep.mubr.bf16.mxu0 0
        %778 = vmatmul.mubr.bf16.gmra.mxu0 %v559
        %v779 = vpop.f32.mrf.mxu0
        %v780 = vadd.f32 %v572, %v779
        %v781 = vpop.f32.mrf.mxu0
        %v782 = vpop.f32.mrf.mxu0
        %v783 = vpop.f32.mrf.mxu0
        %784 = vdwg.mxu0
        %v785 = vpack.c.bf16 %v553, %v553
        %v787 = vlaneseq
        %v788 = vshrl.u32 %v787, 7
        %v789 = vsub.s32 0, %v788
        %v790 = vrot.slane %v550, %v789
        %v791 = vlaneseq
        %v792 = vshrl.u32 %v791, 7
        %v793 = vsub.s32 1, %v792
        %v794 = vrot.slane %v550, %v793
        %v795 = vlaneseq
        %v796 = vshrl.u32 %v795, 7
        %v797 = vsub.s32 2, %v796
        %v798 = vrot.slane %v550, %v797
        %v834 = vunpack.c.l.b16 %v517
        %v835 = vunpack.c.h.b16 %v517
        %v836 = vunpack.c.l.b16 %v518
        %v837 = vunpack.c.l.b16 %v519
        %v838 = vunpack.c.h.b16 %v519
        %v839 = vunpack.c.l.b16 %v520
        %v840 = vunpack.c.l.b16 %v521
        %v841 = vunpack.c.h.b16 %v521
        %v842 = vunpack.c.l.b16 %v522
        %v843 = vunpack.c.l.b16 %v523
        %v844 = vunpack.c.h.b16 %v523
        %v845 = vunpack.c.l.b16 %v524
        %v846 = vunpack.c.l.b16 %v525
        %v847 = vunpack.c.h.b16 %v525
        %v848 = vunpack.c.l.b16 %v526
        %v849 = vunpack.c.l.b16 %v527
        %v850 = vunpack.c.h.b16 %v527
        %v851 = vunpack.c.l.b16 %v528
        %v852 = vunpack.c.l.b16 %v529
        %v853 = vunpack.c.h.b16 %v529
        %v854 = vunpack.c.l.b16 %v530
        %v855 = vunpack.c.l.b16 %v531
        %v856 = vunpack.c.h.b16 %v531
        %v857 = vunpack.c.l.b16 %v532
        %v858 = vunpack.c.l.b16 %v533
        %v859 = vunpack.c.h.b16 %v533
        %v860 = vunpack.c.l.b16 %v534
        %v861 = vunpack.c.l.b16 %v535
        %v862 = vunpack.c.h.b16 %v535
        %v863 = vunpack.c.l.b16 %v536
        %v864 = vunpack.c.l.b16 %v537
        %v865 = vunpack.c.h.b16 %v537
        %v866 = vunpack.c.l.b16 %v538
        %v867 = vunpack.c.l.b16 %v539
        %v868 = vunpack.c.h.b16 %v539
        %v869 = vunpack.c.l.b16 %v540
        %v870 = vunpack.c.l.b16 %v541
        %v871 = vunpack.c.h.b16 %v541
        %v872 = vunpack.c.l.b16 %v542
        %v873 = vunpack.c.l.b16 %v543
        %v874 = vunpack.c.h.b16 %v543
        %v875 = vunpack.c.l.b16 %v544
        %v876 = vunpack.c.l.b16 %v545
        %v877 = vunpack.c.h.b16 %v545
        %v878 = vunpack.c.l.b16 %v546
        %v879 = vunpack.c.l.b16 %v547
        %v880 = vunpack.c.h.b16 %v547
        %v881 = vunpack.c.l.b16 %v548
        %v882 = vpack.c.b16 %v837, %v834
        %v883 = vpack.c.b16 %v838, %v835
        %v884 = vpack.c.b16 %v839, %v836
        %v885 = vpack.c.b16 %v843, %v840
        %v886 = vpack.c.b16 %v844, %v841
        %v887 = vpack.c.b16 %v845, %v842
        %v888 = vpack.c.b16 %v849, %v846
        %v889 = vpack.c.b16 %v850, %v847
        %v890 = vpack.c.b16 %v851, %v848
        %v891 = vpack.c.b16 %v855, %v852
        %v892 = vpack.c.b16 %v856, %v853
        %v893 = vpack.c.b16 %v857, %v854
        %v894 = vpack.c.b16 %v861, %v858
        %v895 = vpack.c.b16 %v862, %v859
        %v896 = vpack.c.b16 %v863, %v860
        %v897 = vpack.c.b16 %v867, %v864
        %v898 = vpack.c.b16 %v868, %v865
        %v899 = vpack.c.b16 %v869, %v866
        %v900 = vpack.c.b16 %v873, %v870
        %v901 = vpack.c.b16 %v874, %v871
        %v902 = vpack.c.b16 %v875, %v872
        %v903 = vpack.c.b16 %v879, %v876
        %v904 = vpack.c.b16 %v880, %v877
        %v905 = vpack.c.b16 %v881, %v878
        %930 = vmatprep.subr.bf16.mxu0 %v904
        %931 = vmatpush1.bf16.msra.mxu0 %v903
        %932 = vmatprep.subr.bf16.mxu0 %v901
        %933 = vmatpush1.bf16.msra.mxu0 %v900
        %934 = vmatprep.subr.bf16.mxu0 %v898
        %935 = vmatpush1.bf16.msra.mxu0 %v897
        %936 = vmatprep.subr.bf16.mxu0 %v895
        %937 = vmatpush1.bf16.msra.mxu0 %v894
        %938 = vmatprep.subr.bf16.mxu0 %v892
        %939 = vmatpush1.bf16.msra.mxu0 %v891
        %940 = vmatprep.subr.bf16.mxu0 %v889
        %941 = vmatpush1.bf16.msra.mxu0 %v888
        %942 = vmatprep.subr.bf16.mxu0 %v886
        %943 = vmatpush1.bf16.msra.mxu0 %v885
        %944 = vmatprep.subr.bf16.mxu0 %v883
        %945 = vmatpush1.bf16.msra.mxu0 %v882
        %946 = vmatprep.subr.bf16.mxu0 0
        %947 = vmatpush2.bf16.msra.mxu0 0
        %948 = vmatprep.subr.bf16.mxu0 0
        %949 = vmatpush2.bf16.msra.mxu0 0
        %950 = vmatprep.subr.bf16.mxu0 0
        %951 = vmatpush2.bf16.msra.mxu0 0
        %952 = vmatprep.subr.bf16.mxu0 0
        %953 = vmatpush2.bf16.msra.mxu0 0
        %954 = vmatprep.subr.bf16.mxu0 0
        %955 = vmatpush2.bf16.msra.mxu0 0
        %956 = vmatprep.subr.bf16.mxu0 0
        %957 = vmatpush2.bf16.msra.mxu0 0
        %958 = vmatprep.subr.bf16.mxu0 0
        %959 = vmatpush2.bf16.msra.mxu0 0
        %960 = vmatprep.subr.bf16.mxu0 0
        %961 = vmatpush2.bf16.msra.mxu0 0
        %962 = vmatprep.mubr.bf16.mxu0 0
        %963 = vmatmul.mubr.bf16.gmra.mxu0 %v785
        %v964 = vpop.f32.mrf.mxu0
        %v965 = vadd.f32 %v790, %v964
        %v966 = vpop.f32.mrf.mxu0
        %v967 = vadd.f32 %v794, %v966
        %v968 = vpop.f32.mrf.mxu0
        %v969 = vpop.f32.mrf.mxu0
        %970 = vdwg.mxu0
        %971 = vmatprep.subr.bf16.mxu0 0
        %972 = vmatpush1.bf16.msra.mxu0 %v905
        %973 = vmatprep.subr.bf16.mxu0 0
        %974 = vmatpush1.bf16.msra.mxu0 %v902
        %975 = vmatprep.subr.bf16.mxu0 0
        %976 = vmatpush1.bf16.msra.mxu0 %v899
        %977 = vmatprep.subr.bf16.mxu0 0
        %978 = vmatpush1.bf16.msra.mxu0 %v896
        %979 = vmatprep.subr.bf16.mxu0 0
        %980 = vmatpush1.bf16.msra.mxu0 %v893
        %981 = vmatprep.subr.bf16.mxu0 0
        %982 = vmatpush1.bf16.msra.mxu0 %v890
        %983 = vmatprep.subr.bf16.mxu0 0
        %984 = vmatpush1.bf16.msra.mxu0 %v887
        %985 = vmatprep.subr.bf16.mxu0 0
        %986 = vmatpush1.bf16.msra.mxu0 %v884
        %987 = vmatprep.subr.bf16.mxu0 0
        %988 = vmatpush2.bf16.msra.mxu0 0
        %989 = vmatprep.subr.bf16.mxu0 0
        %990 = vmatpush2.bf16.msra.mxu0 0
        %991 = vmatprep.subr.bf16.mxu0 0
        %992 = vmatpush2.bf16.msra.mxu0 0
        %993 = vmatprep.subr.bf16.mxu0 0
        %994 = vmatpush2.bf16.msra.mxu0 0
        %995 = vmatprep.subr.bf16.mxu0 0
        %996 = vmatpush2.bf16.msra.mxu0 0
        %997 = vmatprep.subr.bf16.mxu0 0
        %998 = vmatpush2.bf16.msra.mxu0 0
        %999 = vmatprep.subr.bf16.mxu0 0
        %1000 = vmatpush2.bf16.msra.mxu0 0
        %1001 = vmatprep.subr.bf16.mxu0 0
        %1002 = vmatpush2.bf16.msra.mxu0 0
        %1003 = vmatprep.mubr.bf16.mxu0 0
        %1004 = vmatmul.mubr.bf16.gmra.mxu0 %v785
        %v1005 = vpop.f32.mrf.mxu0
        %v1006 = vadd.f32 %v798, %v1005
        %v1007 = vpop.f32.mrf.mxu0
        %v1008 = vpop.f32.mrf.mxu0
        %v1009 = vpop.f32.mrf.mxu0
        %1010 = vdwg.mxu0
        %v1011 = vadd.f32 %v739, %v965
        %v1012 = vxor.u32 %v1011, 2147483648
        %v1013 = vmul.f32 %v1012, 1.442695
        %v1014 = vpow.pop %v1013
        %v1015 = vadd.f32 %v1014, 1.0
        %v1016 = vrcp.pop %v1015
        %v1017 = vmul.f32 1.0, %v1016
        %v1018 = vadd.f32 %v741, %v967
        %v1019 = vxor.u32 %v1018, 2147483648
        %v1020 = vmul.f32 %v1019, 1.442695
        %v1021 = vpow.pop %v1020
        %v1022 = vadd.f32 %v1021, 1.0
        %v1023 = vrcp.pop %v1022
        %v1024 = vmul.f32 1.0, %v1023
        %v1025 = vmul.f32 %v1017, %v1006
        %v1026 = vadd.f32 %v780, %v1025
        %v1027 = vtanh.pop %v1026
        %v1028 = vsub.f32 1.0, %v1024
        %v1029 = vmul.f32 %v1028, %v1027
        %v1030 = vmul.f32 %v1024, %v553
        %v1031 = vadd.f32 %v1029, %v1030
        %s1032 = scalar_lea.vmem %s447, %s556 [#allocation11]
        %1033 = vst [vmem:[%s1032] sm:$0xff] %v1031
        %s1034 = scalar_select %p554, 1, 6
        %s1035 = smul.u32 %s1034, 8
        %s1036 = scalar_lea.vmem %s464, %s1035
        %v1037 = vld [vmem:[%s1036] sm:$0xff]
        %v1038 = vpack.c.bf16 %v1037, %v1037
        %1039 = vmatprep.subr.bf16.mxu0 %v678
        %1040 = vmatpush1.bf16.msra.mxu0 %v677
        %1041 = vmatprep.subr.bf16.mxu0 %v675
        %1042 = vmatpush1.bf16.msra.mxu0 %v674
        %1043 = vmatprep.subr.bf16.mxu0 %v672
        %1044 = vmatpush1.bf16.msra.mxu0 %v671
        %1045 = vmatprep.subr.bf16.mxu0 %v669
        %1046 = vmatpush1.bf16.msra.mxu0 %v668
        %1047 = vmatprep.subr.bf16.mxu0 %v666
        %1048 = vmatpush1.bf16.msra.mxu0 %v665
        %1049 = vmatprep.subr.bf16.mxu0 %v663
        %1050 = vmatpush1.bf16.msra.mxu0 %v662
        %1051 = vmatprep.subr.bf16.mxu0 %v660
        %1052 = vmatpush1.bf16.msra.mxu0 %v659
        %1053 = vmatprep.subr.bf16.mxu0 %v657
        %1054 = vmatpush1.bf16.msra.mxu0 %v656
        %1055 = vmatprep.subr.bf16.mxu0 0
        %1056 = vmatpush2.bf16.msra.mxu0 0
        %1057 = vmatprep.subr.bf16.mxu0 0
        %1058 = vmatpush2.bf16.msra.mxu0 0
        %1059 = vmatprep.subr.bf16.mxu0 0
        %1060 = vmatpush2.bf16.msra.mxu0 0
        %1061 = vmatprep.subr.bf16.mxu0 0
        %1062 = vmatpush2.bf16.msra.mxu0 0
        %1063 = vmatprep.subr.bf16.mxu0 0
        %1064 = vmatpush2.bf16.msra.mxu0 0
        %1065 = vmatprep.subr.bf16.mxu0 0
        %1066 = vmatpush2.bf16.msra.mxu0 0
        %1067 = vmatprep.subr.bf16.mxu0 0
        %1068 = vmatpush2.bf16.msra.mxu0 0
        %1069 = vmatprep.subr.bf16.mxu0 0
        %1070 = vmatpush2.bf16.msra.mxu0 0
        %1071 = vmatprep.mubr.bf16.mxu0 0
        %1072 = vmatmul.mubr.bf16.gmra.mxu0 %v1038
        %v1073 = vpop.f32.mrf.mxu0
        %v1074 = vadd.f32 %v564, %v1073
        %v1075 = vpop.f32.mrf.mxu0
        %v1076 = vadd.f32 %v568, %v1075
        %v1077 = vpop.f32.mrf.mxu0
        %v1078 = vpop.f32.mrf.mxu0
        %1079 = vdwg.mxu0
        %1080 = vmatprep.subr.bf16.mxu0 0
        %1081 = vmatpush1.bf16.msra.mxu0 %v679
        %1082 = vmatprep.subr.bf16.mxu0 0
        %1083 = vmatpush1.bf16.msra.mxu0 %v676
        %1084 = vmatprep.subr.bf16.mxu0 0
        %1085 = vmatpush1.bf16.msra.mxu0 %v673
        %1086 = vmatprep.subr.bf16.mxu0 0
        %1087 = vmatpush1.bf16.msra.mxu0 %v670
        %1088 = vmatprep.subr.bf16.mxu0 0
        %1089 = vmatpush1.bf16.msra.mxu0 %v667
        %1090 = vmatprep.subr.bf16.mxu0 0
        %1091 = vmatpush1.bf16.msra.mxu0 %v664
        %1092 = vmatprep.subr.bf16.mxu0 0
        %1093 = vmatpush1.bf16.msra.mxu0 %v661
        %1094 = vmatprep.subr.bf16.mxu0 0
        %1095 = vmatpush1.bf16.msra.mxu0 %v658
        %1096 = vmatprep.subr.bf16.mxu0 0
        %1097 = vmatpush2.bf16.msra.mxu0 0
        %1098 = vmatprep.subr.bf16.mxu0 0
        %1099 = vmatpush2.bf16.msra.mxu0 0
        %1100 = vmatprep.subr.bf16.mxu0 0
        %1101 = vmatpush2.bf16.msra.mxu0 0
        %1102 = vmatprep.subr.bf16.mxu0 0
        %1103 = vmatpush2.bf16.msra.mxu0 0
        %1104 = vmatprep.subr.bf16.mxu0 0
        %1105 = vmatpush2.bf16.msra.mxu0 0
        %1106 = vmatprep.subr.bf16.mxu0 0
        %1107 = vmatpush2.bf16.msra.mxu0 0
        %1108 = vmatprep.subr.bf16.mxu0 0
        %1109 = vmatpush2.bf16.msra.mxu0 0
        %1110 = vmatprep.subr.bf16.mxu0 0
        %1111 = vmatpush2.bf16.msra.mxu0 0
        %1112 = vmatprep.mubr.bf16.mxu0 0
        %1113 = vmatmul.mubr.bf16.gmra.mxu0 %v1038
        %v1114 = vpop.f32.mrf.mxu0
        %v1115 = vadd.f32 %v572, %v1114
        %v1116 = vpop.f32.mrf.mxu0
        %v1117 = vpop.f32.mrf.mxu0
        %v1118 = vpop.f32.mrf.mxu0
        %1119 = vdwg.mxu0
        %v1120 = vpack.c.bf16 %v1031, %v1031
        %1121 = vmatprep.subr.bf16.mxu0 %v904
        %1122 = vmatpush1.bf16.msra.mxu0 %v903
        %1123 = vmatprep.subr.bf16.mxu0 %v901
        %1124 = vmatpush1.bf16.msra.mxu0 %v900
        %1125 = vmatprep.subr.bf16.mxu0 %v898
        %1126 = vmatpush1.bf16.msra.mxu0 %v897
        %1127 = vmatprep.subr.bf16.mxu0 %v895
        %1128 = vmatpush1.bf16.msra.mxu0 %v894
        %1129 = vmatprep.subr.bf16.mxu0 %v892
        %1130 = vmatpush1.bf16.msra.mxu0 %v891
        %1131 = vmatprep.subr.bf16.mxu0 %v889
        %1132 = vmatpush1.bf16.msra.mxu0 %v888
        %1133 = vmatprep.subr.bf16.mxu0 %v886
        %1134 = vmatpush1.bf16.msra.mxu0 %v885
        %1135 = vmatprep.subr.bf16.mxu0 %v883
        %1136 = vmatpush1.bf16.msra.mxu0 %v882
        %1137 = vmatprep.subr.bf16.mxu0 0
        %1138 = vmatpush2.bf16.msra.mxu0 0
        %1139 = vmatprep.subr.bf16.mxu0 0
        %1140 = vmatpush2.bf16.msra.mxu0 0
        %1141 = vmatprep.subr.bf16.mxu0 0
        %1142 = vmatpush2.bf16.msra.mxu0 0
        %1143 = vmatprep.subr.bf16.mxu0 0
        %1144 = vmatpush2.bf16.msra.mxu0 0
        %1145 = vmatprep.subr.bf16.mxu0 0
        %1146 = vmatpush2.bf16.msra.mxu0 0
        %1147 = vmatprep.subr.bf16.mxu0 0
        %1148 = vmatpush2.bf16.msra.mxu0 0
        %1149 = vmatprep.subr.bf16.mxu0 0
        %1150 = vmatpush2.bf16.msra.mxu0 0
        %1151 = vmatprep.subr.bf16.mxu0 0
        %1152 = vmatpush2.bf16.msra.mxu0 0
        %1153 = vmatprep.mubr.bf16.mxu0 0
        %1154 = vmatmul.mubr.bf16.gmra.mxu0 %v1120
        %v1155 = vpop.f32.mrf.mxu0
        %v1156 = vadd.f32 %v790, %v1155
        %v1157 = vpop.f32.mrf.mxu0
        %v1158 = vadd.f32 %v794, %v1157
        %v1159 = vpop.f32.mrf.mxu0
        %v1160 = vpop.f32.mrf.mxu0
        %1161 = vdwg.mxu0
        %1162 = vmatprep.subr.bf16.mxu0 0
        %1163 = vmatpush1.bf16.msra.mxu0 %v905
        %1164 = vmatprep.subr.bf16.mxu0 0
        %1165 = vmatpush1.bf16.msra.mxu0 %v902
        %1166 = vmatprep.subr.bf16.mxu0 0
        %1167 = vmatpush1.bf16.msra.mxu0 %v899
        %1168 = vmatprep.subr.bf16.mxu0 0
        %1169 = vmatpush1.bf16.msra.mxu0 %v896
        %1170 = vmatprep.subr.bf16.mxu0 0
        %1171 = vmatpush1.bf16.msra.mxu0 %v893
        %1172 = vmatprep.subr.bf16.mxu0 0
        %1173 = vmatpush1.bf16.msra.mxu0 %v890
        %1174 = vmatprep.subr.bf16.mxu0 0
        %1175 = vmatpush1.bf16.msra.mxu0 %v887
        %1176 = vmatprep.subr.bf16.mxu0 0
        %1177 = vmatpush1.bf16.msra.mxu0 %v884
        %1178 = vmatprep.subr.bf16.mxu0 0
        %1179 = vmatpush2.bf16.msra.mxu0 0
        %1180 = vmatprep.subr.bf16.mxu0 0
        %1181 = vmatpush2.bf16.msra.mxu0 0
        %1182 = vmatprep.subr.bf16.mxu0 0
        %1183 = vmatpush2.bf16.msra.mxu0 0
        %1184 = vmatprep.subr.bf16.mxu0 0
        %1185 = vmatpush2.bf16.msra.mxu0 0
        %1186 = vmatprep.subr.bf16.mxu0 0
        %1187 = vmatpush2.bf16.msra.mxu0 0
        %1188 = vmatprep.subr.bf16.mxu0 0
        %1189 = vmatpush2.bf16.msra.mxu0 0
        %1190 = vmatprep.subr.bf16.mxu0 0
        %1191 = vmatpush2.bf16.msra.mxu0 0
        %1192 = vmatprep.subr.bf16.mxu0 0
        %1193 = vmatpush2.bf16.msra.mxu0 0
        %1194 = vmatprep.mubr.bf16.mxu0 0
        %1195 = vmatmul.mubr.bf16.gmra.mxu0 %v1120
        %v1196 = vpop.f32.mrf.mxu0
        %v1197 = vadd.f32 %v798, %v1196
        %v1198 = vpop.f32.mrf.mxu0
        %v1199 = vpop.f32.mrf.mxu0
        %v1200 = vpop.f32.mrf.mxu0
        %1201 = vdwg.mxu0
        %v1202 = vadd.f32 %v1074, %v1156
        %v1203 = vxor.u32 %v1202, 2147483648
        %v1204 = vmul.f32 %v1203, 1.442695
        %v1205 = vpow.pop %v1204
        %v1206 = vadd.f32 %v1205, 1.0
        %v1207 = vrcp.pop %v1206
        %v1208 = vmul.f32 1.0, %v1207
        %v1209 = vadd.f32 %v1076, %v1158
        %v1210 = vxor.u32 %v1209, 2147483648
        %v1211 = vmul.f32 %v1210, 1.442695
        %v1212 = vpow.pop %v1211
        %v1213 = vadd.f32 %v1212, 1.0
        %v1214 = vrcp.pop %v1213
        %v1215 = vmul.f32 1.0, %v1214
        %v1216 = vmul.f32 %v1208, %v1197
        %v1217 = vadd.f32 %v1115, %v1216
        %v1218 = vtanh.pop %v1217
        %v1219 = vsub.f32 1.0, %v1215
        %v1220 = vmul.f32 %v1219, %v1218
        %v1221 = vmul.f32 %v1215, %v1031
        %v1222 = vadd.f32 %v1220, %v1221
        %s1223 = scalar_lea.vmem %s447, %s1035 [#allocation11]
        %1224 = vst [vmem:[%s1223] sm:$0xff] %v1222
        %s1225 = scalar_select %p554, 2, 5
        %s1226 = smul.u32 %s1225, 8
        %s1227 = scalar_lea.vmem %s464, %s1226
        %v1228 = vld [vmem:[%s1227] sm:$0xff]
        %v1229 = vpack.c.bf16 %v1228, %v1228
        %1230 = vmatprep.subr.bf16.mxu0 %v678
        %1231 = vmatpush1.bf16.msra.mxu0 %v677
        %1232 = vmatprep.subr.bf16.mxu0 %v675
        %1233 = vmatpush1.bf16.msra.mxu0 %v674
        %1234 = vmatprep.subr.bf16.mxu0 %v672
        %1235 = vmatpush1.bf16.msra.mxu0 %v671
        %1236 = vmatprep.subr.bf16.mxu0 %v669
        %1237 = vmatpush1.bf16.msra.mxu0 %v668
        %1238 = vmatprep.subr.bf16.mxu0 %v666
        %1239 = vmatpush1.bf16.msra.mxu0 %v665
        %1240 = vmatprep.subr.bf16.mxu0 %v663
        %1241 = vmatpush1.bf16.msra.mxu0 %v662
        %1242 = vmatprep.subr.bf16.mxu0 %v660
        %1243 = vmatpush1.bf16.msra.mxu0 %v659
        %1244 = vmatprep.subr.bf16.mxu0 %v657
        %1245 = vmatpush1.bf16.msra.mxu0 %v656
        %1246 = vmatprep.subr.bf16.mxu0 0
        %1247 = vmatpush2.bf16.msra.mxu0 0
        %1248 = vmatprep.subr.bf16.mxu0 0
        %1249 = vmatpush2.bf16.msra.mxu0 0
        %1250 = vmatprep.subr.bf16.mxu0 0
        %1251 = vmatpush2.bf16.msra.mxu0 0
        %1252 = vmatprep.subr.bf16.mxu0 0
        %1253 = vmatpush2.bf16.msra.mxu0 0
        %1254 = vmatprep.subr.bf16.mxu0 0
        %1255 = vmatpush2.bf16.msra.mxu0 0
        %1256 = vmatprep.subr.bf16.mxu0 0
        %1257 = vmatpush2.bf16.msra.mxu0 0
        %1258 = vmatprep.subr.bf16.mxu0 0
        %1259 = vmatpush2.bf16.msra.mxu0 0
        %1260 = vmatprep.subr.bf16.mxu0 0
        %1261 = vmatpush2.bf16.msra.mxu0 0
        %1262 = vmatprep.mubr.bf16.mxu0 0
        %1263 = vmatmul.mubr.bf16.gmra.mxu0 %v1229
        %v1264 = vpop.f32.mrf.mxu0
        %v1265 = vadd.f32 %v564, %v1264
        %v1266 = vpop.f32.mrf.mxu0
        %v1267 = vadd.f32 %v568, %v1266
        %v1268 = vpop.f32.mrf.mxu0
        %v1269 = vpop.f32.mrf.mxu0
        %1270 = vdwg.mxu0
        %1271 = vmatprep.subr.bf16.mxu0 0
        %1272 = vmatpush1.bf16.msra.mxu0 %v679
        %1273 = vmatprep.subr.bf16.mxu0 0
        %1274 = vmatpush1.bf16.msra.mxu0 %v676
        %1275 = vmatprep.subr.bf16.mxu0 0
        %1276 = vmatpush1.bf16.msra.mxu0 %v673
        %1277 = vmatprep.subr.bf16.mxu0 0
        %1278 = vmatpush1.bf16.msra.mxu0 %v670
        %1279 = vmatprep.subr.bf16.mxu0 0
        %1280 = vmatpush1.bf16.msra.mxu0 %v667
        %1281 = vmatprep.subr.bf16.mxu0 0
        %1282 = vmatpush1.bf16.msra.mxu0 %v664
        %1283 = vmatprep.subr.bf16.mxu0 0
        %1284 = vmatpush1.bf16.msra.mxu0 %v661
        %1285 = vmatprep.subr.bf16.mxu0 0
        %1286 = vmatpush1.bf16.msra.mxu0 %v658
        %1287 = vmatprep.subr.bf16.mxu0 0
        %1288 = vmatpush2.bf16.msra.mxu0 0
        %1289 = vmatprep.subr.bf16.mxu0 0
        %1290 = vmatpush2.bf16.msra.mxu0 0
        %1291 = vmatprep.subr.bf16.mxu0 0
        %1292 = vmatpush2.bf16.msra.mxu0 0
        %1293 = vmatprep.subr.bf16.mxu0 0
        %1294 = vmatpush2.bf16.msra.mxu0 0
        %1295 = vmatprep.subr.bf16.mxu0 0
        %1296 = vmatpush2.bf16.msra.mxu0 0
        %1297 = vmatprep.subr.bf16.mxu0 0
        %1298 = vmatpush2.bf16.msra.mxu0 0
        %1299 = vmatprep.subr.bf16.mxu0 0
        %1300 = vmatpush2.bf16.msra.mxu0 0
        %1301 = vmatprep.subr.bf16.mxu0 0
        %1302 = vmatpush2.bf16.msra.mxu0 0
        %1303 = vmatprep.mubr.bf16.mxu0 0
        %1304 = vmatmul.mubr.bf16.gmra.mxu0 %v1229
        %v1305 = vpop.f32.mrf.mxu0
        %v1306 = vadd.f32 %v572, %v1305
        %v1307 = vpop.f32.mrf.mxu0
        %v1308 = vpop.f32.mrf.mxu0
        %v1309 = vpop.f32.mrf.mxu0
        %1310 = vdwg.mxu0
        %v1311 = vpack.c.bf16 %v1222, %v1222
        %1312 = vmatprep.subr.bf16.mxu0 %v904
        %1313 = vmatpush1.bf16.msra.mxu0 %v903
        %1314 = vmatprep.subr.bf16.mxu0 %v901
        %1315 = vmatpush1.bf16.msra.mxu0 %v900
        %1316 = vmatprep.subr.bf16.mxu0 %v898
        %1317 = vmatpush1.bf16.msra.mxu0 %v897
        %1318 = vmatprep.subr.bf16.mxu0 %v895
        %1319 = vmatpush1.bf16.msra.mxu0 %v894
        %1320 = vmatprep.subr.bf16.mxu0 %v892
        %1321 = vmatpush1.bf16.msra.mxu0 %v891
        %1322 = vmatprep.subr.bf16.mxu0 %v889
        %1323 = vmatpush1.bf16.msra.mxu0 %v888
        %1324 = vmatprep.subr.bf16.mxu0 %v886
        %1325 = vmatpush1.bf16.msra.mxu0 %v885
        %1326 = vmatprep.subr.bf16.mxu0 %v883
        %1327 = vmatpush1.bf16.msra.mxu0 %v882
        %1328 = vmatprep.subr.bf16.mxu0 0
        %1329 = vmatpush2.bf16.msra.mxu0 0
        %1330 = vmatprep.subr.bf16.mxu0 0
        %1331 = vmatpush2.bf16.msra.mxu0 0
        %1332 = vmatprep.subr.bf16.mxu0 0
        %1333 = vmatpush2.bf16.msra.mxu0 0
        %1334 = vmatprep.subr.bf16.mxu0 0
        %1335 = vmatpush2.bf16.msra.mxu0 0
        %1336 = vmatprep.subr.bf16.mxu0 0
        %1337 = vmatpush2.bf16.msra.mxu0 0
        %1338 = vmatprep.subr.bf16.mxu0 0
        %1339 = vmatpush2.bf16.msra.mxu0 0
        %1340 = vmatprep.subr.bf16.mxu0 0
        %1341 = vmatpush2.bf16.msra.mxu0 0
        %1342 = vmatprep.subr.bf16.mxu0 0
        %1343 = vmatpush2.bf16.msra.mxu0 0
        %1344 = vmatprep.mubr.bf16.mxu0 0
        %1345 = vmatmul.mubr.bf16.gmra.mxu0 %v1311
        %v1346 = vpop.f32.mrf.mxu0
        %v1347 = vadd.f32 %v790, %v1346
        %v1348 = vpop.f32.mrf.mxu0
        %v1349 = vadd.f32 %v794, %v1348
        %v1350 = vpop.f32.mrf.mxu0
        %v1351 = vpop.f32.mrf.mxu0
        %1352 = vdwg.mxu0
        %1353 = vmatprep.subr.bf16.mxu0 0
        %1354 = vmatpush1.bf16.msra.mxu0 %v905
        %1355 = vmatprep.subr.bf16.mxu0 0
        %1356 = vmatpush1.bf16.msra.mxu0 %v902
        %1357 = vmatprep.subr.bf16.mxu0 0
        %1358 = vmatpush1.bf16.msra.mxu0 %v899
        %1359 = vmatprep.subr.bf16.mxu0 0
        %1360 = vmatpush1.bf16.msra.mxu0 %v896
        %1361 = vmatprep.subr.bf16.mxu0 0
        %1362 = vmatpush1.bf16.msra.mxu0 %v893
        %1363 = vmatprep.subr.bf16.mxu0 0
        %1364 = vmatpush1.bf16.msra.mxu0 %v890
        %1365 = vmatprep.subr.bf16.mxu0 0
        %1366 = vmatpush1.bf16.msra.mxu0 %v887
        %1367 = vmatprep.subr.bf16.mxu0 0
        %1368 = vmatpush1.bf16.msra.mxu0 %v884
        %1369 = vmatprep.subr.bf16.mxu0 0
        %1370 = vmatpush2.bf16.msra.mxu0 0
        %1371 = vmatprep.subr.bf16.mxu0 0
        %1372 = vmatpush2.bf16.msra.mxu0 0
        %1373 = vmatprep.subr.bf16.mxu0 0
        %1374 = vmatpush2.bf16.msra.mxu0 0
        %1375 = vmatprep.subr.bf16.mxu0 0
        %1376 = vmatpush2.bf16.msra.mxu0 0
        %1377 = vmatprep.subr.bf16.mxu0 0
        %1378 = vmatpush2.bf16.msra.mxu0 0
        %1379 = vmatprep.subr.bf16.mxu0 0
        %1380 = vmatpush2.bf16.msra.mxu0 0
        %1381 = vmatprep.subr.bf16.mxu0 0
        %1382 = vmatpush2.bf16.msra.mxu0 0
        %1383 = vmatprep.subr.bf16.mxu0 0
        %1384 = vmatpush2.bf16.msra.mxu0 0
        %1385 = vmatprep.mubr.bf16.mxu0 0
        %1386 = vmatmul.mubr.bf16.gmra.mxu0 %v1311
        %v1387 = vpop.f32.mrf.mxu0
        %v1388 = vadd.f32 %v798, %v1387
        %v1389 = vpop.f32.mrf.mxu0
        %v1390 = vpop.f32.mrf.mxu0
        %v1391 = vpop.f32.mrf.mxu0
        %1392 = vdwg.mxu0
        %v1393 = vadd.f32 %v1265, %v1347
        %v1394 = vxor.u32 %v1393, 2147483648
        %v1395 = vmul.f32 %v1394, 1.442695
        %v1396 = vpow.pop %v1395
        %v1397 = vadd.f32 %v1396, 1.0
        %v1398 = vrcp.pop %v1397
        %v1399 = vmul.f32 1.0, %v1398
        %v1400 = vadd.f32 %v1267, %v1349
        %v1401 = vxor.u32 %v1400, 2147483648
        %v1402 = vmul.f32 %v1401, 1.442695
        %v1403 = vpow.pop %v1402
        %v1404 = vadd.f32 %v1403, 1.0
        %v1405 = vrcp.pop %v1404
        %v1406 = vmul.f32 1.0, %v1405
        %v1407 = vmul.f32 %v1399, %v1388
        %v1408 = vadd.f32 %v1306, %v1407
        %v1409 = vtanh.pop %v1408
        %v1410 = vsub.f32 1.0, %v1406
        %v1411 = vmul.f32 %v1410, %v1409
        %v1412 = vmul.f32 %v1406, %v1222
        %v1413 = vadd.f32 %v1411, %v1412
        %s1414 = scalar_lea.vmem %s447, %s1226 [#allocation11]
        %1415 = vst [vmem:[%s1414] sm:$0xff] %v1413
        %s1416 = scalar_select %p554, 3, 4
        %s1417 = smul.u32 %s1416, 8
        %s1418 = scalar_lea.vmem %s464, %s1417
        %v1419 = vld [vmem:[%s1418] sm:$0xff]
        %v1420 = vpack.c.bf16 %v1419, %v1419
        %1421 = vmatprep.subr.bf16.mxu0 %v678
        %1422 = vmatpush1.bf16.msra.mxu0 %v677
        %1423 = vmatprep.subr.bf16.mxu0 %v675
        %1424 = vmatpush1.bf16.msra.mxu0 %v674
        %1425 = vmatprep.subr.bf16.mxu0 %v672
        %1426 = vmatpush1.bf16.msra.mxu0 %v671
        %1427 = vmatprep.subr.bf16.mxu0 %v669
        %1428 = vmatpush1.bf16.msra.mxu0 %v668
        %1429 = vmatprep.subr.bf16.mxu0 %v666
        %1430 = vmatpush1.bf16.msra.mxu0 %v665
        %1431 = vmatprep.subr.bf16.mxu0 %v663
        %1432 = vmatpush1.bf16.msra.mxu0 %v662
        %1433 = vmatprep.subr.bf16.mxu0 %v660
        %1434 = vmatpush1.bf16.msra.mxu0 %v659
        %1435 = vmatprep.subr.bf16.mxu0 %v657
        %1436 = vmatpush1.bf16.msra.mxu0 %v656
        %1437 = vmatprep.subr.bf16.mxu0 0
        %1438 = vmatpush2.bf16.msra.mxu0 0
        %1439 = vmatprep.subr.bf16.mxu0 0
        %1440 = vmatpush2.bf16.msra.mxu0 0
        %1441 = vmatprep.subr.bf16.mxu0 0
        %1442 = vmatpush2.bf16.msra.mxu0 0
        %1443 = vmatprep.subr.bf16.mxu0 0
        %1444 = vmatpush2.bf16.msra.mxu0 0
        %1445 = vmatprep.subr.bf16.mxu0 0
        %1446 = vmatpush2.bf16.msra.mxu0 0
        %1447 = vmatprep.subr.bf16.mxu0 0
        %1448 = vmatpush2.bf16.msra.mxu0 0
        %1449 = vmatprep.subr.bf16.mxu0 0
        %1450 = vmatpush2.bf16.msra.mxu0 0
        %1451 = vmatprep.subr.bf16.mxu0 0
        %1452 = vmatpush2.bf16.msra.mxu0 0
        %1453 = vmatprep.mubr.bf16.mxu0 0
        %1454 = vmatmul.mubr.bf16.gmra.mxu0 %v1420
        %v1455 = vpop.f32.mrf.mxu0
        %v1456 = vadd.f32 %v564, %v1455
        %v1457 = vpop.f32.mrf.mxu0
        %v1458 = vadd.f32 %v568, %v1457
        %v1459 = vpop.f32.mrf.mxu0
        %v1460 = vpop.f32.mrf.mxu0
        %1461 = vdwg.mxu0
        %1462 = vmatprep.subr.bf16.mxu0 0
        %1463 = vmatpush1.bf16.msra.mxu0 %v679
        %1464 = vmatprep.subr.bf16.mxu0 0
        %1465 = vmatpush1.bf16.msra.mxu0 %v676
        %1466 = vmatprep.subr.bf16.mxu0 0
        %1467 = vmatpush1.bf16.msra.mxu0 %v673
        %1468 = vmatprep.subr.bf16.mxu0 0
        %1469 = vmatpush1.bf16.msra.mxu0 %v670
        %1470 = vmatprep.subr.bf16.mxu0 0
        %1471 = vmatpush1.bf16.msra.mxu0 %v667
        %1472 = vmatprep.subr.bf16.mxu0 0
        %1473 = vmatpush1.bf16.msra.mxu0 %v664
        %1474 = vmatprep.subr.bf16.mxu0 0
        %1475 = vmatpush1.bf16.msra.mxu0 %v661
        %1476 = vmatprep.subr.bf16.mxu0 0
        %1477 = vmatpush1.bf16.msra.mxu0 %v658
        %1478 = vmatprep.subr.bf16.mxu0 0
        %1479 = vmatpush2.bf16.msra.mxu0 0
        %1480 = vmatprep.subr.bf16.mxu0 0
        %1481 = vmatpush2.bf16.msra.mxu0 0
        %1482 = vmatprep.subr.bf16.mxu0 0
        %1483 = vmatpush2.bf16.msra.mxu0 0
        %1484 = vmatprep.subr.bf16.mxu0 0
        %1485 = vmatpush2.bf16.msra.mxu0 0
        %1486 = vmatprep.subr.bf16.mxu0 0
        %1487 = vmatpush2.bf16.msra.mxu0 0
        %1488 = vmatprep.subr.bf16.mxu0 0
        %1489 = vmatpush2.bf16.msra.mxu0 0
        %1490 = vmatprep.subr.bf16.mxu0 0
        %1491 = vmatpush2.bf16.msra.mxu0 0
        %1492 = vmatprep.subr.bf16.mxu0 0
        %1493 = vmatpush2.bf16.msra.mxu0 0
        %1494 = vmatprep.mubr.bf16.mxu0 0
        %1495 = vmatmul.mubr.bf16.gmra.mxu0 %v1420
        %v1496 = vpop.f32.mrf.mxu0
        %v1497 = vadd.f32 %v572, %v1496
        %v1498 = vpop.f32.mrf.mxu0
        %v1499 = vpop.f32.mrf.mxu0
        %v1500 = vpop.f32.mrf.mxu0
        %1501 = vdwg.mxu0
        %v1502 = vpack.c.bf16 %v1413, %v1413
        %1503 = vmatprep.subr.bf16.mxu0 %v904
        %1504 = vmatpush1.bf16.msra.mxu0 %v903
        %1505 = vmatprep.subr.bf16.mxu0 %v901
        %1506 = vmatpush1.bf16.msra.mxu0 %v900
        %1507 = vmatprep.subr.bf16.mxu0 %v898
        %1508 = vmatpush1.bf16.msra.mxu0 %v897
        %1509 = vmatprep.subr.bf16.mxu0 %v895
        %1510 = vmatpush1.bf16.msra.mxu0 %v894
        %1511 = vmatprep.subr.bf16.mxu0 %v892
        %1512 = vmatpush1.bf16.msra.mxu0 %v891
        %1513 = vmatprep.subr.bf16.mxu0 %v889
        %1514 = vmatpush1.bf16.msra.mxu0 %v888
        %1515 = vmatprep.subr.bf16.mxu0 %v886
        %1516 = vmatpush1.bf16.msra.mxu0 %v885
        %1517 = vmatprep.subr.bf16.mxu0 %v883
        %1518 = vmatpush1.bf16.msra.mxu0 %v882
        %1519 = vmatprep.subr.bf16.mxu0 0
        %1520 = vmatpush2.bf16.msra.mxu0 0
        %1521 = vmatprep.subr.bf16.mxu0 0
        %1522 = vmatpush2.bf16.msra.mxu0 0
        %1523 = vmatprep.subr.bf16.mxu0 0
        %1524 = vmatpush2.bf16.msra.mxu0 0
        %1525 = vmatprep.subr.bf16.mxu0 0
        %1526 = vmatpush2.bf16.msra.mxu0 0
        %1527 = vmatprep.subr.bf16.mxu0 0
        %1528 = vmatpush2.bf16.msra.mxu0 0
        %1529 = vmatprep.subr.bf16.mxu0 0
        %1530 = vmatpush2.bf16.msra.mxu0 0
        %1531 = vmatprep.subr.bf16.mxu0 0
        %1532 = vmatpush2.bf16.msra.mxu0 0
        %1533 = vmatprep.subr.bf16.mxu0 0
        %1534 = vmatpush2.bf16.msra.mxu0 0
        %1535 = vmatprep.mubr.bf16.mxu0 0
        %1536 = vmatmul.mubr.bf16.gmra.mxu0 %v1502
        %v1537 = vpop.f32.mrf.mxu0
        %v1538 = vadd.f32 %v790, %v1537
        %v1539 = vpop.f32.mrf.mxu0
        %v1540 = vadd.f32 %v794, %v1539
        %v1541 = vpop.f32.mrf.mxu0
        %v1542 = vpop.f32.mrf.mxu0
        %1543 = vdwg.mxu0
        %1544 = vmatprep.subr.bf16.mxu0 0
        %1545 = vmatpush1.bf16.msra.mxu0 %v905
        %1546 = vmatprep.subr.bf16.mxu0 0
        %1547 = vmatpush1.bf16.msra.mxu0 %v902
        %1548 = vmatprep.subr.bf16.mxu0 0
        %1549 = vmatpush1.bf16.msra.mxu0 %v899
        %1550 = vmatprep.subr.bf16.mxu0 0
        %1551 = vmatpush1.bf16.msra.mxu0 %v896
        %1552 = vmatprep.subr.bf16.mxu0 0
        %1553 = vmatpush1.bf16.msra.mxu0 %v893
        %1554 = vmatprep.subr.bf16.mxu0 0
        %1555 = vmatpush1.bf16.msra.mxu0 %v890
        %1556 = vmatprep.subr.bf16.mxu0 0
        %1557 = vmatpush1.bf16.msra.mxu0 %v887
        %1558 = vmatprep.subr.bf16.mxu0 0
        %1559 = vmatpush1.bf16.msra.mxu0 %v884
        %1560 = vmatprep.subr.bf16.mxu0 0
        %1561 = vmatpush2.bf16.msra.mxu0 0
        %1562 = vmatprep.subr.bf16.mxu0 0
        %1563 = vmatpush2.bf16.msra.mxu0 0
        %1564 = vmatprep.subr.bf16.mxu0 0
        %1565 = vmatpush2.bf16.msra.mxu0 0
        %1566 = vmatprep.subr.bf16.mxu0 0
        %1567 = vmatpush2.bf16.msra.mxu0 0
        %1568 = vmatprep.subr.bf16.mxu0 0
        %1569 = vmatpush2.bf16.msra.mxu0 0
        %1570 = vmatprep.subr.bf16.mxu0 0
        %1571 = vmatpush2.bf16.msra.mxu0 0
        %1572 = vmatprep.subr.bf16.mxu0 0
        %1573 = vmatpush2.bf16.msra.mxu0 0
        %1574 = vmatprep.subr.bf16.mxu0 0
        %1575 = vmatpush2.bf16.msra.mxu0 0
        %1576 = vmatprep.mubr.bf16.mxu0 0
        %1577 = vmatmul.mubr.bf16.gmra.mxu0 %v1502
        %v1578 = vpop.f32.mrf.mxu0
        %v1579 = vadd.f32 %v798, %v1578
        %v1580 = vpop.f32.mrf.mxu0
        %v1581 = vpop.f32.mrf.mxu0
        %v1582 = vpop.f32.mrf.mxu0
        %1583 = vdwg.mxu0
        %v1584 = vadd.f32 %v1456, %v1538
        %v1585 = vxor.u32 %v1584, 2147483648
        %v1586 = vmul.f32 %v1585, 1.442695
        %v1587 = vpow.pop %v1586
        %v1588 = vadd.f32 %v1587, 1.0
        %v1589 = vrcp.pop %v1588
        %v1590 = vmul.f32 1.0, %v1589
        %v1591 = vadd.f32 %v1458, %v1540
        %v1592 = vxor.u32 %v1591, 2147483648
        %v1593 = vmul.f32 %v1592, 1.442695
        %v1594 = vpow.pop %v1593
        %v1595 = vadd.f32 %v1594, 1.0
        %v1596 = vrcp.pop %v1595
        %v1597 = vmul.f32 1.0, %v1596
        %v1598 = vmul.f32 %v1590, %v1579
        %v1599 = vadd.f32 %v1497, %v1598
        %v1600 = vtanh.pop %v1599
        %v1601 = vsub.f32 1.0, %v1597
        %v1602 = vmul.f32 %v1601, %v1600
        %v1603 = vmul.f32 %v1597, %v1413
        %v1604 = vadd.f32 %v1602, %v1603
        %s1605 = scalar_lea.vmem %s447, %s1417 [#allocation11]
        %1606 = vst [vmem:[%s1605] sm:$0xff] %v1604
        %s1607 = scalar_select %p554, 4, 3
        %s1608 = smul.u32 %s1607, 8
        %s1609 = scalar_lea.vmem %s464, %s1608
        %v1610 = vld [vmem:[%s1609] sm:$0xff]
        %v1611 = vpack.c.bf16 %v1610, %v1610
        %1612 = vmatprep.subr.bf16.mxu0 %v678
        %1613 = vmatpush1.bf16.msra.mxu0 %v677
        %1614 = vmatprep.subr.bf16.mxu0 %v675
        %1615 = vmatpush1.bf16.msra.mxu0 %v674
        %1616 = vmatprep.subr.bf16.mxu0 %v672
        %1617 = vmatpush1.bf16.msra.mxu0 %v671
        %1618 = vmatprep.subr.bf16.mxu0 %v669
        %1619 = vmatpush1.bf16.msra.mxu0 %v668
        %1620 = vmatprep.subr.bf16.mxu0 %v666
        %1621 = vmatpush1.bf16.msra.mxu0 %v665
        %1622 = vmatprep.subr.bf16.mxu0 %v663
        %1623 = vmatpush1.bf16.msra.mxu0 %v662
        %1624 = vmatprep.subr.bf16.mxu0 %v660
        %1625 = vmatpush1.bf16.msra.mxu0 %v659
        %1626 = vmatprep.subr.bf16.mxu0 %v657
        %1627 = vmatpush1.bf16.msra.mxu0 %v656
        %1628 = vmatprep.subr.bf16.mxu0 0
        %1629 = vmatpush2.bf16.msra.mxu0 0
        %1630 = vmatprep.subr.bf16.mxu0 0
        %1631 = vmatpush2.bf16.msra.mxu0 0
        %1632 = vmatprep.subr.bf16.mxu0 0
        %1633 = vmatpush2.bf16.msra.mxu0 0
        %1634 = vmatprep.subr.bf16.mxu0 0
        %1635 = vmatpush2.bf16.msra.mxu0 0
        %1636 = vmatprep.subr.bf16.mxu0 0
        %1637 = vmatpush2.bf16.msra.mxu0 0
        %1638 = vmatprep.subr.bf16.mxu0 0
        %1639 = vmatpush2.bf16.msra.mxu0 0
        %1640 = vmatprep.subr.bf16.mxu0 0
        %1641 = vmatpush2.bf16.msra.mxu0 0
        %1642 = vmatprep.subr.bf16.mxu0 0
        %1643 = vmatpush2.bf16.msra.mxu0 0
        %1644 = vmatprep.mubr.bf16.mxu0 0
        %1645 = vmatmul.mubr.bf16.gmra.mxu0 %v1611
        %v1646 = vpop.f32.mrf.mxu0
        %v1647 = vadd.f32 %v564, %v1646
        %v1648 = vpop.f32.mrf.mxu0
        %v1649 = vadd.f32 %v568, %v1648
        %v1650 = vpop.f32.mrf.mxu0
        %v1651 = vpop.f32.mrf.mxu0
        %1652 = vdwg.mxu0
        %1653 = vmatprep.subr.bf16.mxu0 0
        %1654 = vmatpush1.bf16.msra.mxu0 %v679
        %1655 = vmatprep.subr.bf16.mxu0 0
        %1656 = vmatpush1.bf16.msra.mxu0 %v676
        %1657 = vmatprep.subr.bf16.mxu0 0
        %1658 = vmatpush1.bf16.msra.mxu0 %v673
        %1659 = vmatprep.subr.bf16.mxu0 0
        %1660 = vmatpush1.bf16.msra.mxu0 %v670
        %1661 = vmatprep.subr.bf16.mxu0 0
        %1662 = vmatpush1.bf16.msra.mxu0 %v667
        %1663 = vmatprep.subr.bf16.mxu0 0
        %1664 = vmatpush1.bf16.msra.mxu0 %v664
        %1665 = vmatprep.subr.bf16.mxu0 0
        %1666 = vmatpush1.bf16.msra.mxu0 %v661
        %1667 = vmatprep.subr.bf16.mxu0 0
        %1668 = vmatpush1.bf16.msra.mxu0 %v658
        %1669 = vmatprep.subr.bf16.mxu0 0
        %1670 = vmatpush2.bf16.msra.mxu0 0
        %1671 = vmatprep.subr.bf16.mxu0 0
        %1672 = vmatpush2.bf16.msra.mxu0 0
        %1673 = vmatprep.subr.bf16.mxu0 0
        %1674 = vmatpush2.bf16.msra.mxu0 0
        %1675 = vmatprep.subr.bf16.mxu0 0
        %1676 = vmatpush2.bf16.msra.mxu0 0
        %1677 = vmatprep.subr.bf16.mxu0 0
        %1678 = vmatpush2.bf16.msra.mxu0 0
        %1679 = vmatprep.subr.bf16.mxu0 0
        %1680 = vmatpush2.bf16.msra.mxu0 0
        %1681 = vmatprep.subr.bf16.mxu0 0
        %1682 = vmatpush2.bf16.msra.mxu0 0
        %1683 = vmatprep.subr.bf16.mxu0 0
        %1684 = vmatpush2.bf16.msra.mxu0 0
        %1685 = vmatprep.mubr.bf16.mxu0 0
        %1686 = vmatmul.mubr.bf16.gmra.mxu0 %v1611
        %v1687 = vpop.f32.mrf.mxu0
        %v1688 = vadd.f32 %v572, %v1687
        %v1689 = vpop.f32.mrf.mxu0
        %v1690 = vpop.f32.mrf.mxu0
        %v1691 = vpop.f32.mrf.mxu0
        %1692 = vdwg.mxu0
        %v1693 = vpack.c.bf16 %v1604, %v1604
        %1694 = vmatprep.subr.bf16.mxu0 %v904
        %1695 = vmatpush1.bf16.msra.mxu0 %v903
        %1696 = vmatprep.subr.bf16.mxu0 %v901
        %1697 = vmatpush1.bf16.msra.mxu0 %v900
        %1698 = vmatprep.subr.bf16.mxu0 %v898
        %1699 = vmatpush1.bf16.msra.mxu0 %v897
        %1700 = vmatprep.subr.bf16.mxu0 %v895
        %1701 = vmatpush1.bf16.msra.mxu0 %v894
        %1702 = vmatprep.subr.bf16.mxu0 %v892
        %1703 = vmatpush1.bf16.msra.mxu0 %v891
        %1704 = vmatprep.subr.bf16.mxu0 %v889
        %1705 = vmatpush1.bf16.msra.mxu0 %v888
        %1706 = vmatprep.subr.bf16.mxu0 %v886
        %1707 = vmatpush1.bf16.msra.mxu0 %v885
        %1708 = vmatprep.subr.bf16.mxu0 %v883
        %1709 = vmatpush1.bf16.msra.mxu0 %v882
        %1710 = vmatprep.subr.bf16.mxu0 0
        %1711 = vmatpush2.bf16.msra.mxu0 0
        %1712 = vmatprep.subr.bf16.mxu0 0
        %1713 = vmatpush2.bf16.msra.mxu0 0
        %1714 = vmatprep.subr.bf16.mxu0 0
        %1715 = vmatpush2.bf16.msra.mxu0 0
        %1716 = vmatprep.subr.bf16.mxu0 0
        %1717 = vmatpush2.bf16.msra.mxu0 0
        %1718 = vmatprep.subr.bf16.mxu0 0
        %1719 = vmatpush2.bf16.msra.mxu0 0
        %1720 = vmatprep.subr.bf16.mxu0 0
        %1721 = vmatpush2.bf16.msra.mxu0 0
        %1722 = vmatprep.subr.bf16.mxu0 0
        %1723 = vmatpush2.bf16.msra.mxu0 0
        %1724 = vmatprep.subr.bf16.mxu0 0
        %1725 = vmatpush2.bf16.msra.mxu0 0
        %1726 = vmatprep.mubr.bf16.mxu0 0
        %1727 = vmatmul.mubr.bf16.gmra.mxu0 %v1693
        %v1728 = vpop.f32.mrf.mxu0
        %v1729 = vadd.f32 %v790, %v1728
        %v1730 = vpop.f32.mrf.mxu0
        %v1731 = vadd.f32 %v794, %v1730
        %v1732 = vpop.f32.mrf.mxu0
        %v1733 = vpop.f32.mrf.mxu0
        %1734 = vdwg.mxu0
        %1735 = vmatprep.subr.bf16.mxu0 0
        %1736 = vmatpush1.bf16.msra.mxu0 %v905
        %1737 = vmatprep.subr.bf16.mxu0 0
        %1738 = vmatpush1.bf16.msra.mxu0 %v902
        %1739 = vmatprep.subr.bf16.mxu0 0
        %1740 = vmatpush1.bf16.msra.mxu0 %v899
        %1741 = vmatprep.subr.bf16.mxu0 0
        %1742 = vmatpush1.bf16.msra.mxu0 %v896
        %1743 = vmatprep.subr.bf16.mxu0 0
        %1744 = vmatpush1.bf16.msra.mxu0 %v893
        %1745 = vmatprep.subr.bf16.mxu0 0
        %1746 = vmatpush1.bf16.msra.mxu0 %v890
        %1747 = vmatprep.subr.bf16.mxu0 0
        %1748 = vmatpush1.bf16.msra.mxu0 %v887
        %1749 = vmatprep.subr.bf16.mxu0 0
        %1750 = vmatpush1.bf16.msra.mxu0 %v884
        %1751 = vmatprep.subr.bf16.mxu0 0
        %1752 = vmatpush2.bf16.msra.mxu0 0
        %1753 = vmatprep.subr.bf16.mxu0 0
        %1754 = vmatpush2.bf16.msra.mxu0 0
        %1755 = vmatprep.subr.bf16.mxu0 0
        %1756 = vmatpush2.bf16.msra.mxu0 0
        %1757 = vmatprep.subr.bf16.mxu0 0
        %1758 = vmatpush2.bf16.msra.mxu0 0
        %1759 = vmatprep.subr.bf16.mxu0 0
        %1760 = vmatpush2.bf16.msra.mxu0 0
        %1761 = vmatprep.subr.bf16.mxu0 0
        %1762 = vmatpush2.bf16.msra.mxu0 0
        %1763 = vmatprep.subr.bf16.mxu0 0
        %1764 = vmatpush2.bf16.msra.mxu0 0
        %1765 = vmatprep.subr.bf16.mxu0 0
        %1766 = vmatpush2.bf16.msra.mxu0 0
        %1767 = vmatprep.mubr.bf16.mxu0 0
        %1768 = vmatmul.mubr.bf16.gmra.mxu0 %v1693
        %v1769 = vpop.f32.mrf.mxu0
        %v1770 = vadd.f32 %v798, %v1769
        %v1771 = vpop.f32.mrf.mxu0
        %v1772 = vpop.f32.mrf.mxu0
        %v1773 = vpop.f32.mrf.mxu0
        %1774 = vdwg.mxu0
        %v1775 = vadd.f32 %v1647, %v1729
        %v1776 = vxor.u32 %v1775, 2147483648
        %v1777 = vmul.f32 %v1776, 1.442695
        %v1778 = vpow.pop %v1777
        %v1779 = vadd.f32 %v1778, 1.0
        %v1780 = vrcp.pop %v1779
        %v1781 = vmul.f32 1.0, %v1780
        %v1782 = vadd.f32 %v1649, %v1731
        %v1783 = vxor.u32 %v1782, 2147483648
        %v1784 = vmul.f32 %v1783, 1.442695
        %v1785 = vpow.pop %v1784
        %v1786 = vadd.f32 %v1785, 1.0
        %v1787 = vrcp.pop %v1786
        %v1788 = vmul.f32 1.0, %v1787
        %v1789 = vmul.f32 %v1781, %v1770
        %v1790 = vadd.f32 %v1688, %v1789
        %v1791 = vtanh.pop %v1790
        %v1792 = vsub.f32 1.0, %v1788
        %v1793 = vmul.f32 %v1792, %v1791
        %v1794 = vmul.f32 %v1788, %v1604
        %v1795 = vadd.f32 %v1793, %v1794
        %s1796 = scalar_lea.vmem %s447, %s1608 [#allocation11]
        %1797 = vst [vmem:[%s1796] sm:$0xff] %v1795
        %s1798 = scalar_select %p554, 5, 2
        %s1799 = smul.u32 %s1798, 8
        %s1800 = scalar_lea.vmem %s464, %s1799
        %v1801 = vld [vmem:[%s1800] sm:$0xff]
        %v1802 = vpack.c.bf16 %v1801, %v1801
        %1803 = vmatprep.subr.bf16.mxu0 %v678
        %1804 = vmatpush1.bf16.msra.mxu0 %v677
        %1805 = vmatprep.subr.bf16.mxu0 %v675
        %1806 = vmatpush1.bf16.msra.mxu0 %v674
        %1807 = vmatprep.subr.bf16.mxu0 %v672
        %1808 = vmatpush1.bf16.msra.mxu0 %v671
        %1809 = vmatprep.subr.bf16.mxu0 %v669
        %1810 = vmatpush1.bf16.msra.mxu0 %v668
        %1811 = vmatprep.subr.bf16.mxu0 %v666
        %1812 = vmatpush1.bf16.msra.mxu0 %v665
        %1813 = vmatprep.subr.bf16.mxu0 %v663
        %1814 = vmatpush1.bf16.msra.mxu0 %v662
        %1815 = vmatprep.subr.bf16.mxu0 %v660
        %1816 = vmatpush1.bf16.msra.mxu0 %v659
        %1817 = vmatprep.subr.bf16.mxu0 %v657
        %1818 = vmatpush1.bf16.msra.mxu0 %v656
        %1819 = vmatprep.subr.bf16.mxu0 0
        %1820 = vmatpush2.bf16.msra.mxu0 0
        %1821 = vmatprep.subr.bf16.mxu0 0
        %1822 = vmatpush2.bf16.msra.mxu0 0
        %1823 = vmatprep.subr.bf16.mxu0 0
        %1824 = vmatpush2.bf16.msra.mxu0 0
        %1825 = vmatprep.subr.bf16.mxu0 0
        %1826 = vmatpush2.bf16.msra.mxu0 0
        %1827 = vmatprep.subr.bf16.mxu0 0
        %1828 = vmatpush2.bf16.msra.mxu0 0
        %1829 = vmatprep.subr.bf16.mxu0 0
        %1830 = vmatpush2.bf16.msra.mxu0 0
        %1831 = vmatprep.subr.bf16.mxu0 0
        %1832 = vmatpush2.bf16.msra.mxu0 0
        %1833 = vmatprep.subr.bf16.mxu0 0
        %1834 = vmatpush2.bf16.msra.mxu0 0
        %1835 = vmatprep.mubr.bf16.mxu0 0
        %1836 = vmatmul.mubr.bf16.gmra.mxu0 %v1802
        %v1837 = vpop.f32.mrf.mxu0
        %v1838 = vadd.f32 %v564, %v1837
        %v1839 = vpop.f32.mrf.mxu0
        %v1840 = vadd.f32 %v568, %v1839
        %v1841 = vpop.f32.mrf.mxu0
        %v1842 = vpop.f32.mrf.mxu0
        %1843 = vdwg.mxu0
        %1844 = vmatprep.subr.bf16.mxu0 0
        %1845 = vmatpush1.bf16.msra.mxu0 %v679
        %1846 = vmatprep.subr.bf16.mxu0 0
        %1847 = vmatpush1.bf16.msra.mxu0 %v676
        %1848 = vmatprep.subr.bf16.mxu0 0
        %1849 = vmatpush1.bf16.msra.mxu0 %v673
        %1850 = vmatprep.subr.bf16.mxu0 0
        %1851 = vmatpush1.bf16.msra.mxu0 %v670
        %1852 = vmatprep.subr.bf16.mxu0 0
        %1853 = vmatpush1.bf16.msra.mxu0 %v667
        %1854 = vmatprep.subr.bf16.mxu0 0
        %1855 = vmatpush1.bf16.msra.mxu0 %v664
        %1856 = vmatprep.subr.bf16.mxu0 0
        %1857 = vmatpush1.bf16.msra.mxu0 %v661
        %1858 = vmatprep.subr.bf16.mxu0 0
        %1859 = vmatpush1.bf16.msra.mxu0 %v658
        %1860 = vmatprep.subr.bf16.mxu0 0
        %1861 = vmatpush2.bf16.msra.mxu0 0
        %1862 = vmatprep.subr.bf16.mxu0 0
        %1863 = vmatpush2.bf16.msra.mxu0 0
        %1864 = vmatprep.subr.bf16.mxu0 0
        %1865 = vmatpush2.bf16.msra.mxu0 0
        %1866 = vmatprep.subr.bf16.mxu0 0
        %1867 = vmatpush2.bf16.msra.mxu0 0
        %1868 = vmatprep.subr.bf16.mxu0 0
        %1869 = vmatpush2.bf16.msra.mxu0 0
        %1870 = vmatprep.subr.bf16.mxu0 0
        %1871 = vmatpush2.bf16.msra.mxu0 0
        %1872 = vmatprep.subr.bf16.mxu0 0
        %1873 = vmatpush2.bf16.msra.mxu0 0
        %1874 = vmatprep.subr.bf16.mxu0 0
        %1875 = vmatpush2.bf16.msra.mxu0 0
        %1876 = vmatprep.mubr.bf16.mxu0 0
        %1877 = vmatmul.mubr.bf16.gmra.mxu0 %v1802
        %v1878 = vpop.f32.mrf.mxu0
        %v1879 = vadd.f32 %v572, %v1878
        %v1880 = vpop.f32.mrf.mxu0
        %v1881 = vpop.f32.mrf.mxu0
        %v1882 = vpop.f32.mrf.mxu0
        %1883 = vdwg.mxu0
        %v1884 = vpack.c.bf16 %v1795, %v1795
        %1885 = vmatprep.subr.bf16.mxu0 %v904
        %1886 = vmatpush1.bf16.msra.mxu0 %v903
        %1887 = vmatprep.subr.bf16.mxu0 %v901
        %1888 = vmatpush1.bf16.msra.mxu0 %v900
        %1889 = vmatprep.subr.bf16.mxu0 %v898
        %1890 = vmatpush1.bf16.msra.mxu0 %v897
        %1891 = vmatprep.subr.bf16.mxu0 %v895
        %1892 = vmatpush1.bf16.msra.mxu0 %v894
        %1893 = vmatprep.subr.bf16.mxu0 %v892
        %1894 = vmatpush1.bf16.msra.mxu0 %v891
        %1895 = vmatprep.subr.bf16.mxu0 %v889
        %1896 = vmatpush1.bf16.msra.mxu0 %v888
        %1897 = vmatprep.subr.bf16.mxu0 %v886
        %1898 = vmatpush1.bf16.msra.mxu0 %v885
        %1899 = vmatprep.subr.bf16.mxu0 %v883
        %1900 = vmatpush1.bf16.msra.mxu0 %v882
        %1901 = vmatprep.subr.bf16.mxu0 0
        %1902 = vmatpush2.bf16.msra.mxu0 0
        %1903 = vmatprep.subr.bf16.mxu0 0
        %1904 = vmatpush2.bf16.msra.mxu0 0
        %1905 = vmatprep.subr.bf16.mxu0 0
        %1906 = vmatpush2.bf16.msra.mxu0 0
        %1907 = vmatprep.subr.bf16.mxu0 0
        %1908 = vmatpush2.bf16.msra.mxu0 0
        %1909 = vmatprep.subr.bf16.mxu0 0
        %1910 = vmatpush2.bf16.msra.mxu0 0
        %1911 = vmatprep.subr.bf16.mxu0 0
        %1912 = vmatpush2.bf16.msra.mxu0 0
        %1913 = vmatprep.subr.bf16.mxu0 0
        %1914 = vmatpush2.bf16.msra.mxu0 0
        %1915 = vmatprep.subr.bf16.mxu0 0
        %1916 = vmatpush2.bf16.msra.mxu0 0
        %1917 = vmatprep.mubr.bf16.mxu0 0
        %1918 = vmatmul.mubr.bf16.gmra.mxu0 %v1884
        %v1919 = vpop.f32.mrf.mxu0
        %v1920 = vadd.f32 %v790, %v1919
        %v1921 = vpop.f32.mrf.mxu0
        %v1922 = vadd.f32 %v794, %v1921
        %v1923 = vpop.f32.mrf.mxu0
        %v1924 = vpop.f32.mrf.mxu0
        %1925 = vdwg.mxu0
        %1926 = vmatprep.subr.bf16.mxu0 0
        %1927 = vmatpush1.bf16.msra.mxu0 %v905
        %1928 = vmatprep.subr.bf16.mxu0 0
        %1929 = vmatpush1.bf16.msra.mxu0 %v902
        %1930 = vmatprep.subr.bf16.mxu0 0
        %1931 = vmatpush1.bf16.msra.mxu0 %v899
        %1932 = vmatprep.subr.bf16.mxu0 0
        %1933 = vmatpush1.bf16.msra.mxu0 %v896
        %1934 = vmatprep.subr.bf16.mxu0 0
        %1935 = vmatpush1.bf16.msra.mxu0 %v893
        %1936 = vmatprep.subr.bf16.mxu0 0
        %1937 = vmatpush1.bf16.msra.mxu0 %v890
        %1938 = vmatprep.subr.bf16.mxu0 0
        %1939 = vmatpush1.bf16.msra.mxu0 %v887
        %1940 = vmatprep.subr.bf16.mxu0 0
        %1941 = vmatpush1.bf16.msra.mxu0 %v884
        %1942 = vmatprep.subr.bf16.mxu0 0
        %1943 = vmatpush2.bf16.msra.mxu0 0
        %1944 = vmatprep.subr.bf16.mxu0 0
        %1945 = vmatpush2.bf16.msra.mxu0 0
        %1946 = vmatprep.subr.bf16.mxu0 0
        %1947 = vmatpush2.bf16.msra.mxu0 0
        %1948 = vmatprep.subr.bf16.mxu0 0
        %1949 = vmatpush2.bf16.msra.mxu0 0
        %1950 = vmatprep.subr.bf16.mxu0 0
        %1951 = vmatpush2.bf16.msra.mxu0 0
        %1952 = vmatprep.subr.bf16.mxu0 0
        %1953 = vmatpush2.bf16.msra.mxu0 0
        %1954 = vmatprep.subr.bf16.mxu0 0
        %1955 = vmatpush2.bf16.msra.mxu0 0
        %1956 = vmatprep.subr.bf16.mxu0 0
        %1957 = vmatpush2.bf16.msra.mxu0 0
        %1958 = vmatprep.mubr.bf16.mxu0 0
        %1959 = vmatmul.mubr.bf16.gmra.mxu0 %v1884
        %v1960 = vpop.f32.mrf.mxu0
        %v1961 = vadd.f32 %v798, %v1960
        %v1962 = vpop.f32.mrf.mxu0
        %v1963 = vpop.f32.mrf.mxu0
        %v1964 = vpop.f32.mrf.mxu0
        %1965 = vdwg.mxu0
        %v1966 = vadd.f32 %v1838, %v1920
        %v1967 = vxor.u32 %v1966, 2147483648
        %v1968 = vmul.f32 %v1967, 1.442695
        %v1969 = vpow.pop %v1968
        %v1970 = vadd.f32 %v1969, 1.0
        %v1971 = vrcp.pop %v1970
        %v1972 = vmul.f32 1.0, %v1971
        %v1973 = vadd.f32 %v1840, %v1922
        %v1974 = vxor.u32 %v1973, 2147483648
        %v1975 = vmul.f32 %v1974, 1.442695
        %v1976 = vpow.pop %v1975
        %v1977 = vadd.f32 %v1976, 1.0
        %v1978 = vrcp.pop %v1977
        %v1979 = vmul.f32 1.0, %v1978
        %v1980 = vmul.f32 %v1972, %v1961
        %v1981 = vadd.f32 %v1879, %v1980
        %v1982 = vtanh.pop %v1981
        %v1983 = vsub.f32 1.0, %v1979
        %v1984 = vmul.f32 %v1983, %v1982
        %v1985 = vmul.f32 %v1979, %v1795
        %v1986 = vadd.f32 %v1984, %v1985
        %s1987 = scalar_lea.vmem %s447, %s1799 [#allocation11]
        %1988 = vst [vmem:[%s1987] sm:$0xff] %v1986
        %s1989 = scalar_select %p554, 6, 1
        %s1990 = smul.u32 %s1989, 8
        %s1991 = scalar_lea.vmem %s464, %s1990
        %v1992 = vld [vmem:[%s1991] sm:$0xff]
        %v1993 = vpack.c.bf16 %v1992, %v1992
        %1994 = vmatprep.subr.bf16.mxu0 %v678
        %1995 = vmatpush1.bf16.msra.mxu0 %v677
        %1996 = vmatprep.subr.bf16.mxu0 %v675
        %1997 = vmatpush1.bf16.msra.mxu0 %v674
        %1998 = vmatprep.subr.bf16.mxu0 %v672
        %1999 = vmatpush1.bf16.msra.mxu0 %v671
        %2000 = vmatprep.subr.bf16.mxu0 %v669
        %2001 = vmatpush1.bf16.msra.mxu0 %v668
        %2002 = vmatprep.subr.bf16.mxu0 %v666
        %2003 = vmatpush1.bf16.msra.mxu0 %v665
        %2004 = vmatprep.subr.bf16.mxu0 %v663
        %2005 = vmatpush1.bf16.msra.mxu0 %v662
        %2006 = vmatprep.subr.bf16.mxu0 %v660
        %2007 = vmatpush1.bf16.msra.mxu0 %v659
        %2008 = vmatprep.subr.bf16.mxu0 %v657
        %2009 = vmatpush1.bf16.msra.mxu0 %v656
        %2010 = vmatprep.subr.bf16.mxu0 0
        %2011 = vmatpush2.bf16.msra.mxu0 0
        %2012 = vmatprep.subr.bf16.mxu0 0
        %2013 = vmatpush2.bf16.msra.mxu0 0
        %2014 = vmatprep.subr.bf16.mxu0 0
        %2015 = vmatpush2.bf16.msra.mxu0 0
        %2016 = vmatprep.subr.bf16.mxu0 0
        %2017 = vmatpush2.bf16.msra.mxu0 0
        %2018 = vmatprep.subr.bf16.mxu0 0
        %2019 = vmatpush2.bf16.msra.mxu0 0
        %2020 = vmatprep.subr.bf16.mxu0 0
        %2021 = vmatpush2.bf16.msra.mxu0 0
        %2022 = vmatprep.subr.bf16.mxu0 0
        %2023 = vmatpush2.bf16.msra.mxu0 0
        %2024 = vmatprep.subr.bf16.mxu0 0
        %2025 = vmatpush2.bf16.msra.mxu0 0
        %2026 = vmatprep.mubr.bf16.mxu0 0
        %2027 = vmatmul.mubr.bf16.gmra.mxu0 %v1993
        %v2028 = vpop.f32.mrf.mxu0
        %v2029 = vadd.f32 %v564, %v2028
        %v2030 = vpop.f32.mrf.mxu0
        %v2031 = vadd.f32 %v568, %v2030
        %v2032 = vpop.f32.mrf.mxu0
        %v2033 = vpop.f32.mrf.mxu0
        %2034 = vdwg.mxu0
        %2035 = vmatprep.subr.bf16.mxu0 0
        %2036 = vmatpush1.bf16.msra.mxu0 %v679
        %2037 = vmatprep.subr.bf16.mxu0 0
        %2038 = vmatpush1.bf16.msra.mxu0 %v676
        %2039 = vmatprep.subr.bf16.mxu0 0
        %2040 = vmatpush1.bf16.msra.mxu0 %v673
        %2041 = vmatprep.subr.bf16.mxu0 0
        %2042 = vmatpush1.bf16.msra.mxu0 %v670
        %2043 = vmatprep.subr.bf16.mxu0 0
        %2044 = vmatpush1.bf16.msra.mxu0 %v667
        %2045 = vmatprep.subr.bf16.mxu0 0
        %2046 = vmatpush1.bf16.msra.mxu0 %v664
        %2047 = vmatprep.subr.bf16.mxu0 0
        %2048 = vmatpush1.bf16.msra.mxu0 %v661
        %2049 = vmatprep.subr.bf16.mxu0 0
        %2050 = vmatpush1.bf16.msra.mxu0 %v658
        %2051 = vmatprep.subr.bf16.mxu0 0
        %2052 = vmatpush2.bf16.msra.mxu0 0
        %2053 = vmatprep.subr.bf16.mxu0 0
        %2054 = vmatpush2.bf16.msra.mxu0 0
        %2055 = vmatprep.subr.bf16.mxu0 0
        %2056 = vmatpush2.bf16.msra.mxu0 0
        %2057 = vmatprep.subr.bf16.mxu0 0
        %2058 = vmatpush2.bf16.msra.mxu0 0
        %2059 = vmatprep.subr.bf16.mxu0 0
        %2060 = vmatpush2.bf16.msra.mxu0 0
        %2061 = vmatprep.subr.bf16.mxu0 0
        %2062 = vmatpush2.bf16.msra.mxu0 0
        %2063 = vmatprep.subr.bf16.mxu0 0
        %2064 = vmatpush2.bf16.msra.mxu0 0
        %2065 = vmatprep.subr.bf16.mxu0 0
        %2066 = vmatpush2.bf16.msra.mxu0 0
        %2067 = vmatprep.mubr.bf16.mxu0 0
        %2068 = vmatmul.mubr.bf16.gmra.mxu0 %v1993
        %v2069 = vpop.f32.mrf.mxu0
        %v2070 = vadd.f32 %v572, %v2069
        %v2071 = vpop.f32.mrf.mxu0
        %v2072 = vpop.f32.mrf.mxu0
        %v2073 = vpop.f32.mrf.mxu0
        %2074 = vdwg.mxu0
        %v2075 = vpack.c.bf16 %v1986, %v1986
        %2076 = vmatprep.subr.bf16.mxu0 %v904
        %2077 = vmatpush1.bf16.msra.mxu0 %v903
        %2078 = vmatprep.subr.bf16.mxu0 %v901
        %2079 = vmatpush1.bf16.msra.mxu0 %v900
        %2080 = vmatprep.subr.bf16.mxu0 %v898
        %2081 = vmatpush1.bf16.msra.mxu0 %v897
        %2082 = vmatprep.subr.bf16.mxu0 %v895
        %2083 = vmatpush1.bf16.msra.mxu0 %v894
        %2084 = vmatprep.subr.bf16.mxu0 %v892
        %2085 = vmatpush1.bf16.msra.mxu0 %v891
        %2086 = vmatprep.subr.bf16.mxu0 %v889
        %2087 = vmatpush1.bf16.msra.mxu0 %v888
        %2088 = vmatprep.subr.bf16.mxu0 %v886
        %2089 = vmatpush1.bf16.msra.mxu0 %v885
        %2090 = vmatprep.subr.bf16.mxu0 %v883
        %2091 = vmatpush1.bf16.msra.mxu0 %v882
        %2092 = vmatprep.subr.bf16.mxu0 0
        %2093 = vmatpush2.bf16.msra.mxu0 0
        %2094 = vmatprep.subr.bf16.mxu0 0
        %2095 = vmatpush2.bf16.msra.mxu0 0
        %2096 = vmatprep.subr.bf16.mxu0 0
        %2097 = vmatpush2.bf16.msra.mxu0 0
        %2098 = vmatprep.subr.bf16.mxu0 0
        %2099 = vmatpush2.bf16.msra.mxu0 0
        %2100 = vmatprep.subr.bf16.mxu0 0
        %2101 = vmatpush2.bf16.msra.mxu0 0
        %2102 = vmatprep.subr.bf16.mxu0 0
        %2103 = vmatpush2.bf16.msra.mxu0 0
        %2104 = vmatprep.subr.bf16.mxu0 0
        %2105 = vmatpush2.bf16.msra.mxu0 0
        %2106 = vmatprep.subr.bf16.mxu0 0
        %2107 = vmatpush2.bf16.msra.mxu0 0
        %2108 = vmatprep.mubr.bf16.mxu0 0
        %2109 = vmatmul.mubr.bf16.gmra.mxu0 %v2075
        %v2110 = vpop.f32.mrf.mxu0
        %v2111 = vadd.f32 %v790, %v2110
        %v2112 = vpop.f32.mrf.mxu0
        %v2113 = vadd.f32 %v794, %v2112
        %v2114 = vpop.f32.mrf.mxu0
        %v2115 = vpop.f32.mrf.mxu0
        %2116 = vdwg.mxu0
        %2117 = vmatprep.subr.bf16.mxu0 0
        %2118 = vmatpush1.bf16.msra.mxu0 %v905
        %2119 = vmatprep.subr.bf16.mxu0 0
        %2120 = vmatpush1.bf16.msra.mxu0 %v902
        %2121 = vmatprep.subr.bf16.mxu0 0
        %2122 = vmatpush1.bf16.msra.mxu0 %v899
        %2123 = vmatprep.subr.bf16.mxu0 0
        %2124 = vmatpush1.bf16.msra.mxu0 %v896
        %2125 = vmatprep.subr.bf16.mxu0 0
        %2126 = vmatpush1.bf16.msra.mxu0 %v893
        %2127 = vmatprep.subr.bf16.mxu0 0
        %2128 = vmatpush1.bf16.msra.mxu0 %v890
        %2129 = vmatprep.subr.bf16.mxu0 0
        %2130 = vmatpush1.bf16.msra.mxu0 %v887
        %2131 = vmatprep.subr.bf16.mxu0 0
        %2132 = vmatpush1.bf16.msra.mxu0 %v884
        %2133 = vmatprep.subr.bf16.mxu0 0
        %2134 = vmatpush2.bf16.msra.mxu0 0
        %2135 = vmatprep.subr.bf16.mxu0 0
        %2136 = vmatpush2.bf16.msra.mxu0 0
        %2137 = vmatprep.subr.bf16.mxu0 0
        %2138 = vmatpush2.bf16.msra.mxu0 0
        %2139 = vmatprep.subr.bf16.mxu0 0
        %2140 = vmatpush2.bf16.msra.mxu0 0
        %2141 = vmatprep.subr.bf16.mxu0 0
        %2142 = vmatpush2.bf16.msra.mxu0 0
        %2143 = vmatprep.subr.bf16.mxu0 0
        %2144 = vmatpush2.bf16.msra.mxu0 0
        %2145 = vmatprep.subr.bf16.mxu0 0
        %2146 = vmatpush2.bf16.msra.mxu0 0
        %2147 = vmatprep.subr.bf16.mxu0 0
        %2148 = vmatpush2.bf16.msra.mxu0 0
        %2149 = vmatprep.mubr.bf16.mxu0 0
        %2150 = vmatmul.mubr.bf16.gmra.mxu0 %v2075
        %v2151 = vpop.f32.mrf.mxu0
        %v2152 = vadd.f32 %v798, %v2151
        %v2153 = vpop.f32.mrf.mxu0
        %v2154 = vpop.f32.mrf.mxu0
        %v2155 = vpop.f32.mrf.mxu0
        %2156 = vdwg.mxu0
        %v2157 = vadd.f32 %v2029, %v2111
        %v2158 = vxor.u32 %v2157, 2147483648
        %v2159 = vmul.f32 %v2158, 1.442695
        %v2160 = vpow.pop %v2159
        %v2161 = vadd.f32 %v2160, 1.0
        %v2162 = vrcp.pop %v2161
        %v2163 = vmul.f32 1.0, %v2162
        %v2164 = vadd.f32 %v2031, %v2113
        %v2165 = vxor.u32 %v2164, 2147483648
        %v2166 = vmul.f32 %v2165, 1.442695
        %v2167 = vpow.pop %v2166
        %v2168 = vadd.f32 %v2167, 1.0
        %v2169 = vrcp.pop %v2168
        %v2170 = vmul.f32 1.0, %v2169
        %v2171 = vmul.f32 %v2163, %v2152
        %v2172 = vadd.f32 %v2070, %v2171
        %v2173 = vtanh.pop %v2172
        %v2174 = vsub.f32 1.0, %v2170
        %v2175 = vmul.f32 %v2174, %v2173
        %v2176 = vmul.f32 %v2170, %v1986
        %v2177 = vadd.f32 %v2175, %v2176
        %s2178 = scalar_lea.vmem %s447, %s1990 [#allocation11]
        %2179 = vst [vmem:[%s2178] sm:$0xff] %v2177
        %s2180 = scalar_select %p554, 7, 0
        %s2181 = smul.u32 %s2180, 8
        %s2182 = scalar_lea.vmem %s464, %s2181
        %v2183 = vld [vmem:[%s2182] sm:$0xff]
        %v2184 = vpack.c.bf16 %v2183, %v2183
        %2185 = vmatprep.subr.bf16.mxu0 %v678
        %2186 = vmatpush1.bf16.msra.mxu0 %v677
        %2187 = vmatprep.subr.bf16.mxu0 %v675
        %2188 = vmatpush1.bf16.msra.mxu0 %v674
        %2189 = vmatprep.subr.bf16.mxu0 %v672
        %2190 = vmatpush1.bf16.msra.mxu0 %v671
        %2191 = vmatprep.subr.bf16.mxu0 %v669
        %2192 = vmatpush1.bf16.msra.mxu0 %v668
        %2193 = vmatprep.subr.bf16.mxu0 %v666
        %2194 = vmatpush1.bf16.msra.mxu0 %v665
        %2195 = vmatprep.subr.bf16.mxu0 %v663
        %2196 = vmatpush1.bf16.msra.mxu0 %v662
        %2197 = vmatprep.subr.bf16.mxu0 %v660
        %2198 = vmatpush1.bf16.msra.mxu0 %v659
        %2199 = vmatprep.subr.bf16.mxu0 %v657
        %2200 = vmatpush1.bf16.msra.mxu0 %v656
        %2201 = vmatprep.subr.bf16.mxu0 0
        %2202 = vmatpush2.bf16.msra.mxu0 0
        %2203 = vmatprep.subr.bf16.mxu0 0
        %2204 = vmatpush2.bf16.msra.mxu0 0
        %2205 = vmatprep.subr.bf16.mxu0 0
        %2206 = vmatpush2.bf16.msra.mxu0 0
        %2207 = vmatprep.subr.bf16.mxu0 0
        %2208 = vmatpush2.bf16.msra.mxu0 0
        %2209 = vmatprep.subr.bf16.mxu0 0
        %2210 = vmatpush2.bf16.msra.mxu0 0
        %2211 = vmatprep.subr.bf16.mxu0 0
        %2212 = vmatpush2.bf16.msra.mxu0 0
        %2213 = vmatprep.subr.bf16.mxu0 0
        %2214 = vmatpush2.bf16.msra.mxu0 0
        %2215 = vmatprep.subr.bf16.mxu0 0
        %2216 = vmatpush2.bf16.msra.mxu0 0
        %2217 = vmatprep.mubr.bf16.mxu0 0
        %2218 = vmatmul.mubr.bf16.gmra.mxu0 %v2184
        %v2219 = vpop.f32.mrf.mxu0
        %v2220 = vadd.f32 %v564, %v2219
        %v2221 = vpop.f32.mrf.mxu0
        %v2222 = vadd.f32 %v568, %v2221
        %v2223 = vpop.f32.mrf.mxu0
        %v2224 = vpop.f32.mrf.mxu0
        %2225 = vdwg.mxu0
        %2226 = vmatprep.subr.bf16.mxu0 0
        %2227 = vmatpush1.bf16.msra.mxu0 %v679
        %2228 = vmatprep.subr.bf16.mxu0 0
        %2229 = vmatpush1.bf16.msra.mxu0 %v676
        %2230 = vmatprep.subr.bf16.mxu0 0
        %2231 = vmatpush1.bf16.msra.mxu0 %v673
        %2232 = vmatprep.subr.bf16.mxu0 0
        %2233 = vmatpush1.bf16.msra.mxu0 %v670
        %2234 = vmatprep.subr.bf16.mxu0 0
        %2235 = vmatpush1.bf16.msra.mxu0 %v667
        %2236 = vmatprep.subr.bf16.mxu0 0
        %2237 = vmatpush1.bf16.msra.mxu0 %v664
        %2238 = vmatprep.subr.bf16.mxu0 0
        %2239 = vmatpush1.bf16.msra.mxu0 %v661
        %2240 = vmatprep.subr.bf16.mxu0 0
        %2241 = vmatpush1.bf16.msra.mxu0 %v658
        %2242 = vmatprep.subr.bf16.mxu0 0
        %2243 = vmatpush2.bf16.msra.mxu0 0
        %2244 = vmatprep.subr.bf16.mxu0 0
        %2245 = vmatpush2.bf16.msra.mxu0 0
        %2246 = vmatprep.subr.bf16.mxu0 0
        %2247 = vmatpush2.bf16.msra.mxu0 0
        %2248 = vmatprep.subr.bf16.mxu0 0
        %2249 = vmatpush2.bf16.msra.mxu0 0
        %2250 = vmatprep.subr.bf16.mxu0 0
        %2251 = vmatpush2.bf16.msra.mxu0 0
        %2252 = vmatprep.subr.bf16.mxu0 0
        %2253 = vmatpush2.bf16.msra.mxu0 0
        %2254 = vmatprep.subr.bf16.mxu0 0
        %2255 = vmatpush2.bf16.msra.mxu0 0
        %2256 = vmatprep.subr.bf16.mxu0 0
        %2257 = vmatpush2.bf16.msra.mxu0 0
        %2258 = vmatprep.mubr.bf16.mxu0 0
        %2259 = vmatmul.mubr.bf16.gmra.mxu0 %v2184
        %v2260 = vpop.f32.mrf.mxu0
        %v2261 = vadd.f32 %v572, %v2260
        %v2262 = vpop.f32.mrf.mxu0
        %v2263 = vpop.f32.mrf.mxu0
        %v2264 = vpop.f32.mrf.mxu0
        %2265 = vdwg.mxu0
        %v2266 = vpack.c.bf16 %v2177, %v2177
        %2267 = vmatprep.subr.bf16.mxu0 %v904
        %2268 = vmatpush1.bf16.msra.mxu0 %v903
        %2269 = vmatprep.subr.bf16.mxu0 %v901
        %2270 = vmatpush1.bf16.msra.mxu0 %v900
        %2271 = vmatprep.subr.bf16.mxu0 %v898
        %2272 = vmatpush1.bf16.msra.mxu0 %v897
        %2273 = vmatprep.subr.bf16.mxu0 %v895
        %2274 = vmatpush1.bf16.msra.mxu0 %v894
        %2275 = vmatprep.subr.bf16.mxu0 %v892
        %2276 = vmatpush1.bf16.msra.mxu0 %v891
        %2277 = vmatprep.subr.bf16.mxu0 %v889
        %2278 = vmatpush1.bf16.msra.mxu0 %v888
        %2279 = vmatprep.subr.bf16.mxu0 %v886
        %2280 = vmatpush1.bf16.msra.mxu0 %v885
        %2281 = vmatprep.subr.bf16.mxu0 %v883
        %2282 = vmatpush1.bf16.msra.mxu0 %v882
        %2283 = vmatprep.subr.bf16.mxu0 0
        %2284 = vmatpush2.bf16.msra.mxu0 0
        %2285 = vmatprep.subr.bf16.mxu0 0
        %2286 = vmatpush2.bf16.msra.mxu0 0
        %2287 = vmatprep.subr.bf16.mxu0 0
        %2288 = vmatpush2.bf16.msra.mxu0 0
        %2289 = vmatprep.subr.bf16.mxu0 0
        %2290 = vmatpush2.bf16.msra.mxu0 0
        %2291 = vmatprep.subr.bf16.mxu0 0
        %2292 = vmatpush2.bf16.msra.mxu0 0
        %2293 = vmatprep.subr.bf16.mxu0 0
        %2294 = vmatpush2.bf16.msra.mxu0 0
        %2295 = vmatprep.subr.bf16.mxu0 0
        %2296 = vmatpush2.bf16.msra.mxu0 0
        %2297 = vmatprep.subr.bf16.mxu0 0
        %2298 = vmatpush2.bf16.msra.mxu0 0
        %2299 = vmatprep.mubr.bf16.mxu0 0
        %2300 = vmatmul.mubr.bf16.gmra.mxu0 %v2266
        %v2301 = vpop.f32.mrf.mxu0
        %v2302 = vadd.f32 %v790, %v2301
        %v2303 = vpop.f32.mrf.mxu0
        %v2304 = vadd.f32 %v794, %v2303
        %v2305 = vpop.f32.mrf.mxu0
        %v2306 = vpop.f32.mrf.mxu0
        %2307 = vdwg.mxu0
        %2308 = vmatprep.subr.bf16.mxu0 0
        %2309 = vmatpush1.bf16.msra.mxu0 %v905
        %2310 = vmatprep.subr.bf16.mxu0 0
        %2311 = vmatpush1.bf16.msra.mxu0 %v902
        %2312 = vmatprep.subr.bf16.mxu0 0
        %2313 = vmatpush1.bf16.msra.mxu0 %v899
        %2314 = vmatprep.subr.bf16.mxu0 0
        %2315 = vmatpush1.bf16.msra.mxu0 %v896
        %2316 = vmatprep.subr.bf16.mxu0 0
        %2317 = vmatpush1.bf16.msra.mxu0 %v893
        %2318 = vmatprep.subr.bf16.mxu0 0
        %2319 = vmatpush1.bf16.msra.mxu0 %v890
        %2320 = vmatprep.subr.bf16.mxu0 0
        %2321 = vmatpush1.bf16.msra.mxu0 %v887
        %2322 = vmatprep.subr.bf16.mxu0 0
        %2323 = vmatpush1.bf16.msra.mxu0 %v884
        %2324 = vmatprep.subr.bf16.mxu0 0
        %2325 = vmatpush2.bf16.msra.mxu0 0
        %2326 = vmatprep.subr.bf16.mxu0 0
        %2327 = vmatpush2.bf16.msra.mxu0 0
        %2328 = vmatprep.subr.bf16.mxu0 0
        %2329 = vmatpush2.bf16.msra.mxu0 0
        %2330 = vmatprep.subr.bf16.mxu0 0
        %2331 = vmatpush2.bf16.msra.mxu0 0
        %2332 = vmatprep.subr.bf16.mxu0 0
        %2333 = vmatpush2.bf16.msra.mxu0 0
        %2334 = vmatprep.subr.bf16.mxu0 0
        %2335 = vmatpush2.bf16.msra.mxu0 0
        %2336 = vmatprep.subr.bf16.mxu0 0
        %2337 = vmatpush2.bf16.msra.mxu0 0
        %2338 = vmatprep.subr.bf16.mxu0 0
        %2339 = vmatpush2.bf16.msra.mxu0 0
        %2340 = vmatprep.mubr.bf16.mxu0 0
        %2341 = vmatmul.mubr.bf16.gmra.mxu0 %v2266
        %v2342 = vpop.f32.mrf.mxu0
        %v2343 = vadd.f32 %v798, %v2342
        %v2344 = vpop.f32.mrf.mxu0
        %v2345 = vpop.f32.mrf.mxu0
        %v2346 = vpop.f32.mrf.mxu0
        %2347 = vdwg.mxu0
        %v2348 = vadd.f32 %v2220, %v2302
        %v2349 = vxor.u32 %v2348, 2147483648
        %v2350 = vmul.f32 %v2349, 1.442695
        %v2351 = vpow.pop %v2350
        %v2352 = vadd.f32 %v2351, 1.0
        %v2353 = vrcp.pop %v2352
        %v2354 = vmul.f32 1.0, %v2353
        %v2355 = vadd.f32 %v2222, %v2304
        %v2356 = vxor.u32 %v2355, 2147483648
        %v2357 = vmul.f32 %v2356, 1.442695
        %v2358 = vpow.pop %v2357
        %v2359 = vadd.f32 %v2358, 1.0
        %v2360 = vrcp.pop %v2359
        %v2361 = vmul.f32 1.0, %v2360
        %v2362 = vmul.f32 %v2354, %v2343
        %v2363 = vadd.f32 %v2261, %v2362
        %v2364 = vtanh.pop %v2363
        %v2365 = vsub.f32 1.0, %v2361
        %v2366 = vmul.f32 %v2365, %v2364
        %v2367 = vmul.f32 %v2361, %v2177
        %v2368 = vadd.f32 %v2366, %v2367
        %s2369 = scalar_lea.vmem %s447, %s2181 [#allocation11]
        %2370 = vst [vmem:[%s2369] sm:$0xff] %v2368
        %2371 = vst [vmem:[%s552] sm:$0xff] %v2368
        // Predicated region
        $region61: #{bert_gru_sentiment_forward.3} parent=39 // pred_check
          %p2372 = pneg %p478
        $region62: #{bert_gru_sentiment_forward.3} parent=39 // pred_check_branch
          %2374 = sbr.rel (%p2372) target = $region64
        $region63: #{bert_gru_sentiment_forward.3} parent=39 // pred_region
          %2375 = vst [vmem:[%s454] sm:$0xff] %v2368
        $region64: #{bert_gru_sentiment_forward.3} parent=39 // pred_fallthru
          _
        %s2376 = sand.u32 %s202, 1
        %s2377 = sand.u32 %s202, 1
        %s2378 = smul.addr %s2377, 64
        %s2379 = scalar_lea.vmem [#allocation11], %s2378
        %s2380 = sand.u32 %s228, 1
        %s2381 = scalar_lea.sflag [#allocation5], %s2380
        %s2382 = sand.u32 %s228, 1
        %s2383 = smul.addr %s2382, 8
        %s2384 = scalar_lea.vmem [#allocation12], %s2383
        // Predicated region
        $region65: #{bert_gru_sentiment_forward.3} parent=39 // pred_check
          %p2385 = pneg %p212
        $region66: #{bert_gru_sentiment_forward.3} parent=39 // pred_check_branch
          %2387 = sbr.rel (%p2385) target = $region68
        $region67: #{bert_gru_sentiment_forward.3} parent=39 // pred_region
          %s2388 = ssub.s32 1, %s34
          %s2389 = smul.u32 %s2388, %s35
          %s2390 = ssub.s32 0, %s35
          %s2391 = smul.u32 %s34, %s2390
          %s2392 = sadd.s32 %s2389, %s2391
          %s2393 = smul.u32 8, %s2392
          %s2394 = smul.addr %s2393, 2
          %s2395 = sadd.s32 %s34, %s2394
          %s2396 = smul.addr %s2395, 8
          %s2397 = scalar_lea.vmem %s5, %s2396
          // Predicated region
          $region69: #{bert_gru_sentiment_forward.3} parent=67 // pred_check
            _
          $region70: #{bert_gru_sentiment_forward.3} parent=67 // pred_check_branch
            %2399 = sbr.rel (0) target = $region72
          $region71: #{bert_gru_sentiment_forward.3} parent=67 // pred_region
            // Predicated region
            $region73: #{bert_gru_sentiment_forward.3} parent=71 // pred_check
              _
            $region74: #{bert_gru_sentiment_forward.3} parent=71 // pred_check_branch
              %2401 = sbr.rel (0) target = $region76
            $region75: #{bert_gru_sentiment_forward.3} parent=71 // pred_region
              // Predicated region
              $region88: #{bert_gru_sentiment_forward.3} parent=75 // pred_check
                _
              $region89: #{bert_gru_sentiment_forward.3} parent=75 // pred_check_branch
                %2431 = sbr.rel (0) target = $region91
              $region90: #{bert_gru_sentiment_forward.3} parent=75 // pred_region
                loop: start=0, step=1, limit=1
                $region92: #{bert_gru_sentiment_forward.3} parent=90 // loop_pre_header
                  _
                $region93: #{bert_gru_sentiment_forward.3} parent=90 // loop_header
                  %s2433 = sphi 0, %s2437
                  %p2434 = scmp.ge.s32.totalorder %s2433, 1
                  %s2438 = sphi %s2379, %s2379
                  %s2439 = sphi %s2397, %s2397
                $region94: #{bert_gru_sentiment_forward.3} parent=90 // loop_header_branch
                  %2436 = sbr.rel (%p2434) target = $region98
                $region95: #{bert_gru_sentiment_forward.3} parent=90 // loop_body
                  %v2440 = vld [vmem:[%s2438] sm:$0xff]
                  %2441 = vst [vmem:[%s2439] sm:$0xff] %v2440
                  %v2442 = vld [vmem:[%s2438 + $0x8] sm:$0xff]
                  %2443 = vst [vmem:[%s2439 + $0x10] sm:$0xff] %v2442
                  %v2444 = vld [vmem:[%s2438 + $0x10] sm:$0xff]
                  %2445 = vst [vmem:[%s2439 + $0x20] sm:$0xff] %v2444
                  %v2446 = vld [vmem:[%s2438 + $0x18] sm:$0xff]
                  %2447 = vst [vmem:[%s2439 + $0x30] sm:$0xff] %v2446
                  %v2448 = vld [vmem:[%s2438 + $0x20] sm:$0xff]
                  %2449 = vst [vmem:[%s2439 + $0x40] sm:$0xff] %v2448
                  %v2450 = vld [vmem:[%s2438 + $0x28] sm:$0xff]
                  %2451 = vst [vmem:[%s2439 + $0x50] sm:$0xff] %v2450
                  %v2452 = vld [vmem:[%s2438 + $0x30] sm:$0xff]
                  %2453 = vst [vmem:[%s2439 + $0x60] sm:$0xff] %v2452
                  %v2454 = vld [vmem:[%s2438 + $0x38] sm:$0xff]
                  %2455 = vst [vmem:[%s2439 + $0x70] sm:$0xff] %v2454
                $region96: #{bert_gru_sentiment_forward.3} parent=90 // loop_footer
                  %s2437 = sadd.s32 1, %s2433
                $region97: #{bert_gru_sentiment_forward.3} parent=90 // loop_footer_branch
                  %2432 = sbr.rel target = $region93
                $region98: #{bert_gru_sentiment_forward.3} parent=90 // loop_exit
                  _
              $region91: #{bert_gru_sentiment_forward.3} parent=75 // pred_fallthru
                _
              // Predicated region
              $region99: #{bert_gru_sentiment_forward.3} parent=75 // pred_check
                _
              $region100: #{bert_gru_sentiment_forward.3} parent=75 // pred_check_branch
                %2457 = sbr.rel target = $region102
              $region101: #{bert_gru_sentiment_forward.3} parent=75 // pred_region
                _
              $region102: #{bert_gru_sentiment_forward.3} parent=75 // pred_fallthru
                _
            $region76: #{bert_gru_sentiment_forward.3} parent=71 // pred_fallthru
              _
            // Predicated region
            $region77: #{bert_gru_sentiment_forward.3} parent=71 // pred_check
              _
            $region78: #{bert_gru_sentiment_forward.3} parent=71 // pred_check_branch
              %2403 = sbr.rel target = $region80
            $region79: #{bert_gru_sentiment_forward.3} parent=71 // pred_region
              %s2405 = ssub.s32 256, 1
              loop: start=0, step=1, limit=1
              $region81: #{bert_gru_sentiment_forward.3} parent=79 // loop_pre_header
                _
              $region82: #{bert_gru_sentiment_forward.3} parent=79 // loop_header
                %s2407 = sphi 0, %s2411
                %p2408 = scmp.ge.s32.totalorder %s2407, 1
                %s2412 = sphi %s2379, %s2379
                %s2413 = sphi %s2397, %s2397
              $region83: #{bert_gru_sentiment_forward.3} parent=79 // loop_header_branch
                %2410 = sbr.rel (%p2408) target = $region87
              $region84: #{bert_gru_sentiment_forward.3} parent=79 // loop_body
                %v2414 = vld [vmem:[%s2412] sm:%s2405]
                %2415 = vst [vmem:[%s2413] sm:%s2405] %v2414
                %v2416 = vld [vmem:[%s2412 + $0x8] sm:%s2405]
                %2417 = vst [vmem:[%s2413 + $0x10] sm:%s2405] %v2416
                %v2418 = vld [vmem:[%s2412 + $0x10] sm:%s2405]
                %2419 = vst [vmem:[%s2413 + $0x20] sm:%s2405] %v2418
                %v2420 = vld [vmem:[%s2412 + $0x18] sm:%s2405]
                %2421 = vst [vmem:[%s2413 + $0x30] sm:%s2405] %v2420
                %v2422 = vld [vmem:[%s2412 + $0x20] sm:%s2405]
                %2423 = vst [vmem:[%s2413 + $0x40] sm:%s2405] %v2422
                %v2424 = vld [vmem:[%s2412 + $0x28] sm:%s2405]
                %2425 = vst [vmem:[%s2413 + $0x50] sm:%s2405] %v2424
                %v2426 = vld [vmem:[%s2412 + $0x30] sm:%s2405]
                %2427 = vst [vmem:[%s2413 + $0x60] sm:%s2405] %v2426
                %v2428 = vld [vmem:[%s2412 + $0x38] sm:%s2405]
                %2429 = vst [vmem:[%s2413 + $0x70] sm:%s2405] %v2428
              $region85: #{bert_gru_sentiment_forward.3} parent=79 // loop_footer
                %s2411 = sadd.s32 1, %s2407
              $region86: #{bert_gru_sentiment_forward.3} parent=79 // loop_footer_branch
                %2406 = sbr.rel target = $region82
              $region87: #{bert_gru_sentiment_forward.3} parent=79 // loop_exit
                _
            $region80: #{bert_gru_sentiment_forward.3} parent=71 // pred_fallthru
              _
          $region72: #{bert_gru_sentiment_forward.3} parent=67 // pred_fallthru
            _
          %2458 = vnop
        $region68: #{bert_gru_sentiment_forward.3} parent=39 // pred_fallthru
          _
        // Predicated region
        $region103: #{bert_gru_sentiment_forward.3} parent=39 // pred_check
          %p2459 = pneg %p238
        $region104: #{bert_gru_sentiment_forward.3} parent=39 // pred_check_branch
          %2461 = sbr.rel (%p2459) target = $region106
        $region105: #{bert_gru_sentiment_forward.3} parent=39 // pred_region
          %s2463 = ssub.s32 128, 128
          %2464 = vsyncadd %s2381, %s2463
          %s2465 = smul.addr %s34, 128
          %s2466 = scalar_lea.hbm %s6, %s2465
          %s2468 = sshll.u32 %s2384, 4
          %s2469 = int_to_ptr.vmem [resolvable:$true] %s2468
          %2471 = dma.vmem_to_hbm [thread:$0]  %s2469, 128, %s2466, %s2381
        $region106: #{bert_gru_sentiment_forward.3} parent=39 // pred_fallthru
          _
      $region40: #{bert_gru_sentiment_forward.3} parent=5 // pred_fallthru
        _
      %p2472 = scmp.le.s32.totalorder 2, %s25
      // Predicated region
      $region107: #{bert_gru_sentiment_forward.3} parent=5 // pred_check
        %p2473 = pneg %p2472
      $region108: #{bert_gru_sentiment_forward.3} parent=5 // pred_check_branch
        %2475 = sbr.rel (%p2473) target = $region110
      $region109: #{bert_gru_sentiment_forward.3} parent=5 // pred_region
        %s2476 = ssub.s32 %s25, 2
        // Predicated region
        $region111: #{bert_gru_sentiment_forward.3} parent=109 // pred_check
          %p2477 = pneg %p218
        $region112: #{bert_gru_sentiment_forward.3} parent=109 // pred_check_branch
          %2479 = sbr.rel (%p2477) target = $region114
        $region113: #{bert_gru_sentiment_forward.3} parent=109 // pred_region
          %s2480 = sand.u32 %s203, 1
          %s2481 = sand.u32 %s203, 1
          %s2482 = smul.addr %s2481, 64
          %s2483 = scalar_lea.vmem [#allocation11], %s2482
        $region114: #{bert_gru_sentiment_forward.3} parent=109 // pred_fallthru
          _
        // Predicated region
        $region115: #{bert_gru_sentiment_forward.3} parent=109 // pred_check
          %p2484 = pneg %p244
        $region116: #{bert_gru_sentiment_forward.3} parent=109 // pred_check_branch
          %2486 = sbr.rel (%p2484) target = $region118
        $region117: #{bert_gru_sentiment_forward.3} parent=109 // pred_region
          %s2487 = sand.u32 %s229, 1
          %s2488 = scalar_lea.sflag [#allocation5], %s2487
          %s2489 = sand.u32 %s229, 1
          %s2490 = smul.addr %s2489, 8
          %s2491 = scalar_lea.vmem [#allocation12], %s2490
          %2492 = dma.done %s2488, 128
        $region118: #{bert_gru_sentiment_forward.3} parent=109 // pred_fallthru
          _
      $region110: #{bert_gru_sentiment_forward.3} parent=5 // pred_fallthru
        _
    $region6: #{bert_gru_sentiment_forward.3} parent=1 // loop_footer
      %s29 = sadd.s32 1, %s25
    $region7: #{bert_gru_sentiment_forward.3} parent=1 // loop_footer_branch
      %24 = sbr.rel target = $region3
    $region8: #{bert_gru_sentiment_forward.3} parent=1 // loop_exit
      _
    %2493 = vsyncpa [#allocation4], 1
    %s2494 = scalar_lea.sflag [#allocation4], 1
    %2495 = vsyncpa %s2494, 1
    %2496 = vsyncpa [#allocation7], 1
    %s2497 = scalar_lea.sflag [#allocation7], 1
    %2498 = vsyncpa %s2497, 1
    %2499 = vsyncpa [#allocation10], 1
    %s2500 = scalar_lea.sflag [#allocation10], 1
    %2501 = vsyncpa %s2500, 1
    %2502 = vsyncpa [#allocation5], 1
    %s2503 = scalar_lea.sflag [#allocation5], 1
    %2504 = vsyncpa %s2503, 1

// kernel: bert_gru_sentiment_forward.4
$region0: #{bert_gru_sentiment_forward.4}
  #allocation0 [shape = 'u32[]', space=smem, size = 0x4, offset = 0x4, fixed_abs, tag = 'smem constant byte address 0x4 - core index']
  #allocation1 [shape = 'u32[144,128]{1,0:T(1,128)}', space=vmem, size = 0x12000, scoped, tag = 'internal scratch']
  #allocation2 [shape = 'f32[2,8,128]{2,1,0:T(8,128)}', space=vmem, size = 0x2000, scoped, tag = 'scratch operand']
  %s0 = inlined_call_operand.vmem [shape: f32[8,8,256], index: 0, kind: input, shape index: {}]
  %s1 = inlined_call_operand.vmem [shape: bf16[2,256,384], index: 1, kind: input, shape index: {}]
  %s2 = inlined_call_operand.vmem [shape: bf16[2,128,384], index: 2, kind: input, shape index: {}]
  %s3 = inlined_call_operand.vmem [shape: f32[2,1,384], index: 3, kind: input, shape index: {}]
  %s4 = inlined_call_operand.vmem [shape: f32[2,1,384], index: 4, kind: input, shape index: {}]
  %s5 = inlined_call_operand.hbm [shape: f32[8,8,256], index: 5, kind: output, shape index: {0}]
  %s6 = inlined_call_operand.vmem [shape: f32[2,8,128], index: 6, kind: output, shape index: {1}]
  %7 = xla_tuple %s5, %s6
  %s8 = sld [smem:[#allocation0]]
  $region69: #{bert_gru_sentiment_forward.4} parent=0
    _
  %s10 = ssub.s32 1, %s8
  %s11 = scalar_select 0, %s10, %s8
  $region1: #{bert_gru_sentiment_forward.4} parent=0
    #allocation3 [shape = 'u8[65536]{0}', space=vmem, size = 0x10000, scoped, tag = 'output window, operand 0']
    #allocation4 [shape = 's32[2]{0}', space=sflag, size = 0x8, scoped, tag = 'scoped memory for bert_gru_sentiment_forward.4']
    %12 = vsyncpa [#allocation4], 0
    %s13 = scalar_lea.sflag [#allocation4], 1
    %14 = vsyncpa %s13, 0
    loop: start=0, step=1, limit=4
    $region2: #{bert_gru_sentiment_forward.4} parent=1 // loop_pre_header
      _
    $region3: #{bert_gru_sentiment_forward.4} parent=1 // loop_header
      %s16 = sphi 0, %s20
      %p17 = scmp.ge.s32.totalorder %s16, 4
      %s23 = sphi 0, %s35
      %s24 = sphi 0, %s31
      %s25 = sphi 0, %s23
      %s26 = sphi 0, %s24
      %s27 = sphi 0, %s25
      %s28 = sphi 0, %s26
      %s48 = sphi 0, %s50
      %s51 = sphi 0, %s48
      %s52 = sphi 0, %s51
      %s68 = sphi 0, %s52
      %s74 = sphi 0, %s76
      %s77 = sphi 0, %s74
      %s78 = sphi 0, %s77
      %s94 = sphi 0, %s78
      %s100 = sphi 0, %s102
      %s103 = sphi 0, %s100
      %s104 = sphi 0, %s103
      %s120 = sphi 0, %s104
      %s126 = sphi 0, %s128
      %s129 = sphi 0, %s126
      %s130 = sphi 0, %s129
      %s146 = sphi 0, %s130
      %s152 = sphi 0, %s154
      %s155 = sphi 0, %s152
      %s156 = sphi 0, %s155
      %s172 = sphi 0, %s156
      %s190 = sphi 0, %s192
      %s193 = sphi 0, %s190
      %s194 = sphi 0, %s193
      %s210 = sphi 0, %s194
      %s216 = sphi 0, %s218
      %s219 = sphi 0, %s216
      %s220 = sphi 0, %s219
      %s236 = sphi 0, %s220
    $region4: #{bert_gru_sentiment_forward.4} parent=1 // loop_header_branch
      %19 = sbr.rel (%p17) target = $region8
    $region5: #{bert_gru_sentiment_forward.4} parent=1 // loop_body
      %s21 = ssub.s32 %s16, 1
      %s22 = ssub.s32 %s16, 2
      %s29 = sadd.s32 1, %s24
      %p30 = scmp.ge.s32.totalorder %s29, 1
      %s31 = scalar_select %p30, 0, %s29
      %s32 = sadd.s32 1, %s23
      %s33 = scalar_select %p30, %s32, %s23
      %p34 = scmp.ge.s32.totalorder %s33, 2
      %s35 = scalar_select %p34, 0, %s33
      %s36 = ssub.s32 1, %s23
      %s37 = smul.u32 %s36, %s24
      %s38 = ssub.s32 0, %s24
      %s39 = smul.u32 %s23, %s38
      %s40 = sadd.s32 %s37, %s39
      %s41 = ssub.s32 1, %s35
      %s42 = smul.u32 %s41, %s31
      %s43 = ssub.s32 0, %s31
      %s44 = smul.u32 %s35, %s43
      %s45 = sadd.s32 %s42, %s44
      %s46 = ssub.s32 %s40, %s45
      %p47 = scmp.eq.s32.totalorder %s46, 0
      %s49 = sadd.s32 %s48, 1
      %s50 = scalar_select %p47, %s48, %s49
      %p53 = pneg %p47
      %p54 = scmp.eq.s32.totalorder %s16, 1
      %p55 = por %p53, %p54
      %p56 = scmp.ne.s32.totalorder %s48, %s51
      %p57 = scmp.eq.s32.totalorder %s16, 0
      %p58 = por %p56, %p57
      %p59 = scmp.ne.s32.totalorder %s48, %s51
      %p60 = scmp.eq.s32.totalorder %s21, 1
      %p61 = por %p59, %p60
      %p62 = scmp.ne.s32.totalorder %s51, %s52
      %p63 = scmp.eq.s32.totalorder %s21, 0
      %p64 = por %p62, %p63
      %p65 = scmp.ne.s32.totalorder %s51, %s52
      %p66 = scmp.eq.s32.totalorder %s22, 1
      %p67 = por %p65, %p66
      %p69 = scmp.ne.s32.totalorder %s52, %s68
      %p70 = scmp.eq.s32.totalorder %s22, 0
      %p71 = por %p69, %p70
      %s72 = ssub.s32 %s23, %s35
      %p73 = scmp.eq.s32.totalorder %s72, 0
      %s75 = sadd.s32 %s74, 1
      %s76 = scalar_select %p73, %s74, %s75
      %p79 = pneg %p73
      %p80 = scmp.eq.s32.totalorder %s16, 1
      %p81 = por %p79, %p80
      %p82 = scmp.ne.s32.totalorder %s74, %s77
      %p83 = scmp.eq.s32.totalorder %s16, 0
      %p84 = por %p82, %p83
      %p85 = scmp.ne.s32.totalorder %s74, %s77
      %p86 = scmp.eq.s32.totalorder %s21, 1
      %p87 = por %p85, %p86
      %p88 = scmp.ne.s32.totalorder %s77, %s78
      %p89 = scmp.eq.s32.totalorder %s21, 0
      %p90 = por %p88, %p89
      %p91 = scmp.ne.s32.totalorder %s77, %s78
      %p92 = scmp.eq.s32.totalorder %s22, 1
      %p93 = por %p91, %p92
      %p95 = scmp.ne.s32.totalorder %s78, %s94
      %p96 = scmp.eq.s32.totalorder %s22, 0
      %p97 = por %p95, %p96
      %s98 = ssub.s32 %s23, %s35
      %p99 = scmp.eq.s32.totalorder %s98, 0
      %s101 = sadd.s32 %s100, 1
      %s102 = scalar_select %p99, %s100, %s101
      %p105 = pneg %p99
      %p106 = scmp.eq.s32.totalorder %s16, 1
      %p107 = por %p105, %p106
      %p108 = scmp.ne.s32.totalorder %s100, %s103
      %p109 = scmp.eq.s32.totalorder %s16, 0
      %p110 = por %p108, %p109
      %p111 = scmp.ne.s32.totalorder %s100, %s103
      %p112 = scmp.eq.s32.totalorder %s21, 1
      %p113 = por %p111, %p112
      %p114 = scmp.ne.s32.totalorder %s103, %s104
      %p115 = scmp.eq.s32.totalorder %s21, 0
      %p116 = por %p114, %p115
      %p117 = scmp.ne.s32.totalorder %s103, %s104
      %p118 = scmp.eq.s32.totalorder %s22, 1
      %p119 = por %p117, %p118
      %p121 = scmp.ne.s32.totalorder %s104, %s120
      %p122 = scmp.eq.s32.totalorder %s22, 0
      %p123 = por %p121, %p122
      %s124 = ssub.s32 %s23, %s35
      %p125 = scmp.eq.s32.totalorder %s124, 0
      %s127 = sadd.s32 %s126, 1
      %s128 = scalar_select %p125, %s126, %s127
      %p131 = pneg %p125
      %p132 = scmp.eq.s32.totalorder %s16, 1
      %p133 = por %p131, %p132
      %p134 = scmp.ne.s32.totalorder %s126, %s129
      %p135 = scmp.eq.s32.totalorder %s16, 0
      %p136 = por %p134, %p135
      %p137 = scmp.ne.s32.totalorder %s126, %s129
      %p138 = scmp.eq.s32.totalorder %s21, 1
      %p139 = por %p137, %p138
      %p140 = scmp.ne.s32.totalorder %s129, %s130
      %p141 = scmp.eq.s32.totalorder %s21, 0
      %p142 = por %p140, %p141
      %p143 = scmp.ne.s32.totalorder %s129, %s130
      %p144 = scmp.eq.s32.totalorder %s22, 1
      %p145 = por %p143, %p144
      %p147 = scmp.ne.s32.totalorder %s130, %s146
      %p148 = scmp.eq.s32.totalorder %s22, 0
      %p149 = por %p147, %p148
      %s150 = ssub.s32 %s23, %s35
      %p151 = scmp.eq.s32.totalorder %s150, 0
      %s153 = sadd.s32 %s152, 1
      %s154 = scalar_select %p151, %s152, %s153
      %p157 = pneg %p151
      %p158 = scmp.eq.s32.totalorder %s16, 1
      %p159 = por %p157, %p158
      %p160 = scmp.ne.s32.totalorder %s152, %s155
      %p161 = scmp.eq.s32.totalorder %s16, 0
      %p162 = por %p160, %p161
      %p163 = scmp.ne.s32.totalorder %s152, %s155
      %p164 = scmp.eq.s32.totalorder %s21, 1
      %p165 = por %p163, %p164
      %p166 = scmp.ne.s32.totalorder %s155, %s156
      %p167 = scmp.eq.s32.totalorder %s21, 0
      %p168 = por %p166, %p167
      %p169 = scmp.ne.s32.totalorder %s155, %s156
      %p170 = scmp.eq.s32.totalorder %s22, 1
      %p171 = por %p169, %p170
      %p173 = scmp.ne.s32.totalorder %s156, %s172
      %p174 = scmp.eq.s32.totalorder %s22, 0
      %p175 = por %p173, %p174
      %s176 = ssub.s32 1, %s23
      %s177 = smul.u32 %s176, %s24
      %s178 = ssub.s32 0, %s24
      %s179 = smul.u32 %s23, %s178
      %s180 = sadd.s32 %s177, %s179
      %s181 = ssub.s32 1, %s35
      %s182 = smul.u32 %s181, %s31
      %s183 = ssub.s32 0, %s31
      %s184 = smul.u32 %s35, %s183
      %s185 = sadd.s32 %s182, %s184
      %s186 = ssub.s32 %s180, %s185
      %s187 = ssub.s32 %s23, %s35
      %s188 = sor.u32 %s186, %s187
      %p189 = scmp.eq.s32.totalorder %s188, 0
      %s191 = sadd.s32 %s190, 1
      %s192 = scalar_select %p189, %s190, %s191
      %p195 = pneg %p189
      %p196 = scmp.eq.s32.totalorder %s16, 1
      %p197 = por %p195, %p196
      %p198 = scmp.ne.s32.totalorder %s190, %s193
      %p199 = scmp.eq.s32.totalorder %s16, 0
      %p200 = por %p198, %p199
      %p201 = scmp.ne.s32.totalorder %s190, %s193
      %p202 = scmp.eq.s32.totalorder %s21, 1
      %p203 = por %p201, %p202
      %p204 = scmp.ne.s32.totalorder %s193, %s194
      %p205 = scmp.eq.s32.totalorder %s21, 0
      %p206 = por %p204, %p205
      %p207 = scmp.ne.s32.totalorder %s193, %s194
      %p208 = scmp.eq.s32.totalorder %s22, 1
      %p209 = por %p207, %p208
      %p211 = scmp.ne.s32.totalorder %s194, %s210
      %p212 = scmp.eq.s32.totalorder %s22, 0
      %p213 = por %p211, %p212
      %s214 = ssub.s32 %s23, %s35
      %p215 = scmp.eq.s32.totalorder %s214, 0
      %s217 = sadd.s32 %s216, 1
      %s218 = scalar_select %p215, %s216, %s217
      %p221 = pneg %p215
      %p222 = scmp.eq.s32.totalorder %s16, 1
      %p223 = por %p221, %p222
      %p224 = scmp.ne.s32.totalorder %s216, %s219
      %p225 = scmp.eq.s32.totalorder %s16, 0
      %p226 = por %p224, %p225
      %p227 = scmp.ne.s32.totalorder %s216, %s219
      %p228 = scmp.eq.s32.totalorder %s21, 1
      %p229 = por %p227, %p228
      %p230 = scmp.ne.s32.totalorder %s219, %s220
      %p231 = scmp.eq.s32.totalorder %s21, 0
      %p232 = por %p230, %p231
      %p233 = scmp.ne.s32.totalorder %s219, %s220
      %p234 = scmp.eq.s32.totalorder %s22, 1
      %p235 = por %p233, %p234
      %p237 = scmp.ne.s32.totalorder %s220, %s236
      %p238 = scmp.eq.s32.totalorder %s22, 0
      %p239 = por %p237, %p238
      %p240 = scmp.le.s32.totalorder 1, %s16
      %p241 = scmp.lt.s32.totalorder %s16, 3
      %p242 = pnand %p240, %p241
      %p243 = pneg %p242
      // Predicated region
      $region9: #{bert_gru_sentiment_forward.4} parent=5 // pred_check
        _
      $region10: #{bert_gru_sentiment_forward.4} parent=5 // pred_check_branch
        %245 = sbr.rel (%p242) target = $region12
      $region11: #{bert_gru_sentiment_forward.4} parent=5 // pred_region
        %s246 = ssub.s32 %s16, 1
      $region12: #{bert_gru_sentiment_forward.4} parent=5 // pred_fallthru
        _
      %p247 = scmp.lt.s32.totalorder %s16, 2
      // Predicated region
      $region13: #{bert_gru_sentiment_forward.4} parent=5 // pred_check
        %p248 = pneg %p247
      $region14: #{bert_gru_sentiment_forward.4} parent=5 // pred_check_branch
        %250 = sbr.rel (%p248) target = $region16
      $region15: #{bert_gru_sentiment_forward.4} parent=5 // pred_region
        // Predicated region
        $region17: #{bert_gru_sentiment_forward.4} parent=15 // pred_check
          %p251 = pneg %p58
        $region18: #{bert_gru_sentiment_forward.4} parent=15 // pred_check_branch
          %253 = sbr.rel (%p251) target = $region20
        $region19: #{bert_gru_sentiment_forward.4} parent=15 // pred_region
          %s254 = ssub.s32 1, %s23
          %s255 = smul.u32 %s254, %s24
          %s256 = ssub.s32 0, %s24
          %s257 = smul.u32 %s23, %s256
          %s258 = sadd.s32 %s255, %s257
          %s259 = smul.u32 8, %s258
          %p260 = scmp.lt.s32.totalorder %s259, 7
          %s261 = scalar_select %p260, %s259, 7
          %s262 = smul.addr %s261, 2
          %s263 = smul.addr %s262, 8
          %s264 = scalar_lea.vmem %s0, %s263
          %s265 = ssub.s32 1, %s23
          %s266 = smul.u32 %s265, %s24
          %s267 = ssub.s32 0, %s24
          %s268 = smul.u32 %s23, %s267
          %s269 = sadd.s32 %s266, %s268
          %s270 = smul.u32 8, %s269
        $region20: #{bert_gru_sentiment_forward.4} parent=15 // pred_fallthru
          _
        // Predicated region
        $region21: #{bert_gru_sentiment_forward.4} parent=15 // pred_check
          %p271 = pneg %p84
        $region22: #{bert_gru_sentiment_forward.4} parent=15 // pred_check_branch
          %273 = sbr.rel (%p271) target = $region24
        $region23: #{bert_gru_sentiment_forward.4} parent=15 // pred_region
          %p274 = scmp.lt.s32.totalorder %s23, 1
          %s275 = scalar_select %p274, %s23, 1
          %s276 = smul.addr %s275, 96
          %s277 = smul.addr %s276, 4
          %s278 = scalar_lea.vmem %s1, %s277
        $region24: #{bert_gru_sentiment_forward.4} parent=15 // pred_fallthru
          _
        // Predicated region
        $region25: #{bert_gru_sentiment_forward.4} parent=15 // pred_check
          %p279 = pneg %p110
        $region26: #{bert_gru_sentiment_forward.4} parent=15 // pred_check_branch
          %281 = sbr.rel (%p279) target = $region28
        $region27: #{bert_gru_sentiment_forward.4} parent=15 // pred_region
          %p282 = scmp.lt.s32.totalorder %s23, 1
          %s283 = scalar_select %p282, %s23, 1
          %s284 = smul.addr %s283, 48
          %s285 = smul.addr %s284, 4
          %s286 = scalar_lea.vmem %s2, %s285
        $region28: #{bert_gru_sentiment_forward.4} parent=15 // pred_fallthru
          _
        // Predicated region
        $region29: #{bert_gru_sentiment_forward.4} parent=15 // pred_check
          %p287 = pneg %p136
        $region30: #{bert_gru_sentiment_forward.4} parent=15 // pred_check_branch
          %289 = sbr.rel (%p287) target = $region32
        $region31: #{bert_gru_sentiment_forward.4} parent=15 // pred_region
          %p290 = scmp.lt.s32.totalorder %s23, 1
          %s291 = scalar_select %p290, %s23, 1
          %s292 = smul.addr %s291, 3
          %s293 = scalar_lea.vmem %s3, %s292
        $region32: #{bert_gru_sentiment_forward.4} parent=15 // pred_fallthru
          _
        // Predicated region
        $region33: #{bert_gru_sentiment_forward.4} parent=15 // pred_check
          %p294 = pneg %p162
        $region34: #{bert_gru_sentiment_forward.4} parent=15 // pred_check_branch
          %296 = sbr.rel (%p294) target = $region36
        $region35: #{bert_gru_sentiment_forward.4} parent=15 // pred_region
          %p297 = scmp.lt.s32.totalorder %s23, 1
          %s298 = scalar_select %p297, %s23, 1
          %s299 = smul.addr %s298, 3
          %s300 = scalar_lea.vmem %s4, %s299
        $region36: #{bert_gru_sentiment_forward.4} parent=15 // pred_fallthru
          _
      $region16: #{bert_gru_sentiment_forward.4} parent=5 // pred_fallthru
        _
      %p301 = scmp.le.s32.totalorder 1, %s16
      %p302 = scmp.lt.s32.totalorder %s16, 3
      %p303 = pnand %p301, %p302
      %p304 = pneg %p303
      // Predicated region
      $region37: #{bert_gru_sentiment_forward.4} parent=5 // pred_check
        _
      $region38: #{bert_gru_sentiment_forward.4} parent=5 // pred_check_branch
        %306 = sbr.rel (%p303) target = $region40
      $region39: #{bert_gru_sentiment_forward.4} parent=5 // pred_region
        %s307 = ssub.s32 %s16, 1
        %s308 = ssub.s32 1, %s25
        %s309 = smul.u32 %s308, %s26
        %s310 = ssub.s32 0, %s26
        %s311 = smul.u32 %s25, %s310
        %s312 = sadd.s32 %s309, %s311
        %s313 = smul.u32 8, %s312
        %p314 = scmp.lt.s32.totalorder %s313, 7
        %s315 = scalar_select %p314, %s313, 7
        %s316 = smul.addr %s315, 2
        %s317 = smul.addr %s316, 8
        %s318 = scalar_lea.vmem %s0, %s317
        %p319 = pneg %p64
        %p320 = pneg %p61
        %p321 = scmp.lt.s32.totalorder %s25, 1
        %s322 = scalar_select %p321, %s25, 1
        %s323 = smul.addr %s322, 96
        %s324 = smul.addr %s323, 4
        %s325 = scalar_lea.vmem %s1, %s324
        %p326 = pneg %p90
        %p327 = pneg %p87
        %p328 = scmp.lt.s32.totalorder %s25, 1
        %s329 = scalar_select %p328, %s25, 1
        %s330 = smul.addr %s329, 48
        %s331 = smul.addr %s330, 4
        %s332 = scalar_lea.vmem %s2, %s331
        %p333 = pneg %p116
        %p334 = pneg %p113
        %p335 = scmp.lt.s32.totalorder %s25, 1
        %s336 = scalar_select %p335, %s25, 1
        %s337 = smul.addr %s336, 3
        %s338 = scalar_lea.vmem %s3, %s337
        %p339 = pneg %p142
        %p340 = pneg %p139
        %p341 = scmp.lt.s32.totalorder %s25, 1
        %s342 = scalar_select %p341, %s25, 1
        %s343 = smul.addr %s342, 3
        %s344 = scalar_lea.vmem %s4, %s343
        %p345 = pneg %p168
        %p346 = pneg %p165
        %p347 = pneg %p206
        %p348 = pneg %p203
        %s349 = sand.u32 %s193, 1
        %s350 = scalar_lea.sflag [#allocation4], %s349
        %s351 = sand.u32 %s193, 1
        %s352 = smul.addr %s351, 64
        %s353 = scalar_lea.vmem [#allocation3], %s352
        %p354 = pneg %p232
        %p355 = pneg %p229
        %p356 = scmp.lt.s32.totalorder %s25, 1
        %s357 = scalar_select %p356, %s25, 1
        %s358 = smul.addr %s357, 8
        %s359 = scalar_lea.vmem %s6, %s358
        %s360 = ssub.s32 1, %s25
        %s361 = smul.u32 %s360, %s26
        %s362 = ssub.s32 0, %s26
        %s363 = smul.u32 %s25, %s362
        %s364 = sadd.s32 %s361, %s363
        %s365 = smul.u32 8, %s364
        %p366 = scmp.lt.s32.totalorder %s365, 7
        %s367 = scalar_select %p366, %s365, 7
        %s368 = smul.addr %s367, 2
        %s369 = smul.addr %s368, 8
        %s370 = scalar_lea.vmem %s0, %s369
        %s371 = ssub.s32 1, %s25
        %s372 = smul.u32 %s371, %s26
        %s373 = ssub.s32 0, %s26
        %s374 = smul.u32 %s25, %s373
        %s375 = sadd.s32 %s372, %s374
        %s376 = smul.u32 8, %s375
        %p377 = scmp.lt.s32.totalorder %s25, 1
        %s378 = scalar_select %p377, %s25, 1
        %s379 = smul.addr %s378, 96
        %s380 = smul.addr %s379, 4
        %s381 = scalar_lea.vmem %s1, %s380
        %p382 = scmp.lt.s32.totalorder %s25, 1
        %s383 = scalar_select %p382, %s25, 1
        %s384 = smul.addr %s383, 48
        %s385 = smul.addr %s384, 4
        %s386 = scalar_lea.vmem %s2, %s385
        %p387 = scmp.lt.s32.totalorder %s25, 1
        %s388 = scalar_select %p387, %s25, 1
        %s389 = smul.addr %s388, 3
        %s390 = scalar_lea.vmem %s3, %s389
        %p391 = scmp.lt.s32.totalorder %s25, 1
        %s392 = scalar_select %p391, %s25, 1
        %s393 = smul.addr %s392, 3
        %s394 = scalar_lea.vmem %s4, %s393
        %s395 = ssub.s32 1, %s25
        %s396 = smul.u32 %s395, %s26
        %s397 = ssub.s32 0, %s26
        %s398 = smul.u32 %s25, %s397
        %s399 = sadd.s32 %s396, %s398
        %s400 = smul.u32 8, %s399
        %p401 = scmp.lt.s32.totalorder %s25, 1
        %s402 = scalar_select %p401, %s25, 1
        %s403 = smul.addr %s402, 8
        %s404 = scalar_lea.vmem %s6, %s403
        %p406 = scmp.eq.s32.totalorder %s26, 0
        // Predicated region
        $region41: #{bert_gru_sentiment_forward.4} parent=39 // pred_check
          %p407 = pneg %p406
        $region42: #{bert_gru_sentiment_forward.4} parent=39 // pred_check_branch
          %409 = sbr.rel (%p407) target = $region44
        $region43: #{bert_gru_sentiment_forward.4} parent=39 // pred_region
          %s410 = smul.u32 %s25, 8
          %s411 = scalar_lea.vmem [#allocation2], %s410
          %412 = vst [vmem:[%s411] sm:$0xff] 0.0
        $region44: #{bert_gru_sentiment_forward.4} parent=39 // pred_fallthru
          _
        %v413 = vld [vmem:[%s381] sm:$0xff]
        %v414 = vld [vmem:[%s381 + $0x8] sm:$0xf]
        %v415 = vld [vmem:[%s381 + $0xc] sm:$0xff]
        %v416 = vld [vmem:[%s381 + $0x14] sm:$0xf]
        %v417 = vld [vmem:[%s381 + $0x18] sm:$0xff]
        %v418 = vld [vmem:[%s381 + $0x20] sm:$0xf]
        %v419 = vld [vmem:[%s381 + $0x24] sm:$0xff]
        %v420 = vld [vmem:[%s381 + $0x2c] sm:$0xf]
        %v421 = vld [vmem:[%s381 + $0x30] sm:$0xff]
        %v422 = vld [vmem:[%s381 + $0x38] sm:$0xf]
        %v423 = vld [vmem:[%s381 + $0x3c] sm:$0xff]
        %v424 = vld [vmem:[%s381 + $0x44] sm:$0xf]
        %v425 = vld [vmem:[%s381 + $0x48] sm:$0xff]
        %v426 = vld [vmem:[%s381 + $0x50] sm:$0xf]
        %v427 = vld [vmem:[%s381 + $0x54] sm:$0xff]
        %v428 = vld [vmem:[%s381 + $0x5c] sm:$0xf]
        %v429 = vld [vmem:[%s381 + $0x60] sm:$0xff]
        %v430 = vld [vmem:[%s381 + $0x68] sm:$0xf]
        %v431 = vld [vmem:[%s381 + $0x6c] sm:$0xff]
        %v432 = vld [vmem:[%s381 + $0x74] sm:$0xf]
        %v433 = vld [vmem:[%s381 + $0x78] sm:$0xff]
        %v434 = vld [vmem:[%s381 + $0x80] sm:$0xf]
        %v435 = vld [vmem:[%s381 + $0x84] sm:$0xff]
        %v436 = vld [vmem:[%s381 + $0x8c] sm:$0xf]
        %v437 = vld [vmem:[%s381 + $0x90] sm:$0xff]
        %v438 = vld [vmem:[%s381 + $0x98] sm:$0xf]
        %v439 = vld [vmem:[%s381 + $0x9c] sm:$0xff]
        %v440 = vld [vmem:[%s381 + $0xa4] sm:$0xf]
        %v441 = vld [vmem:[%s381 + $0xa8] sm:$0xff]
        %v442 = vld [vmem:[%s381 + $0xb0] sm:$0xf]
        %v443 = vld [vmem:[%s381 + $0xb4] sm:$0xff]
        %v444 = vld [vmem:[%s381 + $0xbc] sm:$0xf]
        %v445 = vld [vmem:[%s381 + $0xc0] sm:$0xff]
        %v446 = vld [vmem:[%s381 + $0xc8] sm:$0xf]
        %v447 = vld [vmem:[%s381 + $0xcc] sm:$0xff]
        %v448 = vld [vmem:[%s381 + $0xd4] sm:$0xf]
        %v449 = vld [vmem:[%s381 + $0xd8] sm:$0xff]
        %v450 = vld [vmem:[%s381 + $0xe0] sm:$0xf]
        %v451 = vld [vmem:[%s381 + $0xe4] sm:$0xff]
        %v452 = vld [vmem:[%s381 + $0xec] sm:$0xf]
        %v453 = vld [vmem:[%s381 + $0xf0] sm:$0xff]
        %v454 = vld [vmem:[%s381 + $0xf8] sm:$0xf]
        %v455 = vld [vmem:[%s381 + $0xfc] sm:$0xff]
        %v456 = vld [vmem:[%s381 + $0x104] sm:$0xf]
        %v457 = vld [vmem:[%s381 + $0x108] sm:$0xff]
        %v458 = vld [vmem:[%s381 + $0x110] sm:$0xf]
        %v459 = vld [vmem:[%s381 + $0x114] sm:$0xff]
        %v460 = vld [vmem:[%s381 + $0x11c] sm:$0xf]
        %v461 = vld [vmem:[%s381 + $0x120] sm:$0xff]
        %v462 = vld [vmem:[%s381 + $0x128] sm:$0xf]
        %v463 = vld [vmem:[%s381 + $0x12c] sm:$0xff]
        %v464 = vld [vmem:[%s381 + $0x134] sm:$0xf]
        %v465 = vld [vmem:[%s381 + $0x138] sm:$0xff]
        %v466 = vld [vmem:[%s381 + $0x140] sm:$0xf]
        %v467 = vld [vmem:[%s381 + $0x144] sm:$0xff]
        %v468 = vld [vmem:[%s381 + $0x14c] sm:$0xf]
        %v469 = vld [vmem:[%s381 + $0x150] sm:$0xff]
        %v470 = vld [vmem:[%s381 + $0x158] sm:$0xf]
        %v471 = vld [vmem:[%s381 + $0x15c] sm:$0xff]
        %v472 = vld [vmem:[%s381 + $0x164] sm:$0xf]
        %v473 = vld [vmem:[%s381 + $0x168] sm:$0xff]
        %v474 = vld [vmem:[%s381 + $0x170] sm:$0xf]
        %v475 = vld [vmem:[%s381 + $0x174] sm:$0xff]
        %v476 = vld [vmem:[%s381 + $0x17c] sm:$0xf]
        %v477 = vld [vmem:[%s386] sm:$0xff]
        %v478 = vld [vmem:[%s386 + $0x8] sm:$0xf]
        %v479 = vld [vmem:[%s386 + $0xc] sm:$0xff]
        %v480 = vld [vmem:[%s386 + $0x14] sm:$0xf]
        %v481 = vld [vmem:[%s386 + $0x18] sm:$0xff]
        %v482 = vld [vmem:[%s386 + $0x20] sm:$0xf]
        %v483 = vld [vmem:[%s386 + $0x24] sm:$0xff]
        %v484 = vld [vmem:[%s386 + $0x2c] sm:$0xf]
        %v485 = vld [vmem:[%s386 + $0x30] sm:$0xff]
        %v486 = vld [vmem:[%s386 + $0x38] sm:$0xf]
        %v487 = vld [vmem:[%s386 + $0x3c] sm:$0xff]
        %v488 = vld [vmem:[%s386 + $0x44] sm:$0xf]
        %v489 = vld [vmem:[%s386 + $0x48] sm:$0xff]
        %v490 = vld [vmem:[%s386 + $0x50] sm:$0xf]
        %v491 = vld [vmem:[%s386 + $0x54] sm:$0xff]
        %v492 = vld [vmem:[%s386 + $0x5c] sm:$0xf]
        %v493 = vld [vmem:[%s386 + $0x60] sm:$0xff]
        %v494 = vld [vmem:[%s386 + $0x68] sm:$0xf]
        %v495 = vld [vmem:[%s386 + $0x6c] sm:$0xff]
        %v496 = vld [vmem:[%s386 + $0x74] sm:$0xf]
        %v497 = vld [vmem:[%s386 + $0x78] sm:$0xff]
        %v498 = vld [vmem:[%s386 + $0x80] sm:$0xf]
        %v499 = vld [vmem:[%s386 + $0x84] sm:$0xff]
        %v500 = vld [vmem:[%s386 + $0x8c] sm:$0xf]
        %v501 = vld [vmem:[%s386 + $0x90] sm:$0xff]
        %v502 = vld [vmem:[%s386 + $0x98] sm:$0xf]
        %v503 = vld [vmem:[%s386 + $0x9c] sm:$0xff]
        %v504 = vld [vmem:[%s386 + $0xa4] sm:$0xf]
        %v505 = vld [vmem:[%s386 + $0xa8] sm:$0xff]
        %v506 = vld [vmem:[%s386 + $0xb0] sm:$0xf]
        %v507 = vld [vmem:[%s386 + $0xb4] sm:$0xff]
        %v508 = vld [vmem:[%s386 + $0xbc] sm:$0xf]
        %v509 = vld [vmem:[%s390] sm:$0x7]
        %v510 = vld [vmem:[%s394] sm:$0x7]
        %s511 = smul.u32 %s25, 8
        %s512 = scalar_lea.vmem [#allocation2], %s511
        %v513 = vld [vmem:[%s512] sm:$0xff]
        %p514 = scmp.eq.s32.totalorder %s25, 0
        %s515 = scalar_select %p514, 0, 7
        %s516 = smul.u32 %s515, 2
        %s517 = smul.addr %s516, 8
        %s518 = scalar_lea.vmem %s370, %s517
        %v519 = vld [vmem:[%s518] sm:$0xff]
        %v520 = vld [vmem:[%s518 + $0x8] sm:$0xff]
        %v521 = vpack.c.bf16 %v519, %v519
        %v522 = vpack.c.bf16 %v520, %v520
        %v524 = vlaneseq
        %v525 = vshrl.u32 %v524, 7
        %v526 = vsub.s32 0, %v525
        %v527 = vrot.slane %v509, %v526
        %v528 = vlaneseq
        %v529 = vshrl.u32 %v528, 7
        %v530 = vsub.s32 1, %v529
        %v531 = vrot.slane %v509, %v530
        %v532 = vlaneseq
        %v533 = vshrl.u32 %v532, 7
        %v534 = vsub.s32 2, %v533
        %v535 = vrot.slane %v509, %v534
        %v603 = vunpack.c.l.b16 %v413
        %v604 = vunpack.c.h.b16 %v413
        %v605 = vunpack.c.l.b16 %v414
        %v606 = vunpack.c.l.b16 %v415
        %v607 = vunpack.c.h.b16 %v415
        %v608 = vunpack.c.l.b16 %v416
        %v609 = vunpack.c.l.b16 %v417
        %v610 = vunpack.c.h.b16 %v417
        %v611 = vunpack.c.l.b16 %v418
        %v612 = vunpack.c.l.b16 %v419
        %v613 = vunpack.c.h.b16 %v419
        %v614 = vunpack.c.l.b16 %v420
        %v615 = vunpack.c.l.b16 %v421
        %v616 = vunpack.c.h.b16 %v421
        %v617 = vunpack.c.l.b16 %v422
        %v618 = vunpack.c.l.b16 %v423
        %v619 = vunpack.c.h.b16 %v423
        %v620 = vunpack.c.l.b16 %v424
        %v621 = vunpack.c.l.b16 %v425
        %v622 = vunpack.c.h.b16 %v425
        %v623 = vunpack.c.l.b16 %v426
        %v624 = vunpack.c.l.b16 %v427
        %v625 = vunpack.c.h.b16 %v427
        %v626 = vunpack.c.l.b16 %v428
        %v627 = vunpack.c.l.b16 %v429
        %v628 = vunpack.c.h.b16 %v429
        %v629 = vunpack.c.l.b16 %v430
        %v630 = vunpack.c.l.b16 %v431
        %v631 = vunpack.c.h.b16 %v431
        %v632 = vunpack.c.l.b16 %v432
        %v633 = vunpack.c.l.b16 %v433
        %v634 = vunpack.c.h.b16 %v433
        %v635 = vunpack.c.l.b16 %v434
        %v636 = vunpack.c.l.b16 %v435
        %v637 = vunpack.c.h.b16 %v435
        %v638 = vunpack.c.l.b16 %v436
        %v639 = vunpack.c.l.b16 %v437
        %v640 = vunpack.c.h.b16 %v437
        %v641 = vunpack.c.l.b16 %v438
        %v642 = vunpack.c.l.b16 %v439
        %v643 = vunpack.c.h.b16 %v439
        %v644 = vunpack.c.l.b16 %v440
        %v645 = vunpack.c.l.b16 %v441
        %v646 = vunpack.c.h.b16 %v441
        %v647 = vunpack.c.l.b16 %v442
        %v648 = vunpack.c.l.b16 %v443
        %v649 = vunpack.c.h.b16 %v443
        %v650 = vunpack.c.l.b16 %v444
        %v651 = vunpack.c.l.b16 %v445
        %v652 = vunpack.c.h.b16 %v445
        %v653 = vunpack.c.l.b16 %v446
        %v654 = vunpack.c.l.b16 %v447
        %v655 = vunpack.c.h.b16 %v447
        %v656 = vunpack.c.l.b16 %v448
        %v657 = vunpack.c.l.b16 %v449
        %v658 = vunpack.c.h.b16 %v449
        %v659 = vunpack.c.l.b16 %v450
        %v660 = vunpack.c.l.b16 %v451
        %v661 = vunpack.c.h.b16 %v451
        %v662 = vunpack.c.l.b16 %v452
        %v663 = vunpack.c.l.b16 %v453
        %v664 = vunpack.c.h.b16 %v453
        %v665 = vunpack.c.l.b16 %v454
        %v666 = vunpack.c.l.b16 %v455
        %v667 = vunpack.c.h.b16 %v455
        %v668 = vunpack.c.l.b16 %v456
        %v669 = vunpack.c.l.b16 %v457
        %v670 = vunpack.c.h.b16 %v457
        %v671 = vunpack.c.l.b16 %v458
        %v672 = vunpack.c.l.b16 %v459
        %v673 = vunpack.c.h.b16 %v459
        %v674 = vunpack.c.l.b16 %v460
        %v675 = vunpack.c.l.b16 %v461
        %v676 = vunpack.c.h.b16 %v461
        %v677 = vunpack.c.l.b16 %v462
        %v678 = vunpack.c.l.b16 %v463
        %v679 = vunpack.c.h.b16 %v463
        %v680 = vunpack.c.l.b16 %v464
        %v681 = vunpack.c.l.b16 %v465
        %v682 = vunpack.c.h.b16 %v465
        %v683 = vunpack.c.l.b16 %v466
        %v684 = vunpack.c.l.b16 %v467
        %v685 = vunpack.c.h.b16 %v467
        %v686 = vunpack.c.l.b16 %v468
        %v687 = vunpack.c.l.b16 %v469
        %v688 = vunpack.c.h.b16 %v469
        %v689 = vunpack.c.l.b16 %v470
        %v690 = vunpack.c.l.b16 %v471
        %v691 = vunpack.c.h.b16 %v471
        %v692 = vunpack.c.l.b16 %v472
        %v693 = vunpack.c.l.b16 %v473
        %v694 = vunpack.c.h.b16 %v473
        %v695 = vunpack.c.l.b16 %v474
        %v696 = vunpack.c.l.b16 %v475
        %v697 = vunpack.c.h.b16 %v475
        %v698 = vunpack.c.l.b16 %v476
        %v699 = vpack.c.b16 %v606, %v603
        %v700 = vpack.c.b16 %v607, %v604
        %v701 = vpack.c.b16 %v608, %v605
        %v702 = vpack.c.b16 %v612, %v609
        %v703 = vpack.c.b16 %v613, %v610
        %v704 = vpack.c.b16 %v614, %v611
        %v705 = vpack.c.b16 %v618, %v615
        %v706 = vpack.c.b16 %v619, %v616
        %v707 = vpack.c.b16 %v620, %v617
        %v708 = vpack.c.b16 %v624, %v621
        %v709 = vpack.c.b16 %v625, %v622
        %v710 = vpack.c.b16 %v626, %v623
        %v711 = vpack.c.b16 %v630, %v627
        %v712 = vpack.c.b16 %v631, %v628
        %v713 = vpack.c.b16 %v632, %v629
        %v714 = vpack.c.b16 %v636, %v633
        %v715 = vpack.c.b16 %v637, %v634
        %v716 = vpack.c.b16 %v638, %v635
        %v717 = vpack.c.b16 %v642, %v639
        %v718 = vpack.c.b16 %v643, %v640
        %v719 = vpack.c.b16 %v644, %v641
        %v720 = vpack.c.b16 %v648, %v645
        %v721 = vpack.c.b16 %v649, %v646
        %v722 = vpack.c.b16 %v650, %v647
        %v723 = vpack.c.b16 %v654, %v651
        %v724 = vpack.c.b16 %v655, %v652
        %v725 = vpack.c.b16 %v656, %v653
        %v726 = vpack.c.b16 %v660, %v657
        %v727 = vpack.c.b16 %v661, %v658
        %v728 = vpack.c.b16 %v662, %v659
        %v729 = vpack.c.b16 %v666, %v663
        %v730 = vpack.c.b16 %v667, %v664
        %v731 = vpack.c.b16 %v668, %v665
        %v732 = vpack.c.b16 %v672, %v669
        %v733 = vpack.c.b16 %v673, %v670
        %v734 = vpack.c.b16 %v674, %v671
        %v735 = vpack.c.b16 %v678, %v675
        %v736 = vpack.c.b16 %v679, %v676
        %v737 = vpack.c.b16 %v680, %v677
        %v738 = vpack.c.b16 %v684, %v681
        %v739 = vpack.c.b16 %v685, %v682
        %v740 = vpack.c.b16 %v686, %v683
        %v741 = vpack.c.b16 %v690, %v687
        %v742 = vpack.c.b16 %v691, %v688
        %v743 = vpack.c.b16 %v692, %v689
        %v744 = vpack.c.b16 %v696, %v693
        %v745 = vpack.c.b16 %v697, %v694
        %v746 = vpack.c.b16 %v698, %v695
        %795 = vmatprep.subr.bf16.mxu0 %v721
        %796 = vmatpush1.bf16.msra.mxu0 %v720
        %797 = vmatprep.subr.bf16.mxu0 %v718
        %798 = vmatpush1.bf16.msra.mxu0 %v717
        %799 = vmatprep.subr.bf16.mxu0 %v715
        %800 = vmatpush1.bf16.msra.mxu0 %v714
        %801 = vmatprep.subr.bf16.mxu0 %v712
        %802 = vmatpush1.bf16.msra.mxu0 %v711
        %803 = vmatprep.subr.bf16.mxu0 %v709
        %804 = vmatpush1.bf16.msra.mxu0 %v708
        %805 = vmatprep.subr.bf16.mxu0 %v706
        %806 = vmatpush1.bf16.msra.mxu0 %v705
        %807 = vmatprep.subr.bf16.mxu0 %v703
        %808 = vmatpush1.bf16.msra.mxu0 %v702
        %809 = vmatprep.subr.bf16.mxu0 %v700
        %810 = vmatpush1.bf16.msra.mxu0 %v699
        %811 = vmatprep.subr.bf16.mxu0 %v745
        %812 = vmatpush2.bf16.msra.mxu0 %v744
        %813 = vmatprep.subr.bf16.mxu0 %v742
        %814 = vmatpush2.bf16.msra.mxu0 %v741
        %815 = vmatprep.subr.bf16.mxu0 %v739
        %816 = vmatpush2.bf16.msra.mxu0 %v738
        %817 = vmatprep.subr.bf16.mxu0 %v736
        %818 = vmatpush2.bf16.msra.mxu0 %v735
        %819 = vmatprep.subr.bf16.mxu0 %v733
        %820 = vmatpush2.bf16.msra.mxu0 %v732
        %821 = vmatprep.subr.bf16.mxu0 %v730
        %822 = vmatpush2.bf16.msra.mxu0 %v729
        %823 = vmatprep.subr.bf16.mxu0 %v727
        %824 = vmatpush2.bf16.msra.mxu0 %v726
        %825 = vmatprep.subr.bf16.mxu0 %v724
        %826 = vmatpush2.bf16.msra.mxu0 %v723
        %827 = vmatprep.mubr.bf16.mxu0 %v522
        %828 = vmatmul.mubr.bf16.gmra.mxu0 %v521
        %v829 = vpop.f32.mrf.mxu0
        %v830 = vadd.f32 %v527, %v829
        %v831 = vpop.f32.mrf.mxu0
        %v832 = vadd.f32 %v531, %v831
        %v833 = vpop.f32.mrf.mxu0
        %v834 = vpop.f32.mrf.mxu0
        %835 = vdwg.mxu0
        %836 = vmatprep.subr.bf16.mxu0 0
        %837 = vmatpush1.bf16.msra.mxu0 %v722
        %838 = vmatprep.subr.bf16.mxu0 0
        %839 = vmatpush1.bf16.msra.mxu0 %v719
        %840 = vmatprep.subr.bf16.mxu0 0
        %841 = vmatpush1.bf16.msra.mxu0 %v716
        %842 = vmatprep.subr.bf16.mxu0 0
        %843 = vmatpush1.bf16.msra.mxu0 %v713
        %844 = vmatprep.subr.bf16.mxu0 0
        %845 = vmatpush1.bf16.msra.mxu0 %v710
        %846 = vmatprep.subr.bf16.mxu0 0
        %847 = vmatpush1.bf16.msra.mxu0 %v707
        %848 = vmatprep.subr.bf16.mxu0 0
        %849 = vmatpush1.bf16.msra.mxu0 %v704
        %850 = vmatprep.subr.bf16.mxu0 0
        %851 = vmatpush1.bf16.msra.mxu0 %v701
        %852 = vmatprep.subr.bf16.mxu0 0
        %853 = vmatpush2.bf16.msra.mxu0 %v746
        %854 = vmatprep.subr.bf16.mxu0 0
        %855 = vmatpush2.bf16.msra.mxu0 %v743
        %856 = vmatprep.subr.bf16.mxu0 0
        %857 = vmatpush2.bf16.msra.mxu0 %v740
        %858 = vmatprep.subr.bf16.mxu0 0
        %859 = vmatpush2.bf16.msra.mxu0 %v737
        %860 = vmatprep.subr.bf16.mxu0 0
        %861 = vmatpush2.bf16.msra.mxu0 %v734
        %862 = vmatprep.subr.bf16.mxu0 0
        %863 = vmatpush2.bf16.msra.mxu0 %v731
        %864 = vmatprep.subr.bf16.mxu0 0
        %865 = vmatpush2.bf16.msra.mxu0 %v728
        %866 = vmatprep.subr.bf16.mxu0 0
        %867 = vmatpush2.bf16.msra.mxu0 %v725
        %868 = vmatprep.mubr.bf16.mxu0 %v522
        %869 = vmatmul.mubr.bf16.gmra.mxu0 %v521
        %v870 = vpop.f32.mrf.mxu0
        %v871 = vadd.f32 %v535, %v870
        %v872 = vpop.f32.mrf.mxu0
        %v873 = vpop.f32.mrf.mxu0
        %v874 = vpop.f32.mrf.mxu0
        %875 = vdwg.mxu0
        %v876 = vpack.c.bf16 %v513, %v513
        %v878 = vlaneseq
        %v879 = vshrl.u32 %v878, 7
        %v880 = vsub.s32 0, %v879
        %v881 = vrot.slane %v510, %v880
        %v882 = vlaneseq
        %v883 = vshrl.u32 %v882, 7
        %v884 = vsub.s32 1, %v883
        %v885 = vrot.slane %v510, %v884
        %v886 = vlaneseq
        %v887 = vshrl.u32 %v886, 7
        %v888 = vsub.s32 2, %v887
        %v889 = vrot.slane %v510, %v888
        %v925 = vunpack.c.l.b16 %v477
        %v926 = vunpack.c.h.b16 %v477
        %v927 = vunpack.c.l.b16 %v478
        %v928 = vunpack.c.l.b16 %v479
        %v929 = vunpack.c.h.b16 %v479
        %v930 = vunpack.c.l.b16 %v480
        %v931 = vunpack.c.l.b16 %v481
        %v932 = vunpack.c.h.b16 %v481
        %v933 = vunpack.c.l.b16 %v482
        %v934 = vunpack.c.l.b16 %v483
        %v935 = vunpack.c.h.b16 %v483
        %v936 = vunpack.c.l.b16 %v484
        %v937 = vunpack.c.l.b16 %v485
        %v938 = vunpack.c.h.b16 %v485
        %v939 = vunpack.c.l.b16 %v486
        %v940 = vunpack.c.l.b16 %v487
        %v941 = vunpack.c.h.b16 %v487
        %v942 = vunpack.c.l.b16 %v488
        %v943 = vunpack.c.l.b16 %v489
        %v944 = vunpack.c.h.b16 %v489
        %v945 = vunpack.c.l.b16 %v490
        %v946 = vunpack.c.l.b16 %v491
        %v947 = vunpack.c.h.b16 %v491
        %v948 = vunpack.c.l.b16 %v492
        %v949 = vunpack.c.l.b16 %v493
        %v950 = vunpack.c.h.b16 %v493
        %v951 = vunpack.c.l.b16 %v494
        %v952 = vunpack.c.l.b16 %v495
        %v953 = vunpack.c.h.b16 %v495
        %v954 = vunpack.c.l.b16 %v496
        %v955 = vunpack.c.l.b16 %v497
        %v956 = vunpack.c.h.b16 %v497
        %v957 = vunpack.c.l.b16 %v498
        %v958 = vunpack.c.l.b16 %v499
        %v959 = vunpack.c.h.b16 %v499
        %v960 = vunpack.c.l.b16 %v500
        %v961 = vunpack.c.l.b16 %v501
        %v962 = vunpack.c.h.b16 %v501
        %v963 = vunpack.c.l.b16 %v502
        %v964 = vunpack.c.l.b16 %v503
        %v965 = vunpack.c.h.b16 %v503
        %v966 = vunpack.c.l.b16 %v504
        %v967 = vunpack.c.l.b16 %v505
        %v968 = vunpack.c.h.b16 %v505
        %v969 = vunpack.c.l.b16 %v506
        %v970 = vunpack.c.l.b16 %v507
        %v971 = vunpack.c.h.b16 %v507
        %v972 = vunpack.c.l.b16 %v508
        %v973 = vpack.c.b16 %v928, %v925
        %v974 = vpack.c.b16 %v929, %v926
        %v975 = vpack.c.b16 %v930, %v927
        %v976 = vpack.c.b16 %v934, %v931
        %v977 = vpack.c.b16 %v935, %v932
        %v978 = vpack.c.b16 %v936, %v933
        %v979 = vpack.c.b16 %v940, %v937
        %v980 = vpack.c.b16 %v941, %v938
        %v981 = vpack.c.b16 %v942, %v939
        %v982 = vpack.c.b16 %v946, %v943
        %v983 = vpack.c.b16 %v947, %v944
        %v984 = vpack.c.b16 %v948, %v945
        %v985 = vpack.c.b16 %v952, %v949
        %v986 = vpack.c.b16 %v953, %v950
        %v987 = vpack.c.b16 %v954, %v951
        %v988 = vpack.c.b16 %v958, %v955
        %v989 = vpack.c.b16 %v959, %v956
        %v990 = vpack.c.b16 %v960, %v957
        %v991 = vpack.c.b16 %v964, %v961
        %v992 = vpack.c.b16 %v965, %v962
        %v993 = vpack.c.b16 %v966, %v963
        %v994 = vpack.c.b16 %v970, %v967
        %v995 = vpack.c.b16 %v971, %v968
        %v996 = vpack.c.b16 %v972, %v969
        %1021 = vmatprep.subr.bf16.mxu0 %v995
        %1022 = vmatpush1.bf16.msra.mxu0 %v994
        %1023 = vmatprep.subr.bf16.mxu0 %v992
        %1024 = vmatpush1.bf16.msra.mxu0 %v991
        %1025 = vmatprep.subr.bf16.mxu0 %v989
        %1026 = vmatpush1.bf16.msra.mxu0 %v988
        %1027 = vmatprep.subr.bf16.mxu0 %v986
        %1028 = vmatpush1.bf16.msra.mxu0 %v985
        %1029 = vmatprep.subr.bf16.mxu0 %v983
        %1030 = vmatpush1.bf16.msra.mxu0 %v982
        %1031 = vmatprep.subr.bf16.mxu0 %v980
        %1032 = vmatpush1.bf16.msra.mxu0 %v979
        %1033 = vmatprep.subr.bf16.mxu0 %v977
        %1034 = vmatpush1.bf16.msra.mxu0 %v976
        %1035 = vmatprep.subr.bf16.mxu0 %v974
        %1036 = vmatpush1.bf16.msra.mxu0 %v973
        %1037 = vmatprep.subr.bf16.mxu0 0
        %1038 = vmatpush2.bf16.msra.mxu0 0
        %1039 = vmatprep.subr.bf16.mxu0 0
        %1040 = vmatpush2.bf16.msra.mxu0 0
        %1041 = vmatprep.subr.bf16.mxu0 0
        %1042 = vmatpush2.bf16.msra.mxu0 0
        %1043 = vmatprep.subr.bf16.mxu0 0
        %1044 = vmatpush2.bf16.msra.mxu0 0
        %1045 = vmatprep.subr.bf16.mxu0 0
        %1046 = vmatpush2.bf16.msra.mxu0 0
        %1047 = vmatprep.subr.bf16.mxu0 0
        %1048 = vmatpush2.bf16.msra.mxu0 0
        %1049 = vmatprep.subr.bf16.mxu0 0
        %1050 = vmatpush2.bf16.msra.mxu0 0
        %1051 = vmatprep.subr.bf16.mxu0 0
        %1052 = vmatpush2.bf16.msra.mxu0 0
        %1053 = vmatprep.mubr.bf16.mxu0 0
        %1054 = vmatmul.mubr.bf16.gmra.mxu0 %v876
        %v1055 = vpop.f32.mrf.mxu0
        %v1056 = vadd.f32 %v881, %v1055
        %v1057 = vpop.f32.mrf.mxu0
        %v1058 = vadd.f32 %v885, %v1057
        %v1059 = vpop.f32.mrf.mxu0
        %v1060 = vpop.f32.mrf.mxu0
        %1061 = vdwg.mxu0
        %1062 = vmatprep.subr.bf16.mxu0 0
        %1063 = vmatpush1.bf16.msra.mxu0 %v996
        %1064 = vmatprep.subr.bf16.mxu0 0
        %1065 = vmatpush1.bf16.msra.mxu0 %v993
        %1066 = vmatprep.subr.bf16.mxu0 0
        %1067 = vmatpush1.bf16.msra.mxu0 %v990
        %1068 = vmatprep.subr.bf16.mxu0 0
        %1069 = vmatpush1.bf16.msra.mxu0 %v987
        %1070 = vmatprep.subr.bf16.mxu0 0
        %1071 = vmatpush1.bf16.msra.mxu0 %v984
        %1072 = vmatprep.subr.bf16.mxu0 0
        %1073 = vmatpush1.bf16.msra.mxu0 %v981
        %1074 = vmatprep.subr.bf16.mxu0 0
        %1075 = vmatpush1.bf16.msra.mxu0 %v978
        %1076 = vmatprep.subr.bf16.mxu0 0
        %1077 = vmatpush1.bf16.msra.mxu0 %v975
        %1078 = vmatprep.subr.bf16.mxu0 0
        %1079 = vmatpush2.bf16.msra.mxu0 0
        %1080 = vmatprep.subr.bf16.mxu0 0
        %1081 = vmatpush2.bf16.msra.mxu0 0
        %1082 = vmatprep.subr.bf16.mxu0 0
        %1083 = vmatpush2.bf16.msra.mxu0 0
        %1084 = vmatprep.subr.bf16.mxu0 0
        %1085 = vmatpush2.bf16.msra.mxu0 0
        %1086 = vmatprep.subr.bf16.mxu0 0
        %1087 = vmatpush2.bf16.msra.mxu0 0
        %1088 = vmatprep.subr.bf16.mxu0 0
        %1089 = vmatpush2.bf16.msra.mxu0 0
        %1090 = vmatprep.subr.bf16.mxu0 0
        %1091 = vmatpush2.bf16.msra.mxu0 0
        %1092 = vmatprep.subr.bf16.mxu0 0
        %1093 = vmatpush2.bf16.msra.mxu0 0
        %1094 = vmatprep.mubr.bf16.mxu0 0
        %1095 = vmatmul.mubr.bf16.gmra.mxu0 %v876
        %v1096 = vpop.f32.mrf.mxu0
        %v1097 = vadd.f32 %v889, %v1096
        %v1098 = vpop.f32.mrf.mxu0
        %v1099 = vpop.f32.mrf.mxu0
        %v1100 = vpop.f32.mrf.mxu0
        %1101 = vdwg.mxu0
        %v1102 = vadd.f32 %v830, %v1056
        %v1103 = vxor.u32 %v1102, 2147483648
        %v1104 = vmul.f32 %v1103, 1.442695
        %v1105 = vpow.pop %v1104
        %v1106 = vadd.f32 %v1105, 1.0
        %v1107 = vrcp.pop %v1106
        %v1108 = vmul.f32 1.0, %v1107
        %v1109 = vadd.f32 %v832, %v1058
        %v1110 = vxor.u32 %v1109, 2147483648
        %v1111 = vmul.f32 %v1110, 1.442695
        %v1112 = vpow.pop %v1111
        %v1113 = vadd.f32 %v1112, 1.0
        %v1114 = vrcp.pop %v1113
        %v1115 = vmul.f32 1.0, %v1114
        %v1116 = vmul.f32 %v1108, %v1097
        %v1117 = vadd.f32 %v871, %v1116
        %v1118 = vtanh.pop %v1117
        %v1119 = vsub.f32 1.0, %v1115
        %v1120 = vmul.f32 %v1119, %v1118
        %v1121 = vmul.f32 %v1115, %v513
        %v1122 = vadd.f32 %v1120, %v1121
        %s1123 = smul.u32 %s515, 8
        %s1124 = scalar_lea.vmem %s353, %s1123 [#allocation3]
        %1125 = vst [vmem:[%s1124] sm:$0xff] %v1122
        %s1126 = scalar_select %p514, 1, 6
        %s1127 = smul.u32 %s1126, 2
        %s1128 = smul.addr %s1127, 8
        %s1129 = scalar_lea.vmem %s370, %s1128
        %v1130 = vld [vmem:[%s1129] sm:$0xff]
        %v1131 = vld [vmem:[%s1129 + $0x8] sm:$0xff]
        %v1132 = vpack.c.bf16 %v1130, %v1130
        %v1133 = vpack.c.bf16 %v1131, %v1131
        %1134 = vmatprep.subr.bf16.mxu0 %v721
        %1135 = vmatpush1.bf16.msra.mxu0 %v720
        %1136 = vmatprep.subr.bf16.mxu0 %v718
        %1137 = vmatpush1.bf16.msra.mxu0 %v717
        %1138 = vmatprep.subr.bf16.mxu0 %v715
        %1139 = vmatpush1.bf16.msra.mxu0 %v714
        %1140 = vmatprep.subr.bf16.mxu0 %v712
        %1141 = vmatpush1.bf16.msra.mxu0 %v711
        %1142 = vmatprep.subr.bf16.mxu0 %v709
        %1143 = vmatpush1.bf16.msra.mxu0 %v708
        %1144 = vmatprep.subr.bf16.mxu0 %v706
        %1145 = vmatpush1.bf16.msra.mxu0 %v705
        %1146 = vmatprep.subr.bf16.mxu0 %v703
        %1147 = vmatpush1.bf16.msra.mxu0 %v702
        %1148 = vmatprep.subr.bf16.mxu0 %v700
        %1149 = vmatpush1.bf16.msra.mxu0 %v699
        %1150 = vmatprep.subr.bf16.mxu0 %v745
        %1151 = vmatpush2.bf16.msra.mxu0 %v744
        %1152 = vmatprep.subr.bf16.mxu0 %v742
        %1153 = vmatpush2.bf16.msra.mxu0 %v741
        %1154 = vmatprep.subr.bf16.mxu0 %v739
        %1155 = vmatpush2.bf16.msra.mxu0 %v738
        %1156 = vmatprep.subr.bf16.mxu0 %v736
        %1157 = vmatpush2.bf16.msra.mxu0 %v735
        %1158 = vmatprep.subr.bf16.mxu0 %v733
        %1159 = vmatpush2.bf16.msra.mxu0 %v732
        %1160 = vmatprep.subr.bf16.mxu0 %v730
        %1161 = vmatpush2.bf16.msra.mxu0 %v729
        %1162 = vmatprep.subr.bf16.mxu0 %v727
        %1163 = vmatpush2.bf16.msra.mxu0 %v726
        %1164 = vmatprep.subr.bf16.mxu0 %v724
        %1165 = vmatpush2.bf16.msra.mxu0 %v723
        %1166 = vmatprep.mubr.bf16.mxu0 %v1133
        %1167 = vmatmul.mubr.bf16.gmra.mxu0 %v1132
        %v1168 = vpop.f32.mrf.mxu0
        %v1169 = vadd.f32 %v527, %v1168
        %v1170 = vpop.f32.mrf.mxu0
        %v1171 = vadd.f32 %v531, %v1170
        %v1172 = vpop.f32.mrf.mxu0
        %v1173 = vpop.f32.mrf.mxu0
        %1174 = vdwg.mxu0
        %1175 = vmatprep.subr.bf16.mxu0 0
        %1176 = vmatpush1.bf16.msra.mxu0 %v722
        %1177 = vmatprep.subr.bf16.mxu0 0
        %1178 = vmatpush1.bf16.msra.mxu0 %v719
        %1179 = vmatprep.subr.bf16.mxu0 0
        %1180 = vmatpush1.bf16.msra.mxu0 %v716
        %1181 = vmatprep.subr.bf16.mxu0 0
        %1182 = vmatpush1.bf16.msra.mxu0 %v713
        %1183 = vmatprep.subr.bf16.mxu0 0
        %1184 = vmatpush1.bf16.msra.mxu0 %v710
        %1185 = vmatprep.subr.bf16.mxu0 0
        %1186 = vmatpush1.bf16.msra.mxu0 %v707
        %1187 = vmatprep.subr.bf16.mxu0 0
        %1188 = vmatpush1.bf16.msra.mxu0 %v704
        %1189 = vmatprep.subr.bf16.mxu0 0
        %1190 = vmatpush1.bf16.msra.mxu0 %v701
        %1191 = vmatprep.subr.bf16.mxu0 0
        %1192 = vmatpush2.bf16.msra.mxu0 %v746
        %1193 = vmatprep.subr.bf16.mxu0 0
        %1194 = vmatpush2.bf16.msra.mxu0 %v743
        %1195 = vmatprep.subr.bf16.mxu0 0
        %1196 = vmatpush2.bf16.msra.mxu0 %v740
        %1197 = vmatprep.subr.bf16.mxu0 0
        %1198 = vmatpush2.bf16.msra.mxu0 %v737
        %1199 = vmatprep.subr.bf16.mxu0 0
        %1200 = vmatpush2.bf16.msra.mxu0 %v734
        %1201 = vmatprep.subr.bf16.mxu0 0
        %1202 = vmatpush2.bf16.msra.mxu0 %v731
        %1203 = vmatprep.subr.bf16.mxu0 0
        %1204 = vmatpush2.bf16.msra.mxu0 %v728
        %1205 = vmatprep.subr.bf16.mxu0 0
        %1206 = vmatpush2.bf16.msra.mxu0 %v725
        %1207 = vmatprep.mubr.bf16.mxu0 %v1133
        %1208 = vmatmul.mubr.bf16.gmra.mxu0 %v1132
        %v1209 = vpop.f32.mrf.mxu0
        %v1210 = vadd.f32 %v535, %v1209
        %v1211 = vpop.f32.mrf.mxu0
        %v1212 = vpop.f32.mrf.mxu0
        %v1213 = vpop.f32.mrf.mxu0
        %1214 = vdwg.mxu0
        %v1215 = vpack.c.bf16 %v1122, %v1122
        %1216 = vmatprep.subr.bf16.mxu0 %v995
        %1217 = vmatpush1.bf16.msra.mxu0 %v994
        %1218 = vmatprep.subr.bf16.mxu0 %v992
        %1219 = vmatpush1.bf16.msra.mxu0 %v991
        %1220 = vmatprep.subr.bf16.mxu0 %v989
        %1221 = vmatpush1.bf16.msra.mxu0 %v988
        %1222 = vmatprep.subr.bf16.mxu0 %v986
        %1223 = vmatpush1.bf16.msra.mxu0 %v985
        %1224 = vmatprep.subr.bf16.mxu0 %v983
        %1225 = vmatpush1.bf16.msra.mxu0 %v982
        %1226 = vmatprep.subr.bf16.mxu0 %v980
        %1227 = vmatpush1.bf16.msra.mxu0 %v979
        %1228 = vmatprep.subr.bf16.mxu0 %v977
        %1229 = vmatpush1.bf16.msra.mxu0 %v976
        %1230 = vmatprep.subr.bf16.mxu0 %v974
        %1231 = vmatpush1.bf16.msra.mxu0 %v973
        %1232 = vmatprep.subr.bf16.mxu0 0
        %1233 = vmatpush2.bf16.msra.mxu0 0
        %1234 = vmatprep.subr.bf16.mxu0 0
        %1235 = vmatpush2.bf16.msra.mxu0 0
        %1236 = vmatprep.subr.bf16.mxu0 0
        %1237 = vmatpush2.bf16.msra.mxu0 0
        %1238 = vmatprep.subr.bf16.mxu0 0
        %1239 = vmatpush2.bf16.msra.mxu0 0
        %1240 = vmatprep.subr.bf16.mxu0 0
        %1241 = vmatpush2.bf16.msra.mxu0 0
        %1242 = vmatprep.subr.bf16.mxu0 0
        %1243 = vmatpush2.bf16.msra.mxu0 0
        %1244 = vmatprep.subr.bf16.mxu0 0
        %1245 = vmatpush2.bf16.msra.mxu0 0
        %1246 = vmatprep.subr.bf16.mxu0 0
        %1247 = vmatpush2.bf16.msra.mxu0 0
        %1248 = vmatprep.mubr.bf16.mxu0 0
        %1249 = vmatmul.mubr.bf16.gmra.mxu0 %v1215
        %v1250 = vpop.f32.mrf.mxu0
        %v1251 = vadd.f32 %v881, %v1250
        %v1252 = vpop.f32.mrf.mxu0
        %v1253 = vadd.f32 %v885, %v1252
        %v1254 = vpop.f32.mrf.mxu0
        %v1255 = vpop.f32.mrf.mxu0
        %1256 = vdwg.mxu0
        %1257 = vmatprep.subr.bf16.mxu0 0
        %1258 = vmatpush1.bf16.msra.mxu0 %v996
        %1259 = vmatprep.subr.bf16.mxu0 0
        %1260 = vmatpush1.bf16.msra.mxu0 %v993
        %1261 = vmatprep.subr.bf16.mxu0 0
        %1262 = vmatpush1.bf16.msra.mxu0 %v990
        %1263 = vmatprep.subr.bf16.mxu0 0
        %1264 = vmatpush1.bf16.msra.mxu0 %v987
        %1265 = vmatprep.subr.bf16.mxu0 0
        %1266 = vmatpush1.bf16.msra.mxu0 %v984
        %1267 = vmatprep.subr.bf16.mxu0 0
        %1268 = vmatpush1.bf16.msra.mxu0 %v981
        %1269 = vmatprep.subr.bf16.mxu0 0
        %1270 = vmatpush1.bf16.msra.mxu0 %v978
        %1271 = vmatprep.subr.bf16.mxu0 0
        %1272 = vmatpush1.bf16.msra.mxu0 %v975
        %1273 = vmatprep.subr.bf16.mxu0 0
        %1274 = vmatpush2.bf16.msra.mxu0 0
        %1275 = vmatprep.subr.bf16.mxu0 0
        %1276 = vmatpush2.bf16.msra.mxu0 0
        %1277 = vmatprep.subr.bf16.mxu0 0
        %1278 = vmatpush2.bf16.msra.mxu0 0
        %1279 = vmatprep.subr.bf16.mxu0 0
        %1280 = vmatpush2.bf16.msra.mxu0 0
        %1281 = vmatprep.subr.bf16.mxu0 0
        %1282 = vmatpush2.bf16.msra.mxu0 0
        %1283 = vmatprep.subr.bf16.mxu0 0
        %1284 = vmatpush2.bf16.msra.mxu0 0
        %1285 = vmatprep.subr.bf16.mxu0 0
        %1286 = vmatpush2.bf16.msra.mxu0 0
        %1287 = vmatprep.subr.bf16.mxu0 0
        %1288 = vmatpush2.bf16.msra.mxu0 0
        %1289 = vmatprep.mubr.bf16.mxu0 0
        %1290 = vmatmul.mubr.bf16.gmra.mxu0 %v1215
        %v1291 = vpop.f32.mrf.mxu0
        %v1292 = vadd.f32 %v889, %v1291
        %v1293 = vpop.f32.mrf.mxu0
        %v1294 = vpop.f32.mrf.mxu0
        %v1295 = vpop.f32.mrf.mxu0
        %1296 = vdwg.mxu0
        %v1297 = vadd.f32 %v1169, %v1251
        %v1298 = vxor.u32 %v1297, 2147483648
        %v1299 = vmul.f32 %v1298, 1.442695
        %v1300 = vpow.pop %v1299
        %v1301 = vadd.f32 %v1300, 1.0
        %v1302 = vrcp.pop %v1301
        %v1303 = vmul.f32 1.0, %v1302
        %v1304 = vadd.f32 %v1171, %v1253
        %v1305 = vxor.u32 %v1304, 2147483648
        %v1306 = vmul.f32 %v1305, 1.442695
        %v1307 = vpow.pop %v1306
        %v1308 = vadd.f32 %v1307, 1.0
        %v1309 = vrcp.pop %v1308
        %v1310 = vmul.f32 1.0, %v1309
        %v1311 = vmul.f32 %v1303, %v1292
        %v1312 = vadd.f32 %v1210, %v1311
        %v1313 = vtanh.pop %v1312
        %v1314 = vsub.f32 1.0, %v1310
        %v1315 = vmul.f32 %v1314, %v1313
        %v1316 = vmul.f32 %v1310, %v1122
        %v1317 = vadd.f32 %v1315, %v1316
        %s1318 = smul.u32 %s1126, 8
        %s1319 = scalar_lea.vmem %s353, %s1318 [#allocation3]
        %1320 = vst [vmem:[%s1319] sm:$0xff] %v1317
        %s1321 = scalar_select %p514, 2, 5
        %s1322 = smul.u32 %s1321, 2
        %s1323 = smul.addr %s1322, 8
        %s1324 = scalar_lea.vmem %s370, %s1323
        %v1325 = vld [vmem:[%s1324] sm:$0xff]
        %v1326 = vld [vmem:[%s1324 + $0x8] sm:$0xff]
        %v1327 = vpack.c.bf16 %v1325, %v1325
        %v1328 = vpack.c.bf16 %v1326, %v1326
        %1329 = vmatprep.subr.bf16.mxu0 %v721
        %1330 = vmatpush1.bf16.msra.mxu0 %v720
        %1331 = vmatprep.subr.bf16.mxu0 %v718
        %1332 = vmatpush1.bf16.msra.mxu0 %v717
        %1333 = vmatprep.subr.bf16.mxu0 %v715
        %1334 = vmatpush1.bf16.msra.mxu0 %v714
        %1335 = vmatprep.subr.bf16.mxu0 %v712
        %1336 = vmatpush1.bf16.msra.mxu0 %v711
        %1337 = vmatprep.subr.bf16.mxu0 %v709
        %1338 = vmatpush1.bf16.msra.mxu0 %v708
        %1339 = vmatprep.subr.bf16.mxu0 %v706
        %1340 = vmatpush1.bf16.msra.mxu0 %v705
        %1341 = vmatprep.subr.bf16.mxu0 %v703
        %1342 = vmatpush1.bf16.msra.mxu0 %v702
        %1343 = vmatprep.subr.bf16.mxu0 %v700
        %1344 = vmatpush1.bf16.msra.mxu0 %v699
        %1345 = vmatprep.subr.bf16.mxu0 %v745
        %1346 = vmatpush2.bf16.msra.mxu0 %v744
        %1347 = vmatprep.subr.bf16.mxu0 %v742
        %1348 = vmatpush2.bf16.msra.mxu0 %v741
        %1349 = vmatprep.subr.bf16.mxu0 %v739
        %1350 = vmatpush2.bf16.msra.mxu0 %v738
        %1351 = vmatprep.subr.bf16.mxu0 %v736
        %1352 = vmatpush2.bf16.msra.mxu0 %v735
        %1353 = vmatprep.subr.bf16.mxu0 %v733
        %1354 = vmatpush2.bf16.msra.mxu0 %v732
        %1355 = vmatprep.subr.bf16.mxu0 %v730
        %1356 = vmatpush2.bf16.msra.mxu0 %v729
        %1357 = vmatprep.subr.bf16.mxu0 %v727
        %1358 = vmatpush2.bf16.msra.mxu0 %v726
        %1359 = vmatprep.subr.bf16.mxu0 %v724
        %1360 = vmatpush2.bf16.msra.mxu0 %v723
        %1361 = vmatprep.mubr.bf16.mxu0 %v1328
        %1362 = vmatmul.mubr.bf16.gmra.mxu0 %v1327
        %v1363 = vpop.f32.mrf.mxu0
        %v1364 = vadd.f32 %v527, %v1363
        %v1365 = vpop.f32.mrf.mxu0
        %v1366 = vadd.f32 %v531, %v1365
        %v1367 = vpop.f32.mrf.mxu0
        %v1368 = vpop.f32.mrf.mxu0
        %1369 = vdwg.mxu0
        %1370 = vmatprep.subr.bf16.mxu0 0
        %1371 = vmatpush1.bf16.msra.mxu0 %v722
        %1372 = vmatprep.subr.bf16.mxu0 0
        %1373 = vmatpush1.bf16.msra.mxu0 %v719
        %1374 = vmatprep.subr.bf16.mxu0 0
        %1375 = vmatpush1.bf16.msra.mxu0 %v716
        %1376 = vmatprep.subr.bf16.mxu0 0
        %1377 = vmatpush1.bf16.msra.mxu0 %v713
        %1378 = vmatprep.subr.bf16.mxu0 0
        %1379 = vmatpush1.bf16.msra.mxu0 %v710
        %1380 = vmatprep.subr.bf16.mxu0 0
        %1381 = vmatpush1.bf16.msra.mxu0 %v707
        %1382 = vmatprep.subr.bf16.mxu0 0
        %1383 = vmatpush1.bf16.msra.mxu0 %v704
        %1384 = vmatprep.subr.bf16.mxu0 0
        %1385 = vmatpush1.bf16.msra.mxu0 %v701
        %1386 = vmatprep.subr.bf16.mxu0 0
        %1387 = vmatpush2.bf16.msra.mxu0 %v746
        %1388 = vmatprep.subr.bf16.mxu0 0
        %1389 = vmatpush2.bf16.msra.mxu0 %v743
        %1390 = vmatprep.subr.bf16.mxu0 0
        %1391 = vmatpush2.bf16.msra.mxu0 %v740
        %1392 = vmatprep.subr.bf16.mxu0 0
        %1393 = vmatpush2.bf16.msra.mxu0 %v737
        %1394 = vmatprep.subr.bf16.mxu0 0
        %1395 = vmatpush2.bf16.msra.mxu0 %v734
        %1396 = vmatprep.subr.bf16.mxu0 0
        %1397 = vmatpush2.bf16.msra.mxu0 %v731
        %1398 = vmatprep.subr.bf16.mxu0 0
        %1399 = vmatpush2.bf16.msra.mxu0 %v728
        %1400 = vmatprep.subr.bf16.mxu0 0
        %1401 = vmatpush2.bf16.msra.mxu0 %v725
        %1402 = vmatprep.mubr.bf16.mxu0 %v1328
        %1403 = vmatmul.mubr.bf16.gmra.mxu0 %v1327
        %v1404 = vpop.f32.mrf.mxu0
        %v1405 = vadd.f32 %v535, %v1404
        %v1406 = vpop.f32.mrf.mxu0
        %v1407 = vpop.f32.mrf.mxu0
        %v1408 = vpop.f32.mrf.mxu0
        %1409 = vdwg.mxu0
        %v1410 = vpack.c.bf16 %v1317, %v1317
        %1411 = vmatprep.subr.bf16.mxu0 %v995
        %1412 = vmatpush1.bf16.msra.mxu0 %v994
        %1413 = vmatprep.subr.bf16.mxu0 %v992
        %1414 = vmatpush1.bf16.msra.mxu0 %v991
        %1415 = vmatprep.subr.bf16.mxu0 %v989
        %1416 = vmatpush1.bf16.msra.mxu0 %v988
        %1417 = vmatprep.subr.bf16.mxu0 %v986
        %1418 = vmatpush1.bf16.msra.mxu0 %v985
        %1419 = vmatprep.subr.bf16.mxu0 %v983
        %1420 = vmatpush1.bf16.msra.mxu0 %v982
        %1421 = vmatprep.subr.bf16.mxu0 %v980
        %1422 = vmatpush1.bf16.msra.mxu0 %v979
        %1423 = vmatprep.subr.bf16.mxu0 %v977
        %1424 = vmatpush1.bf16.msra.mxu0 %v976
        %1425 = vmatprep.subr.bf16.mxu0 %v974
        %1426 = vmatpush1.bf16.msra.mxu0 %v973
        %1427 = vmatprep.subr.bf16.mxu0 0
        %1428 = vmatpush2.bf16.msra.mxu0 0
        %1429 = vmatprep.subr.bf16.mxu0 0
        %1430 = vmatpush2.bf16.msra.mxu0 0
        %1431 = vmatprep.subr.bf16.mxu0 0
        %1432 = vmatpush2.bf16.msra.mxu0 0
        %1433 = vmatprep.subr.bf16.mxu0 0
        %1434 = vmatpush2.bf16.msra.mxu0 0
        %1435 = vmatprep.subr.bf16.mxu0 0
        %1436 = vmatpush2.bf16.msra.mxu0 0
        %1437 = vmatprep.subr.bf16.mxu0 0
        %1438 = vmatpush2.bf16.msra.mxu0 0
        %1439 = vmatprep.subr.bf16.mxu0 0
        %1440 = vmatpush2.bf16.msra.mxu0 0
        %1441 = vmatprep.subr.bf16.mxu0 0
        %1442 = vmatpush2.bf16.msra.mxu0 0
        %1443 = vmatprep.mubr.bf16.mxu0 0
        %1444 = vmatmul.mubr.bf16.gmra.mxu0 %v1410
        %v1445 = vpop.f32.mrf.mxu0
        %v1446 = vadd.f32 %v881, %v1445
        %v1447 = vpop.f32.mrf.mxu0
        %v1448 = vadd.f32 %v885, %v1447
        %v1449 = vpop.f32.mrf.mxu0
        %v1450 = vpop.f32.mrf.mxu0
        %1451 = vdwg.mxu0
        %1452 = vmatprep.subr.bf16.mxu0 0
        %1453 = vmatpush1.bf16.msra.mxu0 %v996
        %1454 = vmatprep.subr.bf16.mxu0 0
        %1455 = vmatpush1.bf16.msra.mxu0 %v993
        %1456 = vmatprep.subr.bf16.mxu0 0
        %1457 = vmatpush1.bf16.msra.mxu0 %v990
        %1458 = vmatprep.subr.bf16.mxu0 0
        %1459 = vmatpush1.bf16.msra.mxu0 %v987
        %1460 = vmatprep.subr.bf16.mxu0 0
        %1461 = vmatpush1.bf16.msra.mxu0 %v984
        %1462 = vmatprep.subr.bf16.mxu0 0
        %1463 = vmatpush1.bf16.msra.mxu0 %v981
        %1464 = vmatprep.subr.bf16.mxu0 0
        %1465 = vmatpush1.bf16.msra.mxu0 %v978
        %1466 = vmatprep.subr.bf16.mxu0 0
        %1467 = vmatpush1.bf16.msra.mxu0 %v975
        %1468 = vmatprep.subr.bf16.mxu0 0
        %1469 = vmatpush2.bf16.msra.mxu0 0
        %1470 = vmatprep.subr.bf16.mxu0 0
        %1471 = vmatpush2.bf16.msra.mxu0 0
        %1472 = vmatprep.subr.bf16.mxu0 0
        %1473 = vmatpush2.bf16.msra.mxu0 0
        %1474 = vmatprep.subr.bf16.mxu0 0
        %1475 = vmatpush2.bf16.msra.mxu0 0
        %1476 = vmatprep.subr.bf16.mxu0 0
        %1477 = vmatpush2.bf16.msra.mxu0 0
        %1478 = vmatprep.subr.bf16.mxu0 0
        %1479 = vmatpush2.bf16.msra.mxu0 0
        %1480 = vmatprep.subr.bf16.mxu0 0
        %1481 = vmatpush2.bf16.msra.mxu0 0
        %1482 = vmatprep.subr.bf16.mxu0 0
        %1483 = vmatpush2.bf16.msra.mxu0 0
        %1484 = vmatprep.mubr.bf16.mxu0 0
        %1485 = vmatmul.mubr.bf16.gmra.mxu0 %v1410
        %v1486 = vpop.f32.mrf.mxu0
        %v1487 = vadd.f32 %v889, %v1486
        %v1488 = vpop.f32.mrf.mxu0
        %v1489 = vpop.f32.mrf.mxu0
        %v1490 = vpop.f32.mrf.mxu0
        %1491 = vdwg.mxu0
        %v1492 = vadd.f32 %v1364, %v1446
        %v1493 = vxor.u32 %v1492, 2147483648
        %v1494 = vmul.f32 %v1493, 1.442695
        %v1495 = vpow.pop %v1494
        %v1496 = vadd.f32 %v1495, 1.0
        %v1497 = vrcp.pop %v1496
        %v1498 = vmul.f32 1.0, %v1497
        %v1499 = vadd.f32 %v1366, %v1448
        %v1500 = vxor.u32 %v1499, 2147483648
        %v1501 = vmul.f32 %v1500, 1.442695
        %v1502 = vpow.pop %v1501
        %v1503 = vadd.f32 %v1502, 1.0
        %v1504 = vrcp.pop %v1503
        %v1505 = vmul.f32 1.0, %v1504
        %v1506 = vmul.f32 %v1498, %v1487
        %v1507 = vadd.f32 %v1405, %v1506
        %v1508 = vtanh.pop %v1507
        %v1509 = vsub.f32 1.0, %v1505
        %v1510 = vmul.f32 %v1509, %v1508
        %v1511 = vmul.f32 %v1505, %v1317
        %v1512 = vadd.f32 %v1510, %v1511
        %s1513 = smul.u32 %s1321, 8
        %s1514 = scalar_lea.vmem %s353, %s1513 [#allocation3]
        %1515 = vst [vmem:[%s1514] sm:$0xff] %v1512
        %s1516 = scalar_select %p514, 3, 4
        %s1517 = smul.u32 %s1516, 2
        %s1518 = smul.addr %s1517, 8
        %s1519 = scalar_lea.vmem %s370, %s1518
        %v1520 = vld [vmem:[%s1519] sm:$0xff]
        %v1521 = vld [vmem:[%s1519 + $0x8] sm:$0xff]
        %v1522 = vpack.c.bf16 %v1520, %v1520
        %v1523 = vpack.c.bf16 %v1521, %v1521
        %1524 = vmatprep.subr.bf16.mxu0 %v721
        %1525 = vmatpush1.bf16.msra.mxu0 %v720
        %1526 = vmatprep.subr.bf16.mxu0 %v718
        %1527 = vmatpush1.bf16.msra.mxu0 %v717
        %1528 = vmatprep.subr.bf16.mxu0 %v715
        %1529 = vmatpush1.bf16.msra.mxu0 %v714
        %1530 = vmatprep.subr.bf16.mxu0 %v712
        %1531 = vmatpush1.bf16.msra.mxu0 %v711
        %1532 = vmatprep.subr.bf16.mxu0 %v709
        %1533 = vmatpush1.bf16.msra.mxu0 %v708
        %1534 = vmatprep.subr.bf16.mxu0 %v706
        %1535 = vmatpush1.bf16.msra.mxu0 %v705
        %1536 = vmatprep.subr.bf16.mxu0 %v703
        %1537 = vmatpush1.bf16.msra.mxu0 %v702
        %1538 = vmatprep.subr.bf16.mxu0 %v700
        %1539 = vmatpush1.bf16.msra.mxu0 %v699
        %1540 = vmatprep.subr.bf16.mxu0 %v745
        %1541 = vmatpush2.bf16.msra.mxu0 %v744
        %1542 = vmatprep.subr.bf16.mxu0 %v742
        %1543 = vmatpush2.bf16.msra.mxu0 %v741
        %1544 = vmatprep.subr.bf16.mxu0 %v739
        %1545 = vmatpush2.bf16.msra.mxu0 %v738
        %1546 = vmatprep.subr.bf16.mxu0 %v736
        %1547 = vmatpush2.bf16.msra.mxu0 %v735
        %1548 = vmatprep.subr.bf16.mxu0 %v733
        %1549 = vmatpush2.bf16.msra.mxu0 %v732
        %1550 = vmatprep.subr.bf16.mxu0 %v730
        %1551 = vmatpush2.bf16.msra.mxu0 %v729
        %1552 = vmatprep.subr.bf16.mxu0 %v727
        %1553 = vmatpush2.bf16.msra.mxu0 %v726
        %1554 = vmatprep.subr.bf16.mxu0 %v724
        %1555 = vmatpush2.bf16.msra.mxu0 %v723
        %1556 = vmatprep.mubr.bf16.mxu0 %v1523
        %1557 = vmatmul.mubr.bf16.gmra.mxu0 %v1522
        %v1558 = vpop.f32.mrf.mxu0
        %v1559 = vadd.f32 %v527, %v1558
        %v1560 = vpop.f32.mrf.mxu0
        %v1561 = vadd.f32 %v531, %v1560
        %v1562 = vpop.f32.mrf.mxu0
        %v1563 = vpop.f32.mrf.mxu0
        %1564 = vdwg.mxu0
        %1565 = vmatprep.subr.bf16.mxu0 0
        %1566 = vmatpush1.bf16.msra.mxu0 %v722
        %1567 = vmatprep.subr.bf16.mxu0 0
        %1568 = vmatpush1.bf16.msra.mxu0 %v719
        %1569 = vmatprep.subr.bf16.mxu0 0
        %1570 = vmatpush1.bf16.msra.mxu0 %v716
        %1571 = vmatprep.subr.bf16.mxu0 0
        %1572 = vmatpush1.bf16.msra.mxu0 %v713
        %1573 = vmatprep.subr.bf16.mxu0 0
        %1574 = vmatpush1.bf16.msra.mxu0 %v710
        %1575 = vmatprep.subr.bf16.mxu0 0
        %1576 = vmatpush1.bf16.msra.mxu0 %v707
        %1577 = vmatprep.subr.bf16.mxu0 0
        %1578 = vmatpush1.bf16.msra.mxu0 %v704
        %1579 = vmatprep.subr.bf16.mxu0 0
        %1580 = vmatpush1.bf16.msra.mxu0 %v701
        %1581 = vmatprep.subr.bf16.mxu0 0
        %1582 = vmatpush2.bf16.msra.mxu0 %v746
        %1583 = vmatprep.subr.bf16.mxu0 0
        %1584 = vmatpush2.bf16.msra.mxu0 %v743
        %1585 = vmatprep.subr.bf16.mxu0 0
        %1586 = vmatpush2.bf16.msra.mxu0 %v740
        %1587 = vmatprep.subr.bf16.mxu0 0
        %1588 = vmatpush2.bf16.msra.mxu0 %v737
        %1589 = vmatprep.subr.bf16.mxu0 0
        %1590 = vmatpush2.bf16.msra.mxu0 %v734
        %1591 = vmatprep.subr.bf16.mxu0 0
        %1592 = vmatpush2.bf16.msra.mxu0 %v731
        %1593 = vmatprep.subr.bf16.mxu0 0
        %1594 = vmatpush2.bf16.msra.mxu0 %v728
        %1595 = vmatprep.subr.bf16.mxu0 0
        %1596 = vmatpush2.bf16.msra.mxu0 %v725
        %1597 = vmatprep.mubr.bf16.mxu0 %v1523
        %1598 = vmatmul.mubr.bf16.gmra.mxu0 %v1522
        %v1599 = vpop.f32.mrf.mxu0
        %v1600 = vadd.f32 %v535, %v1599
        %v1601 = vpop.f32.mrf.mxu0
        %v1602 = vpop.f32.mrf.mxu0
        %v1603 = vpop.f32.mrf.mxu0
        %1604 = vdwg.mxu0
        %v1605 = vpack.c.bf16 %v1512, %v1512
        %1606 = vmatprep.subr.bf16.mxu0 %v995
        %1607 = vmatpush1.bf16.msra.mxu0 %v994
        %1608 = vmatprep.subr.bf16.mxu0 %v992
        %1609 = vmatpush1.bf16.msra.mxu0 %v991
        %1610 = vmatprep.subr.bf16.mxu0 %v989
        %1611 = vmatpush1.bf16.msra.mxu0 %v988
        %1612 = vmatprep.subr.bf16.mxu0 %v986
        %1613 = vmatpush1.bf16.msra.mxu0 %v985
        %1614 = vmatprep.subr.bf16.mxu0 %v983
        %1615 = vmatpush1.bf16.msra.mxu0 %v982
        %1616 = vmatprep.subr.bf16.mxu0 %v980
        %1617 = vmatpush1.bf16.msra.mxu0 %v979
        %1618 = vmatprep.subr.bf16.mxu0 %v977
        %1619 = vmatpush1.bf16.msra.mxu0 %v976
        %1620 = vmatprep.subr.bf16.mxu0 %v974
        %1621 = vmatpush1.bf16.msra.mxu0 %v973
        %1622 = vmatprep.subr.bf16.mxu0 0
        %1623 = vmatpush2.bf16.msra.mxu0 0
        %1624 = vmatprep.subr.bf16.mxu0 0
        %1625 = vmatpush2.bf16.msra.mxu0 0
        %1626 = vmatprep.subr.bf16.mxu0 0
        %1627 = vmatpush2.bf16.msra.mxu0 0
        %1628 = vmatprep.subr.bf16.mxu0 0
        %1629 = vmatpush2.bf16.msra.mxu0 0
        %1630 = vmatprep.subr.bf16.mxu0 0
        %1631 = vmatpush2.bf16.msra.mxu0 0
        %1632 = vmatprep.subr.bf16.mxu0 0
        %1633 = vmatpush2.bf16.msra.mxu0 0
        %1634 = vmatprep.subr.bf16.mxu0 0
        %1635 = vmatpush2.bf16.msra.mxu0 0
        %1636 = vmatprep.subr.bf16.mxu0 0
        %1637 = vmatpush2.bf16.msra.mxu0 0
        %1638 = vmatprep.mubr.bf16.mxu0 0
        %1639 = vmatmul.mubr.bf16.gmra.mxu0 %v1605
        %v1640 = vpop.f32.mrf.mxu0
        %v1641 = vadd.f32 %v881, %v1640
        %v1642 = vpop.f32.mrf.mxu0
        %v1643 = vadd.f32 %v885, %v1642
        %v1644 = vpop.f32.mrf.mxu0
        %v1645 = vpop.f32.mrf.mxu0
        %1646 = vdwg.mxu0
        %1647 = vmatprep.subr.bf16.mxu0 0
        %1648 = vmatpush1.bf16.msra.mxu0 %v996
        %1649 = vmatprep.subr.bf16.mxu0 0
        %1650 = vmatpush1.bf16.msra.mxu0 %v993
        %1651 = vmatprep.subr.bf16.mxu0 0
        %1652 = vmatpush1.bf16.msra.mxu0 %v990
        %1653 = vmatprep.subr.bf16.mxu0 0
        %1654 = vmatpush1.bf16.msra.mxu0 %v987
        %1655 = vmatprep.subr.bf16.mxu0 0
        %1656 = vmatpush1.bf16.msra.mxu0 %v984
        %1657 = vmatprep.subr.bf16.mxu0 0
        %1658 = vmatpush1.bf16.msra.mxu0 %v981
        %1659 = vmatprep.subr.bf16.mxu0 0
        %1660 = vmatpush1.bf16.msra.mxu0 %v978
        %1661 = vmatprep.subr.bf16.mxu0 0
        %1662 = vmatpush1.bf16.msra.mxu0 %v975
        %1663 = vmatprep.subr.bf16.mxu0 0
        %1664 = vmatpush2.bf16.msra.mxu0 0
        %1665 = vmatprep.subr.bf16.mxu0 0
        %1666 = vmatpush2.bf16.msra.mxu0 0
        %1667 = vmatprep.subr.bf16.mxu0 0
        %1668 = vmatpush2.bf16.msra.mxu0 0
        %1669 = vmatprep.subr.bf16.mxu0 0
        %1670 = vmatpush2.bf16.msra.mxu0 0
        %1671 = vmatprep.subr.bf16.mxu0 0
        %1672 = vmatpush2.bf16.msra.mxu0 0
        %1673 = vmatprep.subr.bf16.mxu0 0
        %1674 = vmatpush2.bf16.msra.mxu0 0
        %1675 = vmatprep.subr.bf16.mxu0 0
        %1676 = vmatpush2.bf16.msra.mxu0 0
        %1677 = vmatprep.subr.bf16.mxu0 0
        %1678 = vmatpush2.bf16.msra.mxu0 0
        %1679 = vmatprep.mubr.bf16.mxu0 0
        %1680 = vmatmul.mubr.bf16.gmra.mxu0 %v1605
        %v1681 = vpop.f32.mrf.mxu0
        %v1682 = vadd.f32 %v889, %v1681
        %v1683 = vpop.f32.mrf.mxu0
        %v1684 = vpop.f32.mrf.mxu0
        %v1685 = vpop.f32.mrf.mxu0
        %1686 = vdwg.mxu0
        %v1687 = vadd.f32 %v1559, %v1641
        %v1688 = vxor.u32 %v1687, 2147483648
        %v1689 = vmul.f32 %v1688, 1.442695
        %v1690 = vpow.pop %v1689
        %v1691 = vadd.f32 %v1690, 1.0
        %v1692 = vrcp.pop %v1691
        %v1693 = vmul.f32 1.0, %v1692
        %v1694 = vadd.f32 %v1561, %v1643
        %v1695 = vxor.u32 %v1694, 2147483648
        %v1696 = vmul.f32 %v1695, 1.442695
        %v1697 = vpow.pop %v1696
        %v1698 = vadd.f32 %v1697, 1.0
        %v1699 = vrcp.pop %v1698
        %v1700 = vmul.f32 1.0, %v1699
        %v1701 = vmul.f32 %v1693, %v1682
        %v1702 = vadd.f32 %v1600, %v1701
        %v1703 = vtanh.pop %v1702
        %v1704 = vsub.f32 1.0, %v1700
        %v1705 = vmul.f32 %v1704, %v1703
        %v1706 = vmul.f32 %v1700, %v1512
        %v1707 = vadd.f32 %v1705, %v1706
        %s1708 = smul.u32 %s1516, 8
        %s1709 = scalar_lea.vmem %s353, %s1708 [#allocation3]
        %1710 = vst [vmem:[%s1709] sm:$0xff] %v1707
        %s1711 = scalar_select %p514, 4, 3
        %s1712 = smul.u32 %s1711, 2
        %s1713 = smul.addr %s1712, 8
        %s1714 = scalar_lea.vmem %s370, %s1713
        %v1715 = vld [vmem:[%s1714] sm:$0xff]
        %v1716 = vld [vmem:[%s1714 + $0x8] sm:$0xff]
        %v1717 = vpack.c.bf16 %v1715, %v1715
        %v1718 = vpack.c.bf16 %v1716, %v1716
        %1719 = vmatprep.subr.bf16.mxu0 %v721
        %1720 = vmatpush1.bf16.msra.mxu0 %v720
        %1721 = vmatprep.subr.bf16.mxu0 %v718
        %1722 = vmatpush1.bf16.msra.mxu0 %v717
        %1723 = vmatprep.subr.bf16.mxu0 %v715
        %1724 = vmatpush1.bf16.msra.mxu0 %v714
        %1725 = vmatprep.subr.bf16.mxu0 %v712
        %1726 = vmatpush1.bf16.msra.mxu0 %v711
        %1727 = vmatprep.subr.bf16.mxu0 %v709
        %1728 = vmatpush1.bf16.msra.mxu0 %v708
        %1729 = vmatprep.subr.bf16.mxu0 %v706
        %1730 = vmatpush1.bf16.msra.mxu0 %v705
        %1731 = vmatprep.subr.bf16.mxu0 %v703
        %1732 = vmatpush1.bf16.msra.mxu0 %v702
        %1733 = vmatprep.subr.bf16.mxu0 %v700
        %1734 = vmatpush1.bf16.msra.mxu0 %v699
        %1735 = vmatprep.subr.bf16.mxu0 %v745
        %1736 = vmatpush2.bf16.msra.mxu0 %v744
        %1737 = vmatprep.subr.bf16.mxu0 %v742
        %1738 = vmatpush2.bf16.msra.mxu0 %v741
        %1739 = vmatprep.subr.bf16.mxu0 %v739
        %1740 = vmatpush2.bf16.msra.mxu0 %v738
        %1741 = vmatprep.subr.bf16.mxu0 %v736
        %1742 = vmatpush2.bf16.msra.mxu0 %v735
        %1743 = vmatprep.subr.bf16.mxu0 %v733
        %1744 = vmatpush2.bf16.msra.mxu0 %v732
        %1745 = vmatprep.subr.bf16.mxu0 %v730
        %1746 = vmatpush2.bf16.msra.mxu0 %v729
        %1747 = vmatprep.subr.bf16.mxu0 %v727
        %1748 = vmatpush2.bf16.msra.mxu0 %v726
        %1749 = vmatprep.subr.bf16.mxu0 %v724
        %1750 = vmatpush2.bf16.msra.mxu0 %v723
        %1751 = vmatprep.mubr.bf16.mxu0 %v1718
        %1752 = vmatmul.mubr.bf16.gmra.mxu0 %v1717
        %v1753 = vpop.f32.mrf.mxu0
        %v1754 = vadd.f32 %v527, %v1753
        %v1755 = vpop.f32.mrf.mxu0
        %v1756 = vadd.f32 %v531, %v1755
        %v1757 = vpop.f32.mrf.mxu0
        %v1758 = vpop.f32.mrf.mxu0
        %1759 = vdwg.mxu0
        %1760 = vmatprep.subr.bf16.mxu0 0
        %1761 = vmatpush1.bf16.msra.mxu0 %v722
        %1762 = vmatprep.subr.bf16.mxu0 0
        %1763 = vmatpush1.bf16.msra.mxu0 %v719
        %1764 = vmatprep.subr.bf16.mxu0 0
        %1765 = vmatpush1.bf16.msra.mxu0 %v716
        %1766 = vmatprep.subr.bf16.mxu0 0
        %1767 = vmatpush1.bf16.msra.mxu0 %v713
        %1768 = vmatprep.subr.bf16.mxu0 0
        %1769 = vmatpush1.bf16.msra.mxu0 %v710
        %1770 = vmatprep.subr.bf16.mxu0 0
        %1771 = vmatpush1.bf16.msra.mxu0 %v707
        %1772 = vmatprep.subr.bf16.mxu0 0
        %1773 = vmatpush1.bf16.msra.mxu0 %v704
        %1774 = vmatprep.subr.bf16.mxu0 0
        %1775 = vmatpush1.bf16.msra.mxu0 %v701
        %1776 = vmatprep.subr.bf16.mxu0 0
        %1777 = vmatpush2.bf16.msra.mxu0 %v746
        %1778 = vmatprep.subr.bf16.mxu0 0
        %1779 = vmatpush2.bf16.msra.mxu0 %v743
        %1780 = vmatprep.subr.bf16.mxu0 0
        %1781 = vmatpush2.bf16.msra.mxu0 %v740
        %1782 = vmatprep.subr.bf16.mxu0 0
        %1783 = vmatpush2.bf16.msra.mxu0 %v737
        %1784 = vmatprep.subr.bf16.mxu0 0
        %1785 = vmatpush2.bf16.msra.mxu0 %v734
        %1786 = vmatprep.subr.bf16.mxu0 0
        %1787 = vmatpush2.bf16.msra.mxu0 %v731
        %1788 = vmatprep.subr.bf16.mxu0 0
        %1789 = vmatpush2.bf16.msra.mxu0 %v728
        %1790 = vmatprep.subr.bf16.mxu0 0
        %1791 = vmatpush2.bf16.msra.mxu0 %v725
        %1792 = vmatprep.mubr.bf16.mxu0 %v1718
        %1793 = vmatmul.mubr.bf16.gmra.mxu0 %v1717
        %v1794 = vpop.f32.mrf.mxu0
        %v1795 = vadd.f32 %v535, %v1794
        %v1796 = vpop.f32.mrf.mxu0
        %v1797 = vpop.f32.mrf.mxu0
        %v1798 = vpop.f32.mrf.mxu0
        %1799 = vdwg.mxu0
        %v1800 = vpack.c.bf16 %v1707, %v1707
        %1801 = vmatprep.subr.bf16.mxu0 %v995
        %1802 = vmatpush1.bf16.msra.mxu0 %v994
        %1803 = vmatprep.subr.bf16.mxu0 %v992
        %1804 = vmatpush1.bf16.msra.mxu0 %v991
        %1805 = vmatprep.subr.bf16.mxu0 %v989
        %1806 = vmatpush1.bf16.msra.mxu0 %v988
        %1807 = vmatprep.subr.bf16.mxu0 %v986
        %1808 = vmatpush1.bf16.msra.mxu0 %v985
        %1809 = vmatprep.subr.bf16.mxu0 %v983
        %1810 = vmatpush1.bf16.msra.mxu0 %v982
        %1811 = vmatprep.subr.bf16.mxu0 %v980
        %1812 = vmatpush1.bf16.msra.mxu0 %v979
        %1813 = vmatprep.subr.bf16.mxu0 %v977
        %1814 = vmatpush1.bf16.msra.mxu0 %v976
        %1815 = vmatprep.subr.bf16.mxu0 %v974
        %1816 = vmatpush1.bf16.msra.mxu0 %v973
        %1817 = vmatprep.subr.bf16.mxu0 0
        %1818 = vmatpush2.bf16.msra.mxu0 0
        %1819 = vmatprep.subr.bf16.mxu0 0
        %1820 = vmatpush2.bf16.msra.mxu0 0
        %1821 = vmatprep.subr.bf16.mxu0 0
        %1822 = vmatpush2.bf16.msra.mxu0 0
        %1823 = vmatprep.subr.bf16.mxu0 0
        %1824 = vmatpush2.bf16.msra.mxu0 0
        %1825 = vmatprep.subr.bf16.mxu0 0
        %1826 = vmatpush2.bf16.msra.mxu0 0
        %1827 = vmatprep.subr.bf16.mxu0 0
        %1828 = vmatpush2.bf16.msra.mxu0 0
        %1829 = vmatprep.subr.bf16.mxu0 0
        %1830 = vmatpush2.bf16.msra.mxu0 0
        %1831 = vmatprep.subr.bf16.mxu0 0
        %1832 = vmatpush2.bf16.msra.mxu0 0
        %1833 = vmatprep.mubr.bf16.mxu0 0
        %1834 = vmatmul.mubr.bf16.gmra.mxu0 %v1800
        %v1835 = vpop.f32.mrf.mxu0
        %v1836 = vadd.f32 %v881, %v1835
        %v1837 = vpop.f32.mrf.mxu0
        %v1838 = vadd.f32 %v885, %v1837
        %v1839 = vpop.f32.mrf.mxu0
        %v1840 = vpop.f32.mrf.mxu0
        %1841 = vdwg.mxu0
        %1842 = vmatprep.subr.bf16.mxu0 0
        %1843 = vmatpush1.bf16.msra.mxu0 %v996
        %1844 = vmatprep.subr.bf16.mxu0 0
        %1845 = vmatpush1.bf16.msra.mxu0 %v993
        %1846 = vmatprep.subr.bf16.mxu0 0
        %1847 = vmatpush1.bf16.msra.mxu0 %v990
        %1848 = vmatprep.subr.bf16.mxu0 0
        %1849 = vmatpush1.bf16.msra.mxu0 %v987
        %1850 = vmatprep.subr.bf16.mxu0 0
        %1851 = vmatpush1.bf16.msra.mxu0 %v984
        %1852 = vmatprep.subr.bf16.mxu0 0
        %1853 = vmatpush1.bf16.msra.mxu0 %v981
        %1854 = vmatprep.subr.bf16.mxu0 0
        %1855 = vmatpush1.bf16.msra.mxu0 %v978
        %1856 = vmatprep.subr.bf16.mxu0 0
        %1857 = vmatpush1.bf16.msra.mxu0 %v975
        %1858 = vmatprep.subr.bf16.mxu0 0
        %1859 = vmatpush2.bf16.msra.mxu0 0
        %1860 = vmatprep.subr.bf16.mxu0 0
        %1861 = vmatpush2.bf16.msra.mxu0 0
        %1862 = vmatprep.subr.bf16.mxu0 0
        %1863 = vmatpush2.bf16.msra.mxu0 0
        %1864 = vmatprep.subr.bf16.mxu0 0
        %1865 = vmatpush2.bf16.msra.mxu0 0
        %1866 = vmatprep.subr.bf16.mxu0 0
        %1867 = vmatpush2.bf16.msra.mxu0 0
        %1868 = vmatprep.subr.bf16.mxu0 0
        %1869 = vmatpush2.bf16.msra.mxu0 0
        %1870 = vmatprep.subr.bf16.mxu0 0
        %1871 = vmatpush2.bf16.msra.mxu0 0
        %1872 = vmatprep.subr.bf16.mxu0 0
        %1873 = vmatpush2.bf16.msra.mxu0 0
        %1874 = vmatprep.mubr.bf16.mxu0 0
        %1875 = vmatmul.mubr.bf16.gmra.mxu0 %v1800
        %v1876 = vpop.f32.mrf.mxu0
        %v1877 = vadd.f32 %v889, %v1876
        %v1878 = vpop.f32.mrf.mxu0
        %v1879 = vpop.f32.mrf.mxu0
        %v1880 = vpop.f32.mrf.mxu0
        %1881 = vdwg.mxu0
        %v1882 = vadd.f32 %v1754, %v1836
        %v1883 = vxor.u32 %v1882, 2147483648
        %v1884 = vmul.f32 %v1883, 1.442695
        %v1885 = vpow.pop %v1884
        %v1886 = vadd.f32 %v1885, 1.0
        %v1887 = vrcp.pop %v1886
        %v1888 = vmul.f32 1.0, %v1887
        %v1889 = vadd.f32 %v1756, %v1838
        %v1890 = vxor.u32 %v1889, 2147483648
        %v1891 = vmul.f32 %v1890, 1.442695
        %v1892 = vpow.pop %v1891
        %v1893 = vadd.f32 %v1892, 1.0
        %v1894 = vrcp.pop %v1893
        %v1895 = vmul.f32 1.0, %v1894
        %v1896 = vmul.f32 %v1888, %v1877
        %v1897 = vadd.f32 %v1795, %v1896
        %v1898 = vtanh.pop %v1897
        %v1899 = vsub.f32 1.0, %v1895
        %v1900 = vmul.f32 %v1899, %v1898
        %v1901 = vmul.f32 %v1895, %v1707
        %v1902 = vadd.f32 %v1900, %v1901
        %s1903 = smul.u32 %s1711, 8
        %s1904 = scalar_lea.vmem %s353, %s1903 [#allocation3]
        %1905 = vst [vmem:[%s1904] sm:$0xff] %v1902
        %s1906 = scalar_select %p514, 5, 2
        %s1907 = smul.u32 %s1906, 2
        %s1908 = smul.addr %s1907, 8
        %s1909 = scalar_lea.vmem %s370, %s1908
        %v1910 = vld [vmem:[%s1909] sm:$0xff]
        %v1911 = vld [vmem:[%s1909 + $0x8] sm:$0xff]
        %v1912 = vpack.c.bf16 %v1910, %v1910
        %v1913 = vpack.c.bf16 %v1911, %v1911
        %1914 = vmatprep.subr.bf16.mxu0 %v721
        %1915 = vmatpush1.bf16.msra.mxu0 %v720
        %1916 = vmatprep.subr.bf16.mxu0 %v718
        %1917 = vmatpush1.bf16.msra.mxu0 %v717
        %1918 = vmatprep.subr.bf16.mxu0 %v715
        %1919 = vmatpush1.bf16.msra.mxu0 %v714
        %1920 = vmatprep.subr.bf16.mxu0 %v712
        %1921 = vmatpush1.bf16.msra.mxu0 %v711
        %1922 = vmatprep.subr.bf16.mxu0 %v709
        %1923 = vmatpush1.bf16.msra.mxu0 %v708
        %1924 = vmatprep.subr.bf16.mxu0 %v706
        %1925 = vmatpush1.bf16.msra.mxu0 %v705
        %1926 = vmatprep.subr.bf16.mxu0 %v703
        %1927 = vmatpush1.bf16.msra.mxu0 %v702
        %1928 = vmatprep.subr.bf16.mxu0 %v700
        %1929 = vmatpush1.bf16.msra.mxu0 %v699
        %1930 = vmatprep.subr.bf16.mxu0 %v745
        %1931 = vmatpush2.bf16.msra.mxu0 %v744
        %1932 = vmatprep.subr.bf16.mxu0 %v742
        %1933 = vmatpush2.bf16.msra.mxu0 %v741
        %1934 = vmatprep.subr.bf16.mxu0 %v739
        %1935 = vmatpush2.bf16.msra.mxu0 %v738
        %1936 = vmatprep.subr.bf16.mxu0 %v736
        %1937 = vmatpush2.bf16.msra.mxu0 %v735
        %1938 = vmatprep.subr.bf16.mxu0 %v733
        %1939 = vmatpush2.bf16.msra.mxu0 %v732
        %1940 = vmatprep.subr.bf16.mxu0 %v730
        %1941 = vmatpush2.bf16.msra.mxu0 %v729
        %1942 = vmatprep.subr.bf16.mxu0 %v727
        %1943 = vmatpush2.bf16.msra.mxu0 %v726
        %1944 = vmatprep.subr.bf16.mxu0 %v724
        %1945 = vmatpush2.bf16.msra.mxu0 %v723
        %1946 = vmatprep.mubr.bf16.mxu0 %v1913
        %1947 = vmatmul.mubr.bf16.gmra.mxu0 %v1912
        %v1948 = vpop.f32.mrf.mxu0
        %v1949 = vadd.f32 %v527, %v1948
        %v1950 = vpop.f32.mrf.mxu0
        %v1951 = vadd.f32 %v531, %v1950
        %v1952 = vpop.f32.mrf.mxu0
        %v1953 = vpop.f32.mrf.mxu0
        %1954 = vdwg.mxu0
        %1955 = vmatprep.subr.bf16.mxu0 0
        %1956 = vmatpush1.bf16.msra.mxu0 %v722
        %1957 = vmatprep.subr.bf16.mxu0 0
        %1958 = vmatpush1.bf16.msra.mxu0 %v719
        %1959 = vmatprep.subr.bf16.mxu0 0
        %1960 = vmatpush1.bf16.msra.mxu0 %v716
        %1961 = vmatprep.subr.bf16.mxu0 0
        %1962 = vmatpush1.bf16.msra.mxu0 %v713
        %1963 = vmatprep.subr.bf16.mxu0 0
        %1964 = vmatpush1.bf16.msra.mxu0 %v710
        %1965 = vmatprep.subr.bf16.mxu0 0
        %1966 = vmatpush1.bf16.msra.mxu0 %v707
        %1967 = vmatprep.subr.bf16.mxu0 0
        %1968 = vmatpush1.bf16.msra.mxu0 %v704
        %1969 = vmatprep.subr.bf16.mxu0 0
        %1970 = vmatpush1.bf16.msra.mxu0 %v701
        %1971 = vmatprep.subr.bf16.mxu0 0
        %1972 = vmatpush2.bf16.msra.mxu0 %v746
        %1973 = vmatprep.subr.bf16.mxu0 0
        %1974 = vmatpush2.bf16.msra.mxu0 %v743
        %1975 = vmatprep.subr.bf16.mxu0 0
        %1976 = vmatpush2.bf16.msra.mxu0 %v740
        %1977 = vmatprep.subr.bf16.mxu0 0
        %1978 = vmatpush2.bf16.msra.mxu0 %v737
        %1979 = vmatprep.subr.bf16.mxu0 0
        %1980 = vmatpush2.bf16.msra.mxu0 %v734
        %1981 = vmatprep.subr.bf16.mxu0 0
        %1982 = vmatpush2.bf16.msra.mxu0 %v731
        %1983 = vmatprep.subr.bf16.mxu0 0
        %1984 = vmatpush2.bf16.msra.mxu0 %v728
        %1985 = vmatprep.subr.bf16.mxu0 0
        %1986 = vmatpush2.bf16.msra.mxu0 %v725
        %1987 = vmatprep.mubr.bf16.mxu0 %v1913
        %1988 = vmatmul.mubr.bf16.gmra.mxu0 %v1912
        %v1989 = vpop.f32.mrf.mxu0
        %v1990 = vadd.f32 %v535, %v1989
        %v1991 = vpop.f32.mrf.mxu0
        %v1992 = vpop.f32.mrf.mxu0
        %v1993 = vpop.f32.mrf.mxu0
        %1994 = vdwg.mxu0
        %v1995 = vpack.c.bf16 %v1902, %v1902
        %1996 = vmatprep.subr.bf16.mxu0 %v995
        %1997 = vmatpush1.bf16.msra.mxu0 %v994
        %1998 = vmatprep.subr.bf16.mxu0 %v992
        %1999 = vmatpush1.bf16.msra.mxu0 %v991
        %2000 = vmatprep.subr.bf16.mxu0 %v989
        %2001 = vmatpush1.bf16.msra.mxu0 %v988
        %2002 = vmatprep.subr.bf16.mxu0 %v986
        %2003 = vmatpush1.bf16.msra.mxu0 %v985
        %2004 = vmatprep.subr.bf16.mxu0 %v983
        %2005 = vmatpush1.bf16.msra.mxu0 %v982
        %2006 = vmatprep.subr.bf16.mxu0 %v980
        %2007 = vmatpush1.bf16.msra.mxu0 %v979
        %2008 = vmatprep.subr.bf16.mxu0 %v977
        %2009 = vmatpush1.bf16.msra.mxu0 %v976
        %2010 = vmatprep.subr.bf16.mxu0 %v974
        %2011 = vmatpush1.bf16.msra.mxu0 %v973
        %2012 = vmatprep.subr.bf16.mxu0 0
        %2013 = vmatpush2.bf16.msra.mxu0 0
        %2014 = vmatprep.subr.bf16.mxu0 0
        %2015 = vmatpush2.bf16.msra.mxu0 0
        %2016 = vmatprep.subr.bf16.mxu0 0
        %2017 = vmatpush2.bf16.msra.mxu0 0
        %2018 = vmatprep.subr.bf16.mxu0 0
        %2019 = vmatpush2.bf16.msra.mxu0 0
        %2020 = vmatprep.subr.bf16.mxu0 0
        %2021 = vmatpush2.bf16.msra.mxu0 0
        %2022 = vmatprep.subr.bf16.mxu0 0
        %2023 = vmatpush2.bf16.msra.mxu0 0
        %2024 = vmatprep.subr.bf16.mxu0 0
        %2025 = vmatpush2.bf16.msra.mxu0 0
        %2026 = vmatprep.subr.bf16.mxu0 0
        %2027 = vmatpush2.bf16.msra.mxu0 0
        %2028 = vmatprep.mubr.bf16.mxu0 0
        %2029 = vmatmul.mubr.bf16.gmra.mxu0 %v1995
        %v2030 = vpop.f32.mrf.mxu0
        %v2031 = vadd.f32 %v881, %v2030
        %v2032 = vpop.f32.mrf.mxu0
        %v2033 = vadd.f32 %v885, %v2032
        %v2034 = vpop.f32.mrf.mxu0
        %v2035 = vpop.f32.mrf.mxu0
        %2036 = vdwg.mxu0
        %2037 = vmatprep.subr.bf16.mxu0 0
        %2038 = vmatpush1.bf16.msra.mxu0 %v996
        %2039 = vmatprep.subr.bf16.mxu0 0
        %2040 = vmatpush1.bf16.msra.mxu0 %v993
        %2041 = vmatprep.subr.bf16.mxu0 0
        %2042 = vmatpush1.bf16.msra.mxu0 %v990
        %2043 = vmatprep.subr.bf16.mxu0 0
        %2044 = vmatpush1.bf16.msra.mxu0 %v987
        %2045 = vmatprep.subr.bf16.mxu0 0
        %2046 = vmatpush1.bf16.msra.mxu0 %v984
        %2047 = vmatprep.subr.bf16.mxu0 0
        %2048 = vmatpush1.bf16.msra.mxu0 %v981
        %2049 = vmatprep.subr.bf16.mxu0 0
        %2050 = vmatpush1.bf16.msra.mxu0 %v978
        %2051 = vmatprep.subr.bf16.mxu0 0
        %2052 = vmatpush1.bf16.msra.mxu0 %v975
        %2053 = vmatprep.subr.bf16.mxu0 0
        %2054 = vmatpush2.bf16.msra.mxu0 0
        %2055 = vmatprep.subr.bf16.mxu0 0
        %2056 = vmatpush2.bf16.msra.mxu0 0
        %2057 = vmatprep.subr.bf16.mxu0 0
        %2058 = vmatpush2.bf16.msra.mxu0 0
        %2059 = vmatprep.subr.bf16.mxu0 0
        %2060 = vmatpush2.bf16.msra.mxu0 0
        %2061 = vmatprep.subr.bf16.mxu0 0
        %2062 = vmatpush2.bf16.msra.mxu0 0
        %2063 = vmatprep.subr.bf16.mxu0 0
        %2064 = vmatpush2.bf16.msra.mxu0 0
        %2065 = vmatprep.subr.bf16.mxu0 0
        %2066 = vmatpush2.bf16.msra.mxu0 0
        %2067 = vmatprep.subr.bf16.mxu0 0
        %2068 = vmatpush2.bf16.msra.mxu0 0
        %2069 = vmatprep.mubr.bf16.mxu0 0
        %2070 = vmatmul.mubr.bf16.gmra.mxu0 %v1995
        %v2071 = vpop.f32.mrf.mxu0
        %v2072 = vadd.f32 %v889, %v2071
        %v2073 = vpop.f32.mrf.mxu0
        %v2074 = vpop.f32.mrf.mxu0
        %v2075 = vpop.f32.mrf.mxu0
        %2076 = vdwg.mxu0
        %v2077 = vadd.f32 %v1949, %v2031
        %v2078 = vxor.u32 %v2077, 2147483648
        %v2079 = vmul.f32 %v2078, 1.442695
        %v2080 = vpow.pop %v2079
        %v2081 = vadd.f32 %v2080, 1.0
        %v2082 = vrcp.pop %v2081
        %v2083 = vmul.f32 1.0, %v2082
        %v2084 = vadd.f32 %v1951, %v2033
        %v2085 = vxor.u32 %v2084, 2147483648
        %v2086 = vmul.f32 %v2085, 1.442695
        %v2087 = vpow.pop %v2086
        %v2088 = vadd.f32 %v2087, 1.0
        %v2089 = vrcp.pop %v2088
        %v2090 = vmul.f32 1.0, %v2089
        %v2091 = vmul.f32 %v2083, %v2072
        %v2092 = vadd.f32 %v1990, %v2091
        %v2093 = vtanh.pop %v2092
        %v2094 = vsub.f32 1.0, %v2090
        %v2095 = vmul.f32 %v2094, %v2093
        %v2096 = vmul.f32 %v2090, %v1902
        %v2097 = vadd.f32 %v2095, %v2096
        %s2098 = smul.u32 %s1906, 8
        %s2099 = scalar_lea.vmem %s353, %s2098 [#allocation3]
        %2100 = vst [vmem:[%s2099] sm:$0xff] %v2097
        %s2101 = scalar_select %p514, 6, 1
        %s2102 = smul.u32 %s2101, 2
        %s2103 = smul.addr %s2102, 8
        %s2104 = scalar_lea.vmem %s370, %s2103
        %v2105 = vld [vmem:[%s2104] sm:$0xff]
        %v2106 = vld [vmem:[%s2104 + $0x8] sm:$0xff]
        %v2107 = vpack.c.bf16 %v2105, %v2105
        %v2108 = vpack.c.bf16 %v2106, %v2106
        %2109 = vmatprep.subr.bf16.mxu0 %v721
        %2110 = vmatpush1.bf16.msra.mxu0 %v720
        %2111 = vmatprep.subr.bf16.mxu0 %v718
        %2112 = vmatpush1.bf16.msra.mxu0 %v717
        %2113 = vmatprep.subr.bf16.mxu0 %v715
        %2114 = vmatpush1.bf16.msra.mxu0 %v714
        %2115 = vmatprep.subr.bf16.mxu0 %v712
        %2116 = vmatpush1.bf16.msra.mxu0 %v711
        %2117 = vmatprep.subr.bf16.mxu0 %v709
        %2118 = vmatpush1.bf16.msra.mxu0 %v708
        %2119 = vmatprep.subr.bf16.mxu0 %v706
        %2120 = vmatpush1.bf16.msra.mxu0 %v705
        %2121 = vmatprep.subr.bf16.mxu0 %v703
        %2122 = vmatpush1.bf16.msra.mxu0 %v702
        %2123 = vmatprep.subr.bf16.mxu0 %v700
        %2124 = vmatpush1.bf16.msra.mxu0 %v699
        %2125 = vmatprep.subr.bf16.mxu0 %v745
        %2126 = vmatpush2.bf16.msra.mxu0 %v744
        %2127 = vmatprep.subr.bf16.mxu0 %v742
        %2128 = vmatpush2.bf16.msra.mxu0 %v741
        %2129 = vmatprep.subr.bf16.mxu0 %v739
        %2130 = vmatpush2.bf16.msra.mxu0 %v738
        %2131 = vmatprep.subr.bf16.mxu0 %v736
        %2132 = vmatpush2.bf16.msra.mxu0 %v735
        %2133 = vmatprep.subr.bf16.mxu0 %v733
        %2134 = vmatpush2.bf16.msra.mxu0 %v732
        %2135 = vmatprep.subr.bf16.mxu0 %v730
        %2136 = vmatpush2.bf16.msra.mxu0 %v729
        %2137 = vmatprep.subr.bf16.mxu0 %v727
        %2138 = vmatpush2.bf16.msra.mxu0 %v726
        %2139 = vmatprep.subr.bf16.mxu0 %v724
        %2140 = vmatpush2.bf16.msra.mxu0 %v723
        %2141 = vmatprep.mubr.bf16.mxu0 %v2108
        %2142 = vmatmul.mubr.bf16.gmra.mxu0 %v2107
        %v2143 = vpop.f32.mrf.mxu0
        %v2144 = vadd.f32 %v527, %v2143
        %v2145 = vpop.f32.mrf.mxu0
        %v2146 = vadd.f32 %v531, %v2145
        %v2147 = vpop.f32.mrf.mxu0
        %v2148 = vpop.f32.mrf.mxu0
        %2149 = vdwg.mxu0
        %2150 = vmatprep.subr.bf16.mxu0 0
        %2151 = vmatpush1.bf16.msra.mxu0 %v722
        %2152 = vmatprep.subr.bf16.mxu0 0
        %2153 = vmatpush1.bf16.msra.mxu0 %v719
        %2154 = vmatprep.subr.bf16.mxu0 0
        %2155 = vmatpush1.bf16.msra.mxu0 %v716
        %2156 = vmatprep.subr.bf16.mxu0 0
        %2157 = vmatpush1.bf16.msra.mxu0 %v713
        %2158 = vmatprep.subr.bf16.mxu0 0
        %2159 = vmatpush1.bf16.msra.mxu0 %v710
        %2160 = vmatprep.subr.bf16.mxu0 0
        %2161 = vmatpush1.bf16.msra.mxu0 %v707
        %2162 = vmatprep.subr.bf16.mxu0 0
        %2163 = vmatpush1.bf16.msra.mxu0 %v704
        %2164 = vmatprep.subr.bf16.mxu0 0
        %2165 = vmatpush1.bf16.msra.mxu0 %v701
        %2166 = vmatprep.subr.bf16.mxu0 0
        %2167 = vmatpush2.bf16.msra.mxu0 %v746
        %2168 = vmatprep.subr.bf16.mxu0 0
        %2169 = vmatpush2.bf16.msra.mxu0 %v743
        %2170 = vmatprep.subr.bf16.mxu0 0
        %2171 = vmatpush2.bf16.msra.mxu0 %v740
        %2172 = vmatprep.subr.bf16.mxu0 0
        %2173 = vmatpush2.bf16.msra.mxu0 %v737
        %2174 = vmatprep.subr.bf16.mxu0 0
        %2175 = vmatpush2.bf16.msra.mxu0 %v734
        %2176 = vmatprep.subr.bf16.mxu0 0
        %2177 = vmatpush2.bf16.msra.mxu0 %v731
        %2178 = vmatprep.subr.bf16.mxu0 0
        %2179 = vmatpush2.bf16.msra.mxu0 %v728
        %2180 = vmatprep.subr.bf16.mxu0 0
        %2181 = vmatpush2.bf16.msra.mxu0 %v725
        %2182 = vmatprep.mubr.bf16.mxu0 %v2108
        %2183 = vmatmul.mubr.bf16.gmra.mxu0 %v2107
        %v2184 = vpop.f32.mrf.mxu0
        %v2185 = vadd.f32 %v535, %v2184
        %v2186 = vpop.f32.mrf.mxu0
        %v2187 = vpop.f32.mrf.mxu0
        %v2188 = vpop.f32.mrf.mxu0
        %2189 = vdwg.mxu0
        %v2190 = vpack.c.bf16 %v2097, %v2097
        %2191 = vmatprep.subr.bf16.mxu0 %v995
        %2192 = vmatpush1.bf16.msra.mxu0 %v994
        %2193 = vmatprep.subr.bf16.mxu0 %v992
        %2194 = vmatpush1.bf16.msra.mxu0 %v991
        %2195 = vmatprep.subr.bf16.mxu0 %v989
        %2196 = vmatpush1.bf16.msra.mxu0 %v988
        %2197 = vmatprep.subr.bf16.mxu0 %v986
        %2198 = vmatpush1.bf16.msra.mxu0 %v985
        %2199 = vmatprep.subr.bf16.mxu0 %v983
        %2200 = vmatpush1.bf16.msra.mxu0 %v982
        %2201 = vmatprep.subr.bf16.mxu0 %v980
        %2202 = vmatpush1.bf16.msra.mxu0 %v979
        %2203 = vmatprep.subr.bf16.mxu0 %v977
        %2204 = vmatpush1.bf16.msra.mxu0 %v976
        %2205 = vmatprep.subr.bf16.mxu0 %v974
        %2206 = vmatpush1.bf16.msra.mxu0 %v973
        %2207 = vmatprep.subr.bf16.mxu0 0
        %2208 = vmatpush2.bf16.msra.mxu0 0
        %2209 = vmatprep.subr.bf16.mxu0 0
        %2210 = vmatpush2.bf16.msra.mxu0 0
        %2211 = vmatprep.subr.bf16.mxu0 0
        %2212 = vmatpush2.bf16.msra.mxu0 0
        %2213 = vmatprep.subr.bf16.mxu0 0
        %2214 = vmatpush2.bf16.msra.mxu0 0
        %2215 = vmatprep.subr.bf16.mxu0 0
        %2216 = vmatpush2.bf16.msra.mxu0 0
        %2217 = vmatprep.subr.bf16.mxu0 0
        %2218 = vmatpush2.bf16.msra.mxu0 0
        %2219 = vmatprep.subr.bf16.mxu0 0
        %2220 = vmatpush2.bf16.msra.mxu0 0
        %2221 = vmatprep.subr.bf16.mxu0 0
        %2222 = vmatpush2.bf16.msra.mxu0 0
        %2223 = vmatprep.mubr.bf16.mxu0 0
        %2224 = vmatmul.mubr.bf16.gmra.mxu0 %v2190
        %v2225 = vpop.f32.mrf.mxu0
        %v2226 = vadd.f32 %v881, %v2225
        %v2227 = vpop.f32.mrf.mxu0
        %v2228 = vadd.f32 %v885, %v2227
        %v2229 = vpop.f32.mrf.mxu0
        %v2230 = vpop.f32.mrf.mxu0
        %2231 = vdwg.mxu0
        %2232 = vmatprep.subr.bf16.mxu0 0
        %2233 = vmatpush1.bf16.msra.mxu0 %v996
        %2234 = vmatprep.subr.bf16.mxu0 0
        %2235 = vmatpush1.bf16.msra.mxu0 %v993
        %2236 = vmatprep.subr.bf16.mxu0 0
        %2237 = vmatpush1.bf16.msra.mxu0 %v990
        %2238 = vmatprep.subr.bf16.mxu0 0
        %2239 = vmatpush1.bf16.msra.mxu0 %v987
        %2240 = vmatprep.subr.bf16.mxu0 0
        %2241 = vmatpush1.bf16.msra.mxu0 %v984
        %2242 = vmatprep.subr.bf16.mxu0 0
        %2243 = vmatpush1.bf16.msra.mxu0 %v981
        %2244 = vmatprep.subr.bf16.mxu0 0
        %2245 = vmatpush1.bf16.msra.mxu0 %v978
        %2246 = vmatprep.subr.bf16.mxu0 0
        %2247 = vmatpush1.bf16.msra.mxu0 %v975
        %2248 = vmatprep.subr.bf16.mxu0 0
        %2249 = vmatpush2.bf16.msra.mxu0 0
        %2250 = vmatprep.subr.bf16.mxu0 0
        %2251 = vmatpush2.bf16.msra.mxu0 0
        %2252 = vmatprep.subr.bf16.mxu0 0
        %2253 = vmatpush2.bf16.msra.mxu0 0
        %2254 = vmatprep.subr.bf16.mxu0 0
        %2255 = vmatpush2.bf16.msra.mxu0 0
        %2256 = vmatprep.subr.bf16.mxu0 0
        %2257 = vmatpush2.bf16.msra.mxu0 0
        %2258 = vmatprep.subr.bf16.mxu0 0
        %2259 = vmatpush2.bf16.msra.mxu0 0
        %2260 = vmatprep.subr.bf16.mxu0 0
        %2261 = vmatpush2.bf16.msra.mxu0 0
        %2262 = vmatprep.subr.bf16.mxu0 0
        %2263 = vmatpush2.bf16.msra.mxu0 0
        %2264 = vmatprep.mubr.bf16.mxu0 0
        %2265 = vmatmul.mubr.bf16.gmra.mxu0 %v2190
        %v2266 = vpop.f32.mrf.mxu0
        %v2267 = vadd.f32 %v889, %v2266
        %v2268 = vpop.f32.mrf.mxu0
        %v2269 = vpop.f32.mrf.mxu0
        %v2270 = vpop.f32.mrf.mxu0
        %2271 = vdwg.mxu0
        %v2272 = vadd.f32 %v2144, %v2226
        %v2273 = vxor.u32 %v2272, 2147483648
        %v2274 = vmul.f32 %v2273, 1.442695
        %v2275 = vpow.pop %v2274
        %v2276 = vadd.f32 %v2275, 1.0
        %v2277 = vrcp.pop %v2276
        %v2278 = vmul.f32 1.0, %v2277
        %v2279 = vadd.f32 %v2146, %v2228
        %v2280 = vxor.u32 %v2279, 2147483648
        %v2281 = vmul.f32 %v2280, 1.442695
        %v2282 = vpow.pop %v2281
        %v2283 = vadd.f32 %v2282, 1.0
        %v2284 = vrcp.pop %v2283
        %v2285 = vmul.f32 1.0, %v2284
        %v2286 = vmul.f32 %v2278, %v2267
        %v2287 = vadd.f32 %v2185, %v2286
        %v2288 = vtanh.pop %v2287
        %v2289 = vsub.f32 1.0, %v2285
        %v2290 = vmul.f32 %v2289, %v2288
        %v2291 = vmul.f32 %v2285, %v2097
        %v2292 = vadd.f32 %v2290, %v2291
        %s2293 = smul.u32 %s2101, 8
        %s2294 = scalar_lea.vmem %s353, %s2293 [#allocation3]
        %2295 = vst [vmem:[%s2294] sm:$0xff] %v2292
        %s2296 = scalar_select %p514, 7, 0
        %s2297 = smul.u32 %s2296, 2
        %s2298 = smul.addr %s2297, 8
        %s2299 = scalar_lea.vmem %s370, %s2298
        %v2300 = vld [vmem:[%s2299] sm:$0xff]
        %v2301 = vld [vmem:[%s2299 + $0x8] sm:$0xff]
        %v2302 = vpack.c.bf16 %v2300, %v2300
        %v2303 = vpack.c.bf16 %v2301, %v2301
        %2304 = vmatprep.subr.bf16.mxu0 %v721
        %2305 = vmatpush1.bf16.msra.mxu0 %v720
        %2306 = vmatprep.subr.bf16.mxu0 %v718
        %2307 = vmatpush1.bf16.msra.mxu0 %v717
        %2308 = vmatprep.subr.bf16.mxu0 %v715
        %2309 = vmatpush1.bf16.msra.mxu0 %v714
        %2310 = vmatprep.subr.bf16.mxu0 %v712
        %2311 = vmatpush1.bf16.msra.mxu0 %v711
        %2312 = vmatprep.subr.bf16.mxu0 %v709
        %2313 = vmatpush1.bf16.msra.mxu0 %v708
        %2314 = vmatprep.subr.bf16.mxu0 %v706
        %2315 = vmatpush1.bf16.msra.mxu0 %v705
        %2316 = vmatprep.subr.bf16.mxu0 %v703
        %2317 = vmatpush1.bf16.msra.mxu0 %v702
        %2318 = vmatprep.subr.bf16.mxu0 %v700
        %2319 = vmatpush1.bf16.msra.mxu0 %v699
        %2320 = vmatprep.subr.bf16.mxu0 %v745
        %2321 = vmatpush2.bf16.msra.mxu0 %v744
        %2322 = vmatprep.subr.bf16.mxu0 %v742
        %2323 = vmatpush2.bf16.msra.mxu0 %v741
        %2324 = vmatprep.subr.bf16.mxu0 %v739
        %2325 = vmatpush2.bf16.msra.mxu0 %v738
        %2326 = vmatprep.subr.bf16.mxu0 %v736
        %2327 = vmatpush2.bf16.msra.mxu0 %v735
        %2328 = vmatprep.subr.bf16.mxu0 %v733
        %2329 = vmatpush2.bf16.msra.mxu0 %v732
        %2330 = vmatprep.subr.bf16.mxu0 %v730
        %2331 = vmatpush2.bf16.msra.mxu0 %v729
        %2332 = vmatprep.subr.bf16.mxu0 %v727
        %2333 = vmatpush2.bf16.msra.mxu0 %v726
        %2334 = vmatprep.subr.bf16.mxu0 %v724
        %2335 = vmatpush2.bf16.msra.mxu0 %v723
        %2336 = vmatprep.mubr.bf16.mxu0 %v2303
        %2337 = vmatmul.mubr.bf16.gmra.mxu0 %v2302
        %v2338 = vpop.f32.mrf.mxu0
        %v2339 = vadd.f32 %v527, %v2338
        %v2340 = vpop.f32.mrf.mxu0
        %v2341 = vadd.f32 %v531, %v2340
        %v2342 = vpop.f32.mrf.mxu0
        %v2343 = vpop.f32.mrf.mxu0
        %2344 = vdwg.mxu0
        %2345 = vmatprep.subr.bf16.mxu0 0
        %2346 = vmatpush1.bf16.msra.mxu0 %v722
        %2347 = vmatprep.subr.bf16.mxu0 0
        %2348 = vmatpush1.bf16.msra.mxu0 %v719
        %2349 = vmatprep.subr.bf16.mxu0 0
        %2350 = vmatpush1.bf16.msra.mxu0 %v716
        %2351 = vmatprep.subr.bf16.mxu0 0
        %2352 = vmatpush1.bf16.msra.mxu0 %v713
        %2353 = vmatprep.subr.bf16.mxu0 0
        %2354 = vmatpush1.bf16.msra.mxu0 %v710
        %2355 = vmatprep.subr.bf16.mxu0 0
        %2356 = vmatpush1.bf16.msra.mxu0 %v707
        %2357 = vmatprep.subr.bf16.mxu0 0
        %2358 = vmatpush1.bf16.msra.mxu0 %v704
        %2359 = vmatprep.subr.bf16.mxu0 0
        %2360 = vmatpush1.bf16.msra.mxu0 %v701
        %2361 = vmatprep.subr.bf16.mxu0 0
        %2362 = vmatpush2.bf16.msra.mxu0 %v746
        %2363 = vmatprep.subr.bf16.mxu0 0
        %2364 = vmatpush2.bf16.msra.mxu0 %v743
        %2365 = vmatprep.subr.bf16.mxu0 0
        %2366 = vmatpush2.bf16.msra.mxu0 %v740
        %2367 = vmatprep.subr.bf16.mxu0 0
        %2368 = vmatpush2.bf16.msra.mxu0 %v737
        %2369 = vmatprep.subr.bf16.mxu0 0
        %2370 = vmatpush2.bf16.msra.mxu0 %v734
        %2371 = vmatprep.subr.bf16.mxu0 0
        %2372 = vmatpush2.bf16.msra.mxu0 %v731
        %2373 = vmatprep.subr.bf16.mxu0 0
        %2374 = vmatpush2.bf16.msra.mxu0 %v728
        %2375 = vmatprep.subr.bf16.mxu0 0
        %2376 = vmatpush2.bf16.msra.mxu0 %v725
        %2377 = vmatprep.mubr.bf16.mxu0 %v2303
        %2378 = vmatmul.mubr.bf16.gmra.mxu0 %v2302
        %v2379 = vpop.f32.mrf.mxu0
        %v2380 = vadd.f32 %v535, %v2379
        %v2381 = vpop.f32.mrf.mxu0
        %v2382 = vpop.f32.mrf.mxu0
        %v2383 = vpop.f32.mrf.mxu0
        %2384 = vdwg.mxu0
        %v2385 = vpack.c.bf16 %v2292, %v2292
        %2386 = vmatprep.subr.bf16.mxu0 %v995
        %2387 = vmatpush1.bf16.msra.mxu0 %v994
        %2388 = vmatprep.subr.bf16.mxu0 %v992
        %2389 = vmatpush1.bf16.msra.mxu0 %v991
        %2390 = vmatprep.subr.bf16.mxu0 %v989
        %2391 = vmatpush1.bf16.msra.mxu0 %v988
        %2392 = vmatprep.subr.bf16.mxu0 %v986
        %2393 = vmatpush1.bf16.msra.mxu0 %v985
        %2394 = vmatprep.subr.bf16.mxu0 %v983
        %2395 = vmatpush1.bf16.msra.mxu0 %v982
        %2396 = vmatprep.subr.bf16.mxu0 %v980
        %2397 = vmatpush1.bf16.msra.mxu0 %v979
        %2398 = vmatprep.subr.bf16.mxu0 %v977
        %2399 = vmatpush1.bf16.msra.mxu0 %v976
        %2400 = vmatprep.subr.bf16.mxu0 %v974
        %2401 = vmatpush1.bf16.msra.mxu0 %v973
        %2402 = vmatprep.subr.bf16.mxu0 0
        %2403 = vmatpush2.bf16.msra.mxu0 0
        %2404 = vmatprep.subr.bf16.mxu0 0
        %2405 = vmatpush2.bf16.msra.mxu0 0
        %2406 = vmatprep.subr.bf16.mxu0 0
        %2407 = vmatpush2.bf16.msra.mxu0 0
        %2408 = vmatprep.subr.bf16.mxu0 0
        %2409 = vmatpush2.bf16.msra.mxu0 0
        %2410 = vmatprep.subr.bf16.mxu0 0
        %2411 = vmatpush2.bf16.msra.mxu0 0
        %2412 = vmatprep.subr.bf16.mxu0 0
        %2413 = vmatpush2.bf16.msra.mxu0 0
        %2414 = vmatprep.subr.bf16.mxu0 0
        %2415 = vmatpush2.bf16.msra.mxu0 0
        %2416 = vmatprep.subr.bf16.mxu0 0
        %2417 = vmatpush2.bf16.msra.mxu0 0
        %2418 = vmatprep.mubr.bf16.mxu0 0
        %2419 = vmatmul.mubr.bf16.gmra.mxu0 %v2385
        %v2420 = vpop.f32.mrf.mxu0
        %v2421 = vadd.f32 %v881, %v2420
        %v2422 = vpop.f32.mrf.mxu0
        %v2423 = vadd.f32 %v885, %v2422
        %v2424 = vpop.f32.mrf.mxu0
        %v2425 = vpop.f32.mrf.mxu0
        %2426 = vdwg.mxu0
        %2427 = vmatprep.subr.bf16.mxu0 0
        %2428 = vmatpush1.bf16.msra.mxu0 %v996
        %2429 = vmatprep.subr.bf16.mxu0 0
        %2430 = vmatpush1.bf16.msra.mxu0 %v993
        %2431 = vmatprep.subr.bf16.mxu0 0
        %2432 = vmatpush1.bf16.msra.mxu0 %v990
        %2433 = vmatprep.subr.bf16.mxu0 0
        %2434 = vmatpush1.bf16.msra.mxu0 %v987
        %2435 = vmatprep.subr.bf16.mxu0 0
        %2436 = vmatpush1.bf16.msra.mxu0 %v984
        %2437 = vmatprep.subr.bf16.mxu0 0
        %2438 = vmatpush1.bf16.msra.mxu0 %v981
        %2439 = vmatprep.subr.bf16.mxu0 0
        %2440 = vmatpush1.bf16.msra.mxu0 %v978
        %2441 = vmatprep.subr.bf16.mxu0 0
        %2442 = vmatpush1.bf16.msra.mxu0 %v975
        %2443 = vmatprep.subr.bf16.mxu0 0
        %2444 = vmatpush2.bf16.msra.mxu0 0
        %2445 = vmatprep.subr.bf16.mxu0 0
        %2446 = vmatpush2.bf16.msra.mxu0 0
        %2447 = vmatprep.subr.bf16.mxu0 0
        %2448 = vmatpush2.bf16.msra.mxu0 0
        %2449 = vmatprep.subr.bf16.mxu0 0
        %2450 = vmatpush2.bf16.msra.mxu0 0
        %2451 = vmatprep.subr.bf16.mxu0 0
        %2452 = vmatpush2.bf16.msra.mxu0 0
        %2453 = vmatprep.subr.bf16.mxu0 0
        %2454 = vmatpush2.bf16.msra.mxu0 0
        %2455 = vmatprep.subr.bf16.mxu0 0
        %2456 = vmatpush2.bf16.msra.mxu0 0
        %2457 = vmatprep.subr.bf16.mxu0 0
        %2458 = vmatpush2.bf16.msra.mxu0 0
        %2459 = vmatprep.mubr.bf16.mxu0 0
        %2460 = vmatmul.mubr.bf16.gmra.mxu0 %v2385
        %v2461 = vpop.f32.mrf.mxu0
        %v2462 = vadd.f32 %v889, %v2461
        %v2463 = vpop.f32.mrf.mxu0
        %v2464 = vpop.f32.mrf.mxu0
        %v2465 = vpop.f32.mrf.mxu0
        %2466 = vdwg.mxu0
        %v2467 = vadd.f32 %v2339, %v2421
        %v2468 = vxor.u32 %v2467, 2147483648
        %v2469 = vmul.f32 %v2468, 1.442695
        %v2470 = vpow.pop %v2469
        %v2471 = vadd.f32 %v2470, 1.0
        %v2472 = vrcp.pop %v2471
        %v2473 = vmul.f32 1.0, %v2472
        %v2474 = vadd.f32 %v2341, %v2423
        %v2475 = vxor.u32 %v2474, 2147483648
        %v2476 = vmul.f32 %v2475, 1.442695
        %v2477 = vpow.pop %v2476
        %v2478 = vadd.f32 %v2477, 1.0
        %v2479 = vrcp.pop %v2478
        %v2480 = vmul.f32 1.0, %v2479
        %v2481 = vmul.f32 %v2473, %v2462
        %v2482 = vadd.f32 %v2380, %v2481
        %v2483 = vtanh.pop %v2482
        %v2484 = vsub.f32 1.0, %v2480
        %v2485 = vmul.f32 %v2484, %v2483
        %v2486 = vmul.f32 %v2480, %v2292
        %v2487 = vadd.f32 %v2485, %v2486
        %s2488 = smul.u32 %s2296, 8
        %s2489 = scalar_lea.vmem %s353, %s2488 [#allocation3]
        %2490 = vst [vmem:[%s2489] sm:$0xff] %v2487
        %2491 = vst [vmem:[%s512] sm:$0xff] %v2487
        // Predicated region
        $region45: #{bert_gru_sentiment_forward.4} parent=39 // pred_check
          %p2492 = pneg %p406
        $region46: #{bert_gru_sentiment_forward.4} parent=39 // pred_check_branch
          %2494 = sbr.rel (%p2492) target = $region48
        $region47: #{bert_gru_sentiment_forward.4} parent=39 // pred_region
          %2495 = vst [vmem:[%s404] sm:$0xff] %v2487
        $region48: #{bert_gru_sentiment_forward.4} parent=39 // pred_fallthru
          _
        %s2496 = sand.u32 %s193, 1
        %s2497 = scalar_lea.sflag [#allocation4], %s2496
        %s2498 = sand.u32 %s193, 1
        %s2499 = smul.addr %s2498, 64
        %s2500 = scalar_lea.vmem [#allocation3], %s2499
        %p2501 = scmp.lt.s32.totalorder %s25, 1
        %s2502 = scalar_select %p2501, %s25, 1
        %s2503 = smul.addr %s2502, 8
        %s2504 = scalar_lea.vmem %s6, %s2503
        // Predicated region
        $region49: #{bert_gru_sentiment_forward.4} parent=39 // pred_check
          %p2505 = pneg %p203
        $region50: #{bert_gru_sentiment_forward.4} parent=39 // pred_check_branch
          %2507 = sbr.rel (%p2505) target = $region52
        $region51: #{bert_gru_sentiment_forward.4} parent=39 // pred_region
          %s2508 = ssub.s32 1, %s25
          %s2509 = smul.u32 %s2508, %s26
          %s2510 = ssub.s32 0, %s26
          %s2511 = smul.u32 %s25, %s2510
          %s2512 = sadd.s32 %s2509, %s2511
          %s2513 = smul.u32 8, %s2512
          %s2515 = ssub.s32 1024, 1024
          %2516 = vsyncadd %s2497, %s2515
          %s2517 = smul.addr %s2513, 2
          %s2518 = sadd.s32 %s25, %s2517
          %s2519 = smul.addr %s2518, 128
          %s2520 = scalar_lea.hbm %s5, %s2519
          %s2521 = sshll.u32 %s2500, 4
          %s2522 = int_to_ptr.vmem [resolvable:$true] %s2521
          %2527 = dma.vmem_to_hbm [thread:$0]  %s2522, 1024, %s2520, %s2497, 128, 256, 8
        $region52: #{bert_gru_sentiment_forward.4} parent=39 // pred_fallthru
          _
        // Predicated region
        $region53: #{bert_gru_sentiment_forward.4} parent=39 // pred_check
          %p2528 = pneg %p229
        $region54: #{bert_gru_sentiment_forward.4} parent=39 // pred_check_branch
          %2530 = sbr.rel (%p2528) target = $region56
        $region55: #{bert_gru_sentiment_forward.4} parent=39 // pred_region
          _
        $region56: #{bert_gru_sentiment_forward.4} parent=39 // pred_fallthru
          _
      $region40: #{bert_gru_sentiment_forward.4} parent=5 // pred_fallthru
        _
      %p2531 = scmp.le.s32.totalorder 2, %s16
      // Predicated region
      $region57: #{bert_gru_sentiment_forward.4} parent=5 // pred_check
        %p2532 = pneg %p2531
      $region58: #{bert_gru_sentiment_forward.4} parent=5 // pred_check_branch
        %2534 = sbr.rel (%p2532) target = $region60
      $region59: #{bert_gru_sentiment_forward.4} parent=5 // pred_region
        %s2535 = ssub.s32 %s16, 2
        // Predicated region
        $region61: #{bert_gru_sentiment_forward.4} parent=59 // pred_check
          %p2536 = pneg %p209
        $region62: #{bert_gru_sentiment_forward.4} parent=59 // pred_check_branch
          %2538 = sbr.rel (%p2536) target = $region64
        $region63: #{bert_gru_sentiment_forward.4} parent=59 // pred_region
          %s2539 = sand.u32 %s194, 1
          %s2540 = scalar_lea.sflag [#allocation4], %s2539
          %s2541 = sand.u32 %s194, 1
          %s2542 = smul.addr %s2541, 64
          %s2543 = scalar_lea.vmem [#allocation3], %s2542
          %2544 = dma.done %s2540, 1024
        $region64: #{bert_gru_sentiment_forward.4} parent=59 // pred_fallthru
          _
        // Predicated region
        $region65: #{bert_gru_sentiment_forward.4} parent=59 // pred_check
          %p2545 = pneg %p235
        $region66: #{bert_gru_sentiment_forward.4} parent=59 // pred_check_branch
          %2547 = sbr.rel (%p2545) target = $region68
        $region67: #{bert_gru_sentiment_forward.4} parent=59 // pred_region
          %p2548 = scmp.lt.s32.totalorder %s27, 1
          %s2549 = scalar_select %p2548, %s27, 1
          %s2550 = smul.addr %s2549, 8
          %s2551 = scalar_lea.vmem %s6, %s2550
        $region68: #{bert_gru_sentiment_forward.4} parent=59 // pred_fallthru
          _
      $region60: #{bert_gru_sentiment_forward.4} parent=5 // pred_fallthru
        _
    $region6: #{bert_gru_sentiment_forward.4} parent=1 // loop_footer
      %s20 = sadd.s32 1, %s16
    $region7: #{bert_gru_sentiment_forward.4} parent=1 // loop_footer_branch
      %15 = sbr.rel target = $region3
    $region8: #{bert_gru_sentiment_forward.4} parent=1 // loop_exit
      _
    %2552 = vsyncpa [#allocation4], 1
    %s2553 = scalar_lea.sflag [#allocation4], 1
    %2554 = vsyncpa %s2553, 1

</llo_original>
